<compile_context>
chip_gen: v7x
topology: tpu7x:2x2x1
jax: 0.10.0
libtpu: 0.0.40
codegen_flags: <defaults>
</compile_context>

<pallas_src>
import functools

import jax
import jax.numpy as jnp
from jax import lax
from jax.experimental import pallas as pl
from jax.experimental.pallas import tpu as pltpu

C_PAD = 128  # lane-dense padded width for the (tiny) class_num outputs


# ----------------------------------------------------------------------------
# Fused FSNet forward kernel.
# ----------------------------------------------------------------------------
def _fsnet_kernel(
    ids_ref, emb_ref,
    e0_wf, e0_wb, e0_bi, e0_whh, e0_bhh,
    e1_wf, e1_wb, e1_bi, e1_whh, e1_bhh,
    d0_wf, d0_wb, d0_bi, d0_whh, d0_bhh,
    d1_wf, d1_wb, d1_bi, d1_whh, d1_bhh,
    wr_ref, br_ref, w1_ref, b1_ref, w2_ref, b2_ref, w3_ref, b3_ref,
    recon_ref, out_ref,
    *, L_enc, L_dec, B, H,
):
    f32 = jnp.float32
    H2, H4, H6 = 2 * H, 4 * H, 6 * H

    def mm(a, b):
        return jnp.dot(a, b, preferred_element_type=f32)

    # One fused bidirectional GRU layer.  The hidden state is carried as one
    # (B, 2H) value [h_f | h_b]; gates are packed [r_f r_b | z_f z_b | n_f n_b]
    # so the update is 1 matmul + 1 sigmoid (4H lanes) + 1 tanh (2H lanes) per
    # step.  gi_fn(i) returns that step's packed (B, 6H) input projection (it
    # does not depend on h, so it is off the serial chain).  Fully unrolled
    # (n_steps is a small static int).
    def bidir(n_steps, gi_fn, whh_ref, bhh_ref, collect):
        W = whh_ref[...]                                   # (2H, 6H) packed
        bhh = jnp.broadcast_to(bhh_ref[...], (B, H6))      # hoisted broadcast
        h = jnp.zeros((B, H2), f32)                        # [h_f | h_b]
        yf, yb = [], []
        for i in range(n_steps):
            gi = gi_fn(i)                                  # (B, 6H)
            gh = mm(h, W) + bhh                            # (B, 6H)
            rz = jax.nn.sigmoid(gi[:, 0:H4] + gh[:, 0:H4])  # [r_f r_b z_f z_b]
            r = rz[:, 0:H2]
            z = rz[:, H2:H4]
            n = jnp.tanh(gi[:, H4:H6] + r * gh[:, H4:H6])   # [n_f n_b]
            h = (1.0 - z) * n + z * h
            if collect:
                yf.append(h[:, 0:H])        # fwd output at time i
                yb.insert(0, h[:, H:H2])    # bwd output at time n_steps-1-i
        if collect:
            # (L*B, 2H): row block t = [h_f(t) | h_b(t)] -> next layer's input.
            y = jnp.concatenate(
                [jnp.concatenate(yf, axis=0), jnp.concatenate(yb, axis=0)],
                axis=-1)
        else:
            y = None
        return h, y                         # h = [h_f_final | h_b_final]

    # Per-step packed gi from the two precomputed slabs: fwd gates come from
    # timestep i, bwd gates from timestep n_steps-1-i (disjoint column blocks,
    # so a single add combines them).
    def slab_gi_fn(slab_f, slab_b, n_steps):
        def fn(i):
            tb = n_steps - 1 - i
            return (slab_f[i * B:(i + 1) * B, :]
                    + slab_b[tb * B:(tb + 1) * B, :])
        return fn

    # ------------------------------ encoder ---------------------------------
    n_token = emb_ref.shape[0]
    LBe = L_enc * B
    ids = ids_ref[...]                                     # (L_enc*B, 1) int32
    # TODO(synk): one-hot matmul is cheapest at n_token=50; use a DMA row
    # gather (ids via scalar prefetch) once the vocab is realistic.
    onehot = (ids == lax.broadcasted_iota(jnp.int32, (LBe, n_token), 1)).astype(f32)
    x_emb = mm(onehot, emb_ref[...])                       # (LBe, E)

    # Layer 0: batched input projections (both directions, packed columns).
    slab_f = mm(x_emb, e0_wf[...]) + e0_bi[...]
    slab_b = mm(x_emb, e0_wb[...])
    h_e0, y_e0 = bidir(L_enc, slab_gi_fn(slab_f, slab_b, L_enc),
                       e0_whh, e0_bhh, collect=True)

    # Layer 1 (nn.GRU inter-layer dropout is identity in eval mode).
    slab_f = mm(y_e0, e1_wf[...]) + e1_bi[...]
    slab_b = mm(y_e0, e1_wb[...])
    h_e1, _ = bidir(L_enc, slab_gi_fn(slab_f, slab_b, L_enc),
                    e1_whh, e1_bhh, collect=False)

    # torch h_n layout: [l0_fwd, l0_bwd, l1_fwd, l1_bwd] -> z_e (B, 4H).
    z_e = jnp.concatenate([h_e0, h_e1], axis=-1)

    # ------------------------------ decoder ---------------------------------
    # Decoder input is z_e at every timestep: compute the packed layer-0 input
    # projection once and reuse it for all steps and both directions.
    gi_d0 = mm(z_e, d0_wf[...]) + mm(z_e, d0_wb[...]) + d0_bi[...]
    h_d0, y_d0 = bidir(L_dec, lambda i: gi_d0, d0_whh, d0_bhh, collect=True)

    slab_f = mm(y_d0, d1_wf[...]) + d1_bi[...]
    slab_b = mm(y_d0, d1_wb[...])
    h_d1, _ = bidir(L_dec, slab_gi_fn(slab_f, slab_b, L_dec),
                    d1_whh, d1_bhh, collect=False)

    z_d = jnp.concatenate([h_d0, h_d1], axis=-1)

    # ------------------------------- head -----------------------------------
    # Outputs are 128-lane padded (lane-dense stores); wrapper slices to C.
    recon_ref[...] = mm(z_e, wr_ref[...]) + br_ref[...]

    feats = jnp.concatenate([z_e, z_d, z_e * z_d, jnp.abs(z_e - z_d)], axis=-1)
    # nn.Dropout between dense layers is identity (eval mode).
    hd1 = jnp.maximum(mm(feats, w1_ref[...]) + b1_ref[...], 0.0)
    hd2 = jnp.maximum(mm(hd1, w2_ref[...]) + b2_ref[...], 0.0)
    out_ref[...] = mm(hd2, w3_ref[...]) + b3_ref[...]


# ----------------------------------------------------------------------------
# Parameter construction (deterministic, synthetic), packed for the kernel.
# Packed column order for every (., 6H) object: [r_f r_b | z_f z_b | n_f n_b].
#   wih_f -> (in, 6H) fwd gates in fwd columns, zeros elsewhere
#   wih_b -> (in, 6H) bwd gates in bwd columns, zeros elsewhere
#   bih   -> (1, 6H)  both directions' input biases
#   whh   -> (2H, 6H) rows 0:H = fwd hidden weights (fwd cols),
#                     rows H:2H = bwd hidden weights (bwd cols)
#   bhh   -> (1, 6H)
# Head recon/w3 columns zero-padded to C_PAD = 128 lanes.
# ----------------------------------------------------------------------------
def _pack_bidir_layer(key, in_size, hidden, scale):
    H = hidden
    ks = jax.random.split(key, 8)

    def rnd(k, shape):
        return jax.random.normal(k, shape, jnp.float32) * scale

    wih_f = rnd(ks[0], (in_size, 3 * H))    # [r | z | n]
    whh_f = rnd(ks[1], (H, 3 * H))
    bih_f = rnd(ks[2], (1, 3 * H))
    bhh_f = rnd(ks[3], (1, 3 * H))
    wih_b = rnd(ks[4], (in_size, 3 * H))
    whh_b = rnd(ks[5], (H, 3 * H))
    bih_b = rnd(ks[6], (1, 3 * H))
    bhh_b = rnd(ks[7], (1, 3 * H))

    def scatter_cols(mat, dir_idx):
        """(rows, 3H) [r|z|n] -> (rows, 6H) with gate g at cols (2g+dir)*H."""
        rows = mat.shape[0]
        out = jnp.zeros((rows, 6 * H), jnp.float32)
        for g in range(3):
            out = out.at[:, (2 * g + dir_idx) * H:(2 * g + dir_idx + 1) * H].set(
                mat[:, g * H:(g + 1) * H])
        return out

    wf = scatter_cols(wih_f, 0)                                   # (in, 6H)
    wb = scatter_cols(wih_b, 1)                                   # (in, 6H)
    bi = scatter_cols(bih_f, 0) + scatter_cols(bih_b, 1)          # (1, 6H)
    whh = jnp.concatenate(
        [scatter_cols(whh_f, 0), scatter_cols(whh_b, 1)], axis=0)  # (2H, 6H)
    bhh = scatter_cols(bhh_f, 0) + scatter_cols(bhh_b, 1)         # (1, 6H)
    return [wf, wb, bi, whh, bhh]


def make_params(key, n_token, emb_size, hidden, class_num, scale=0.1):
    keys = jax.random.split(key, 16)

    def rnd(k, shape):
        return jax.random.normal(k, shape, jnp.float32) * scale

    def pad_cols(a):
        return jnp.pad(a, ((0, 0), (0, C_PAD - a.shape[1])))

    encoder = (_pack_bidir_layer(keys[1], emb_size, hidden, scale)
               + _pack_bidir_layer(keys[2], 2 * hidden, hidden, scale))
    decoder = (_pack_bidir_layer(keys[3], 4 * hidden, hidden, scale)
               + _pack_bidir_layer(keys[4], 2 * hidden, hidden, scale))
    head = [
        pad_cols(rnd(keys[5], (4 * hidden, class_num))),    # w_recon (4H, 128)
        pad_cols(rnd(keys[6], (1, class_num))),             # b_recon (1, 128)
        rnd(keys[7], (16 * hidden, 16 * hidden)),            # w1
        rnd(keys[8], (1, 16 * hidden)),                      # b1
        rnd(keys[9], (16 * hidden, 16 * hidden)),             # w2
        rnd(keys[10], (1, 16 * hidden)),                      # b2
        pad_cols(rnd(keys[11], (16 * hidden, class_num))),   # w3 (16H, 128)
        pad_cols(rnd(keys[12], (1, class_num))),             # b3 (1, 128)
    ]
    return {
        "embedding": rnd(keys[0], (n_token, emb_size)),
        "encoder": encoder,
        "decoder": decoder,
        "head": head,
    }


# ----------------------------------------------------------------------------
# Full forward: one fused pallas_call.
# ----------------------------------------------------------------------------
@functools.partial(jax.jit, static_argnames=("max_length", "class_num"))
def fsnet_forward(params, input_x, *, max_length, class_num):
    B, L = input_x.shape
    enc = params["encoder"]
    dec = params["decoder"]
    head = params["head"]
    H = enc[3].shape[0] // 2          # layer-0 packed whh: (2H, 6H)

    # Time-major flattened token ids: row t*B + b = input_x[b, t].
    ids_flat = jnp.transpose(input_x).reshape(L * B, 1).astype(jnp.int32)

    args = [ids_flat, params["embedding"], *enc, *dec, *head]
    vmem = pl.BlockSpec(memory_space=pltpu.MemorySpace.VMEM)

    kernel = functools.partial(
        _fsnet_kernel, L_enc=L, L_dec=max_length, B=B, H=H)

    recon_p, out_p = pl.pallas_call(
        kernel,
        out_shape=(jax.ShapeDtypeStruct((B, C_PAD), jnp.float32),
                   jax.ShapeDtypeStruct((B, C_PAD), jnp.float32)),
        in_specs=[vmem] * len(args),
        out_specs=(vmem, vmem),
        compiler_params=pltpu.CompilerParams(
            vmem_limit_bytes=32 * 1024 * 1024),
    )(*args)

    # Slice the lane-dense padded head outputs back to class_num.
    return recon_p[:, :class_num], out_p[:, :class_num]


if __name__ == "__main__":
    # Small, forward-consistent shapes.
    batch_size = 2
    max_length = 8          # sequence length L
    n_token = 50
    embedding_size = 16
    hidden_unit = 32        # H  (z_e / z_d are 4H = 128 wide; MLP width 16H = 512)
    class_num = 5

    key = jax.random.PRNGKey(0)
    pkey, xkey = jax.random.split(key)
    params = make_params(pkey, n_token, embedding_size, hidden_unit, class_num)

    input_x = jax.random.randint(
        xkey, (batch_size, max_length), minval=0, maxval=n_token, dtype=jnp.int32)

    recon, dense_out = fsnet_forward(
        params, input_x, max_length=max_length, class_num=class_num)
    jax.block_until_ready((recon, dense_out))

    assert recon.shape == (batch_size, class_num)
    assert dense_out.shape == (batch_size, class_num)
    assert bool(jnp.all(jnp.isfinite(recon))) and bool(jnp.all(jnp.isfinite(dense_out)))
    print("KERNEL_OK")
</pallas_src>

<mosaic_0001>
module attributes {stable_mosaic.version = 11 : i64} {
  func.func @_fsnet_kernel(%arg0: memref<16x1xi32, #tpu.memory_space<vmem>>, %arg1: memref<50x16xf32, #tpu.memory_space<vmem>>, %arg2: memref<16x192xf32, #tpu.memory_space<vmem>>, %arg3: memref<16x192xf32, #tpu.memory_space<vmem>>, %arg4: memref<1x192xf32, #tpu.memory_space<vmem>>, %arg5: memref<64x192xf32, #tpu.memory_space<vmem>>, %arg6: memref<1x192xf32, #tpu.memory_space<vmem>>, %arg7: memref<64x192xf32, #tpu.memory_space<vmem>>, %arg8: memref<64x192xf32, #tpu.memory_space<vmem>>, %arg9: memref<1x192xf32, #tpu.memory_space<vmem>>, %arg10: memref<64x192xf32, #tpu.memory_space<vmem>>, %arg11: memref<1x192xf32, #tpu.memory_space<vmem>>, %arg12: memref<128x192xf32, #tpu.memory_space<vmem>>, %arg13: memref<128x192xf32, #tpu.memory_space<vmem>>, %arg14: memref<1x192xf32, #tpu.memory_space<vmem>>, %arg15: memref<64x192xf32, #tpu.memory_space<vmem>>, %arg16: memref<1x192xf32, #tpu.memory_space<vmem>>, %arg17: memref<64x192xf32, #tpu.memory_space<vmem>>, %arg18: memref<64x192xf32, #tpu.memory_space<vmem>>, %arg19: memref<1x192xf32, #tpu.memory_space<vmem>>, %arg20: memref<64x192xf32, #tpu.memory_space<vmem>>, %arg21: memref<1x192xf32, #tpu.memory_space<vmem>>, %arg22: memref<128x128xf32, #tpu.memory_space<vmem>>, %arg23: memref<1x128xf32, #tpu.memory_space<vmem>>, %arg24: memref<512x512xf32, #tpu.memory_space<vmem>>, %arg25: memref<1x512xf32, #tpu.memory_space<vmem>>, %arg26: memref<512x512xf32, #tpu.memory_space<vmem>>, %arg27: memref<1x512xf32, #tpu.memory_space<vmem>>, %arg28: memref<512x128xf32, #tpu.memory_space<vmem>>, %arg29: memref<1x128xf32, #tpu.memory_space<vmem>>, %arg30: memref<2x128xf32, #tpu.memory_space<vmem>>, %arg31: memref<2x128xf32, #tpu.memory_space<vmem>>) attributes {dimension_semantics = [], scalar_prefetch = 0 : i64, scratch_operands = 0 : i64, tpu.core_type = #tpu.core_type<tc>} {
    %c0 = arith.constant 0 : index
    %c0_0 = arith.constant 0 : index
    %0 = vector.load %arg0[%c0, %c0_0] : memref<16x1xi32, #tpu.memory_space<vmem>>, vector<16x1xi32>
    %1 = tpu.iota {dimensions = array<i32: 1>} : vector<16x50xi32>
    %2 = vector.broadcast %0 : vector<16x1xi32> to vector<16x50xi32>
    %3 = arith.cmpi eq, %2, %1 : vector<16x50xi32>
    %4 = arith.extui %3 : vector<16x50xi1> to vector<16x50xi32>
    %5 = arith.sitofp %4 : vector<16x50xi32> to vector<16x50xf32>
    %c0_1 = arith.constant 0 : index
    %c0_2 = arith.constant 0 : index
    %6 = vector.load %arg1[%c0_1, %c0_2] : memref<50x16xf32, #tpu.memory_space<vmem>>, vector<50x16xf32>
    %cst = arith.constant dense<0.000000e+00> : vector<16x16xf32>
    %7 = tpu.matmul %5, %6, %cst {dimension_numbers = #tpu.dot_dimension_numbers<[1], [0], [0], [1], [0, 0, 1, 1], [], []>} : vector<16x50xf32>, vector<50x16xf32>, vector<16x16xf32> -> vector<16x16xf32>
    %c0_3 = arith.constant 0 : index
    %c0_4 = arith.constant 0 : index
    %8 = vector.load %arg2[%c0_3, %c0_4] : memref<16x192xf32, #tpu.memory_space<vmem>>, vector<16x192xf32>
    %cst_5 = arith.constant dense<0.000000e+00> : vector<16x192xf32>
    %9 = tpu.matmul %7, %8, %cst_5 {dimension_numbers = #tpu.dot_dimension_numbers<[1], [0], [0], [1], [0, 0, 1, 1], [], []>} : vector<16x16xf32>, vector<16x192xf32>, vector<16x192xf32> -> vector<16x192xf32>
    %c0_6 = arith.constant 0 : index
    %c0_7 = arith.constant 0 : index
    %10 = vector.load %arg4[%c0_6, %c0_7] : memref<1x192xf32, #tpu.memory_space<vmem>>, vector<1x192xf32>
    %11 = vector.broadcast %10 : vector<1x192xf32> to vector<16x192xf32>
    %12 = arith.addf %9, %11 : vector<16x192xf32>
    %c0_8 = arith.constant 0 : index
    %c0_9 = arith.constant 0 : index
    %13 = vector.load %arg3[%c0_8, %c0_9] : memref<16x192xf32, #tpu.memory_space<vmem>>, vector<16x192xf32>
    %cst_10 = arith.constant dense<0.000000e+00> : vector<16x192xf32>
    %14 = tpu.matmul %7, %13, %cst_10 {dimension_numbers = #tpu.dot_dimension_numbers<[1], [0], [0], [1], [0, 0, 1, 1], [], []>} : vector<16x16xf32>, vector<16x192xf32>, vector<16x192xf32> -> vector<16x192xf32>
    %c0_11 = arith.constant 0 : index
    %c0_12 = arith.constant 0 : index
    %15 = vector.load %arg5[%c0_11, %c0_12] : memref<64x192xf32, #tpu.memory_space<vmem>>, vector<64x192xf32>
    %c0_13 = arith.constant 0 : index
    %c0_14 = arith.constant 0 : index
    %16 = vector.load %arg6[%c0_13, %c0_14] : memref<1x192xf32, #tpu.memory_space<vmem>>, vector<1x192xf32>
    %17 = vector.shape_cast %16 : vector<1x192xf32> to vector<1x192xf32>
    %18 = vector.broadcast %17 : vector<1x192xf32> to vector<2x192xf32>
    %cst_15 = arith.constant 0.000000e+00 : f32
    %19 = vector.broadcast %cst_15 : f32 to vector<2x64xf32>
    %20 = vector.extract_strided_slice %12 {offsets = [0, 0], sizes = [2, 192], strides = [1, 1]} : vector<16x192xf32> to vector<2x192xf32>
    %21 = vector.extract_strided_slice %14 {offsets = [14, 0], sizes = [2, 192], strides = [1, 1]} : vector<16x192xf32> to vector<2x192xf32>
    %22 = arith.addf %20, %21 : vector<2x192xf32>
    %cst_16 = arith.constant dense<0.000000e+00> : vector<2x192xf32>
    %23 = tpu.matmul %19, %15, %cst_16 {dimension_numbers = #tpu.dot_dimension_numbers<[1], [0], [0], [1], [0, 0, 1, 1], [], []>} : vector<2x64xf32>, vector<64x192xf32>, vector<2x192xf32> -> vector<2x192xf32>
    %24 = arith.addf %23, %18 : vector<2x192xf32>
    %25 = vector.extract_strided_slice %22 {offsets = [0, 0], sizes = [2, 128], strides = [1, 1]} : vector<2x192xf32> to vector<2x128xf32>
    %26 = vector.extract_strided_slice %24 {offsets = [0, 0], sizes = [2, 128], strides = [1, 1]} : vector<2x192xf32> to vector<2x128xf32>
    %27 = arith.addf %25, %26 : vector<2x128xf32>
    %28 = arith.negf %27 : vector<2x128xf32>
    %29 = math.exp %28 : vector<2x128xf32>
    %cst_17 = arith.constant 1.000000e+00 : f32
    %30 = vector.broadcast %cst_17 : f32 to vector<2x128xf32>
    %31 = arith.addf %30, %29 : vector<2x128xf32>
    %32 = arith.divf %30, %31 : vector<2x128xf32>
    %33 = vector.extract_strided_slice %32 {offsets = [0, 0], sizes = [2, 64], strides = [1, 1]} : vector<2x128xf32> to vector<2x64xf32>
    %34 = vector.extract_strided_slice %32 {offsets = [0, 64], sizes = [2, 64], strides = [1, 1]} : vector<2x128xf32> to vector<2x64xf32>
    %35 = vector.extract_strided_slice %22 {offsets = [0, 128], sizes = [2, 64], strides = [1, 1]} : vector<2x192xf32> to vector<2x64xf32>
    %36 = vector.extract_strided_slice %24 {offsets = [0, 128], sizes = [2, 64], strides = [1, 1]} : vector<2x192xf32> to vector<2x64xf32>
    %37 = arith.mulf %33, %36 : vector<2x64xf32>
    %38 = arith.addf %35, %37 : vector<2x64xf32>
    %39 = math.tanh %38 : vector<2x64xf32>
    %cst_18 = arith.constant 1.000000e+00 : f32
    %40 = vector.broadcast %cst_18 : f32 to vector<2x64xf32>
    %41 = arith.subf %40, %34 : vector<2x64xf32>
    %42 = arith.mulf %41, %39 : vector<2x64xf32>
    %43 = arith.mulf %34, %19 : vector<2x64xf32>
    %44 = arith.addf %42, %43 : vector<2x64xf32>
    %45 = vector.extract_strided_slice %44 {offsets = [0, 0], sizes = [2, 32], strides = [1, 1]} : vector<2x64xf32> to vector<2x32xf32>
    %46 = vector.extract_strided_slice %44 {offsets = [0, 32], sizes = [2, 32], strides = [1, 1]} : vector<2x64xf32> to vector<2x32xf32>
    %47 = vector.extract_strided_slice %12 {offsets = [2, 0], sizes = [2, 192], strides = [1, 1]} : vector<16x192xf32> to vector<2x192xf32>
    %48 = vector.extract_strided_slice %14 {offsets = [12, 0], sizes = [2, 192], strides = [1, 1]} : vector<16x192xf32> to vector<2x192xf32>
    %49 = arith.addf %47, %48 : vector<2x192xf32>
    %cst_19 = arith.constant dense<0.000000e+00> : vector<2x192xf32>
    %50 = tpu.matmul %44, %15, %cst_19 {dimension_numbers = #tpu.dot_dimension_numbers<[1], [0], [0], [1], [0, 0, 1, 1], [], []>} : vector<2x64xf32>, vector<64x192xf32>, vector<2x192xf32> -> vector<2x192xf32>
    %51 = arith.addf %50, %18 : vector<2x192xf32>
    %52 = vector.extract_strided_slice %49 {offsets = [0, 0], sizes = [2, 128], strides = [1, 1]} : vector<2x192xf32> to vector<2x128xf32>
    %53 = vector.extract_strided_slice %51 {offsets = [0, 0], sizes = [2, 128], strides = [1, 1]} : vector<2x192xf32> to vector<2x128xf32>
    %54 = arith.addf %52, %53 : vector<2x128xf32>
    %55 = arith.negf %54 : vector<2x128xf32>
    %56 = math.exp %55 : vector<2x128xf32>
    %cst_20 = arith.constant 1.000000e+00 : f32
    %57 = vector.broadcast %cst_20 : f32 to vector<2x128xf32>
    %58 = arith.addf %57, %56 : vector<2x128xf32>
    %59 = arith.divf %57, %58 : vector<2x128xf32>
    %60 = vector.extract_strided_slice %59 {offsets = [0, 0], sizes = [2, 64], strides = [1, 1]} : vector<2x128xf32> to vector<2x64xf32>
    %61 = vector.extract_strided_slice %59 {offsets = [0, 64], sizes = [2, 64], strides = [1, 1]} : vector<2x128xf32> to vector<2x64xf32>
    %62 = vector.extract_strided_slice %49 {offsets = [0, 128], sizes = [2, 64], strides = [1, 1]} : vector<2x192xf32> to vector<2x64xf32>
    %63 = vector.extract_strided_slice %51 {offsets = [0, 128], sizes = [2, 64], strides = [1, 1]} : vector<2x192xf32> to vector<2x64xf32>
    %64 = arith.mulf %60, %63 : vector<2x64xf32>
    %65 = arith.addf %62, %64 : vector<2x64xf32>
    %66 = math.tanh %65 : vector<2x64xf32>
    %cst_21 = arith.constant 1.000000e+00 : f32
    %67 = vector.broadcast %cst_21 : f32 to vector<2x64xf32>
    %68 = arith.subf %67, %61 : vector<2x64xf32>
    %69 = arith.mulf %68, %66 : vector<2x64xf32>
    %70 = arith.mulf %61, %44 : vector<2x64xf32>
    %71 = arith.addf %69, %70 : vector<2x64xf32>
    %72 = vector.extract_strided_slice %71 {offsets = [0, 0], sizes = [2, 32], strides = [1, 1]} : vector<2x64xf32> to vector<2x32xf32>
    %73 = vector.extract_strided_slice %71 {offsets = [0, 32], sizes = [2, 32], strides = [1, 1]} : vector<2x64xf32> to vector<2x32xf32>
    %74 = vector.extract_strided_slice %12 {offsets = [4, 0], sizes = [2, 192], strides = [1, 1]} : vector<16x192xf32> to vector<2x192xf32>
    %75 = vector.extract_strided_slice %14 {offsets = [10, 0], sizes = [2, 192], strides = [1, 1]} : vector<16x192xf32> to vector<2x192xf32>
    %76 = arith.addf %74, %75 : vector<2x192xf32>
    %cst_22 = arith.constant dense<0.000000e+00> : vector<2x192xf32>
    %77 = tpu.matmul %71, %15, %cst_22 {dimension_numbers = #tpu.dot_dimension_numbers<[1], [0], [0], [1], [0, 0, 1, 1], [], []>} : vector<2x64xf32>, vector<64x192xf32>, vector<2x192xf32> -> vector<2x192xf32>
    %78 = arith.addf %77, %18 : vector<2x192xf32>
    %79 = vector.extract_strided_slice %76 {offsets = [0, 0], sizes = [2, 128], strides = [1, 1]} : vector<2x192xf32> to vector<2x128xf32>
    %80 = vector.extract_strided_slice %78 {offsets = [0, 0], sizes = [2, 128], strides = [1, 1]} : vector<2x192xf32> to vector<2x128xf32>
    %81 = arith.addf %79, %80 : vector<2x128xf32>
    %82 = arith.negf %81 : vector<2x128xf32>
    %83 = math.exp %82 : vector<2x128xf32>
    %cst_23 = arith.constant 1.000000e+00 : f32
    %84 = vector.broadcast %cst_23 : f32 to vector<2x128xf32>
    %85 = arith.addf %84, %83 : vector<2x128xf32>
    %86 = arith.divf %84, %85 : vector<2x128xf32>
    %87 = vector.extract_strided_slice %86 {offsets = [0, 0], sizes = [2, 64], strides = [1, 1]} : vector<2x128xf32> to vector<2x64xf32>
    %88 = vector.extract_strided_slice %86 {offsets = [0, 64], sizes = [2, 64], strides = [1, 1]} : vector<2x128xf32> to vector<2x64xf32>
    %89 = vector.extract_strided_slice %76 {offsets = [0, 128], sizes = [2, 64], strides = [1, 1]} : vector<2x192xf32> to vector<2x64xf32>
    %90 = vector.extract_strided_slice %78 {offsets = [0, 128], sizes = [2, 64], strides = [1, 1]} : vector<2x192xf32> to vector<2x64xf32>
    %91 = arith.mulf %87, %90 : vector<2x64xf32>
    %92 = arith.addf %89, %91 : vector<2x64xf32>
    %93 = math.tanh %92 : vector<2x64xf32>
    %cst_24 = arith.constant 1.000000e+00 : f32
    %94 = vector.broadcast %cst_24 : f32 to vector<2x64xf32>
    %95 = arith.subf %94, %88 : vector<2x64xf32>
    %96 = arith.mulf %95, %93 : vector<2x64xf32>
    %97 = arith.mulf %88, %71 : vector<2x64xf32>
    %98 = arith.addf %96, %97 : vector<2x64xf32>
    %99 = vector.extract_strided_slice %98 {offsets = [0, 0], sizes = [2, 32], strides = [1, 1]} : vector<2x64xf32> to vector<2x32xf32>
    %100 = vector.extract_strided_slice %98 {offsets = [0, 32], sizes = [2, 32], strides = [1, 1]} : vector<2x64xf32> to vector<2x32xf32>
    %101 = vector.extract_strided_slice %12 {offsets = [6, 0], sizes = [2, 192], strides = [1, 1]} : vector<16x192xf32> to vector<2x192xf32>
    %102 = vector.extract_strided_slice %14 {offsets = [8, 0], sizes = [2, 192], strides = [1, 1]} : vector<16x192xf32> to vector<2x192xf32>
    %103 = arith.addf %101, %102 : vector<2x192xf32>
    %cst_25 = arith.constant dense<0.000000e+00> : vector<2x192xf32>
    %104 = tpu.matmul %98, %15, %cst_25 {dimension_numbers = #tpu.dot_dimension_numbers<[1], [0], [0], [1], [0, 0, 1, 1], [], []>} : vector<2x64xf32>, vector<64x192xf32>, vector<2x192xf32> -> vector<2x192xf32>
    %105 = arith.addf %104, %18 : vector<2x192xf32>
    %106 = vector.extract_strided_slice %103 {offsets = [0, 0], sizes = [2, 128], strides = [1, 1]} : vector<2x192xf32> to vector<2x128xf32>
    %107 = vector.extract_strided_slice %105 {offsets = [0, 0], sizes = [2, 128], strides = [1, 1]} : vector<2x192xf32> to vector<2x128xf32>
    %108 = arith.addf %106, %107 : vector<2x128xf32>
    %109 = arith.negf %108 : vector<2x128xf32>
    %110 = math.exp %109 : vector<2x128xf32>
    %cst_26 = arith.constant 1.000000e+00 : f32
    %111 = vector.broadcast %cst_26 : f32 to vector<2x128xf32>
    %112 = arith.addf %111, %110 : vector<2x128xf32>
    %113 = arith.divf %111, %112 : vector<2x128xf32>
    %114 = vector.extract_strided_slice %113 {offsets = [0, 0], sizes = [2, 64], strides = [1, 1]} : vector<2x128xf32> to vector<2x64xf32>
    %115 = vector.extract_strided_slice %113 {offsets = [0, 64], sizes = [2, 64], strides = [1, 1]} : vector<2x128xf32> to vector<2x64xf32>
    %116 = vector.extract_strided_slice %103 {offsets = [0, 128], sizes = [2, 64], strides = [1, 1]} : vector<2x192xf32> to vector<2x64xf32>
    %117 = vector.extract_strided_slice %105 {offsets = [0, 128], sizes = [2, 64], strides = [1, 1]} : vector<2x192xf32> to vector<2x64xf32>
    %118 = arith.mulf %114, %117 : vector<2x64xf32>
    %119 = arith.addf %116, %118 : vector<2x64xf32>
    %120 = math.tanh %119 : vector<2x64xf32>
    %cst_27 = arith.constant 1.000000e+00 : f32
    %121 = vector.broadcast %cst_27 : f32 to vector<2x64xf32>
    %122 = arith.subf %121, %115 : vector<2x64xf32>
    %123 = arith.mulf %122, %120 : vector<2x64xf32>
    %124 = arith.mulf %115, %98 : vector<2x64xf32>
    %125 = arith.addf %123, %124 : vector<2x64xf32>
    %126 = vector.extract_strided_slice %125 {offsets = [0, 0], sizes = [2, 32], strides = [1, 1]} : vector<2x64xf32> to vector<2x32xf32>
    %127 = vector.extract_strided_slice %125 {offsets = [0, 32], sizes = [2, 32], strides = [1, 1]} : vector<2x64xf32> to vector<2x32xf32>
    %128 = vector.extract_strided_slice %12 {offsets = [8, 0], sizes = [2, 192], strides = [1, 1]} : vector<16x192xf32> to vector<2x192xf32>
    %129 = vector.extract_strided_slice %14 {offsets = [6, 0], sizes = [2, 192], strides = [1, 1]} : vector<16x192xf32> to vector<2x192xf32>
    %130 = arith.addf %128, %129 : vector<2x192xf32>
    %cst_28 = arith.constant dense<0.000000e+00> : vector<2x192xf32>
    %131 = tpu.matmul %125, %15, %cst_28 {dimension_numbers = #tpu.dot_dimension_numbers<[1], [0], [0], [1], [0, 0, 1, 1], [], []>} : vector<2x64xf32>, vector<64x192xf32>, vector<2x192xf32> -> vector<2x192xf32>
    %132 = arith.addf %131, %18 : vector<2x192xf32>
    %133 = vector.extract_strided_slice %130 {offsets = [0, 0], sizes = [2, 128], strides = [1, 1]} : vector<2x192xf32> to vector<2x128xf32>
    %134 = vector.extract_strided_slice %132 {offsets = [0, 0], sizes = [2, 128], strides = [1, 1]} : vector<2x192xf32> to vector<2x128xf32>
    %135 = arith.addf %133, %134 : vector<2x128xf32>
    %136 = arith.negf %135 : vector<2x128xf32>
    %137 = math.exp %136 : vector<2x128xf32>
    %cst_29 = arith.constant 1.000000e+00 : f32
    %138 = vector.broadcast %cst_29 : f32 to vector<2x128xf32>
    %139 = arith.addf %138, %137 : vector<2x128xf32>
    %140 = arith.divf %138, %139 : vector<2x128xf32>
    %141 = vector.extract_strided_slice %140 {offsets = [0, 0], sizes = [2, 64], strides = [1, 1]} : vector<2x128xf32> to vector<2x64xf32>
    %142 = vector.extract_strided_slice %140 {offsets = [0, 64], sizes = [2, 64], strides = [1, 1]} : vector<2x128xf32> to vector<2x64xf32>
    %143 = vector.extract_strided_slice %130 {offsets = [0, 128], sizes = [2, 64], strides = [1, 1]} : vector<2x192xf32> to vector<2x64xf32>
    %144 = vector.extract_strided_slice %132 {offsets = [0, 128], sizes = [2, 64], strides = [1, 1]} : vector<2x192xf32> to vector<2x64xf32>
    %145 = arith.mulf %141, %144 : vector<2x64xf32>
    %146 = arith.addf %143, %145 : vector<2x64xf32>
    %147 = math.tanh %146 : vector<2x64xf32>
    %cst_30 = arith.constant 1.000000e+00 : f32
    %148 = vector.broadcast %cst_30 : f32 to vector<2x64xf32>
    %149 = arith.subf %148, %142 : vector<2x64xf32>
    %150 = arith.mulf %149, %147 : vector<2x64xf32>
    %151 = arith.mulf %142, %125 : vector<2x64xf32>
    %152 = arith.addf %150, %151 : vector<2x64xf32>
    %153 = vector.extract_strided_slice %152 {offsets = [0, 0], sizes = [2, 32], strides = [1, 1]} : vector<2x64xf32> to vector<2x32xf32>
    %154 = vector.extract_strided_slice %152 {offsets = [0, 32], sizes = [2, 32], strides = [1, 1]} : vector<2x64xf32> to vector<2x32xf32>
    %155 = vector.extract_strided_slice %12 {offsets = [10, 0], sizes = [2, 192], strides = [1, 1]} : vector<16x192xf32> to vector<2x192xf32>
    %156 = vector.extract_strided_slice %14 {offsets = [4, 0], sizes = [2, 192], strides = [1, 1]} : vector<16x192xf32> to vector<2x192xf32>
    %157 = arith.addf %155, %156 : vector<2x192xf32>
    %cst_31 = arith.constant dense<0.000000e+00> : vector<2x192xf32>
    %158 = tpu.matmul %152, %15, %cst_31 {dimension_numbers = #tpu.dot_dimension_numbers<[1], [0], [0], [1], [0, 0, 1, 1], [], []>} : vector<2x64xf32>, vector<64x192xf32>, vector<2x192xf32> -> vector<2x192xf32>
    %159 = arith.addf %158, %18 : vector<2x192xf32>
    %160 = vector.extract_strided_slice %157 {offsets = [0, 0], sizes = [2, 128], strides = [1, 1]} : vector<2x192xf32> to vector<2x128xf32>
    %161 = vector.extract_strided_slice %159 {offsets = [0, 0], sizes = [2, 128], strides = [1, 1]} : vector<2x192xf32> to vector<2x128xf32>
    %162 = arith.addf %160, %161 : vector<2x128xf32>
    %163 = arith.negf %162 : vector<2x128xf32>
    %164 = math.exp %163 : vector<2x128xf32>
    %cst_32 = arith.constant 1.000000e+00 : f32
    %165 = vector.broadcast %cst_32 : f32 to vector<2x128xf32>
    %166 = arith.addf %165, %164 : vector<2x128xf32>
    %167 = arith.divf %165, %166 : vector<2x128xf32>
    %168 = vector.extract_strided_slice %167 {offsets = [0, 0], sizes = [2, 64], strides = [1, 1]} : vector<2x128xf32> to vector<2x64xf32>
    %169 = vector.extract_strided_slice %167 {offsets = [0, 64], sizes = [2, 64], strides = [1, 1]} : vector<2x128xf32> to vector<2x64xf32>
    %170 = vector.extract_strided_slice %157 {offsets = [0, 128], sizes = [2, 64], strides = [1, 1]} : vector<2x192xf32> to vector<2x64xf32>
    %171 = vector.extract_strided_slice %159 {offsets = [0, 128], sizes = [2, 64], strides = [1, 1]} : vector<2x192xf32> to vector<2x64xf32>
    %172 = arith.mulf %168, %171 : vector<2x64xf32>
    %173 = arith.addf %170, %172 : vector<2x64xf32>
    %174 = math.tanh %173 : vector<2x64xf32>
    %cst_33 = arith.constant 1.000000e+00 : f32
    %175 = vector.broadcast %cst_33 : f32 to vector<2x64xf32>
    %176 = arith.subf %175, %169 : vector<2x64xf32>
    %177 = arith.mulf %176, %174 : vector<2x64xf32>
    %178 = arith.mulf %169, %152 : vector<2x64xf32>
    %179 = arith.addf %177, %178 : vector<2x64xf32>
    %180 = vector.extract_strided_slice %179 {offsets = [0, 0], sizes = [2, 32], strides = [1, 1]} : vector<2x64xf32> to vector<2x32xf32>
    %181 = vector.extract_strided_slice %179 {offsets = [0, 32], sizes = [2, 32], strides = [1, 1]} : vector<2x64xf32> to vector<2x32xf32>
    %182 = vector.extract_strided_slice %12 {offsets = [12, 0], sizes = [2, 192], strides = [1, 1]} : vector<16x192xf32> to vector<2x192xf32>
    %183 = vector.extract_strided_slice %14 {offsets = [2, 0], sizes = [2, 192], strides = [1, 1]} : vector<16x192xf32> to vector<2x192xf32>
    %184 = arith.addf %182, %183 : vector<2x192xf32>
    %cst_34 = arith.constant dense<0.000000e+00> : vector<2x192xf32>
    %185 = tpu.matmul %179, %15, %cst_34 {dimension_numbers = #tpu.dot_dimension_numbers<[1], [0], [0], [1], [0, 0, 1, 1], [], []>} : vector<2x64xf32>, vector<64x192xf32>, vector<2x192xf32> -> vector<2x192xf32>
    %186 = arith.addf %185, %18 : vector<2x192xf32>
    %187 = vector.extract_strided_slice %184 {offsets = [0, 0], sizes = [2, 128], strides = [1, 1]} : vector<2x192xf32> to vector<2x128xf32>
    %188 = vector.extract_strided_slice %186 {offsets = [0, 0], sizes = [2, 128], strides = [1, 1]} : vector<2x192xf32> to vector<2x128xf32>
    %189 = arith.addf %187, %188 : vector<2x128xf32>
    %190 = arith.negf %189 : vector<2x128xf32>
    %191 = math.exp %190 : vector<2x128xf32>
    %cst_35 = arith.constant 1.000000e+00 : f32
    %192 = vector.broadcast %cst_35 : f32 to vector<2x128xf32>
    %193 = arith.addf %192, %191 : vector<2x128xf32>
    %194 = arith.divf %192, %193 : vector<2x128xf32>
    %195 = vector.extract_strided_slice %194 {offsets = [0, 0], sizes = [2, 64], strides = [1, 1]} : vector<2x128xf32> to vector<2x64xf32>
    %196 = vector.extract_strided_slice %194 {offsets = [0, 64], sizes = [2, 64], strides = [1, 1]} : vector<2x128xf32> to vector<2x64xf32>
    %197 = vector.extract_strided_slice %184 {offsets = [0, 128], sizes = [2, 64], strides = [1, 1]} : vector<2x192xf32> to vector<2x64xf32>
    %198 = vector.extract_strided_slice %186 {offsets = [0, 128], sizes = [2, 64], strides = [1, 1]} : vector<2x192xf32> to vector<2x64xf32>
    %199 = arith.mulf %195, %198 : vector<2x64xf32>
    %200 = arith.addf %197, %199 : vector<2x64xf32>
    %201 = math.tanh %200 : vector<2x64xf32>
    %cst_36 = arith.constant 1.000000e+00 : f32
    %202 = vector.broadcast %cst_36 : f32 to vector<2x64xf32>
    %203 = arith.subf %202, %196 : vector<2x64xf32>
    %204 = arith.mulf %203, %201 : vector<2x64xf32>
    %205 = arith.mulf %196, %179 : vector<2x64xf32>
    %206 = arith.addf %204, %205 : vector<2x64xf32>
    %207 = vector.extract_strided_slice %206 {offsets = [0, 0], sizes = [2, 32], strides = [1, 1]} : vector<2x64xf32> to vector<2x32xf32>
    %208 = vector.extract_strided_slice %206 {offsets = [0, 32], sizes = [2, 32], strides = [1, 1]} : vector<2x64xf32> to vector<2x32xf32>
    %209 = vector.extract_strided_slice %12 {offsets = [14, 0], sizes = [2, 192], strides = [1, 1]} : vector<16x192xf32> to vector<2x192xf32>
    %210 = vector.extract_strided_slice %14 {offsets = [0, 0], sizes = [2, 192], strides = [1, 1]} : vector<16x192xf32> to vector<2x192xf32>
    %211 = arith.addf %209, %210 : vector<2x192xf32>
    %cst_37 = arith.constant dense<0.000000e+00> : vector<2x192xf32>
    %212 = tpu.matmul %206, %15, %cst_37 {dimension_numbers = #tpu.dot_dimension_numbers<[1], [0], [0], [1], [0, 0, 1, 1], [], []>} : vector<2x64xf32>, vector<64x192xf32>, vector<2x192xf32> -> vector<2x192xf32>
    %213 = arith.addf %212, %18 : vector<2x192xf32>
    %214 = vector.extract_strided_slice %211 {offsets = [0, 0], sizes = [2, 128], strides = [1, 1]} : vector<2x192xf32> to vector<2x128xf32>
    %215 = vector.extract_strided_slice %213 {offsets = [0, 0], sizes = [2, 128], strides = [1, 1]} : vector<2x192xf32> to vector<2x128xf32>
    %216 = arith.addf %214, %215 : vector<2x128xf32>
    %217 = arith.negf %216 : vector<2x128xf32>
    %218 = math.exp %217 : vector<2x128xf32>
    %cst_38 = arith.constant 1.000000e+00 : f32
    %219 = vector.broadcast %cst_38 : f32 to vector<2x128xf32>
    %220 = arith.addf %219, %218 : vector<2x128xf32>
    %221 = arith.divf %219, %220 : vector<2x128xf32>
    %222 = vector.extract_strided_slice %221 {offsets = [0, 0], sizes = [2, 64], strides = [1, 1]} : vector<2x128xf32> to vector<2x64xf32>
    %223 = vector.extract_strided_slice %221 {offsets = [0, 64], sizes = [2, 64], strides = [1, 1]} : vector<2x128xf32> to vector<2x64xf32>
    %224 = vector.extract_strided_slice %211 {offsets = [0, 128], sizes = [2, 64], strides = [1, 1]} : vector<2x192xf32> to vector<2x64xf32>
    %225 = vector.extract_strided_slice %213 {offsets = [0, 128], sizes = [2, 64], strides = [1, 1]} : vector<2x192xf32> to vector<2x64xf32>
    %226 = arith.mulf %222, %225 : vector<2x64xf32>
    %227 = arith.addf %224, %226 : vector<2x64xf32>
    %228 = math.tanh %227 : vector<2x64xf32>
    %cst_39 = arith.constant 1.000000e+00 : f32
    %229 = vector.broadcast %cst_39 : f32 to vector<2x64xf32>
    %230 = arith.subf %229, %223 : vector<2x64xf32>
    %231 = arith.mulf %230, %228 : vector<2x64xf32>
    %232 = arith.mulf %223, %206 : vector<2x64xf32>
    %233 = arith.addf %231, %232 : vector<2x64xf32>
    %234 = vector.extract_strided_slice %233 {offsets = [0, 0], sizes = [2, 32], strides = [1, 1]} : vector<2x64xf32> to vector<2x32xf32>
    %235 = vector.extract_strided_slice %233 {offsets = [0, 32], sizes = [2, 32], strides = [1, 1]} : vector<2x64xf32> to vector<2x32xf32>
    %236 = tpu.concatenate %45, %72, %99, %126, %153, %180, %207, %234 in 0 : vector<2x32xf32>, vector<2x32xf32>, vector<2x32xf32>, vector<2x32xf32>, vector<2x32xf32>, vector<2x32xf32>, vector<2x32xf32>, vector<2x32xf32> -> vector<16x32xf32>
    %237 = tpu.concatenate %235, %208, %181, %154, %127, %100, %73, %46 in 0 : vector<2x32xf32>, vector<2x32xf32>, vector<2x32xf32>, vector<2x32xf32>, vector<2x32xf32>, vector<2x32xf32>, vector<2x32xf32>, vector<2x32xf32> -> vector<16x32xf32>
    %238 = tpu.concatenate %236, %237 in 1 : vector<16x32xf32>, vector<16x32xf32> -> vector<16x64xf32>
    %c0_40 = arith.constant 0 : index
    %c0_41 = arith.constant 0 : index
    %239 = vector.load %arg7[%c0_40, %c0_41] : memref<64x192xf32, #tpu.memory_space<vmem>>, vector<64x192xf32>
    %cst_42 = arith.constant dense<0.000000e+00> : vector<16x192xf32>
    %240 = tpu.matmul %238, %239, %cst_42 {dimension_numbers = #tpu.dot_dimension_numbers<[1], [0], [0], [1], [0, 0, 1, 1], [], []>} : vector<16x64xf32>, vector<64x192xf32>, vector<16x192xf32> -> vector<16x192xf32>
    %c0_43 = arith.constant 0 : index
    %c0_44 = arith.constant 0 : index
    %241 = vector.load %arg9[%c0_43, %c0_44] : memref<1x192xf32, #tpu.memory_space<vmem>>, vector<1x192xf32>
    %242 = vector.broadcast %241 : vector<1x192xf32> to vector<16x192xf32>
    %243 = arith.addf %240, %242 : vector<16x192xf32>
    %c0_45 = arith.constant 0 : index
    %c0_46 = arith.constant 0 : index
    %244 = vector.load %arg8[%c0_45, %c0_46] : memref<64x192xf32, #tpu.memory_space<vmem>>, vector<64x192xf32>
    %cst_47 = arith.constant dense<0.000000e+00> : vector<16x192xf32>
    %245 = tpu.matmul %238, %244, %cst_47 {dimension_numbers = #tpu.dot_dimension_numbers<[1], [0], [0], [1], [0, 0, 1, 1], [], []>} : vector<16x64xf32>, vector<64x192xf32>, vector<16x192xf32> -> vector<16x192xf32>
    %c0_48 = arith.constant 0 : index
    %c0_49 = arith.constant 0 : index
    %246 = vector.load %arg10[%c0_48, %c0_49] : memref<64x192xf32, #tpu.memory_space<vmem>>, vector<64x192xf32>
    %c0_50 = arith.constant 0 : index
    %c0_51 = arith.constant 0 : index
    %247 = vector.load %arg11[%c0_50, %c0_51] : memref<1x192xf32, #tpu.memory_space<vmem>>, vector<1x192xf32>
    %248 = vector.shape_cast %247 : vector<1x192xf32> to vector<1x192xf32>
    %249 = vector.broadcast %248 : vector<1x192xf32> to vector<2x192xf32>
    %cst_52 = arith.constant 0.000000e+00 : f32
    %250 = vector.broadcast %cst_52 : f32 to vector<2x64xf32>
    %251 = vector.extract_strided_slice %243 {offsets = [0, 0], sizes = [2, 192], strides = [1, 1]} : vector<16x192xf32> to vector<2x192xf32>
    %252 = vector.extract_strided_slice %245 {offsets = [14, 0], sizes = [2, 192], strides = [1, 1]} : vector<16x192xf32> to vector<2x192xf32>
    %253 = arith.addf %251, %252 : vector<2x192xf32>
    %cst_53 = arith.constant dense<0.000000e+00> : vector<2x192xf32>
    %254 = tpu.matmul %250, %246, %cst_53 {dimension_numbers = #tpu.dot_dimension_numbers<[1], [0], [0], [1], [0, 0, 1, 1], [], []>} : vector<2x64xf32>, vector<64x192xf32>, vector<2x192xf32> -> vector<2x192xf32>
    %255 = arith.addf %254, %249 : vector<2x192xf32>
    %256 = vector.extract_strided_slice %253 {offsets = [0, 0], sizes = [2, 128], strides = [1, 1]} : vector<2x192xf32> to vector<2x128xf32>
    %257 = vector.extract_strided_slice %255 {offsets = [0, 0], sizes = [2, 128], strides = [1, 1]} : vector<2x192xf32> to vector<2x128xf32>
    %258 = arith.addf %256, %257 : vector<2x128xf32>
    %259 = arith.negf %258 : vector<2x128xf32>
    %260 = math.exp %259 : vector<2x128xf32>
    %cst_54 = arith.constant 1.000000e+00 : f32
    %261 = vector.broadcast %cst_54 : f32 to vector<2x128xf32>
    %262 = arith.addf %261, %260 : vector<2x128xf32>
    %263 = arith.divf %261, %262 : vector<2x128xf32>
    %264 = vector.extract_strided_slice %263 {offsets = [0, 0], sizes = [2, 64], strides = [1, 1]} : vector<2x128xf32> to vector<2x64xf32>
    %265 = vector.extract_strided_slice %263 {offsets = [0, 64], sizes = [2, 64], strides = [1, 1]} : vector<2x128xf32> to vector<2x64xf32>
    %266 = vector.extract_strided_slice %253 {offsets = [0, 128], sizes = [2, 64], strides = [1, 1]} : vector<2x192xf32> to vector<2x64xf32>
    %267 = vector.extract_strided_slice %255 {offsets = [0, 128], sizes = [2, 64], strides = [1, 1]} : vector<2x192xf32> to vector<2x64xf32>
    %268 = arith.mulf %264, %267 : vector<2x64xf32>
    %269 = arith.addf %266, %268 : vector<2x64xf32>
    %270 = math.tanh %269 : vector<2x64xf32>
    %cst_55 = arith.constant 1.000000e+00 : f32
    %271 = vector.broadcast %cst_55 : f32 to vector<2x64xf32>
    %272 = arith.subf %271, %265 : vector<2x64xf32>
    %273 = arith.mulf %272, %270 : vector<2x64xf32>
    %274 = arith.mulf %265, %250 : vector<2x64xf32>
    %275 = arith.addf %273, %274 : vector<2x64xf32>
    %276 = vector.extract_strided_slice %243 {offsets = [2, 0], sizes = [2, 192], strides = [1, 1]} : vector<16x192xf32> to vector<2x192xf32>
    %277 = vector.extract_strided_slice %245 {offsets = [12, 0], sizes = [2, 192], strides = [1, 1]} : vector<16x192xf32> to vector<2x192xf32>
    %278 = arith.addf %276, %277 : vector<2x192xf32>
    %cst_56 = arith.constant dense<0.000000e+00> : vector<2x192xf32>
    %279 = tpu.matmul %275, %246, %cst_56 {dimension_numbers = #tpu.dot_dimension_numbers<[1], [0], [0], [1], [0, 0, 1, 1], [], []>} : vector<2x64xf32>, vector<64x192xf32>, vector<2x192xf32> -> vector<2x192xf32>
    %280 = arith.addf %279, %249 : vector<2x192xf32>
    %281 = vector.extract_strided_slice %278 {offsets = [0, 0], sizes = [2, 128], strides = [1, 1]} : vector<2x192xf32> to vector<2x128xf32>
    %282 = vector.extract_strided_slice %280 {offsets = [0, 0], sizes = [2, 128], strides = [1, 1]} : vector<2x192xf32> to vector<2x128xf32>
    %283 = arith.addf %281, %282 : vector<2x128xf32>
    %284 = arith.negf %283 : vector<2x128xf32>
    %285 = math.exp %284 : vector<2x128xf32>
    %cst_57 = arith.constant 1.000000e+00 : f32
    %286 = vector.broadcast %cst_57 : f32 to vector<2x128xf32>
    %287 = arith.addf %286, %285 : vector<2x128xf32>
    %288 = arith.divf %286, %287 : vector<2x128xf32>
    %289 = vector.extract_strided_slice %288 {offsets = [0, 0], sizes = [2, 64], strides = [1, 1]} : vector<2x128xf32> to vector<2x64xf32>
    %290 = vector.extract_strided_slice %288 {offsets = [0, 64], sizes = [2, 64], strides = [1, 1]} : vector<2x128xf32> to vector<2x64xf32>
    %291 = vector.extract_strided_slice %278 {offsets = [0, 128], sizes = [2, 64], strides = [1, 1]} : vector<2x192xf32> to vector<2x64xf32>
    %292 = vector.extract_strided_slice %280 {offsets = [0, 128], sizes = [2, 64], strides = [1, 1]} : vector<2x192xf32> to vector<2x64xf32>
    %293 = arith.mulf %289, %292 : vector<2x64xf32>
    %294 = arith.addf %291, %293 : vector<2x64xf32>
    %295 = math.tanh %294 : vector<2x64xf32>
    %cst_58 = arith.constant 1.000000e+00 : f32
    %296 = vector.broadcast %cst_58 : f32 to vector<2x64xf32>
    %297 = arith.subf %296, %290 : vector<2x64xf32>
    %298 = arith.mulf %297, %295 : vector<2x64xf32>
    %299 = arith.mulf %290, %275 : vector<2x64xf32>
    %300 = arith.addf %298, %299 : vector<2x64xf32>
    %301 = vector.extract_strided_slice %243 {offsets = [4, 0], sizes = [2, 192], strides = [1, 1]} : vector<16x192xf32> to vector<2x192xf32>
    %302 = vector.extract_strided_slice %245 {offsets = [10, 0], sizes = [2, 192], strides = [1, 1]} : vector<16x192xf32> to vector<2x192xf32>
    %303 = arith.addf %301, %302 : vector<2x192xf32>
    %cst_59 = arith.constant dense<0.000000e+00> : vector<2x192xf32>
    %304 = tpu.matmul %300, %246, %cst_59 {dimension_numbers = #tpu.dot_dimension_numbers<[1], [0], [0], [1], [0, 0, 1, 1], [], []>} : vector<2x64xf32>, vector<64x192xf32>, vector<2x192xf32> -> vector<2x192xf32>
    %305 = arith.addf %304, %249 : vector<2x192xf32>
    %306 = vector.extract_strided_slice %303 {offsets = [0, 0], sizes = [2, 128], strides = [1, 1]} : vector<2x192xf32> to vector<2x128xf32>
    %307 = vector.extract_strided_slice %305 {offsets = [0, 0], sizes = [2, 128], strides = [1, 1]} : vector<2x192xf32> to vector<2x128xf32>
    %308 = arith.addf %306, %307 : vector<2x128xf32>
    %309 = arith.negf %308 : vector<2x128xf32>
    %310 = math.exp %309 : vector<2x128xf32>
    %cst_60 = arith.constant 1.000000e+00 : f32
    %311 = vector.broadcast %cst_60 : f32 to vector<2x128xf32>
    %312 = arith.addf %311, %310 : vector<2x128xf32>
    %313 = arith.divf %311, %312 : vector<2x128xf32>
    %314 = vector.extract_strided_slice %313 {offsets = [0, 0], sizes = [2, 64], strides = [1, 1]} : vector<2x128xf32> to vector<2x64xf32>
    %315 = vector.extract_strided_slice %313 {offsets = [0, 64], sizes = [2, 64], strides = [1, 1]} : vector<2x128xf32> to vector<2x64xf32>
    %316 = vector.extract_strided_slice %303 {offsets = [0, 128], sizes = [2, 64], strides = [1, 1]} : vector<2x192xf32> to vector<2x64xf32>
    %317 = vector.extract_strided_slice %305 {offsets = [0, 128], sizes = [2, 64], strides = [1, 1]} : vector<2x192xf32> to vector<2x64xf32>
    %318 = arith.mulf %314, %317 : vector<2x64xf32>
    %319 = arith.addf %316, %318 : vector<2x64xf32>
    %320 = math.tanh %319 : vector<2x64xf32>
    %cst_61 = arith.constant 1.000000e+00 : f32
    %321 = vector.broadcast %cst_61 : f32 to vector<2x64xf32>
    %322 = arith.subf %321, %315 : vector<2x64xf32>
    %323 = arith.mulf %322, %320 : vector<2x64xf32>
    %324 = arith.mulf %315, %300 : vector<2x64xf32>
    %325 = arith.addf %323, %324 : vector<2x64xf32>
    %326 = vector.extract_strided_slice %243 {offsets = [6, 0], sizes = [2, 192], strides = [1, 1]} : vector<16x192xf32> to vector<2x192xf32>
    %327 = vector.extract_strided_slice %245 {offsets = [8, 0], sizes = [2, 192], strides = [1, 1]} : vector<16x192xf32> to vector<2x192xf32>
    %328 = arith.addf %326, %327 : vector<2x192xf32>
    %cst_62 = arith.constant dense<0.000000e+00> : vector<2x192xf32>
    %329 = tpu.matmul %325, %246, %cst_62 {dimension_numbers = #tpu.dot_dimension_numbers<[1], [0], [0], [1], [0, 0, 1, 1], [], []>} : vector<2x64xf32>, vector<64x192xf32>, vector<2x192xf32> -> vector<2x192xf32>
    %330 = arith.addf %329, %249 : vector<2x192xf32>
    %331 = vector.extract_strided_slice %328 {offsets = [0, 0], sizes = [2, 128], strides = [1, 1]} : vector<2x192xf32> to vector<2x128xf32>
    %332 = vector.extract_strided_slice %330 {offsets = [0, 0], sizes = [2, 128], strides = [1, 1]} : vector<2x192xf32> to vector<2x128xf32>
    %333 = arith.addf %331, %332 : vector<2x128xf32>
    %334 = arith.negf %333 : vector<2x128xf32>
    %335 = math.exp %334 : vector<2x128xf32>
    %cst_63 = arith.constant 1.000000e+00 : f32
    %336 = vector.broadcast %cst_63 : f32 to vector<2x128xf32>
    %337 = arith.addf %336, %335 : vector<2x128xf32>
    %338 = arith.divf %336, %337 : vector<2x128xf32>
    %339 = vector.extract_strided_slice %338 {offsets = [0, 0], sizes = [2, 64], strides = [1, 1]} : vector<2x128xf32> to vector<2x64xf32>
    %340 = vector.extract_strided_slice %338 {offsets = [0, 64], sizes = [2, 64], strides = [1, 1]} : vector<2x128xf32> to vector<2x64xf32>
    %341 = vector.extract_strided_slice %328 {offsets = [0, 128], sizes = [2, 64], strides = [1, 1]} : vector<2x192xf32> to vector<2x64xf32>
    %342 = vector.extract_strided_slice %330 {offsets = [0, 128], sizes = [2, 64], strides = [1, 1]} : vector<2x192xf32> to vector<2x64xf32>
    %343 = arith.mulf %339, %342 : vector<2x64xf32>
    %344 = arith.addf %341, %343 : vector<2x64xf32>
    %345 = math.tanh %344 : vector<2x64xf32>
    %cst_64 = arith.constant 1.000000e+00 : f32
    %346 = vector.broadcast %cst_64 : f32 to vector<2x64xf32>
    %347 = arith.subf %346, %340 : vector<2x64xf32>
    %348 = arith.mulf %347, %345 : vector<2x64xf32>
    %349 = arith.mulf %340, %325 : vector<2x64xf32>
    %350 = arith.addf %348, %349 : vector<2x64xf32>
    %351 = vector.extract_strided_slice %243 {offsets = [8, 0], sizes = [2, 192], strides = [1, 1]} : vector<16x192xf32> to vector<2x192xf32>
    %352 = vector.extract_strided_slice %245 {offsets = [6, 0], sizes = [2, 192], strides = [1, 1]} : vector<16x192xf32> to vector<2x192xf32>
    %353 = arith.addf %351, %352 : vector<2x192xf32>
    %cst_65 = arith.constant dense<0.000000e+00> : vector<2x192xf32>
    %354 = tpu.matmul %350, %246, %cst_65 {dimension_numbers = #tpu.dot_dimension_numbers<[1], [0], [0], [1], [0, 0, 1, 1], [], []>} : vector<2x64xf32>, vector<64x192xf32>, vector<2x192xf32> -> vector<2x192xf32>
    %355 = arith.addf %354, %249 : vector<2x192xf32>
    %356 = vector.extract_strided_slice %353 {offsets = [0, 0], sizes = [2, 128], strides = [1, 1]} : vector<2x192xf32> to vector<2x128xf32>
    %357 = vector.extract_strided_slice %355 {offsets = [0, 0], sizes = [2, 128], strides = [1, 1]} : vector<2x192xf32> to vector<2x128xf32>
    %358 = arith.addf %356, %357 : vector<2x128xf32>
    %359 = arith.negf %358 : vector<2x128xf32>
    %360 = math.exp %359 : vector<2x128xf32>
    %cst_66 = arith.constant 1.000000e+00 : f32
    %361 = vector.broadcast %cst_66 : f32 to vector<2x128xf32>
    %362 = arith.addf %361, %360 : vector<2x128xf32>
    %363 = arith.divf %361, %362 : vector<2x128xf32>
    %364 = vector.extract_strided_slice %363 {offsets = [0, 0], sizes = [2, 64], strides = [1, 1]} : vector<2x128xf32> to vector<2x64xf32>
    %365 = vector.extract_strided_slice %363 {offsets = [0, 64], sizes = [2, 64], strides = [1, 1]} : vector<2x128xf32> to vector<2x64xf32>
    %366 = vector.extract_strided_slice %353 {offsets = [0, 128], sizes = [2, 64], strides = [1, 1]} : vector<2x192xf32> to vector<2x64xf32>
    %367 = vector.extract_strided_slice %355 {offsets = [0, 128], sizes = [2, 64], strides = [1, 1]} : vector<2x192xf32> to vector<2x64xf32>
    %368 = arith.mulf %364, %367 : vector<2x64xf32>
    %369 = arith.addf %366, %368 : vector<2x64xf32>
    %370 = math.tanh %369 : vector<2x64xf32>
    %cst_67 = arith.constant 1.000000e+00 : f32
    %371 = vector.broadcast %cst_67 : f32 to vector<2x64xf32>
    %372 = arith.subf %371, %365 : vector<2x64xf32>
    %373 = arith.mulf %372, %370 : vector<2x64xf32>
    %374 = arith.mulf %365, %350 : vector<2x64xf32>
    %375 = arith.addf %373, %374 : vector<2x64xf32>
    %376 = vector.extract_strided_slice %243 {offsets = [10, 0], sizes = [2, 192], strides = [1, 1]} : vector<16x192xf32> to vector<2x192xf32>
    %377 = vector.extract_strided_slice %245 {offsets = [4, 0], sizes = [2, 192], strides = [1, 1]} : vector<16x192xf32> to vector<2x192xf32>
    %378 = arith.addf %376, %377 : vector<2x192xf32>
    %cst_68 = arith.constant dense<0.000000e+00> : vector<2x192xf32>
    %379 = tpu.matmul %375, %246, %cst_68 {dimension_numbers = #tpu.dot_dimension_numbers<[1], [0], [0], [1], [0, 0, 1, 1], [], []>} : vector<2x64xf32>, vector<64x192xf32>, vector<2x192xf32> -> vector<2x192xf32>
    %380 = arith.addf %379, %249 : vector<2x192xf32>
    %381 = vector.extract_strided_slice %378 {offsets = [0, 0], sizes = [2, 128], strides = [1, 1]} : vector<2x192xf32> to vector<2x128xf32>
    %382 = vector.extract_strided_slice %380 {offsets = [0, 0], sizes = [2, 128], strides = [1, 1]} : vector<2x192xf32> to vector<2x128xf32>
    %383 = arith.addf %381, %382 : vector<2x128xf32>
    %384 = arith.negf %383 : vector<2x128xf32>
    %385 = math.exp %384 : vector<2x128xf32>
    %cst_69 = arith.constant 1.000000e+00 : f32
    %386 = vector.broadcast %cst_69 : f32 to vector<2x128xf32>
    %387 = arith.addf %386, %385 : vector<2x128xf32>
    %388 = arith.divf %386, %387 : vector<2x128xf32>
    %389 = vector.extract_strided_slice %388 {offsets = [0, 0], sizes = [2, 64], strides = [1, 1]} : vector<2x128xf32> to vector<2x64xf32>
    %390 = vector.extract_strided_slice %388 {offsets = [0, 64], sizes = [2, 64], strides = [1, 1]} : vector<2x128xf32> to vector<2x64xf32>
    %391 = vector.extract_strided_slice %378 {offsets = [0, 128], sizes = [2, 64], strides = [1, 1]} : vector<2x192xf32> to vector<2x64xf32>
    %392 = vector.extract_strided_slice %380 {offsets = [0, 128], sizes = [2, 64], strides = [1, 1]} : vector<2x192xf32> to vector<2x64xf32>
    %393 = arith.mulf %389, %392 : vector<2x64xf32>
    %394 = arith.addf %391, %393 : vector<2x64xf32>
    %395 = math.tanh %394 : vector<2x64xf32>
    %cst_70 = arith.constant 1.000000e+00 : f32
    %396 = vector.broadcast %cst_70 : f32 to vector<2x64xf32>
    %397 = arith.subf %396, %390 : vector<2x64xf32>
    %398 = arith.mulf %397, %395 : vector<2x64xf32>
    %399 = arith.mulf %390, %375 : vector<2x64xf32>
    %400 = arith.addf %398, %399 : vector<2x64xf32>
    %401 = vector.extract_strided_slice %243 {offsets = [12, 0], sizes = [2, 192], strides = [1, 1]} : vector<16x192xf32> to vector<2x192xf32>
    %402 = vector.extract_strided_slice %245 {offsets = [2, 0], sizes = [2, 192], strides = [1, 1]} : vector<16x192xf32> to vector<2x192xf32>
    %403 = arith.addf %401, %402 : vector<2x192xf32>
    %cst_71 = arith.constant dense<0.000000e+00> : vector<2x192xf32>
    %404 = tpu.matmul %400, %246, %cst_71 {dimension_numbers = #tpu.dot_dimension_numbers<[1], [0], [0], [1], [0, 0, 1, 1], [], []>} : vector<2x64xf32>, vector<64x192xf32>, vector<2x192xf32> -> vector<2x192xf32>
    %405 = arith.addf %404, %249 : vector<2x192xf32>
    %406 = vector.extract_strided_slice %403 {offsets = [0, 0], sizes = [2, 128], strides = [1, 1]} : vector<2x192xf32> to vector<2x128xf32>
    %407 = vector.extract_strided_slice %405 {offsets = [0, 0], sizes = [2, 128], strides = [1, 1]} : vector<2x192xf32> to vector<2x128xf32>
    %408 = arith.addf %406, %407 : vector<2x128xf32>
    %409 = arith.negf %408 : vector<2x128xf32>
    %410 = math.exp %409 : vector<2x128xf32>
    %cst_72 = arith.constant 1.000000e+00 : f32
    %411 = vector.broadcast %cst_72 : f32 to vector<2x128xf32>
    %412 = arith.addf %411, %410 : vector<2x128xf32>
    %413 = arith.divf %411, %412 : vector<2x128xf32>
    %414 = vector.extract_strided_slice %413 {offsets = [0, 0], sizes = [2, 64], strides = [1, 1]} : vector<2x128xf32> to vector<2x64xf32>
    %415 = vector.extract_strided_slice %413 {offsets = [0, 64], sizes = [2, 64], strides = [1, 1]} : vector<2x128xf32> to vector<2x64xf32>
    %416 = vector.extract_strided_slice %403 {offsets = [0, 128], sizes = [2, 64], strides = [1, 1]} : vector<2x192xf32> to vector<2x64xf32>
    %417 = vector.extract_strided_slice %405 {offsets = [0, 128], sizes = [2, 64], strides = [1, 1]} : vector<2x192xf32> to vector<2x64xf32>
    %418 = arith.mulf %414, %417 : vector<2x64xf32>
    %419 = arith.addf %416, %418 : vector<2x64xf32>
    %420 = math.tanh %419 : vector<2x64xf32>
    %cst_73 = arith.constant 1.000000e+00 : f32
    %421 = vector.broadcast %cst_73 : f32 to vector<2x64xf32>
    %422 = arith.subf %421, %415 : vector<2x64xf32>
    %423 = arith.mulf %422, %420 : vector<2x64xf32>
    %424 = arith.mulf %415, %400 : vector<2x64xf32>
    %425 = arith.addf %423, %424 : vector<2x64xf32>
    %426 = vector.extract_strided_slice %243 {offsets = [14, 0], sizes = [2, 192], strides = [1, 1]} : vector<16x192xf32> to vector<2x192xf32>
    %427 = vector.extract_strided_slice %245 {offsets = [0, 0], sizes = [2, 192], strides = [1, 1]} : vector<16x192xf32> to vector<2x192xf32>
    %428 = arith.addf %426, %427 : vector<2x192xf32>
    %cst_74 = arith.constant dense<0.000000e+00> : vector<2x192xf32>
    %429 = tpu.matmul %425, %246, %cst_74 {dimension_numbers = #tpu.dot_dimension_numbers<[1], [0], [0], [1], [0, 0, 1, 1], [], []>} : vector<2x64xf32>, vector<64x192xf32>, vector<2x192xf32> -> vector<2x192xf32>
    %430 = arith.addf %429, %249 : vector<2x192xf32>
    %431 = vector.extract_strided_slice %428 {offsets = [0, 0], sizes = [2, 128], strides = [1, 1]} : vector<2x192xf32> to vector<2x128xf32>
    %432 = vector.extract_strided_slice %430 {offsets = [0, 0], sizes = [2, 128], strides = [1, 1]} : vector<2x192xf32> to vector<2x128xf32>
    %433 = arith.addf %431, %432 : vector<2x128xf32>
    %434 = arith.negf %433 : vector<2x128xf32>
    %435 = math.exp %434 : vector<2x128xf32>
    %cst_75 = arith.constant 1.000000e+00 : f32
    %436 = vector.broadcast %cst_75 : f32 to vector<2x128xf32>
    %437 = arith.addf %436, %435 : vector<2x128xf32>
    %438 = arith.divf %436, %437 : vector<2x128xf32>
    %439 = vector.extract_strided_slice %438 {offsets = [0, 0], sizes = [2, 64], strides = [1, 1]} : vector<2x128xf32> to vector<2x64xf32>
    %440 = vector.extract_strided_slice %438 {offsets = [0, 64], sizes = [2, 64], strides = [1, 1]} : vector<2x128xf32> to vector<2x64xf32>
    %441 = vector.extract_strided_slice %428 {offsets = [0, 128], sizes = [2, 64], strides = [1, 1]} : vector<2x192xf32> to vector<2x64xf32>
    %442 = vector.extract_strided_slice %430 {offsets = [0, 128], sizes = [2, 64], strides = [1, 1]} : vector<2x192xf32> to vector<2x64xf32>
    %443 = arith.mulf %439, %442 : vector<2x64xf32>
    %444 = arith.addf %441, %443 : vector<2x64xf32>
    %445 = math.tanh %444 : vector<2x64xf32>
    %cst_76 = arith.constant 1.000000e+00 : f32
    %446 = vector.broadcast %cst_76 : f32 to vector<2x64xf32>
    %447 = arith.subf %446, %440 : vector<2x64xf32>
    %448 = arith.mulf %447, %445 : vector<2x64xf32>
    %449 = arith.mulf %440, %425 : vector<2x64xf32>
    %450 = arith.addf %448, %449 : vector<2x64xf32>
    %451 = tpu.concatenate %233, %450 in 1 : vector<2x64xf32>, vector<2x64xf32> -> vector<2x128xf32>
    %c0_77 = arith.constant 0 : index
    %c0_78 = arith.constant 0 : index
    %452 = vector.load %arg12[%c0_77, %c0_78] : memref<128x192xf32, #tpu.memory_space<vmem>>, vector<128x192xf32>
    %cst_79 = arith.constant dense<0.000000e+00> : vector<2x192xf32>
    %453 = tpu.matmul %451, %452, %cst_79 {dimension_numbers = #tpu.dot_dimension_numbers<[1], [0], [0], [1], [0, 0, 1, 1], [], []>} : vector<2x128xf32>, vector<128x192xf32>, vector<2x192xf32> -> vector<2x192xf32>
    %c0_80 = arith.constant 0 : index
    %c0_81 = arith.constant 0 : index
    %454 = vector.load %arg13[%c0_80, %c0_81] : memref<128x192xf32, #tpu.memory_space<vmem>>, vector<128x192xf32>
    %cst_82 = arith.constant dense<0.000000e+00> : vector<2x192xf32>
    %455 = tpu.matmul %451, %454, %cst_82 {dimension_numbers = #tpu.dot_dimension_numbers<[1], [0], [0], [1], [0, 0, 1, 1], [], []>} : vector<2x128xf32>, vector<128x192xf32>, vector<2x192xf32> -> vector<2x192xf32>
    %456 = arith.addf %453, %455 : vector<2x192xf32>
    %c0_83 = arith.constant 0 : index
    %c0_84 = arith.constant 0 : index
    %457 = vector.load %arg14[%c0_83, %c0_84] : memref<1x192xf32, #tpu.memory_space<vmem>>, vector<1x192xf32>
    %458 = vector.broadcast %457 : vector<1x192xf32> to vector<2x192xf32>
    %459 = arith.addf %456, %458 : vector<2x192xf32>
    %c0_85 = arith.constant 0 : index
    %c0_86 = arith.constant 0 : index
    %460 = vector.load %arg15[%c0_85, %c0_86] : memref<64x192xf32, #tpu.memory_space<vmem>>, vector<64x192xf32>
    %c0_87 = arith.constant 0 : index
    %c0_88 = arith.constant 0 : index
    %461 = vector.load %arg16[%c0_87, %c0_88] : memref<1x192xf32, #tpu.memory_space<vmem>>, vector<1x192xf32>
    %462 = vector.shape_cast %461 : vector<1x192xf32> to vector<1x192xf32>
    %463 = vector.broadcast %462 : vector<1x192xf32> to vector<2x192xf32>
    %cst_89 = arith.constant 0.000000e+00 : f32
    %464 = vector.broadcast %cst_89 : f32 to vector<2x64xf32>
    %cst_90 = arith.constant dense<0.000000e+00> : vector<2x192xf32>
    %465 = tpu.matmul %464, %460, %cst_90 {dimension_numbers = #tpu.dot_dimension_numbers<[1], [0], [0], [1], [0, 0, 1, 1], [], []>} : vector<2x64xf32>, vector<64x192xf32>, vector<2x192xf32> -> vector<2x192xf32>
    %466 = arith.addf %465, %463 : vector<2x192xf32>
    %467 = vector.extract_strided_slice %459 {offsets = [0, 0], sizes = [2, 128], strides = [1, 1]} : vector<2x192xf32> to vector<2x128xf32>
    %468 = vector.extract_strided_slice %466 {offsets = [0, 0], sizes = [2, 128], strides = [1, 1]} : vector<2x192xf32> to vector<2x128xf32>
    %469 = arith.addf %467, %468 : vector<2x128xf32>
    %470 = arith.negf %469 : vector<2x128xf32>
    %471 = math.exp %470 : vector<2x128xf32>
    %cst_91 = arith.constant 1.000000e+00 : f32
    %472 = vector.broadcast %cst_91 : f32 to vector<2x128xf32>
    %473 = arith.addf %472, %471 : vector<2x128xf32>
    %474 = arith.divf %472, %473 : vector<2x128xf32>
    %475 = vector.extract_strided_slice %474 {offsets = [0, 0], sizes = [2, 64], strides = [1, 1]} : vector<2x128xf32> to vector<2x64xf32>
    %476 = vector.extract_strided_slice %474 {offsets = [0, 64], sizes = [2, 64], strides = [1, 1]} : vector<2x128xf32> to vector<2x64xf32>
    %477 = vector.extract_strided_slice %459 {offsets = [0, 128], sizes = [2, 64], strides = [1, 1]} : vector<2x192xf32> to vector<2x64xf32>
    %478 = vector.extract_strided_slice %466 {offsets = [0, 128], sizes = [2, 64], strides = [1, 1]} : vector<2x192xf32> to vector<2x64xf32>
    %479 = arith.mulf %475, %478 : vector<2x64xf32>
    %480 = arith.addf %477, %479 : vector<2x64xf32>
    %481 = math.tanh %480 : vector<2x64xf32>
    %cst_92 = arith.constant 1.000000e+00 : f32
    %482 = vector.broadcast %cst_92 : f32 to vector<2x64xf32>
    %483 = arith.subf %482, %476 : vector<2x64xf32>
    %484 = arith.mulf %483, %481 : vector<2x64xf32>
    %485 = arith.mulf %476, %464 : vector<2x64xf32>
    %486 = arith.addf %484, %485 : vector<2x64xf32>
    %487 = vector.extract_strided_slice %486 {offsets = [0, 0], sizes = [2, 32], strides = [1, 1]} : vector<2x64xf32> to vector<2x32xf32>
    %488 = vector.extract_strided_slice %486 {offsets = [0, 32], sizes = [2, 32], strides = [1, 1]} : vector<2x64xf32> to vector<2x32xf32>
    %cst_93 = arith.constant dense<0.000000e+00> : vector<2x192xf32>
    %489 = tpu.matmul %486, %460, %cst_93 {dimension_numbers = #tpu.dot_dimension_numbers<[1], [0], [0], [1], [0, 0, 1, 1], [], []>} : vector<2x64xf32>, vector<64x192xf32>, vector<2x192xf32> -> vector<2x192xf32>
    %490 = arith.addf %489, %463 : vector<2x192xf32>
    %491 = vector.extract_strided_slice %459 {offsets = [0, 0], sizes = [2, 128], strides = [1, 1]} : vector<2x192xf32> to vector<2x128xf32>
    %492 = vector.extract_strided_slice %490 {offsets = [0, 0], sizes = [2, 128], strides = [1, 1]} : vector<2x192xf32> to vector<2x128xf32>
    %493 = arith.addf %491, %492 : vector<2x128xf32>
    %494 = arith.negf %493 : vector<2x128xf32>
    %495 = math.exp %494 : vector<2x128xf32>
    %cst_94 = arith.constant 1.000000e+00 : f32
    %496 = vector.broadcast %cst_94 : f32 to vector<2x128xf32>
    %497 = arith.addf %496, %495 : vector<2x128xf32>
    %498 = arith.divf %496, %497 : vector<2x128xf32>
    %499 = vector.extract_strided_slice %498 {offsets = [0, 0], sizes = [2, 64], strides = [1, 1]} : vector<2x128xf32> to vector<2x64xf32>
    %500 = vector.extract_strided_slice %498 {offsets = [0, 64], sizes = [2, 64], strides = [1, 1]} : vector<2x128xf32> to vector<2x64xf32>
    %501 = vector.extract_strided_slice %459 {offsets = [0, 128], sizes = [2, 64], strides = [1, 1]} : vector<2x192xf32> to vector<2x64xf32>
    %502 = vector.extract_strided_slice %490 {offsets = [0, 128], sizes = [2, 64], strides = [1, 1]} : vector<2x192xf32> to vector<2x64xf32>
    %503 = arith.mulf %499, %502 : vector<2x64xf32>
    %504 = arith.addf %501, %503 : vector<2x64xf32>
    %505 = math.tanh %504 : vector<2x64xf32>
    %cst_95 = arith.constant 1.000000e+00 : f32
    %506 = vector.broadcast %cst_95 : f32 to vector<2x64xf32>
    %507 = arith.subf %506, %500 : vector<2x64xf32>
    %508 = arith.mulf %507, %505 : vector<2x64xf32>
    %509 = arith.mulf %500, %486 : vector<2x64xf32>
    %510 = arith.addf %508, %509 : vector<2x64xf32>
    %511 = vector.extract_strided_slice %510 {offsets = [0, 0], sizes = [2, 32], strides = [1, 1]} : vector<2x64xf32> to vector<2x32xf32>
    %512 = vector.extract_strided_slice %510 {offsets = [0, 32], sizes = [2, 32], strides = [1, 1]} : vector<2x64xf32> to vector<2x32xf32>
    %cst_96 = arith.constant dense<0.000000e+00> : vector<2x192xf32>
    %513 = tpu.matmul %510, %460, %cst_96 {dimension_numbers = #tpu.dot_dimension_numbers<[1], [0], [0], [1], [0, 0, 1, 1], [], []>} : vector<2x64xf32>, vector<64x192xf32>, vector<2x192xf32> -> vector<2x192xf32>
    %514 = arith.addf %513, %463 : vector<2x192xf32>
    %515 = vector.extract_strided_slice %459 {offsets = [0, 0], sizes = [2, 128], strides = [1, 1]} : vector<2x192xf32> to vector<2x128xf32>
    %516 = vector.extract_strided_slice %514 {offsets = [0, 0], sizes = [2, 128], strides = [1, 1]} : vector<2x192xf32> to vector<2x128xf32>
    %517 = arith.addf %515, %516 : vector<2x128xf32>
    %518 = arith.negf %517 : vector<2x128xf32>
    %519 = math.exp %518 : vector<2x128xf32>
    %cst_97 = arith.constant 1.000000e+00 : f32
    %520 = vector.broadcast %cst_97 : f32 to vector<2x128xf32>
    %521 = arith.addf %520, %519 : vector<2x128xf32>
    %522 = arith.divf %520, %521 : vector<2x128xf32>
    %523 = vector.extract_strided_slice %522 {offsets = [0, 0], sizes = [2, 64], strides = [1, 1]} : vector<2x128xf32> to vector<2x64xf32>
    %524 = vector.extract_strided_slice %522 {offsets = [0, 64], sizes = [2, 64], strides = [1, 1]} : vector<2x128xf32> to vector<2x64xf32>
    %525 = vector.extract_strided_slice %459 {offsets = [0, 128], sizes = [2, 64], strides = [1, 1]} : vector<2x192xf32> to vector<2x64xf32>
    %526 = vector.extract_strided_slice %514 {offsets = [0, 128], sizes = [2, 64], strides = [1, 1]} : vector<2x192xf32> to vector<2x64xf32>
    %527 = arith.mulf %523, %526 : vector<2x64xf32>
    %528 = arith.addf %525, %527 : vector<2x64xf32>
    %529 = math.tanh %528 : vector<2x64xf32>
    %cst_98 = arith.constant 1.000000e+00 : f32
    %530 = vector.broadcast %cst_98 : f32 to vector<2x64xf32>
    %531 = arith.subf %530, %524 : vector<2x64xf32>
    %532 = arith.mulf %531, %529 : vector<2x64xf32>
    %533 = arith.mulf %524, %510 : vector<2x64xf32>
    %534 = arith.addf %532, %533 : vector<2x64xf32>
    %535 = vector.extract_strided_slice %534 {offsets = [0, 0], sizes = [2, 32], strides = [1, 1]} : vector<2x64xf32> to vector<2x32xf32>
    %536 = vector.extract_strided_slice %534 {offsets = [0, 32], sizes = [2, 32], strides = [1, 1]} : vector<2x64xf32> to vector<2x32xf32>
    %cst_99 = arith.constant dense<0.000000e+00> : vector<2x192xf32>
    %537 = tpu.matmul %534, %460, %cst_99 {dimension_numbers = #tpu.dot_dimension_numbers<[1], [0], [0], [1], [0, 0, 1, 1], [], []>} : vector<2x64xf32>, vector<64x192xf32>, vector<2x192xf32> -> vector<2x192xf32>
    %538 = arith.addf %537, %463 : vector<2x192xf32>
    %539 = vector.extract_strided_slice %459 {offsets = [0, 0], sizes = [2, 128], strides = [1, 1]} : vector<2x192xf32> to vector<2x128xf32>
    %540 = vector.extract_strided_slice %538 {offsets = [0, 0], sizes = [2, 128], strides = [1, 1]} : vector<2x192xf32> to vector<2x128xf32>
    %541 = arith.addf %539, %540 : vector<2x128xf32>
    %542 = arith.negf %541 : vector<2x128xf32>
    %543 = math.exp %542 : vector<2x128xf32>
    %cst_100 = arith.constant 1.000000e+00 : f32
    %544 = vector.broadcast %cst_100 : f32 to vector<2x128xf32>
    %545 = arith.addf %544, %543 : vector<2x128xf32>
    %546 = arith.divf %544, %545 : vector<2x128xf32>
    %547 = vector.extract_strided_slice %546 {offsets = [0, 0], sizes = [2, 64], strides = [1, 1]} : vector<2x128xf32> to vector<2x64xf32>
    %548 = vector.extract_strided_slice %546 {offsets = [0, 64], sizes = [2, 64], strides = [1, 1]} : vector<2x128xf32> to vector<2x64xf32>
    %549 = vector.extract_strided_slice %459 {offsets = [0, 128], sizes = [2, 64], strides = [1, 1]} : vector<2x192xf32> to vector<2x64xf32>
    %550 = vector.extract_strided_slice %538 {offsets = [0, 128], sizes = [2, 64], strides = [1, 1]} : vector<2x192xf32> to vector<2x64xf32>
    %551 = arith.mulf %547, %550 : vector<2x64xf32>
    %552 = arith.addf %549, %551 : vector<2x64xf32>
    %553 = math.tanh %552 : vector<2x64xf32>
    %cst_101 = arith.constant 1.000000e+00 : f32
    %554 = vector.broadcast %cst_101 : f32 to vector<2x64xf32>
    %555 = arith.subf %554, %548 : vector<2x64xf32>
    %556 = arith.mulf %555, %553 : vector<2x64xf32>
    %557 = arith.mulf %548, %534 : vector<2x64xf32>
    %558 = arith.addf %556, %557 : vector<2x64xf32>
    %559 = vector.extract_strided_slice %558 {offsets = [0, 0], sizes = [2, 32], strides = [1, 1]} : vector<2x64xf32> to vector<2x32xf32>
    %560 = vector.extract_strided_slice %558 {offsets = [0, 32], sizes = [2, 32], strides = [1, 1]} : vector<2x64xf32> to vector<2x32xf32>
    %cst_102 = arith.constant dense<0.000000e+00> : vector<2x192xf32>
    %561 = tpu.matmul %558, %460, %cst_102 {dimension_numbers = #tpu.dot_dimension_numbers<[1], [0], [0], [1], [0, 0, 1, 1], [], []>} : vector<2x64xf32>, vector<64x192xf32>, vector<2x192xf32> -> vector<2x192xf32>
    %562 = arith.addf %561, %463 : vector<2x192xf32>
    %563 = vector.extract_strided_slice %459 {offsets = [0, 0], sizes = [2, 128], strides = [1, 1]} : vector<2x192xf32> to vector<2x128xf32>
    %564 = vector.extract_strided_slice %562 {offsets = [0, 0], sizes = [2, 128], strides = [1, 1]} : vector<2x192xf32> to vector<2x128xf32>
    %565 = arith.addf %563, %564 : vector<2x128xf32>
    %566 = arith.negf %565 : vector<2x128xf32>
    %567 = math.exp %566 : vector<2x128xf32>
    %cst_103 = arith.constant 1.000000e+00 : f32
    %568 = vector.broadcast %cst_103 : f32 to vector<2x128xf32>
    %569 = arith.addf %568, %567 : vector<2x128xf32>
    %570 = arith.divf %568, %569 : vector<2x128xf32>
    %571 = vector.extract_strided_slice %570 {offsets = [0, 0], sizes = [2, 64], strides = [1, 1]} : vector<2x128xf32> to vector<2x64xf32>
    %572 = vector.extract_strided_slice %570 {offsets = [0, 64], sizes = [2, 64], strides = [1, 1]} : vector<2x128xf32> to vector<2x64xf32>
    %573 = vector.extract_strided_slice %459 {offsets = [0, 128], sizes = [2, 64], strides = [1, 1]} : vector<2x192xf32> to vector<2x64xf32>
    %574 = vector.extract_strided_slice %562 {offsets = [0, 128], sizes = [2, 64], strides = [1, 1]} : vector<2x192xf32> to vector<2x64xf32>
    %575 = arith.mulf %571, %574 : vector<2x64xf32>
    %576 = arith.addf %573, %575 : vector<2x64xf32>
    %577 = math.tanh %576 : vector<2x64xf32>
    %cst_104 = arith.constant 1.000000e+00 : f32
    %578 = vector.broadcast %cst_104 : f32 to vector<2x64xf32>
    %579 = arith.subf %578, %572 : vector<2x64xf32>
    %580 = arith.mulf %579, %577 : vector<2x64xf32>
    %581 = arith.mulf %572, %558 : vector<2x64xf32>
    %582 = arith.addf %580, %581 : vector<2x64xf32>
    %583 = vector.extract_strided_slice %582 {offsets = [0, 0], sizes = [2, 32], strides = [1, 1]} : vector<2x64xf32> to vector<2x32xf32>
    %584 = vector.extract_strided_slice %582 {offsets = [0, 32], sizes = [2, 32], strides = [1, 1]} : vector<2x64xf32> to vector<2x32xf32>
    %cst_105 = arith.constant dense<0.000000e+00> : vector<2x192xf32>
    %585 = tpu.matmul %582, %460, %cst_105 {dimension_numbers = #tpu.dot_dimension_numbers<[1], [0], [0], [1], [0, 0, 1, 1], [], []>} : vector<2x64xf32>, vector<64x192xf32>, vector<2x192xf32> -> vector<2x192xf32>
    %586 = arith.addf %585, %463 : vector<2x192xf32>
    %587 = vector.extract_strided_slice %459 {offsets = [0, 0], sizes = [2, 128], strides = [1, 1]} : vector<2x192xf32> to vector<2x128xf32>
    %588 = vector.extract_strided_slice %586 {offsets = [0, 0], sizes = [2, 128], strides = [1, 1]} : vector<2x192xf32> to vector<2x128xf32>
    %589 = arith.addf %587, %588 : vector<2x128xf32>
    %590 = arith.negf %589 : vector<2x128xf32>
    %591 = math.exp %590 : vector<2x128xf32>
    %cst_106 = arith.constant 1.000000e+00 : f32
    %592 = vector.broadcast %cst_106 : f32 to vector<2x128xf32>
    %593 = arith.addf %592, %591 : vector<2x128xf32>
    %594 = arith.divf %592, %593 : vector<2x128xf32>
    %595 = vector.extract_strided_slice %594 {offsets = [0, 0], sizes = [2, 64], strides = [1, 1]} : vector<2x128xf32> to vector<2x64xf32>
    %596 = vector.extract_strided_slice %594 {offsets = [0, 64], sizes = [2, 64], strides = [1, 1]} : vector<2x128xf32> to vector<2x64xf32>
    %597 = vector.extract_strided_slice %459 {offsets = [0, 128], sizes = [2, 64], strides = [1, 1]} : vector<2x192xf32> to vector<2x64xf32>
    %598 = vector.extract_strided_slice %586 {offsets = [0, 128], sizes = [2, 64], strides = [1, 1]} : vector<2x192xf32> to vector<2x64xf32>
    %599 = arith.mulf %595, %598 : vector<2x64xf32>
    %600 = arith.addf %597, %599 : vector<2x64xf32>
    %601 = math.tanh %600 : vector<2x64xf32>
    %cst_107 = arith.constant 1.000000e+00 : f32
    %602 = vector.broadcast %cst_107 : f32 to vector<2x64xf32>
    %603 = arith.subf %602, %596 : vector<2x64xf32>
    %604 = arith.mulf %603, %601 : vector<2x64xf32>
    %605 = arith.mulf %596, %582 : vector<2x64xf32>
    %606 = arith.addf %604, %605 : vector<2x64xf32>
    %607 = vector.extract_strided_slice %606 {offsets = [0, 0], sizes = [2, 32], strides = [1, 1]} : vector<2x64xf32> to vector<2x32xf32>
    %608 = vector.extract_strided_slice %606 {offsets = [0, 32], sizes = [2, 32], strides = [1, 1]} : vector<2x64xf32> to vector<2x32xf32>
    %cst_108 = arith.constant dense<0.000000e+00> : vector<2x192xf32>
    %609 = tpu.matmul %606, %460, %cst_108 {dimension_numbers = #tpu.dot_dimension_numbers<[1], [0], [0], [1], [0, 0, 1, 1], [], []>} : vector<2x64xf32>, vector<64x192xf32>, vector<2x192xf32> -> vector<2x192xf32>
    %610 = arith.addf %609, %463 : vector<2x192xf32>
    %611 = vector.extract_strided_slice %459 {offsets = [0, 0], sizes = [2, 128], strides = [1, 1]} : vector<2x192xf32> to vector<2x128xf32>
    %612 = vector.extract_strided_slice %610 {offsets = [0, 0], sizes = [2, 128], strides = [1, 1]} : vector<2x192xf32> to vector<2x128xf32>
    %613 = arith.addf %611, %612 : vector<2x128xf32>
    %614 = arith.negf %613 : vector<2x128xf32>
    %615 = math.exp %614 : vector<2x128xf32>
    %cst_109 = arith.constant 1.000000e+00 : f32
    %616 = vector.broadcast %cst_109 : f32 to vector<2x128xf32>
    %617 = arith.addf %616, %615 : vector<2x128xf32>
    %618 = arith.divf %616, %617 : vector<2x128xf32>
    %619 = vector.extract_strided_slice %618 {offsets = [0, 0], sizes = [2, 64], strides = [1, 1]} : vector<2x128xf32> to vector<2x64xf32>
    %620 = vector.extract_strided_slice %618 {offsets = [0, 64], sizes = [2, 64], strides = [1, 1]} : vector<2x128xf32> to vector<2x64xf32>
    %621 = vector.extract_strided_slice %459 {offsets = [0, 128], sizes = [2, 64], strides = [1, 1]} : vector<2x192xf32> to vector<2x64xf32>
    %622 = vector.extract_strided_slice %610 {offsets = [0, 128], sizes = [2, 64], strides = [1, 1]} : vector<2x192xf32> to vector<2x64xf32>
    %623 = arith.mulf %619, %622 : vector<2x64xf32>
    %624 = arith.addf %621, %623 : vector<2x64xf32>
    %625 = math.tanh %624 : vector<2x64xf32>
    %cst_110 = arith.constant 1.000000e+00 : f32
    %626 = vector.broadcast %cst_110 : f32 to vector<2x64xf32>
    %627 = arith.subf %626, %620 : vector<2x64xf32>
    %628 = arith.mulf %627, %625 : vector<2x64xf32>
    %629 = arith.mulf %620, %606 : vector<2x64xf32>
    %630 = arith.addf %628, %629 : vector<2x64xf32>
    %631 = vector.extract_strided_slice %630 {offsets = [0, 0], sizes = [2, 32], strides = [1, 1]} : vector<2x64xf32> to vector<2x32xf32>
    %632 = vector.extract_strided_slice %630 {offsets = [0, 32], sizes = [2, 32], strides = [1, 1]} : vector<2x64xf32> to vector<2x32xf32>
    %cst_111 = arith.constant dense<0.000000e+00> : vector<2x192xf32>
    %633 = tpu.matmul %630, %460, %cst_111 {dimension_numbers = #tpu.dot_dimension_numbers<[1], [0], [0], [1], [0, 0, 1, 1], [], []>} : vector<2x64xf32>, vector<64x192xf32>, vector<2x192xf32> -> vector<2x192xf32>
    %634 = arith.addf %633, %463 : vector<2x192xf32>
    %635 = vector.extract_strided_slice %459 {offsets = [0, 0], sizes = [2, 128], strides = [1, 1]} : vector<2x192xf32> to vector<2x128xf32>
    %636 = vector.extract_strided_slice %634 {offsets = [0, 0], sizes = [2, 128], strides = [1, 1]} : vector<2x192xf32> to vector<2x128xf32>
    %637 = arith.addf %635, %636 : vector<2x128xf32>
    %638 = arith.negf %637 : vector<2x128xf32>
    %639 = math.exp %638 : vector<2x128xf32>
    %cst_112 = arith.constant 1.000000e+00 : f32
    %640 = vector.broadcast %cst_112 : f32 to vector<2x128xf32>
    %641 = arith.addf %640, %639 : vector<2x128xf32>
    %642 = arith.divf %640, %641 : vector<2x128xf32>
    %643 = vector.extract_strided_slice %642 {offsets = [0, 0], sizes = [2, 64], strides = [1, 1]} : vector<2x128xf32> to vector<2x64xf32>
    %644 = vector.extract_strided_slice %642 {offsets = [0, 64], sizes = [2, 64], strides = [1, 1]} : vector<2x128xf32> to vector<2x64xf32>
    %645 = vector.extract_strided_slice %459 {offsets = [0, 128], sizes = [2, 64], strides = [1, 1]} : vector<2x192xf32> to vector<2x64xf32>
    %646 = vector.extract_strided_slice %634 {offsets = [0, 128], sizes = [2, 64], strides = [1, 1]} : vector<2x192xf32> to vector<2x64xf32>
    %647 = arith.mulf %643, %646 : vector<2x64xf32>
    %648 = arith.addf %645, %647 : vector<2x64xf32>
    %649 = math.tanh %648 : vector<2x64xf32>
    %cst_113 = arith.constant 1.000000e+00 : f32
    %650 = vector.broadcast %cst_113 : f32 to vector<2x64xf32>
    %651 = arith.subf %650, %644 : vector<2x64xf32>
    %652 = arith.mulf %651, %649 : vector<2x64xf32>
    %653 = arith.mulf %644, %630 : vector<2x64xf32>
    %654 = arith.addf %652, %653 : vector<2x64xf32>
    %655 = vector.extract_strided_slice %654 {offsets = [0, 0], sizes = [2, 32], strides = [1, 1]} : vector<2x64xf32> to vector<2x32xf32>
    %656 = vector.extract_strided_slice %654 {offsets = [0, 32], sizes = [2, 32], strides = [1, 1]} : vector<2x64xf32> to vector<2x32xf32>
    %657 = tpu.concatenate %487, %511, %535, %559, %583, %607, %631, %655 in 0 : vector<2x32xf32>, vector<2x32xf32>, vector<2x32xf32>, vector<2x32xf32>, vector<2x32xf32>, vector<2x32xf32>, vector<2x32xf32>, vector<2x32xf32> -> vector<16x32xf32>
    %658 = tpu.concatenate %656, %632, %608, %584, %560, %536, %512, %488 in 0 : vector<2x32xf32>, vector<2x32xf32>, vector<2x32xf32>, vector<2x32xf32>, vector<2x32xf32>, vector<2x32xf32>, vector<2x32xf32>, vector<2x32xf32> -> vector<16x32xf32>
    %659 = tpu.concatenate %657, %658 in 1 : vector<16x32xf32>, vector<16x32xf32> -> vector<16x64xf32>
    %c0_114 = arith.constant 0 : index
    %c0_115 = arith.constant 0 : index
    %660 = vector.load %arg17[%c0_114, %c0_115] : memref<64x192xf32, #tpu.memory_space<vmem>>, vector<64x192xf32>
    %cst_116 = arith.constant dense<0.000000e+00> : vector<16x192xf32>
    %661 = tpu.matmul %659, %660, %cst_116 {dimension_numbers = #tpu.dot_dimension_numbers<[1], [0], [0], [1], [0, 0, 1, 1], [], []>} : vector<16x64xf32>, vector<64x192xf32>, vector<16x192xf32> -> vector<16x192xf32>
    %c0_117 = arith.constant 0 : index
    %c0_118 = arith.constant 0 : index
    %662 = vector.load %arg19[%c0_117, %c0_118] : memref<1x192xf32, #tpu.memory_space<vmem>>, vector<1x192xf32>
    %663 = vector.broadcast %662 : vector<1x192xf32> to vector<16x192xf32>
    %664 = arith.addf %661, %663 : vector<16x192xf32>
    %c0_119 = arith.constant 0 : index
    %c0_120 = arith.constant 0 : index
    %665 = vector.load %arg18[%c0_119, %c0_120] : memref<64x192xf32, #tpu.memory_space<vmem>>, vector<64x192xf32>
    %cst_121 = arith.constant dense<0.000000e+00> : vector<16x192xf32>
    %666 = tpu.matmul %659, %665, %cst_121 {dimension_numbers = #tpu.dot_dimension_numbers<[1], [0], [0], [1], [0, 0, 1, 1], [], []>} : vector<16x64xf32>, vector<64x192xf32>, vector<16x192xf32> -> vector<16x192xf32>
    %c0_122 = arith.constant 0 : index
    %c0_123 = arith.constant 0 : index
    %667 = vector.load %arg20[%c0_122, %c0_123] : memref<64x192xf32, #tpu.memory_space<vmem>>, vector<64x192xf32>
    %c0_124 = arith.constant 0 : index
    %c0_125 = arith.constant 0 : index
    %668 = vector.load %arg21[%c0_124, %c0_125] : memref<1x192xf32, #tpu.memory_space<vmem>>, vector<1x192xf32>
    %669 = vector.shape_cast %668 : vector<1x192xf32> to vector<1x192xf32>
    %670 = vector.broadcast %669 : vector<1x192xf32> to vector<2x192xf32>
    %cst_126 = arith.constant 0.000000e+00 : f32
    %671 = vector.broadcast %cst_126 : f32 to vector<2x64xf32>
    %672 = vector.extract_strided_slice %664 {offsets = [0, 0], sizes = [2, 192], strides = [1, 1]} : vector<16x192xf32> to vector<2x192xf32>
    %673 = vector.extract_strided_slice %666 {offsets = [14, 0], sizes = [2, 192], strides = [1, 1]} : vector<16x192xf32> to vector<2x192xf32>
    %674 = arith.addf %672, %673 : vector<2x192xf32>
    %cst_127 = arith.constant dense<0.000000e+00> : vector<2x192xf32>
    %675 = tpu.matmul %671, %667, %cst_127 {dimension_numbers = #tpu.dot_dimension_numbers<[1], [0], [0], [1], [0, 0, 1, 1], [], []>} : vector<2x64xf32>, vector<64x192xf32>, vector<2x192xf32> -> vector<2x192xf32>
    %676 = arith.addf %675, %670 : vector<2x192xf32>
    %677 = vector.extract_strided_slice %674 {offsets = [0, 0], sizes = [2, 128], strides = [1, 1]} : vector<2x192xf32> to vector<2x128xf32>
    %678 = vector.extract_strided_slice %676 {offsets = [0, 0], sizes = [2, 128], strides = [1, 1]} : vector<2x192xf32> to vector<2x128xf32>
    %679 = arith.addf %677, %678 : vector<2x128xf32>
    %680 = arith.negf %679 : vector<2x128xf32>
    %681 = math.exp %680 : vector<2x128xf32>
    %cst_128 = arith.constant 1.000000e+00 : f32
    %682 = vector.broadcast %cst_128 : f32 to vector<2x128xf32>
    %683 = arith.addf %682, %681 : vector<2x128xf32>
    %684 = arith.divf %682, %683 : vector<2x128xf32>
    %685 = vector.extract_strided_slice %684 {offsets = [0, 0], sizes = [2, 64], strides = [1, 1]} : vector<2x128xf32> to vector<2x64xf32>
    %686 = vector.extract_strided_slice %684 {offsets = [0, 64], sizes = [2, 64], strides = [1, 1]} : vector<2x128xf32> to vector<2x64xf32>
    %687 = vector.extract_strided_slice %674 {offsets = [0, 128], sizes = [2, 64], strides = [1, 1]} : vector<2x192xf32> to vector<2x64xf32>
    %688 = vector.extract_strided_slice %676 {offsets = [0, 128], sizes = [2, 64], strides = [1, 1]} : vector<2x192xf32> to vector<2x64xf32>
    %689 = arith.mulf %685, %688 : vector<2x64xf32>
    %690 = arith.addf %687, %689 : vector<2x64xf32>
    %691 = math.tanh %690 : vector<2x64xf32>
    %cst_129 = arith.constant 1.000000e+00 : f32
    %692 = vector.broadcast %cst_129 : f32 to vector<2x64xf32>
    %693 = arith.subf %692, %686 : vector<2x64xf32>
    %694 = arith.mulf %693, %691 : vector<2x64xf32>
    %695 = arith.mulf %686, %671 : vector<2x64xf32>
    %696 = arith.addf %694, %695 : vector<2x64xf32>
    %697 = vector.extract_strided_slice %664 {offsets = [2, 0], sizes = [2, 192], strides = [1, 1]} : vector<16x192xf32> to vector<2x192xf32>
    %698 = vector.extract_strided_slice %666 {offsets = [12, 0], sizes = [2, 192], strides = [1, 1]} : vector<16x192xf32> to vector<2x192xf32>
    %699 = arith.addf %697, %698 : vector<2x192xf32>
    %cst_130 = arith.constant dense<0.000000e+00> : vector<2x192xf32>
    %700 = tpu.matmul %696, %667, %cst_130 {dimension_numbers = #tpu.dot_dimension_numbers<[1], [0], [0], [1], [0, 0, 1, 1], [], []>} : vector<2x64xf32>, vector<64x192xf32>, vector<2x192xf32> -> vector<2x192xf32>
    %701 = arith.addf %700, %670 : vector<2x192xf32>
    %702 = vector.extract_strided_slice %699 {offsets = [0, 0], sizes = [2, 128], strides = [1, 1]} : vector<2x192xf32> to vector<2x128xf32>
    %703 = vector.extract_strided_slice %701 {offsets = [0, 0], sizes = [2, 128], strides = [1, 1]} : vector<2x192xf32> to vector<2x128xf32>
    %704 = arith.addf %702, %703 : vector<2x128xf32>
    %705 = arith.negf %704 : vector<2x128xf32>
    %706 = math.exp %705 : vector<2x128xf32>
    %cst_131 = arith.constant 1.000000e+00 : f32
    %707 = vector.broadcast %cst_131 : f32 to vector<2x128xf32>
    %708 = arith.addf %707, %706 : vector<2x128xf32>
    %709 = arith.divf %707, %708 : vector<2x128xf32>
    %710 = vector.extract_strided_slice %709 {offsets = [0, 0], sizes = [2, 64], strides = [1, 1]} : vector<2x128xf32> to vector<2x64xf32>
    %711 = vector.extract_strided_slice %709 {offsets = [0, 64], sizes = [2, 64], strides = [1, 1]} : vector<2x128xf32> to vector<2x64xf32>
    %712 = vector.extract_strided_slice %699 {offsets = [0, 128], sizes = [2, 64], strides = [1, 1]} : vector<2x192xf32> to vector<2x64xf32>
    %713 = vector.extract_strided_slice %701 {offsets = [0, 128], sizes = [2, 64], strides = [1, 1]} : vector<2x192xf32> to vector<2x64xf32>
    %714 = arith.mulf %710, %713 : vector<2x64xf32>
    %715 = arith.addf %712, %714 : vector<2x64xf32>
    %716 = math.tanh %715 : vector<2x64xf32>
    %cst_132 = arith.constant 1.000000e+00 : f32
    %717 = vector.broadcast %cst_132 : f32 to vector<2x64xf32>
    %718 = arith.subf %717, %711 : vector<2x64xf32>
    %719 = arith.mulf %718, %716 : vector<2x64xf32>
    %720 = arith.mulf %711, %696 : vector<2x64xf32>
    %721 = arith.addf %719, %720 : vector<2x64xf32>
    %722 = vector.extract_strided_slice %664 {offsets = [4, 0], sizes = [2, 192], strides = [1, 1]} : vector<16x192xf32> to vector<2x192xf32>
    %723 = vector.extract_strided_slice %666 {offsets = [10, 0], sizes = [2, 192], strides = [1, 1]} : vector<16x192xf32> to vector<2x192xf32>
    %724 = arith.addf %722, %723 : vector<2x192xf32>
    %cst_133 = arith.constant dense<0.000000e+00> : vector<2x192xf32>
    %725 = tpu.matmul %721, %667, %cst_133 {dimension_numbers = #tpu.dot_dimension_numbers<[1], [0], [0], [1], [0, 0, 1, 1], [], []>} : vector<2x64xf32>, vector<64x192xf32>, vector<2x192xf32> -> vector<2x192xf32>
    %726 = arith.addf %725, %670 : vector<2x192xf32>
    %727 = vector.extract_strided_slice %724 {offsets = [0, 0], sizes = [2, 128], strides = [1, 1]} : vector<2x192xf32> to vector<2x128xf32>
    %728 = vector.extract_strided_slice %726 {offsets = [0, 0], sizes = [2, 128], strides = [1, 1]} : vector<2x192xf32> to vector<2x128xf32>
    %729 = arith.addf %727, %728 : vector<2x128xf32>
    %730 = arith.negf %729 : vector<2x128xf32>
    %731 = math.exp %730 : vector<2x128xf32>
    %cst_134 = arith.constant 1.000000e+00 : f32
    %732 = vector.broadcast %cst_134 : f32 to vector<2x128xf32>
    %733 = arith.addf %732, %731 : vector<2x128xf32>
    %734 = arith.divf %732, %733 : vector<2x128xf32>
    %735 = vector.extract_strided_slice %734 {offsets = [0, 0], sizes = [2, 64], strides = [1, 1]} : vector<2x128xf32> to vector<2x64xf32>
    %736 = vector.extract_strided_slice %734 {offsets = [0, 64], sizes = [2, 64], strides = [1, 1]} : vector<2x128xf32> to vector<2x64xf32>
    %737 = vector.extract_strided_slice %724 {offsets = [0, 128], sizes = [2, 64], strides = [1, 1]} : vector<2x192xf32> to vector<2x64xf32>
    %738 = vector.extract_strided_slice %726 {offsets = [0, 128], sizes = [2, 64], strides = [1, 1]} : vector<2x192xf32> to vector<2x64xf32>
    %739 = arith.mulf %735, %738 : vector<2x64xf32>
    %740 = arith.addf %737, %739 : vector<2x64xf32>
    %741 = math.tanh %740 : vector<2x64xf32>
    %cst_135 = arith.constant 1.000000e+00 : f32
    %742 = vector.broadcast %cst_135 : f32 to vector<2x64xf32>
    %743 = arith.subf %742, %736 : vector<2x64xf32>
    %744 = arith.mulf %743, %741 : vector<2x64xf32>
    %745 = arith.mulf %736, %721 : vector<2x64xf32>
    %746 = arith.addf %744, %745 : vector<2x64xf32>
    %747 = vector.extract_strided_slice %664 {offsets = [6, 0], sizes = [2, 192], strides = [1, 1]} : vector<16x192xf32> to vector<2x192xf32>
    %748 = vector.extract_strided_slice %666 {offsets = [8, 0], sizes = [2, 192], strides = [1, 1]} : vector<16x192xf32> to vector<2x192xf32>
    %749 = arith.addf %747, %748 : vector<2x192xf32>
    %cst_136 = arith.constant dense<0.000000e+00> : vector<2x192xf32>
    %750 = tpu.matmul %746, %667, %cst_136 {dimension_numbers = #tpu.dot_dimension_numbers<[1], [0], [0], [1], [0, 0, 1, 1], [], []>} : vector<2x64xf32>, vector<64x192xf32>, vector<2x192xf32> -> vector<2x192xf32>
    %751 = arith.addf %750, %670 : vector<2x192xf32>
    %752 = vector.extract_strided_slice %749 {offsets = [0, 0], sizes = [2, 128], strides = [1, 1]} : vector<2x192xf32> to vector<2x128xf32>
    %753 = vector.extract_strided_slice %751 {offsets = [0, 0], sizes = [2, 128], strides = [1, 1]} : vector<2x192xf32> to vector<2x128xf32>
    %754 = arith.addf %752, %753 : vector<2x128xf32>
    %755 = arith.negf %754 : vector<2x128xf32>
    %756 = math.exp %755 : vector<2x128xf32>
    %cst_137 = arith.constant 1.000000e+00 : f32
    %757 = vector.broadcast %cst_137 : f32 to vector<2x128xf32>
    %758 = arith.addf %757, %756 : vector<2x128xf32>
    %759 = arith.divf %757, %758 : vector<2x128xf32>
    %760 = vector.extract_strided_slice %759 {offsets = [0, 0], sizes = [2, 64], strides = [1, 1]} : vector<2x128xf32> to vector<2x64xf32>
    %761 = vector.extract_strided_slice %759 {offsets = [0, 64], sizes = [2, 64], strides = [1, 1]} : vector<2x128xf32> to vector<2x64xf32>
    %762 = vector.extract_strided_slice %749 {offsets = [0, 128], sizes = [2, 64], strides = [1, 1]} : vector<2x192xf32> to vector<2x64xf32>
    %763 = vector.extract_strided_slice %751 {offsets = [0, 128], sizes = [2, 64], strides = [1, 1]} : vector<2x192xf32> to vector<2x64xf32>
    %764 = arith.mulf %760, %763 : vector<2x64xf32>
    %765 = arith.addf %762, %764 : vector<2x64xf32>
    %766 = math.tanh %765 : vector<2x64xf32>
    %cst_138 = arith.constant 1.000000e+00 : f32
    %767 = vector.broadcast %cst_138 : f32 to vector<2x64xf32>
    %768 = arith.subf %767, %761 : vector<2x64xf32>
    %769 = arith.mulf %768, %766 : vector<2x64xf32>
    %770 = arith.mulf %761, %746 : vector<2x64xf32>
    %771 = arith.addf %769, %770 : vector<2x64xf32>
    %772 = vector.extract_strided_slice %664 {offsets = [8, 0], sizes = [2, 192], strides = [1, 1]} : vector<16x192xf32> to vector<2x192xf32>
    %773 = vector.extract_strided_slice %666 {offsets = [6, 0], sizes = [2, 192], strides = [1, 1]} : vector<16x192xf32> to vector<2x192xf32>
    %774 = arith.addf %772, %773 : vector<2x192xf32>
    %cst_139 = arith.constant dense<0.000000e+00> : vector<2x192xf32>
    %775 = tpu.matmul %771, %667, %cst_139 {dimension_numbers = #tpu.dot_dimension_numbers<[1], [0], [0], [1], [0, 0, 1, 1], [], []>} : vector<2x64xf32>, vector<64x192xf32>, vector<2x192xf32> -> vector<2x192xf32>
    %776 = arith.addf %775, %670 : vector<2x192xf32>
    %777 = vector.extract_strided_slice %774 {offsets = [0, 0], sizes = [2, 128], strides = [1, 1]} : vector<2x192xf32> to vector<2x128xf32>
    %778 = vector.extract_strided_slice %776 {offsets = [0, 0], sizes = [2, 128], strides = [1, 1]} : vector<2x192xf32> to vector<2x128xf32>
    %779 = arith.addf %777, %778 : vector<2x128xf32>
    %780 = arith.negf %779 : vector<2x128xf32>
    %781 = math.exp %780 : vector<2x128xf32>
    %cst_140 = arith.constant 1.000000e+00 : f32
    %782 = vector.broadcast %cst_140 : f32 to vector<2x128xf32>
    %783 = arith.addf %782, %781 : vector<2x128xf32>
    %784 = arith.divf %782, %783 : vector<2x128xf32>
    %785 = vector.extract_strided_slice %784 {offsets = [0, 0], sizes = [2, 64], strides = [1, 1]} : vector<2x128xf32> to vector<2x64xf32>
    %786 = vector.extract_strided_slice %784 {offsets = [0, 64], sizes = [2, 64], strides = [1, 1]} : vector<2x128xf32> to vector<2x64xf32>
    %787 = vector.extract_strided_slice %774 {offsets = [0, 128], sizes = [2, 64], strides = [1, 1]} : vector<2x192xf32> to vector<2x64xf32>
    %788 = vector.extract_strided_slice %776 {offsets = [0, 128], sizes = [2, 64], strides = [1, 1]} : vector<2x192xf32> to vector<2x64xf32>
    %789 = arith.mulf %785, %788 : vector<2x64xf32>
    %790 = arith.addf %787, %789 : vector<2x64xf32>
    %791 = math.tanh %790 : vector<2x64xf32>
    %cst_141 = arith.constant 1.000000e+00 : f32
    %792 = vector.broadcast %cst_141 : f32 to vector<2x64xf32>
    %793 = arith.subf %792, %786 : vector<2x64xf32>
    %794 = arith.mulf %793, %791 : vector<2x64xf32>
    %795 = arith.mulf %786, %771 : vector<2x64xf32>
    %796 = arith.addf %794, %795 : vector<2x64xf32>
    %797 = vector.extract_strided_slice %664 {offsets = [10, 0], sizes = [2, 192], strides = [1, 1]} : vector<16x192xf32> to vector<2x192xf32>
    %798 = vector.extract_strided_slice %666 {offsets = [4, 0], sizes = [2, 192], strides = [1, 1]} : vector<16x192xf32> to vector<2x192xf32>
    %799 = arith.addf %797, %798 : vector<2x192xf32>
    %cst_142 = arith.constant dense<0.000000e+00> : vector<2x192xf32>
    %800 = tpu.matmul %796, %667, %cst_142 {dimension_numbers = #tpu.dot_dimension_numbers<[1], [0], [0], [1], [0, 0, 1, 1], [], []>} : vector<2x64xf32>, vector<64x192xf32>, vector<2x192xf32> -> vector<2x192xf32>
    %801 = arith.addf %800, %670 : vector<2x192xf32>
    %802 = vector.extract_strided_slice %799 {offsets = [0, 0], sizes = [2, 128], strides = [1, 1]} : vector<2x192xf32> to vector<2x128xf32>
    %803 = vector.extract_strided_slice %801 {offsets = [0, 0], sizes = [2, 128], strides = [1, 1]} : vector<2x192xf32> to vector<2x128xf32>
    %804 = arith.addf %802, %803 : vector<2x128xf32>
    %805 = arith.negf %804 : vector<2x128xf32>
    %806 = math.exp %805 : vector<2x128xf32>
    %cst_143 = arith.constant 1.000000e+00 : f32
    %807 = vector.broadcast %cst_143 : f32 to vector<2x128xf32>
    %808 = arith.addf %807, %806 : vector<2x128xf32>
    %809 = arith.divf %807, %808 : vector<2x128xf32>
    %810 = vector.extract_strided_slice %809 {offsets = [0, 0], sizes = [2, 64], strides = [1, 1]} : vector<2x128xf32> to vector<2x64xf32>
    %811 = vector.extract_strided_slice %809 {offsets = [0, 64], sizes = [2, 64], strides = [1, 1]} : vector<2x128xf32> to vector<2x64xf32>
    %812 = vector.extract_strided_slice %799 {offsets = [0, 128], sizes = [2, 64], strides = [1, 1]} : vector<2x192xf32> to vector<2x64xf32>
    %813 = vector.extract_strided_slice %801 {offsets = [0, 128], sizes = [2, 64], strides = [1, 1]} : vector<2x192xf32> to vector<2x64xf32>
    %814 = arith.mulf %810, %813 : vector<2x64xf32>
    %815 = arith.addf %812, %814 : vector<2x64xf32>
    %816 = math.tanh %815 : vector<2x64xf32>
    %cst_144 = arith.constant 1.000000e+00 : f32
    %817 = vector.broadcast %cst_144 : f32 to vector<2x64xf32>
    %818 = arith.subf %817, %811 : vector<2x64xf32>
    %819 = arith.mulf %818, %816 : vector<2x64xf32>
    %820 = arith.mulf %811, %796 : vector<2x64xf32>
    %821 = arith.addf %819, %820 : vector<2x64xf32>
    %822 = vector.extract_strided_slice %664 {offsets = [12, 0], sizes = [2, 192], strides = [1, 1]} : vector<16x192xf32> to vector<2x192xf32>
    %823 = vector.extract_strided_slice %666 {offsets = [2, 0], sizes = [2, 192], strides = [1, 1]} : vector<16x192xf32> to vector<2x192xf32>
    %824 = arith.addf %822, %823 : vector<2x192xf32>
    %cst_145 = arith.constant dense<0.000000e+00> : vector<2x192xf32>
    %825 = tpu.matmul %821, %667, %cst_145 {dimension_numbers = #tpu.dot_dimension_numbers<[1], [0], [0], [1], [0, 0, 1, 1], [], []>} : vector<2x64xf32>, vector<64x192xf32>, vector<2x192xf32> -> vector<2x192xf32>
    %826 = arith.addf %825, %670 : vector<2x192xf32>
    %827 = vector.extract_strided_slice %824 {offsets = [0, 0], sizes = [2, 128], strides = [1, 1]} : vector<2x192xf32> to vector<2x128xf32>
    %828 = vector.extract_strided_slice %826 {offsets = [0, 0], sizes = [2, 128], strides = [1, 1]} : vector<2x192xf32> to vector<2x128xf32>
    %829 = arith.addf %827, %828 : vector<2x128xf32>
    %830 = arith.negf %829 : vector<2x128xf32>
    %831 = math.exp %830 : vector<2x128xf32>
    %cst_146 = arith.constant 1.000000e+00 : f32
    %832 = vector.broadcast %cst_146 : f32 to vector<2x128xf32>
    %833 = arith.addf %832, %831 : vector<2x128xf32>
    %834 = arith.divf %832, %833 : vector<2x128xf32>
    %835 = vector.extract_strided_slice %834 {offsets = [0, 0], sizes = [2, 64], strides = [1, 1]} : vector<2x128xf32> to vector<2x64xf32>
    %836 = vector.extract_strided_slice %834 {offsets = [0, 64], sizes = [2, 64], strides = [1, 1]} : vector<2x128xf32> to vector<2x64xf32>
    %837 = vector.extract_strided_slice %824 {offsets = [0, 128], sizes = [2, 64], strides = [1, 1]} : vector<2x192xf32> to vector<2x64xf32>
    %838 = vector.extract_strided_slice %826 {offsets = [0, 128], sizes = [2, 64], strides = [1, 1]} : vector<2x192xf32> to vector<2x64xf32>
    %839 = arith.mulf %835, %838 : vector<2x64xf32>
    %840 = arith.addf %837, %839 : vector<2x64xf32>
    %841 = math.tanh %840 : vector<2x64xf32>
    %cst_147 = arith.constant 1.000000e+00 : f32
    %842 = vector.broadcast %cst_147 : f32 to vector<2x64xf32>
    %843 = arith.subf %842, %836 : vector<2x64xf32>
    %844 = arith.mulf %843, %841 : vector<2x64xf32>
    %845 = arith.mulf %836, %821 : vector<2x64xf32>
    %846 = arith.addf %844, %845 : vector<2x64xf32>
    %847 = vector.extract_strided_slice %664 {offsets = [14, 0], sizes = [2, 192], strides = [1, 1]} : vector<16x192xf32> to vector<2x192xf32>
    %848 = vector.extract_strided_slice %666 {offsets = [0, 0], sizes = [2, 192], strides = [1, 1]} : vector<16x192xf32> to vector<2x192xf32>
    %849 = arith.addf %847, %848 : vector<2x192xf32>
    %cst_148 = arith.constant dense<0.000000e+00> : vector<2x192xf32>
    %850 = tpu.matmul %846, %667, %cst_148 {dimension_numbers = #tpu.dot_dimension_numbers<[1], [0], [0], [1], [0, 0, 1, 1], [], []>} : vector<2x64xf32>, vector<64x192xf32>, vector<2x192xf32> -> vector<2x192xf32>
    %851 = arith.addf %850, %670 : vector<2x192xf32>
    %852 = vector.extract_strided_slice %849 {offsets = [0, 0], sizes = [2, 128], strides = [1, 1]} : vector<2x192xf32> to vector<2x128xf32>
    %853 = vector.extract_strided_slice %851 {offsets = [0, 0], sizes = [2, 128], strides = [1, 1]} : vector<2x192xf32> to vector<2x128xf32>
    %854 = arith.addf %852, %853 : vector<2x128xf32>
    %855 = arith.negf %854 : vector<2x128xf32>
    %856 = math.exp %855 : vector<2x128xf32>
    %cst_149 = arith.constant 1.000000e+00 : f32
    %857 = vector.broadcast %cst_149 : f32 to vector<2x128xf32>
    %858 = arith.addf %857, %856 : vector<2x128xf32>
    %859 = arith.divf %857, %858 : vector<2x128xf32>
    %860 = vector.extract_strided_slice %859 {offsets = [0, 0], sizes = [2, 64], strides = [1, 1]} : vector<2x128xf32> to vector<2x64xf32>
    %861 = vector.extract_strided_slice %859 {offsets = [0, 64], sizes = [2, 64], strides = [1, 1]} : vector<2x128xf32> to vector<2x64xf32>
    %862 = vector.extract_strided_slice %849 {offsets = [0, 128], sizes = [2, 64], strides = [1, 1]} : vector<2x192xf32> to vector<2x64xf32>
    %863 = vector.extract_strided_slice %851 {offsets = [0, 128], sizes = [2, 64], strides = [1, 1]} : vector<2x192xf32> to vector<2x64xf32>
    %864 = arith.mulf %860, %863 : vector<2x64xf32>
    %865 = arith.addf %862, %864 : vector<2x64xf32>
    %866 = math.tanh %865 : vector<2x64xf32>
    %cst_150 = arith.constant 1.000000e+00 : f32
    %867 = vector.broadcast %cst_150 : f32 to vector<2x64xf32>
    %868 = arith.subf %867, %861 : vector<2x64xf32>
    %869 = arith.mulf %868, %866 : vector<2x64xf32>
    %870 = arith.mulf %861, %846 : vector<2x64xf32>
    %871 = arith.addf %869, %870 : vector<2x64xf32>
    %872 = tpu.concatenate %654, %871 in 1 : vector<2x64xf32>, vector<2x64xf32> -> vector<2x128xf32>
    %c0_151 = arith.constant 0 : index
    %c0_152 = arith.constant 0 : index
    %873 = vector.load %arg22[%c0_151, %c0_152] : memref<128x128xf32, #tpu.memory_space<vmem>>, vector<128x128xf32>
    %cst_153 = arith.constant dense<0.000000e+00> : vector<2x128xf32>
    %874 = tpu.matmul %451, %873, %cst_153 {dimension_numbers = #tpu.dot_dimension_numbers<[1], [0], [0], [1], [0, 0, 1, 1], [], []>} : vector<2x128xf32>, vector<128x128xf32>, vector<2x128xf32> -> vector<2x128xf32>
    %c0_154 = arith.constant 0 : index
    %c0_155 = arith.constant 0 : index
    %875 = vector.load %arg23[%c0_154, %c0_155] : memref<1x128xf32, #tpu.memory_space<vmem>>, vector<1x128xf32>
    %876 = vector.broadcast %875 : vector<1x128xf32> to vector<2x128xf32>
    %877 = arith.addf %874, %876 : vector<2x128xf32>
    %c0_156 = arith.constant 0 : index
    %c0_157 = arith.constant 0 : index
    %878 = vector.load %arg30[%c0_156, %c0_157] : memref<2x128xf32, #tpu.memory_space<vmem>>, vector<2x128xf32>
    tpu.vector_store %arg30[%c0_156, %c0_157], %877 {strides = array<i32>} : memref<2x128xf32, #tpu.memory_space<vmem>>, vector<2x128xf32>,
    %879 = arith.mulf %451, %872 : vector<2x128xf32>
    %880 = arith.subf %451, %872 : vector<2x128xf32>
    %881 = math.absf %880 : vector<2x128xf32>
    %882 = tpu.concatenate %451, %872, %879, %881 in 1 : vector<2x128xf32>, vector<2x128xf32>, vector<2x128xf32>, vector<2x128xf32> -> vector<2x512xf32>
    %c0_158 = arith.constant 0 : index
    %c0_159 = arith.constant 0 : index
    %883 = vector.load %arg24[%c0_158, %c0_159] : memref<512x512xf32, #tpu.memory_space<vmem>>, vector<512x512xf32>
    %cst_160 = arith.constant dense<0.000000e+00> : vector<2x512xf32>
    %884 = tpu.matmul %882, %883, %cst_160 {dimension_numbers = #tpu.dot_dimension_numbers<[1], [0], [0], [1], [0, 0, 1, 1], [], []>} : vector<2x512xf32>, vector<512x512xf32>, vector<2x512xf32> -> vector<2x512xf32>
    %c0_161 = arith.constant 0 : index
    %c0_162 = arith.constant 0 : index
    %885 = vector.load %arg25[%c0_161, %c0_162] : memref<1x512xf32, #tpu.memory_space<vmem>>, vector<1x512xf32>
    %886 = vector.broadcast %885 : vector<1x512xf32> to vector<2x512xf32>
    %887 = arith.addf %884, %886 : vector<2x512xf32>
    %cst_163 = arith.constant 0.000000e+00 : f32
    %888 = vector.broadcast %cst_163 : f32 to vector<2x512xf32>
    %889 = arith.maximumf %887, %888 : vector<2x512xf32>
    %c0_164 = arith.constant 0 : index
    %c0_165 = arith.constant 0 : index
    %890 = vector.load %arg26[%c0_164, %c0_165] : memref<512x512xf32, #tpu.memory_space<vmem>>, vector<512x512xf32>
    %cst_166 = arith.constant dense<0.000000e+00> : vector<2x512xf32>
    %891 = tpu.matmul %889, %890, %cst_166 {dimension_numbers = #tpu.dot_dimension_numbers<[1], [0], [0], [1], [0, 0, 1, 1], [], []>} : vector<2x512xf32>, vector<512x512xf32>, vector<2x512xf32> -> vector<2x512xf32>
    %c0_167 = arith.constant 0 : index
    %c0_168 = arith.constant 0 : index
    %892 = vector.load %arg27[%c0_167, %c0_168] : memref<1x512xf32, #tpu.memory_space<vmem>>, vector<1x512xf32>
    %893 = vector.broadcast %892 : vector<1x512xf32> to vector<2x512xf32>
    %894 = arith.addf %891, %893 : vector<2x512xf32>
    %cst_169 = arith.constant 0.000000e+00 : f32
    %895 = vector.broadcast %cst_169 : f32 to vector<2x512xf32>
    %896 = arith.maximumf %894, %895 : vector<2x512xf32>
    %c0_170 = arith.constant 0 : index
    %c0_171 = arith.constant 0 : index
    %897 = vector.load %arg28[%c0_170, %c0_171] : memref<512x128xf32, #tpu.memory_space<vmem>>, vector<512x128xf32>
    %cst_172 = arith.constant dense<0.000000e+00> : vector<2x128xf32>
    %898 = tpu.matmul %896, %897, %cst_172 {dimension_numbers = #tpu.dot_dimension_numbers<[1], [0], [0], [1], [0, 0, 1, 1], [], []>} : vector<2x512xf32>, vector<512x128xf32>, vector<2x128xf32> -> vector<2x128xf32>
    %c0_173 = arith.constant 0 : index
    %c0_174 = arith.constant 0 : index
    %899 = vector.load %arg29[%c0_173, %c0_174] : memref<1x128xf32, #tpu.memory_space<vmem>>, vector<1x128xf32>
    %900 = vector.broadcast %899 : vector<1x128xf32> to vector<2x128xf32>
    %901 = arith.addf %898, %900 : vector<2x128xf32>
    %c0_175 = arith.constant 0 : index
    %c0_176 = arith.constant 0 : index
    %902 = vector.load %arg31[%c0_175, %c0_176] : memref<2x128xf32, #tpu.memory_space<vmem>>, vector<2x128xf32>
    tpu.vector_store %arg31[%c0_175, %c0_176], %901 {strides = array<i32>} : memref<2x128xf32, #tpu.memory_space<vmem>>, vector<2x128xf32>,
    return
  }
}

</mosaic_0001>

<llo_original>
// kernel: fsnet_forward.1
$region0: #{fsnet_forward.1}
  #allocation0 [shape = 'u32[]', space=smem, size = 0x4, offset = 0x4, fixed_abs, tag = 'smem constant byte address 0x4 - core index']
  #allocation1 [shape = 'u32[144,128]{1,0:T(1,128)}', space=vmem, size = 0x12000, scoped, tag = 'internal scratch']
  %s0 = inlined_call_operand.smem [shape: u32[32], index: -1, kind: input, shape index: {}]
  %s1 = sld [smem:[%s0]]
  %s2 = scalar_lea.smem %s0, 1
  %s3 = sld [smem:[%s2]]
  %s4 = scalar_lea.smem %s0, 2
  %s5 = sld [smem:[%s4]]
  %s6 = scalar_lea.smem %s0, 3
  %s7 = sld [smem:[%s6]]
  %s8 = scalar_lea.smem %s0, 4
  %s9 = sld [smem:[%s8]]
  %s10 = scalar_lea.smem %s0, 5
  %s11 = sld [smem:[%s10]]
  %s12 = scalar_lea.smem %s0, 6
  %s13 = sld [smem:[%s12]]
  %s14 = scalar_lea.smem %s0, 7
  %s15 = sld [smem:[%s14]]
  %s16 = scalar_lea.smem %s0, 8
  %s17 = sld [smem:[%s16]]
  %s18 = scalar_lea.smem %s0, 9
  %s19 = sld [smem:[%s18]]
  %s20 = scalar_lea.smem %s0, 10
  %s21 = sld [smem:[%s20]]
  %s22 = scalar_lea.smem %s0, 11
  %s23 = sld [smem:[%s22]]
  %s24 = scalar_lea.smem %s0, 12
  %s25 = sld [smem:[%s24]]
  %s26 = scalar_lea.smem %s0, 13
  %s27 = sld [smem:[%s26]]
  %s28 = scalar_lea.smem %s0, 14
  %s29 = sld [smem:[%s28]]
  %s30 = scalar_lea.smem %s0, 15
  %s31 = sld [smem:[%s30]]
  %s32 = scalar_lea.smem %s0, 16
  %s33 = sld [smem:[%s32]]
  %s34 = scalar_lea.smem %s0, 17
  %s35 = sld [smem:[%s34]]
  %s36 = scalar_lea.smem %s0, 18
  %s37 = sld [smem:[%s36]]
  %s38 = scalar_lea.smem %s0, 19
  %s39 = sld [smem:[%s38]]
  %s40 = scalar_lea.smem %s0, 20
  %s41 = sld [smem:[%s40]]
  %s42 = scalar_lea.smem %s0, 21
  %s43 = sld [smem:[%s42]]
  %s44 = scalar_lea.smem %s0, 22
  %s45 = sld [smem:[%s44]]
  %s46 = scalar_lea.smem %s0, 23
  %s47 = sld [smem:[%s46]]
  %s48 = scalar_lea.smem %s0, 24
  %s49 = sld [smem:[%s48]]
  %s50 = scalar_lea.smem %s0, 25
  %s51 = sld [smem:[%s50]]
  %s52 = scalar_lea.smem %s0, 26
  %s53 = sld [smem:[%s52]]
  %s54 = scalar_lea.smem %s0, 27
  %s55 = sld [smem:[%s54]]
  %s56 = scalar_lea.smem %s0, 28
  %s57 = sld [smem:[%s56]]
  %s58 = scalar_lea.smem %s0, 29
  %s59 = sld [smem:[%s58]]
  %s60 = scalar_lea.smem %s0, 30
  %s61 = sld [smem:[%s60]]
  %s62 = scalar_lea.smem %s0, 31
  %s63 = sld [smem:[%s62]]
  %64 = xla_tuple %s61, %s63
  %s65 = sld [smem:[#allocation0]]
  $region190: #{fsnet_forward.1} parent=0
    _
  %s67 = ssub.s32 1, %s65
  %s68 = scalar_select 0, %s67, %s65
  $region1: #{fsnet_forward.1} parent=0
    #allocation2 [shape = 'u8[16384]{0}', space=vmem, size = 0x4000, scoped, tag = 'input window, operand 2, single buffered']
    #allocation3 [shape = 's32[1]{0}', space=sflag, size = 0x4, scoped, tag = 'scoped memory for fsnet_forward.1']
    #allocation4 [shape = 's32[1]{0}', space=sflag, size = 0x4, scoped, tag = 'scoped memory for fsnet_forward.1']
    #allocation5 [shape = 'u8[16384]{0}', space=vmem, size = 0x4000, scoped, tag = 'input window, operand 3, single buffered']
    #allocation6 [shape = 's32[1]{0}', space=sflag, size = 0x4, scoped, tag = 'scoped memory for fsnet_forward.1']
    #allocation7 [shape = 'u8[1024]{0}', space=vmem, size = 0x400, scoped, tag = 'input window, operand 14, single buffered']
    #allocation8 [shape = 'u8[65536]{0}', space=vmem, size = 0x10000, scoped, tag = 'input window, operand 15, single buffered']
    #allocation9 [shape = 's32[1]{0}', space=sflag, size = 0x4, scoped, tag = 'scoped memory for fsnet_forward.1']
    #allocation10 [shape = 'u8[1024]{0}', space=vmem, size = 0x400, scoped, tag = 'input window, operand 16, single buffered']
    #allocation11 [shape = 'u8[65536]{0}', space=vmem, size = 0x10000, scoped, tag = 'input window, operand 17, single buffered']
    #allocation12 [shape = 's32[1]{0}', space=sflag, size = 0x4, scoped, tag = 'scoped memory for fsnet_forward.1']
    #allocation13 [shape = 'u8[65536]{0}', space=vmem, size = 0x10000, scoped, tag = 'input window, operand 18, single buffered']
    #allocation14 [shape = 'u8[1024]{0}', space=vmem, size = 0x400, scoped, tag = 'input window, operand 19, single buffered']
    #allocation15 [shape = 's32[1]{0}', space=sflag, size = 0x4, scoped, tag = 'scoped memory for fsnet_forward.1']
    #allocation16 [shape = 'u8[65536]{0}', space=vmem, size = 0x10000, scoped, tag = 'input window, operand 20, single buffered']
    #allocation17 [shape = 'u8[1024]{0}', space=vmem, size = 0x400, scoped, tag = 'input window, operand 21, single buffered']
    #allocation18 [shape = 's32[1]{0}', space=sflag, size = 0x4, scoped, tag = 'scoped memory for fsnet_forward.1']
    #allocation19 [shape = 'u8[65536]{0}', space=vmem, size = 0x10000, scoped, tag = 'input window, operand 22, single buffered']
    #allocation20 [shape = 'u8[1048576]{0}', space=vmem, size = 0x100000, scoped, tag = 'input window, operand 24, single buffered']
    #allocation21 [shape = 's32[1]{0}', space=sflag, size = 0x4, scoped, tag = 'scoped memory for fsnet_forward.1']
    #allocation22 [shape = 'u8[1048576]{0}', space=vmem, size = 0x100000, scoped, tag = 'input window, operand 26, single buffered']
    #allocation23 [shape = 'u8[1024]{0}', space=vmem, size = 0x400, scoped, tag = 'output window, operand 0, single buffered']
    #allocation24 [shape = 'u8[1024]{0}', space=vmem, size = 0x400, scoped, tag = 'output window, operand 1, single buffered']
    #allocation25 [shape = 's32[1]{0}', space=sflag, size = 0x4, scoped, tag = 'scoped memory for fsnet_forward.1']
    %69 = vsyncpa [#allocation3], 0
    %70 = vsyncpa [#allocation6], 0
    %71 = vsyncpa [#allocation9], 0
    %72 = vsyncpa [#allocation12], 0
    %73 = vsyncpa [#allocation15], 0
    %74 = vsyncpa [#allocation18], 0
    %75 = vsyncpa [#allocation21], 0
    %76 = vsyncpa [#allocation4], 0
    %77 = vsyncpa [#allocation25], 0
    // Predicated region
    $region2: #{fsnet_forward.1} parent=1 // pred_check
      _
    $region3: #{fsnet_forward.1} parent=1 // pred_check_branch
      %79 = sbr.rel (0) target = $region5
    $region4: #{fsnet_forward.1} parent=1 // pred_region
      _
    $region5: #{fsnet_forward.1} parent=1 // pred_fallthru
      _
    // Predicated region
    $region6: #{fsnet_forward.1} parent=1 // pred_check
      _
    $region7: #{fsnet_forward.1} parent=1 // pred_check_branch
      %81 = sbr.rel (0) target = $region9
    $region8: #{fsnet_forward.1} parent=1 // pred_region
      _
    $region9: #{fsnet_forward.1} parent=1 // pred_fallthru
      _
    // Predicated region
    $region10: #{fsnet_forward.1} parent=1 // pred_check
      _
    $region11: #{fsnet_forward.1} parent=1 // pred_check_branch
      %83 = sbr.rel (0) target = $region13
    $region12: #{fsnet_forward.1} parent=1 // pred_region
      %s85 = ssub.s32 512, 512
      %86 = vsyncadd [#allocation3], %s85
      %s87 = sshll.u32 [#allocation2], 4
      %s88 = int_to_ptr.vmem [resolvable:$true] %s87
      %93 = dma.hbm_to_vmem [thread:$0]  %s5, 512, %s88, [#allocation3], 256, 256, 16
    $region13: #{fsnet_forward.1} parent=1 // pred_fallthru
      _
    // Predicated region
    $region14: #{fsnet_forward.1} parent=1 // pred_check
      _
    $region15: #{fsnet_forward.1} parent=1 // pred_check_branch
      %95 = sbr.rel (0) target = $region17
    $region16: #{fsnet_forward.1} parent=1 // pred_region
      %s97 = ssub.s32 512, 512
      %98 = vsyncadd [#allocation6], %s97
      %s99 = sshll.u32 [#allocation5], 4
      %s100 = int_to_ptr.vmem [resolvable:$true] %s99
      %105 = dma.hbm_to_vmem [thread:$0]  %s7, 512, %s100, [#allocation6], 256, 256, 16
    $region17: #{fsnet_forward.1} parent=1 // pred_fallthru
      _
    // Predicated region
    $region18: #{fsnet_forward.1} parent=1 // pred_check
      _
    $region19: #{fsnet_forward.1} parent=1 // pred_check_branch
      %107 = sbr.rel (0) target = $region21
    $region20: #{fsnet_forward.1} parent=1 // pred_region
      _
    $region21: #{fsnet_forward.1} parent=1 // pred_fallthru
      _
    // Predicated region
    $region22: #{fsnet_forward.1} parent=1 // pred_check
      _
    $region23: #{fsnet_forward.1} parent=1 // pred_check_branch
      %109 = sbr.rel (0) target = $region25
    $region24: #{fsnet_forward.1} parent=1 // pred_region
      _
    $region25: #{fsnet_forward.1} parent=1 // pred_fallthru
      _
    // Predicated region
    $region26: #{fsnet_forward.1} parent=1 // pred_check
      _
    $region27: #{fsnet_forward.1} parent=1 // pred_check_branch
      %111 = sbr.rel (0) target = $region29
    $region28: #{fsnet_forward.1} parent=1 // pred_region
      _
    $region29: #{fsnet_forward.1} parent=1 // pred_fallthru
      _
    // Predicated region
    $region30: #{fsnet_forward.1} parent=1 // pred_check
      _
    $region31: #{fsnet_forward.1} parent=1 // pred_check_branch
      %113 = sbr.rel (0) target = $region33
    $region32: #{fsnet_forward.1} parent=1 // pred_region
      _
    $region33: #{fsnet_forward.1} parent=1 // pred_fallthru
      _
    // Predicated region
    $region34: #{fsnet_forward.1} parent=1 // pred_check
      _
    $region35: #{fsnet_forward.1} parent=1 // pred_check_branch
      %115 = sbr.rel (0) target = $region37
    $region36: #{fsnet_forward.1} parent=1 // pred_region
      _
    $region37: #{fsnet_forward.1} parent=1 // pred_fallthru
      _
    // Predicated region
    $region38: #{fsnet_forward.1} parent=1 // pred_check
      _
    $region39: #{fsnet_forward.1} parent=1 // pred_check_branch
      %117 = sbr.rel (0) target = $region41
    $region40: #{fsnet_forward.1} parent=1 // pred_region
      _
    $region41: #{fsnet_forward.1} parent=1 // pred_fallthru
      _
    // Predicated region
    $region42: #{fsnet_forward.1} parent=1 // pred_check
      _
    $region43: #{fsnet_forward.1} parent=1 // pred_check_branch
      %119 = sbr.rel (0) target = $region45
    $region44: #{fsnet_forward.1} parent=1 // pred_region
      _
    $region45: #{fsnet_forward.1} parent=1 // pred_fallthru
      _
    // Predicated region
    $region46: #{fsnet_forward.1} parent=1 // pred_check
      _
    $region47: #{fsnet_forward.1} parent=1 // pred_check_branch
      %121 = sbr.rel (0) target = $region49
    $region48: #{fsnet_forward.1} parent=1 // pred_region
      _
    $region49: #{fsnet_forward.1} parent=1 // pred_fallthru
      _
    // Predicated region
    $region50: #{fsnet_forward.1} parent=1 // pred_check
      _
    $region51: #{fsnet_forward.1} parent=1 // pred_check_branch
      %123 = sbr.rel (0) target = $region53
    $region52: #{fsnet_forward.1} parent=1 // pred_region
      _
    $region53: #{fsnet_forward.1} parent=1 // pred_fallthru
      _
    // Predicated region
    $region54: #{fsnet_forward.1} parent=1 // pred_check
      _
    $region55: #{fsnet_forward.1} parent=1 // pred_check_branch
      %125 = sbr.rel (0) target = $region57
    $region56: #{fsnet_forward.1} parent=1 // pred_region
      _
    $region57: #{fsnet_forward.1} parent=1 // pred_fallthru
      _
    // Predicated region
    $region58: #{fsnet_forward.1} parent=1 // pred_check
      _
    $region59: #{fsnet_forward.1} parent=1 // pred_check_branch
      %127 = sbr.rel (0) target = $region61
    $region60: #{fsnet_forward.1} parent=1 // pred_region
      %s129 = ssub.s32 32, 32
      %130 = vsyncadd [#allocation6], %s129
      %s132 = sshll.u32 [#allocation7], 4
      %s133 = int_to_ptr.vmem [resolvable:$true] %s132
      %135 = dma.hbm_to_vmem [thread:$0]  %s29, 32, %s133, [#allocation6]
    $region61: #{fsnet_forward.1} parent=1 // pred_fallthru
      _
    // Predicated region
    $region62: #{fsnet_forward.1} parent=1 // pred_check
      _
    $region63: #{fsnet_forward.1} parent=1 // pred_check_branch
      %137 = sbr.rel (0) target = $region65
    $region64: #{fsnet_forward.1} parent=1 // pred_region
      %s139 = ssub.s32 2048, 2048
      %140 = vsyncadd [#allocation9], %s139
      %s141 = sshll.u32 [#allocation8], 4
      %s142 = int_to_ptr.vmem [resolvable:$true] %s141
      %147 = dma.hbm_to_vmem [thread:$0]  %s31, 2048, %s142, [#allocation9], 256, 256, 16
    $region65: #{fsnet_forward.1} parent=1 // pred_fallthru
      _
    // Predicated region
    $region66: #{fsnet_forward.1} parent=1 // pred_check
      _
    $region67: #{fsnet_forward.1} parent=1 // pred_check_branch
      %149 = sbr.rel (0) target = $region69
    $region68: #{fsnet_forward.1} parent=1 // pred_region
      %s151 = ssub.s32 32, 32
      %152 = vsyncadd [#allocation9], %s151
      %s154 = sshll.u32 [#allocation10], 4
      %s155 = int_to_ptr.vmem [resolvable:$true] %s154
      %157 = dma.hbm_to_vmem [thread:$0]  %s33, 32, %s155, [#allocation9]
    $region69: #{fsnet_forward.1} parent=1 // pred_fallthru
      _
    // Predicated region
    $region70: #{fsnet_forward.1} parent=1 // pred_check
      _
    $region71: #{fsnet_forward.1} parent=1 // pred_check_branch
      %159 = sbr.rel (0) target = $region73
    $region72: #{fsnet_forward.1} parent=1 // pred_region
      %s161 = ssub.s32 2048, 2048
      %162 = vsyncadd [#allocation12], %s161
      %s163 = sshll.u32 [#allocation11], 4
      %s164 = int_to_ptr.vmem [resolvable:$true] %s163
      %169 = dma.hbm_to_vmem [thread:$0]  %s35, 2048, %s164, [#allocation12], 256, 256, 16
    $region73: #{fsnet_forward.1} parent=1 // pred_fallthru
      _
    // Predicated region
    $region74: #{fsnet_forward.1} parent=1 // pred_check
      _
    $region75: #{fsnet_forward.1} parent=1 // pred_check_branch
      %171 = sbr.rel (0) target = $region77
    $region76: #{fsnet_forward.1} parent=1 // pred_region
      %s173 = ssub.s32 2048, 2048
      %174 = vsyncadd [#allocation12], %s173
      %s175 = sshll.u32 [#allocation13], 4
      %s176 = int_to_ptr.vmem [resolvable:$true] %s175
      %181 = dma.hbm_to_vmem [thread:$0]  %s37, 2048, %s176, [#allocation12], 256, 256, 16
    $region77: #{fsnet_forward.1} parent=1 // pred_fallthru
      _
    // Predicated region
    $region78: #{fsnet_forward.1} parent=1 // pred_check
      _
    $region79: #{fsnet_forward.1} parent=1 // pred_check_branch
      %183 = sbr.rel (0) target = $region81
    $region80: #{fsnet_forward.1} parent=1 // pred_region
      %s185 = ssub.s32 32, 32
      %186 = vsyncadd [#allocation15], %s185
      %s188 = sshll.u32 [#allocation14], 4
      %s189 = int_to_ptr.vmem [resolvable:$true] %s188
      %191 = dma.hbm_to_vmem [thread:$0]  %s39, 32, %s189, [#allocation15]
    $region81: #{fsnet_forward.1} parent=1 // pred_fallthru
      _
    // Predicated region
    $region82: #{fsnet_forward.1} parent=1 // pred_check
      _
    $region83: #{fsnet_forward.1} parent=1 // pred_check_branch
      %193 = sbr.rel (0) target = $region85
    $region84: #{fsnet_forward.1} parent=1 // pred_region
      %s195 = ssub.s32 2048, 2048
      %196 = vsyncadd [#allocation15], %s195
      %s197 = sshll.u32 [#allocation16], 4
      %s198 = int_to_ptr.vmem [resolvable:$true] %s197
      %203 = dma.hbm_to_vmem [thread:$0]  %s41, 2048, %s198, [#allocation15], 256, 256, 16
    $region85: #{fsnet_forward.1} parent=1 // pred_fallthru
      _
    // Predicated region
    $region86: #{fsnet_forward.1} parent=1 // pred_check
      _
    $region87: #{fsnet_forward.1} parent=1 // pred_check_branch
      %205 = sbr.rel (0) target = $region89
    $region88: #{fsnet_forward.1} parent=1 // pred_region
      %s207 = ssub.s32 32, 32
      %208 = vsyncadd [#allocation18], %s207
      %s210 = sshll.u32 [#allocation17], 4
      %s211 = int_to_ptr.vmem [resolvable:$true] %s210
      %213 = dma.hbm_to_vmem [thread:$0]  %s43, 32, %s211, [#allocation18]
    $region89: #{fsnet_forward.1} parent=1 // pred_fallthru
      _
    // Predicated region
    $region90: #{fsnet_forward.1} parent=1 // pred_check
      _
    $region91: #{fsnet_forward.1} parent=1 // pred_check_branch
      %215 = sbr.rel (0) target = $region93
    $region92: #{fsnet_forward.1} parent=1 // pred_region
      %s217 = ssub.s32 2048, 2048
      %218 = vsyncadd [#allocation18], %s217
      %s219 = sshll.u32 [#allocation19], 4
      %s220 = int_to_ptr.vmem [resolvable:$true] %s219
      %225 = dma.hbm_to_vmem [thread:$0]  %s45, 2048, %s220, [#allocation18], 128, 128, 8
    $region93: #{fsnet_forward.1} parent=1 // pred_fallthru
      _
    // Predicated region
    $region94: #{fsnet_forward.1} parent=1 // pred_check
      _
    $region95: #{fsnet_forward.1} parent=1 // pred_check_branch
      %227 = sbr.rel (0) target = $region97
    $region96: #{fsnet_forward.1} parent=1 // pred_region
      _
    $region97: #{fsnet_forward.1} parent=1 // pred_fallthru
      _
    // Predicated region
    $region98: #{fsnet_forward.1} parent=1 // pred_check
      _
    $region99: #{fsnet_forward.1} parent=1 // pred_check_branch
      %229 = sbr.rel (0) target = $region101
    $region100: #{fsnet_forward.1} parent=1 // pred_region
      %s231 = ssub.s32 32768, 32768
      %232 = vsyncadd [#allocation21], %s231
      %s233 = sshll.u32 [#allocation20], 4
      %s234 = int_to_ptr.vmem [resolvable:$true] %s233
      %239 = dma.hbm_to_vmem [thread:$0]  %s49, 32768, %s234, [#allocation21], 512, 512, 32
    $region101: #{fsnet_forward.1} parent=1 // pred_fallthru
      _
    // Predicated region
    $region102: #{fsnet_forward.1} parent=1 // pred_check
      _
    $region103: #{fsnet_forward.1} parent=1 // pred_check_branch
      %241 = sbr.rel (0) target = $region105
    $region104: #{fsnet_forward.1} parent=1 // pred_region
      _
    $region105: #{fsnet_forward.1} parent=1 // pred_fallthru
      _
    // Predicated region
    $region106: #{fsnet_forward.1} parent=1 // pred_check
      _
    $region107: #{fsnet_forward.1} parent=1 // pred_check_branch
      %243 = sbr.rel (0) target = $region109
    $region108: #{fsnet_forward.1} parent=1 // pred_region
      %s245 = ssub.s32 32768, 32768
      %246 = vsyncadd [#allocation21], %s245
      %s247 = sshll.u32 [#allocation22], 4
      %s248 = int_to_ptr.vmem [resolvable:$true] %s247
      %253 = dma.hbm_to_vmem [thread:$0]  %s53, 32768, %s248, [#allocation21], 512, 512, 32
    $region109: #{fsnet_forward.1} parent=1 // pred_fallthru
      _
    // Predicated region
    $region110: #{fsnet_forward.1} parent=1 // pred_check
      _
    $region111: #{fsnet_forward.1} parent=1 // pred_check_branch
      %255 = sbr.rel (0) target = $region113
    $region112: #{fsnet_forward.1} parent=1 // pred_region
      _
    $region113: #{fsnet_forward.1} parent=1 // pred_fallthru
      _
    // Predicated region
    $region114: #{fsnet_forward.1} parent=1 // pred_check
      _
    $region115: #{fsnet_forward.1} parent=1 // pred_check_branch
      %257 = sbr.rel (0) target = $region117
    $region116: #{fsnet_forward.1} parent=1 // pred_region
      _
    $region117: #{fsnet_forward.1} parent=1 // pred_fallthru
      _
    // Predicated region
    $region118: #{fsnet_forward.1} parent=1 // pred_check
      _
    $region119: #{fsnet_forward.1} parent=1 // pred_check_branch
      %259 = sbr.rel (0) target = $region121
    $region120: #{fsnet_forward.1} parent=1 // pred_region
      _
    $region121: #{fsnet_forward.1} parent=1 // pred_fallthru
      _
    // Predicated region
    $region122: #{fsnet_forward.1} parent=1 // pred_check
      _
    $region123: #{fsnet_forward.1} parent=1 // pred_check_branch
      %261 = sbr.rel (0) target = $region125
    $region124: #{fsnet_forward.1} parent=1 // pred_region
      %262 = dma.done [#allocation3], 512
    $region125: #{fsnet_forward.1} parent=1 // pred_fallthru
      _
    // Predicated region
    $region126: #{fsnet_forward.1} parent=1 // pred_check
      _
    $region127: #{fsnet_forward.1} parent=1 // pred_check_branch
      %264 = sbr.rel (0) target = $region129
    $region128: #{fsnet_forward.1} parent=1 // pred_region
      %265 = dma.done [#allocation6], 512
    $region129: #{fsnet_forward.1} parent=1 // pred_fallthru
      _
    // Predicated region
    $region130: #{fsnet_forward.1} parent=1 // pred_check
      _
    $region131: #{fsnet_forward.1} parent=1 // pred_check_branch
      %267 = sbr.rel (0) target = $region133
    $region132: #{fsnet_forward.1} parent=1 // pred_region
      %268 = dma.done [#allocation6], 32
    $region133: #{fsnet_forward.1} parent=1 // pred_fallthru
      _
    // Predicated region
    $region134: #{fsnet_forward.1} parent=1 // pred_check
      _
    $region135: #{fsnet_forward.1} parent=1 // pred_check_branch
      %270 = sbr.rel (0) target = $region137
    $region136: #{fsnet_forward.1} parent=1 // pred_region
      %271 = dma.done [#allocation9], 2048
    $region137: #{fsnet_forward.1} parent=1 // pred_fallthru
      _
    // Predicated region
    $region138: #{fsnet_forward.1} parent=1 // pred_check
      _
    $region139: #{fsnet_forward.1} parent=1 // pred_check_branch
      %273 = sbr.rel (0) target = $region141
    $region140: #{fsnet_forward.1} parent=1 // pred_region
      %274 = dma.done [#allocation9], 32
    $region141: #{fsnet_forward.1} parent=1 // pred_fallthru
      _
    // Predicated region
    $region142: #{fsnet_forward.1} parent=1 // pred_check
      _
    $region143: #{fsnet_forward.1} parent=1 // pred_check_branch
      %276 = sbr.rel (0) target = $region145
    $region144: #{fsnet_forward.1} parent=1 // pred_region
      %277 = dma.done [#allocation12], 2048
    $region145: #{fsnet_forward.1} parent=1 // pred_fallthru
      _
    // Predicated region
    $region146: #{fsnet_forward.1} parent=1 // pred_check
      _
    $region147: #{fsnet_forward.1} parent=1 // pred_check_branch
      %279 = sbr.rel (0) target = $region149
    $region148: #{fsnet_forward.1} parent=1 // pred_region
      %280 = dma.done [#allocation12], 2048
    $region149: #{fsnet_forward.1} parent=1 // pred_fallthru
      _
    // Predicated region
    $region150: #{fsnet_forward.1} parent=1 // pred_check
      _
    $region151: #{fsnet_forward.1} parent=1 // pred_check_branch
      %282 = sbr.rel (0) target = $region153
    $region152: #{fsnet_forward.1} parent=1 // pred_region
      %283 = dma.done [#allocation15], 32
    $region153: #{fsnet_forward.1} parent=1 // pred_fallthru
      _
    // Predicated region
    $region154: #{fsnet_forward.1} parent=1 // pred_check
      _
    $region155: #{fsnet_forward.1} parent=1 // pred_check_branch
      %285 = sbr.rel (0) target = $region157
    $region156: #{fsnet_forward.1} parent=1 // pred_region
      %286 = dma.done [#allocation15], 2048
    $region157: #{fsnet_forward.1} parent=1 // pred_fallthru
      _
    // Predicated region
    $region158: #{fsnet_forward.1} parent=1 // pred_check
      _
    $region159: #{fsnet_forward.1} parent=1 // pred_check_branch
      %288 = sbr.rel (0) target = $region161
    $region160: #{fsnet_forward.1} parent=1 // pred_region
      %289 = dma.done [#allocation18], 32
    $region161: #{fsnet_forward.1} parent=1 // pred_fallthru
      _
    // Predicated region
    $region162: #{fsnet_forward.1} parent=1 // pred_check
      _
    $region163: #{fsnet_forward.1} parent=1 // pred_check_branch
      %291 = sbr.rel (0) target = $region165
    $region164: #{fsnet_forward.1} parent=1 // pred_region
      %292 = dma.done [#allocation18], 2048
    $region165: #{fsnet_forward.1} parent=1 // pred_fallthru
      _
    // Predicated region
    $region166: #{fsnet_forward.1} parent=1 // pred_check
      _
    $region167: #{fsnet_forward.1} parent=1 // pred_check_branch
      %294 = sbr.rel (0) target = $region169
    $region168: #{fsnet_forward.1} parent=1 // pred_region
      %295 = dma.done [#allocation21], 32768
    $region169: #{fsnet_forward.1} parent=1 // pred_fallthru
      _
    // Predicated region
    $region170: #{fsnet_forward.1} parent=1 // pred_check
      _
    $region171: #{fsnet_forward.1} parent=1 // pred_check_branch
      %297 = sbr.rel (0) target = $region173
    $region172: #{fsnet_forward.1} parent=1 // pred_region
      %298 = dma.done [#allocation21], 32768
    $region173: #{fsnet_forward.1} parent=1 // pred_fallthru
      _
    %v299 = vld [vmem:[%s1] sm:$0xff]
    %v300 = vld [vmem:[%s1 + $0x8] sm:$0xff]
    %v301 = vlaneseq
    %v302 = vand.u32 %v301, 127
    %303 = vset.pattern.permute.xlu0 0
    %304 = vperm.xlu0 %303, %v299
    %v305 = vpop.permute.xlu0 %304
    %306 = vset.pattern.permute.xlu0 0
    %307 = vperm.xlu0 %306, %v300
    %v308 = vpop.permute.xlu0 %307
    %vm309 = vcmp.eq.s32.totalorder %v305, %v302
    %vm310 = vcmp.eq.s32.totalorder %v308, %v302
    %v311 = vsel %vm309, 1, 0
    %v312 = vsel %vm310, 1, 0
    %v313 = vcvt.s32.f32 %v311
    %v314 = vcvt.s32.f32 %v312
    %v315 = vld [vmem:[%s3] sm:$0xff]
    %v316 = vld [vmem:[%s3 + $0x8] sm:$0xff]
    %v317 = vld [vmem:[%s3 + $0x10] sm:$0xff]
    %v318 = vld [vmem:[%s3 + $0x18] sm:$0xff]
    %v319 = vld [vmem:[%s3 + $0x20] sm:$0xff]
    %v320 = vld [vmem:[%s3 + $0x28] sm:$0xff]
    %v321 = vld [vmem:[%s3 + $0x30] sm:$0x3]
    %vm322 = vcmask 408576
    %v324 = vsel %vm322, %v313, 0
    %v327 = vsel %vm322, %v314, 0
    %vm329 = vcmask 1041408
    %v331 = vsel %vm329, %v321, 0
    %333 = vmatprep.subr.mxu0 0.0
    %334 = vmatpush1.msra.mxu0 %v315
    %335 = vmatprep.subr.mxu0 0.0
    %336 = vmatpush1.msra.mxu0 %v316
    %337 = vmatprep.subr.mxu0 0.0
    %338 = vmatpush1.msra.mxu0 %v317
    %339 = vmatprep.subr.mxu0 0.0
    %340 = vmatpush1.msra.mxu0 %v318
    %341 = vmatprep.subr.mxu0 0.0
    %342 = vmatpush1.msra.mxu0 %v319
    %343 = vmatprep.subr.mxu0 0.0
    %344 = vmatpush1.msra.mxu0 %v320
    %345 = vmatprep.subr.mxu0 0.0
    %346 = vmatpush1.msra.mxu0 %v331
    %347 = vmatprep.subr.mxu0 0.0
    %348 = vmatpush1.msra.mxu0 0.0
    %349 = vmatprep.subr.mxu0 0.0
    %350 = vmatpush1.msra.mxu0 0.0
    %351 = vmatprep.subr.mxu0 0.0
    %352 = vmatpush1.msra.mxu0 0.0
    %353 = vmatprep.subr.mxu0 0.0
    %354 = vmatpush1.msra.mxu0 0.0
    %355 = vmatprep.subr.mxu0 0.0
    %356 = vmatpush1.msra.mxu0 0.0
    %357 = vmatprep.subr.mxu0 0.0
    %358 = vmatpush1.msra.mxu0 0.0
    %359 = vmatprep.subr.mxu0 0.0
    %360 = vmatpush1.msra.mxu0 0.0
    %361 = vmatprep.subr.mxu0 0.0
    %362 = vmatpush1.msra.mxu0 0.0
    %363 = vmatprep.subr.mxu0 0.0
    %364 = vmatpush1.msra.mxu0 0.0
    %365 = vmatprep.subr.mxu0 0.0
    %366 = vmatpush1.msra.mxu0 0.0
    %367 = vmatprep.subr.mxu0 0.0
    %368 = vmatpush1.msra.mxu0 0.0
    %369 = vmatprep.subr.mxu0 0.0
    %370 = vmatpush1.msra.mxu0 0.0
    %371 = vmatprep.subr.mxu0 0.0
    %372 = vmatpush1.msra.mxu0 0.0
    %373 = vmatprep.subr.mxu0 0.0
    %374 = vmatpush1.msra.mxu0 0.0
    %375 = vmatprep.subr.mxu0 0.0
    %376 = vmatpush1.msra.mxu0 0.0
    %377 = vmatprep.subr.mxu0 0.0
    %378 = vmatpush1.msra.mxu0 0.0
    %379 = vmatprep.subr.mxu0 0.0
    %380 = vmatpush1.msra.mxu0 0.0
    %381 = vmatprep.subr.mxu0 0.0
    %382 = vmatpush1.msra.mxu0 0.0
    %383 = vmatprep.subr.mxu0 0.0
    %384 = vmatpush1.msra.mxu0 0.0
    %385 = vmatprep.subr.mxu0 0.0
    %386 = vmatpush1.msra.mxu0 0.0
    %387 = vmatprep.subr.mxu0 0.0
    %388 = vmatpush1.msra.mxu0 0.0
    %389 = vmatprep.subr.mxu0 0.0
    %390 = vmatpush1.msra.mxu0 0.0
    %391 = vmatprep.subr.mxu0 0.0
    %392 = vmatpush1.msra.mxu0 0.0
    %393 = vmatprep.subr.mxu0 0.0
    %394 = vmatpush1.msra.mxu0 0.0
    %395 = vmatprep.subr.mxu0 0.0
    %396 = vmatpush1.msra.mxu0 0.0
    %397 = vmatprep.mubr.f32.mxu0 0.0
    %398 = vmatmul.mubr.f32.gmra.mrb[0].mxu0 %v324
    %v399 = vpop.f32.mrb[0].mxu0
    %v400 = vadd.f32 0.0, %v399
    %v401 = vpop.f32.mrb[0].mxu0
    %402 = vmatprep.mubr.f32.mxu0 0.0
    %403 = vmatmul.mubr.f32.gmra.mrb[0].mxu0 %v327
    %v404 = vpop.f32.mrb[0].mxu0
    %v405 = vadd.f32 0.0, %v404
    %v406 = vpop.f32.mrb[0].mxu0
    %407 = vdwg.mxu0
    %v408 = vld [vmem:[#allocation2] sm:$0xff]
    %v409 = vld [vmem:[#allocation2 + $0x8] sm:$0xff]
    %v410 = vld [vmem:[#allocation2 + $0x10] sm:$0xff]
    %v411 = vld [vmem:[#allocation2 + $0x18] sm:$0xff]
    %v412 = vld [vmem:[%s9] sm:$0x3]
    %v414 = vlaneseq
    %v415 = vshrl.u32 %v414, 7
    %v416 = vsub.s32 0, %v415
    %v417 = vrot.slane %v412, %v416
    %v418 = vlaneseq
    %v419 = vshrl.u32 %v418, 7
    %v420 = vsub.s32 1, %v419
    %v421 = vrot.slane %v412, %v420
    %vm424 = vcmask 130048
    %v426 = vsel %vm424, %v400, 0
    %v429 = vsel %vm424, %v405, 0
    %431 = vmatprep.subr.mxu0 %v409
    %432 = vmatpush1.msra.mxu0 %v408
    %433 = vmatprep.subr.mxu0 %v411
    %434 = vmatpush1.msra.mxu0 %v410
    %435 = vmatprep.subr.mxu0 0.0
    %436 = vmatpush1.msra.mxu0 0.0
    %437 = vmatprep.subr.mxu0 0.0
    %438 = vmatpush1.msra.mxu0 0.0
    %439 = vmatprep.subr.mxu0 0.0
    %440 = vmatpush1.msra.mxu0 0.0
    %441 = vmatprep.subr.mxu0 0.0
    %442 = vmatpush1.msra.mxu0 0.0
    %443 = vmatprep.subr.mxu0 0.0
    %444 = vmatpush1.msra.mxu0 0.0
    %445 = vmatprep.subr.mxu0 0.0
    %446 = vmatpush1.msra.mxu0 0.0
    %447 = vmatprep.subr.mxu0 0.0
    %448 = vmatpush1.msra.mxu0 0.0
    %449 = vmatprep.subr.mxu0 0.0
    %450 = vmatpush1.msra.mxu0 0.0
    %451 = vmatprep.subr.mxu0 0.0
    %452 = vmatpush1.msra.mxu0 0.0
    %453 = vmatprep.subr.mxu0 0.0
    %454 = vmatpush1.msra.mxu0 0.0
    %455 = vmatprep.subr.mxu0 0.0
    %456 = vmatpush1.msra.mxu0 0.0
    %457 = vmatprep.subr.mxu0 0.0
    %458 = vmatpush1.msra.mxu0 0.0
    %459 = vmatprep.subr.mxu0 0.0
    %460 = vmatpush1.msra.mxu0 0.0
    %461 = vmatprep.subr.mxu0 0.0
    %462 = vmatpush1.msra.mxu0 0.0
    %463 = vmatprep.subr.mxu0 0.0
    %464 = vmatpush1.msra.mxu0 0.0
    %465 = vmatprep.subr.mxu0 0.0
    %466 = vmatpush1.msra.mxu0 0.0
    %467 = vmatprep.subr.mxu0 0.0
    %468 = vmatpush1.msra.mxu0 0.0
    %469 = vmatprep.subr.mxu0 0.0
    %470 = vmatpush1.msra.mxu0 0.0
    %471 = vmatprep.subr.mxu0 0.0
    %472 = vmatpush1.msra.mxu0 0.0
    %473 = vmatprep.subr.mxu0 0.0
    %474 = vmatpush1.msra.mxu0 0.0
    %475 = vmatprep.subr.mxu0 0.0
    %476 = vmatpush1.msra.mxu0 0.0
    %477 = vmatprep.subr.mxu0 0.0
    %478 = vmatpush1.msra.mxu0 0.0
    %479 = vmatprep.subr.mxu0 0.0
    %480 = vmatpush1.msra.mxu0 0.0
    %481 = vmatprep.subr.mxu0 0.0
    %482 = vmatpush1.msra.mxu0 0.0
    %483 = vmatprep.subr.mxu0 0.0
    %484 = vmatpush1.msra.mxu0 0.0
    %485 = vmatprep.subr.mxu0 0.0
    %486 = vmatpush1.msra.mxu0 0.0
    %487 = vmatprep.subr.mxu0 0.0
    %488 = vmatpush1.msra.mxu0 0.0
    %489 = vmatprep.subr.mxu0 0.0
    %490 = vmatpush1.msra.mxu0 0.0
    %491 = vmatprep.subr.mxu0 0.0
    %492 = vmatpush1.msra.mxu0 0.0
    %493 = vmatprep.subr.mxu0 0.0
    %494 = vmatpush1.msra.mxu0 0.0
    %495 = vmatprep.mubr.f32.mxu0 0.0
    %496 = vmatmul.mubr.f32.gmra.mrb[0].mxu0 %v426
    %v497 = vpop.f32.mrb[0].mxu0
    %v498 = vadd.f32 %v417, %v497
    %v499 = vpop.f32.mrb[0].mxu0
    %v500 = vadd.f32 %v421, %v499
    %501 = vmatprep.mubr.f32.mxu0 0.0
    %502 = vmatmul.mubr.f32.gmra.mrb[0].mxu0 %v429
    %v503 = vpop.f32.mrb[0].mxu0
    %v504 = vadd.f32 %v417, %v503
    %v505 = vpop.f32.mrb[0].mxu0
    %v506 = vadd.f32 %v421, %v505
    %507 = vdwg.mxu0
    %v508 = vld [vmem:[#allocation5] sm:$0xff]
    %v509 = vld [vmem:[#allocation5 + $0x8] sm:$0xff]
    %v510 = vld [vmem:[#allocation5 + $0x10] sm:$0xff]
    %v511 = vld [vmem:[#allocation5 + $0x18] sm:$0xff]
    %512 = vmatprep.subr.mxu0 %v509
    %513 = vmatpush1.msra.mxu0 %v508
    %514 = vmatprep.subr.mxu0 %v511
    %515 = vmatpush1.msra.mxu0 %v510
    %516 = vmatprep.subr.mxu0 0.0
    %517 = vmatpush1.msra.mxu0 0.0
    %518 = vmatprep.subr.mxu0 0.0
    %519 = vmatpush1.msra.mxu0 0.0
    %520 = vmatprep.subr.mxu0 0.0
    %521 = vmatpush1.msra.mxu0 0.0
    %522 = vmatprep.subr.mxu0 0.0
    %523 = vmatpush1.msra.mxu0 0.0
    %524 = vmatprep.subr.mxu0 0.0
    %525 = vmatpush1.msra.mxu0 0.0
    %526 = vmatprep.subr.mxu0 0.0
    %527 = vmatpush1.msra.mxu0 0.0
    %528 = vmatprep.subr.mxu0 0.0
    %529 = vmatpush1.msra.mxu0 0.0
    %530 = vmatprep.subr.mxu0 0.0
    %531 = vmatpush1.msra.mxu0 0.0
    %532 = vmatprep.subr.mxu0 0.0
    %533 = vmatpush1.msra.mxu0 0.0
    %534 = vmatprep.subr.mxu0 0.0
    %535 = vmatpush1.msra.mxu0 0.0
    %536 = vmatprep.subr.mxu0 0.0
    %537 = vmatpush1.msra.mxu0 0.0
    %538 = vmatprep.subr.mxu0 0.0
    %539 = vmatpush1.msra.mxu0 0.0
    %540 = vmatprep.subr.mxu0 0.0
    %541 = vmatpush1.msra.mxu0 0.0
    %542 = vmatprep.subr.mxu0 0.0
    %543 = vmatpush1.msra.mxu0 0.0
    %544 = vmatprep.subr.mxu0 0.0
    %545 = vmatpush1.msra.mxu0 0.0
    %546 = vmatprep.subr.mxu0 0.0
    %547 = vmatpush1.msra.mxu0 0.0
    %548 = vmatprep.subr.mxu0 0.0
    %549 = vmatpush1.msra.mxu0 0.0
    %550 = vmatprep.subr.mxu0 0.0
    %551 = vmatpush1.msra.mxu0 0.0
    %552 = vmatprep.subr.mxu0 0.0
    %553 = vmatpush1.msra.mxu0 0.0
    %554 = vmatprep.subr.mxu0 0.0
    %555 = vmatpush1.msra.mxu0 0.0
    %556 = vmatprep.subr.mxu0 0.0
    %557 = vmatpush1.msra.mxu0 0.0
    %558 = vmatprep.subr.mxu0 0.0
    %559 = vmatpush1.msra.mxu0 0.0
    %560 = vmatprep.subr.mxu0 0.0
    %561 = vmatpush1.msra.mxu0 0.0
    %562 = vmatprep.subr.mxu0 0.0
    %563 = vmatpush1.msra.mxu0 0.0
    %564 = vmatprep.subr.mxu0 0.0
    %565 = vmatpush1.msra.mxu0 0.0
    %566 = vmatprep.subr.mxu0 0.0
    %567 = vmatpush1.msra.mxu0 0.0
    %568 = vmatprep.subr.mxu0 0.0
    %569 = vmatpush1.msra.mxu0 0.0
    %570 = vmatprep.subr.mxu0 0.0
    %571 = vmatpush1.msra.mxu0 0.0
    %572 = vmatprep.subr.mxu0 0.0
    %573 = vmatpush1.msra.mxu0 0.0
    %574 = vmatprep.subr.mxu0 0.0
    %575 = vmatpush1.msra.mxu0 0.0
    %576 = vmatprep.mubr.f32.mxu0 0.0
    %577 = vmatmul.mubr.f32.gmra.mrb[0].mxu0 %v426
    %v578 = vpop.f32.mrb[0].mxu0
    %v579 = vadd.f32 0.0, %v578
    %v580 = vpop.f32.mrb[0].mxu0
    %v581 = vadd.f32 0.0, %v580
    %582 = vmatprep.mubr.f32.mxu0 0.0
    %583 = vmatmul.mubr.f32.gmra.mrb[0].mxu0 %v429
    %v584 = vpop.f32.mrb[0].mxu0
    %v585 = vadd.f32 0.0, %v584
    %v586 = vpop.f32.mrb[0].mxu0
    %v587 = vadd.f32 0.0, %v586
    %588 = vdwg.mxu0
    %v589 = vld [vmem:[%s11] sm:$0xff]
    %v590 = vld [vmem:[%s11 + $0x8] sm:$0xff]
    %v591 = vld [vmem:[%s11 + $0x10] sm:$0xff]
    %v592 = vld [vmem:[%s11 + $0x18] sm:$0xff]
    %v593 = vld [vmem:[%s11 + $0x20] sm:$0xff]
    %v594 = vld [vmem:[%s11 + $0x28] sm:$0xff]
    %v595 = vld [vmem:[%s11 + $0x30] sm:$0xff]
    %v596 = vld [vmem:[%s11 + $0x38] sm:$0xff]
    %v597 = vld [vmem:[%s11 + $0x40] sm:$0xff]
    %v598 = vld [vmem:[%s11 + $0x48] sm:$0xff]
    %v599 = vld [vmem:[%s11 + $0x50] sm:$0xff]
    %v600 = vld [vmem:[%s11 + $0x58] sm:$0xff]
    %v601 = vld [vmem:[%s11 + $0x60] sm:$0xff]
    %v602 = vld [vmem:[%s11 + $0x68] sm:$0xff]
    %v603 = vld [vmem:[%s11 + $0x70] sm:$0xff]
    %v604 = vld [vmem:[%s11 + $0x78] sm:$0xff]
    %v605 = vld [vmem:[%s13] sm:$0x3]
    %v607 = vlaneseq
    %v608 = vshrl.u32 %v607, 7
    %v609 = vsub.s32 0, %v608
    %v610 = vrot.slane %v605, %v609
    %v611 = vlaneseq
    %v612 = vshrl.u32 %v611, 7
    %v613 = vsub.s32 1, %v612
    %v614 = vrot.slane %v605, %v613
    %v619 = vrot.slane %v585, 6
    %v620 = vrot.slane %v587, 6
    %v623 = vadd.f32 %v498, %v619
    %v624 = vadd.f32 %v500, %v620
    %vm625 = vcmask 523264
    %v627 = vsel %vm625, 0.0, 0
    %629 = vmatprep.subr.mxu0 %v590
    %630 = vmatpush1.msra.mxu0 %v589
    %631 = vmatprep.subr.mxu0 %v592
    %632 = vmatpush1.msra.mxu0 %v591
    %633 = vmatprep.subr.mxu0 %v594
    %634 = vmatpush1.msra.mxu0 %v593
    %635 = vmatprep.subr.mxu0 %v596
    %636 = vmatpush1.msra.mxu0 %v595
    %637 = vmatprep.subr.mxu0 %v598
    %638 = vmatpush1.msra.mxu0 %v597
    %639 = vmatprep.subr.mxu0 %v600
    %640 = vmatpush1.msra.mxu0 %v599
    %641 = vmatprep.subr.mxu0 %v602
    %642 = vmatpush1.msra.mxu0 %v601
    %643 = vmatprep.subr.mxu0 %v604
    %644 = vmatpush1.msra.mxu0 %v603
    %645 = vmatprep.subr.mxu0 0.0
    %646 = vmatpush1.msra.mxu0 0.0
    %647 = vmatprep.subr.mxu0 0.0
    %648 = vmatpush1.msra.mxu0 0.0
    %649 = vmatprep.subr.mxu0 0.0
    %650 = vmatpush1.msra.mxu0 0.0
    %651 = vmatprep.subr.mxu0 0.0
    %652 = vmatpush1.msra.mxu0 0.0
    %653 = vmatprep.subr.mxu0 0.0
    %654 = vmatpush1.msra.mxu0 0.0
    %655 = vmatprep.subr.mxu0 0.0
    %656 = vmatpush1.msra.mxu0 0.0
    %657 = vmatprep.subr.mxu0 0.0
    %658 = vmatpush1.msra.mxu0 0.0
    %659 = vmatprep.subr.mxu0 0.0
    %660 = vmatpush1.msra.mxu0 0.0
    %661 = vmatprep.subr.mxu0 0.0
    %662 = vmatpush1.msra.mxu0 0.0
    %663 = vmatprep.subr.mxu0 0.0
    %664 = vmatpush1.msra.mxu0 0.0
    %665 = vmatprep.subr.mxu0 0.0
    %666 = vmatpush1.msra.mxu0 0.0
    %667 = vmatprep.subr.mxu0 0.0
    %668 = vmatpush1.msra.mxu0 0.0
    %669 = vmatprep.subr.mxu0 0.0
    %670 = vmatpush1.msra.mxu0 0.0
    %671 = vmatprep.subr.mxu0 0.0
    %672 = vmatpush1.msra.mxu0 0.0
    %673 = vmatprep.subr.mxu0 0.0
    %674 = vmatpush1.msra.mxu0 0.0
    %675 = vmatprep.subr.mxu0 0.0
    %676 = vmatpush1.msra.mxu0 0.0
    %677 = vmatprep.subr.mxu0 0.0
    %678 = vmatpush1.msra.mxu0 0.0
    %679 = vmatprep.subr.mxu0 0.0
    %680 = vmatpush1.msra.mxu0 0.0
    %681 = vmatprep.subr.mxu0 0.0
    %682 = vmatpush1.msra.mxu0 0.0
    %683 = vmatprep.subr.mxu0 0.0
    %684 = vmatpush1.msra.mxu0 0.0
    %685 = vmatprep.subr.mxu0 0.0
    %686 = vmatpush1.msra.mxu0 0.0
    %687 = vmatprep.subr.mxu0 0.0
    %688 = vmatpush1.msra.mxu0 0.0
    %689 = vmatprep.subr.mxu0 0.0
    %690 = vmatpush1.msra.mxu0 0.0
    %691 = vmatprep.subr.mxu0 0.0
    %692 = vmatpush1.msra.mxu0 0.0
    %693 = vmatprep.mubr.f32.mxu0 0.0
    %694 = vmatmul.mubr.f32.gmra.mrb[0].mxu0 %v627
    %v695 = vpop.f32.mrb[0].mxu0
    %v696 = vadd.f32 %v610, %v695
    %v697 = vpop.f32.mrb[0].mxu0
    %v698 = vadd.f32 %v614, %v697
    %699 = vdwg.mxu0
    %v700 = vadd.f32 %v623, %v696
    %v701 = vxor.u32 %v700, 2147483648
    %v702 = vmul.f32 %v701, 1.442695
    %v703 = vpow.pop %v702
    %v704 = vadd.f32 %v703, 1.0
    %v705 = vrcp.pop %v704
    %v706 = vmul.f32 1.0, %v705
    %v707 = vmul.f32 %v706, %v698
    %v708 = vadd.f32 %v624, %v707
    %v709 = vtanh.pop %v708
    %v710 = vsub.f32 1.0, %v706
    %712 = vrot.lane.b32.xlu0 %v709, 64
    %v713 = vpop.permute.xlu0 %712
    %v715 = vmul.f32 %v710, %v713
    %v716 = vmul.f32 %v706, 0.0
    %v717 = vadd.f32 %v715, %v716
    %v718 = vrot.slane %v585, 2
    %v719 = vrot.slane %v587, 2
    %v722 = vadd.f32 %v498, %v718
    %v723 = vadd.f32 %v500, %v719
    %725 = vrot.lane.b32.xlu0 %v717, 64
    %v726 = vpop.permute.xlu0 %725
    %v727 = vsel %vm625, %v726, 0
    %729 = vmatprep.subr.mxu0 %v590
    %730 = vmatpush1.msra.mxu0 %v589
    %731 = vmatprep.subr.mxu0 %v592
    %732 = vmatpush1.msra.mxu0 %v591
    %733 = vmatprep.subr.mxu0 %v594
    %734 = vmatpush1.msra.mxu0 %v593
    %735 = vmatprep.subr.mxu0 %v596
    %736 = vmatpush1.msra.mxu0 %v595
    %737 = vmatprep.subr.mxu0 %v598
    %738 = vmatpush1.msra.mxu0 %v597
    %739 = vmatprep.subr.mxu0 %v600
    %740 = vmatpush1.msra.mxu0 %v599
    %741 = vmatprep.subr.mxu0 %v602
    %742 = vmatpush1.msra.mxu0 %v601
    %743 = vmatprep.subr.mxu0 %v604
    %744 = vmatpush1.msra.mxu0 %v603
    %745 = vmatprep.subr.mxu0 0.0
    %746 = vmatpush1.msra.mxu0 0.0
    %747 = vmatprep.subr.mxu0 0.0
    %748 = vmatpush1.msra.mxu0 0.0
    %749 = vmatprep.subr.mxu0 0.0
    %750 = vmatpush1.msra.mxu0 0.0
    %751 = vmatprep.subr.mxu0 0.0
    %752 = vmatpush1.msra.mxu0 0.0
    %753 = vmatprep.subr.mxu0 0.0
    %754 = vmatpush1.msra.mxu0 0.0
    %755 = vmatprep.subr.mxu0 0.0
    %756 = vmatpush1.msra.mxu0 0.0
    %757 = vmatprep.subr.mxu0 0.0
    %758 = vmatpush1.msra.mxu0 0.0
    %759 = vmatprep.subr.mxu0 0.0
    %760 = vmatpush1.msra.mxu0 0.0
    %761 = vmatprep.subr.mxu0 0.0
    %762 = vmatpush1.msra.mxu0 0.0
    %763 = vmatprep.subr.mxu0 0.0
    %764 = vmatpush1.msra.mxu0 0.0
    %765 = vmatprep.subr.mxu0 0.0
    %766 = vmatpush1.msra.mxu0 0.0
    %767 = vmatprep.subr.mxu0 0.0
    %768 = vmatpush1.msra.mxu0 0.0
    %769 = vmatprep.subr.mxu0 0.0
    %770 = vmatpush1.msra.mxu0 0.0
    %771 = vmatprep.subr.mxu0 0.0
    %772 = vmatpush1.msra.mxu0 0.0
    %773 = vmatprep.subr.mxu0 0.0
    %774 = vmatpush1.msra.mxu0 0.0
    %775 = vmatprep.subr.mxu0 0.0
    %776 = vmatpush1.msra.mxu0 0.0
    %777 = vmatprep.subr.mxu0 0.0
    %778 = vmatpush1.msra.mxu0 0.0
    %779 = vmatprep.subr.mxu0 0.0
    %780 = vmatpush1.msra.mxu0 0.0
    %781 = vmatprep.subr.mxu0 0.0
    %782 = vmatpush1.msra.mxu0 0.0
    %783 = vmatprep.subr.mxu0 0.0
    %784 = vmatpush1.msra.mxu0 0.0
    %785 = vmatprep.subr.mxu0 0.0
    %786 = vmatpush1.msra.mxu0 0.0
    %787 = vmatprep.subr.mxu0 0.0
    %788 = vmatpush1.msra.mxu0 0.0
    %789 = vmatprep.subr.mxu0 0.0
    %790 = vmatpush1.msra.mxu0 0.0
    %791 = vmatprep.subr.mxu0 0.0
    %792 = vmatpush1.msra.mxu0 0.0
    %793 = vmatprep.mubr.f32.mxu0 0.0
    %794 = vmatmul.mubr.f32.gmra.mrb[0].mxu0 %v727
    %v795 = vpop.f32.mrb[0].mxu0
    %v796 = vadd.f32 %v610, %v795
    %v797 = vpop.f32.mrb[0].mxu0
    %v798 = vadd.f32 %v614, %v797
    %799 = vdwg.mxu0
    %v801 = vrot.slane %v796, 6
    %v803 = vadd.f32 %v722, %v801
    %v804 = vxor.u32 %v803, 2147483648
    %v805 = vmul.f32 %v804, 1.442695
    %v806 = vpow.pop %v805
    %v807 = vadd.f32 %v806, 1.0
    %v808 = vrcp.pop %v807
    %v809 = vmul.f32 1.0, %v808
    %v811 = vrot.slane %v798, 6
    %v813 = vmul.f32 %v809, %v811
    %v814 = vadd.f32 %v723, %v813
    %v815 = vtanh.pop %v814
    %v816 = vsub.f32 1.0, %v809
    %818 = vrot.lane.b32.xlu0 %v815, 64
    %v819 = vpop.permute.xlu0 %818
    %v821 = vmul.f32 %v816, %v819
    %v822 = vrot.slane %v717, 6
    %v824 = vmul.f32 %v809, %v822
    %v825 = vadd.f32 %v821, %v824
    %v827 = vrot.slane %v825, 2
    %828 = vrot.lane.b32.xlu0 %v827, 64
    %v829 = vpop.permute.xlu0 %828
    %v830 = vsel %vm625, %v829, 0
    %832 = vmatprep.subr.mxu0 %v590
    %833 = vmatpush1.msra.mxu0 %v589
    %834 = vmatprep.subr.mxu0 %v592
    %835 = vmatpush1.msra.mxu0 %v591
    %836 = vmatprep.subr.mxu0 %v594
    %837 = vmatpush1.msra.mxu0 %v593
    %838 = vmatprep.subr.mxu0 %v596
    %839 = vmatpush1.msra.mxu0 %v595
    %840 = vmatprep.subr.mxu0 %v598
    %841 = vmatpush1.msra.mxu0 %v597
    %842 = vmatprep.subr.mxu0 %v600
    %843 = vmatpush1.msra.mxu0 %v599
    %844 = vmatprep.subr.mxu0 %v602
    %845 = vmatpush1.msra.mxu0 %v601
    %846 = vmatprep.subr.mxu0 %v604
    %847 = vmatpush1.msra.mxu0 %v603
    %848 = vmatprep.subr.mxu0 0.0
    %849 = vmatpush1.msra.mxu0 0.0
    %850 = vmatprep.subr.mxu0 0.0
    %851 = vmatpush1.msra.mxu0 0.0
    %852 = vmatprep.subr.mxu0 0.0
    %853 = vmatpush1.msra.mxu0 0.0
    %854 = vmatprep.subr.mxu0 0.0
    %855 = vmatpush1.msra.mxu0 0.0
    %856 = vmatprep.subr.mxu0 0.0
    %857 = vmatpush1.msra.mxu0 0.0
    %858 = vmatprep.subr.mxu0 0.0
    %859 = vmatpush1.msra.mxu0 0.0
    %860 = vmatprep.subr.mxu0 0.0
    %861 = vmatpush1.msra.mxu0 0.0
    %862 = vmatprep.subr.mxu0 0.0
    %863 = vmatpush1.msra.mxu0 0.0
    %864 = vmatprep.subr.mxu0 0.0
    %865 = vmatpush1.msra.mxu0 0.0
    %866 = vmatprep.subr.mxu0 0.0
    %867 = vmatpush1.msra.mxu0 0.0
    %868 = vmatprep.subr.mxu0 0.0
    %869 = vmatpush1.msra.mxu0 0.0
    %870 = vmatprep.subr.mxu0 0.0
    %871 = vmatpush1.msra.mxu0 0.0
    %872 = vmatprep.subr.mxu0 0.0
    %873 = vmatpush1.msra.mxu0 0.0
    %874 = vmatprep.subr.mxu0 0.0
    %875 = vmatpush1.msra.mxu0 0.0
    %876 = vmatprep.subr.mxu0 0.0
    %877 = vmatpush1.msra.mxu0 0.0
    %878 = vmatprep.subr.mxu0 0.0
    %879 = vmatpush1.msra.mxu0 0.0
    %880 = vmatprep.subr.mxu0 0.0
    %881 = vmatpush1.msra.mxu0 0.0
    %882 = vmatprep.subr.mxu0 0.0
    %883 = vmatpush1.msra.mxu0 0.0
    %884 = vmatprep.subr.mxu0 0.0
    %885 = vmatpush1.msra.mxu0 0.0
    %886 = vmatprep.subr.mxu0 0.0
    %887 = vmatpush1.msra.mxu0 0.0
    %888 = vmatprep.subr.mxu0 0.0
    %889 = vmatpush1.msra.mxu0 0.0
    %890 = vmatprep.subr.mxu0 0.0
    %891 = vmatpush1.msra.mxu0 0.0
    %892 = vmatprep.subr.mxu0 0.0
    %893 = vmatpush1.msra.mxu0 0.0
    %894 = vmatprep.subr.mxu0 0.0
    %895 = vmatpush1.msra.mxu0 0.0
    %896 = vmatprep.mubr.f32.mxu0 0.0
    %897 = vmatmul.mubr.f32.gmra.mrb[0].mxu0 %v830
    %v898 = vpop.f32.mrb[0].mxu0
    %v899 = vadd.f32 %v610, %v898
    %v900 = vpop.f32.mrb[0].mxu0
    %v901 = vadd.f32 %v614, %v900
    %902 = vdwg.mxu0
    %v904 = vrot.slane %v899, 4
    %v906 = vadd.f32 %v623, %v904
    %v907 = vxor.u32 %v906, 2147483648
    %v908 = vmul.f32 %v907, 1.442695
    %v909 = vpow.pop %v908
    %v910 = vadd.f32 %v909, 1.0
    %v911 = vrcp.pop %v910
    %v912 = vmul.f32 1.0, %v911
    %v914 = vrot.slane %v901, 4
    %v916 = vmul.f32 %v912, %v914
    %v917 = vadd.f32 %v624, %v916
    %v918 = vtanh.pop %v917
    %v919 = vsub.f32 1.0, %v912
    %921 = vrot.lane.b32.xlu0 %v918, 64
    %v922 = vpop.permute.xlu0 %921
    %v924 = vmul.f32 %v919, %v922
    %v925 = vrot.slane %v825, 6
    %v927 = vmul.f32 %v912, %v925
    %v928 = vadd.f32 %v924, %v927
    %v930 = vrot.slane %v928, 4
    %931 = vrot.lane.b32.xlu0 %v930, 64
    %v932 = vpop.permute.xlu0 %931
    %v933 = vsel %vm625, %v932, 0
    %935 = vmatprep.subr.mxu0 %v590
    %936 = vmatpush1.msra.mxu0 %v589
    %937 = vmatprep.subr.mxu0 %v592
    %938 = vmatpush1.msra.mxu0 %v591
    %939 = vmatprep.subr.mxu0 %v594
    %940 = vmatpush1.msra.mxu0 %v593
    %941 = vmatprep.subr.mxu0 %v596
    %942 = vmatpush1.msra.mxu0 %v595
    %943 = vmatprep.subr.mxu0 %v598
    %944 = vmatpush1.msra.mxu0 %v597
    %945 = vmatprep.subr.mxu0 %v600
    %946 = vmatpush1.msra.mxu0 %v599
    %947 = vmatprep.subr.mxu0 %v602
    %948 = vmatpush1.msra.mxu0 %v601
    %949 = vmatprep.subr.mxu0 %v604
    %950 = vmatpush1.msra.mxu0 %v603
    %951 = vmatprep.subr.mxu0 0.0
    %952 = vmatpush1.msra.mxu0 0.0
    %953 = vmatprep.subr.mxu0 0.0
    %954 = vmatpush1.msra.mxu0 0.0
    %955 = vmatprep.subr.mxu0 0.0
    %956 = vmatpush1.msra.mxu0 0.0
    %957 = vmatprep.subr.mxu0 0.0
    %958 = vmatpush1.msra.mxu0 0.0
    %959 = vmatprep.subr.mxu0 0.0
    %960 = vmatpush1.msra.mxu0 0.0
    %961 = vmatprep.subr.mxu0 0.0
    %962 = vmatpush1.msra.mxu0 0.0
    %963 = vmatprep.subr.mxu0 0.0
    %964 = vmatpush1.msra.mxu0 0.0
    %965 = vmatprep.subr.mxu0 0.0
    %966 = vmatpush1.msra.mxu0 0.0
    %967 = vmatprep.subr.mxu0 0.0
    %968 = vmatpush1.msra.mxu0 0.0
    %969 = vmatprep.subr.mxu0 0.0
    %970 = vmatpush1.msra.mxu0 0.0
    %971 = vmatprep.subr.mxu0 0.0
    %972 = vmatpush1.msra.mxu0 0.0
    %973 = vmatprep.subr.mxu0 0.0
    %974 = vmatpush1.msra.mxu0 0.0
    %975 = vmatprep.subr.mxu0 0.0
    %976 = vmatpush1.msra.mxu0 0.0
    %977 = vmatprep.subr.mxu0 0.0
    %978 = vmatpush1.msra.mxu0 0.0
    %979 = vmatprep.subr.mxu0 0.0
    %980 = vmatpush1.msra.mxu0 0.0
    %981 = vmatprep.subr.mxu0 0.0
    %982 = vmatpush1.msra.mxu0 0.0
    %983 = vmatprep.subr.mxu0 0.0
    %984 = vmatpush1.msra.mxu0 0.0
    %985 = vmatprep.subr.mxu0 0.0
    %986 = vmatpush1.msra.mxu0 0.0
    %987 = vmatprep.subr.mxu0 0.0
    %988 = vmatpush1.msra.mxu0 0.0
    %989 = vmatprep.subr.mxu0 0.0
    %990 = vmatpush1.msra.mxu0 0.0
    %991 = vmatprep.subr.mxu0 0.0
    %992 = vmatpush1.msra.mxu0 0.0
    %993 = vmatprep.subr.mxu0 0.0
    %994 = vmatpush1.msra.mxu0 0.0
    %995 = vmatprep.subr.mxu0 0.0
    %996 = vmatpush1.msra.mxu0 0.0
    %997 = vmatprep.subr.mxu0 0.0
    %998 = vmatpush1.msra.mxu0 0.0
    %999 = vmatprep.mubr.f32.mxu0 0.0
    %1000 = vmatmul.mubr.f32.gmra.mrb[0].mxu0 %v933
    %v1001 = vpop.f32.mrb[0].mxu0
    %v1002 = vadd.f32 %v610, %v1001
    %v1003 = vpop.f32.mrb[0].mxu0
    %v1004 = vadd.f32 %v614, %v1003
    %1005 = vdwg.mxu0
    %v1007 = vrot.slane %v1002, 2
    %v1009 = vadd.f32 %v722, %v1007
    %v1010 = vxor.u32 %v1009, 2147483648
    %v1011 = vmul.f32 %v1010, 1.442695
    %v1012 = vpow.pop %v1011
    %v1013 = vadd.f32 %v1012, 1.0
    %v1014 = vrcp.pop %v1013
    %v1015 = vmul.f32 1.0, %v1014
    %v1017 = vrot.slane %v1004, 2
    %v1019 = vmul.f32 %v1015, %v1017
    %v1020 = vadd.f32 %v723, %v1019
    %v1021 = vtanh.pop %v1020
    %v1022 = vsub.f32 1.0, %v1015
    %1024 = vrot.lane.b32.xlu0 %v1021, 64
    %v1025 = vpop.permute.xlu0 %1024
    %v1027 = vmul.f32 %v1022, %v1025
    %v1028 = vrot.slane %v928, 6
    %v1030 = vmul.f32 %v1015, %v1028
    %v1031 = vadd.f32 %v1027, %v1030
    %v1034 = vrot.slane %v579, 6
    %v1035 = vrot.slane %v581, 6
    %v1038 = vadd.f32 %v504, %v1034
    %v1039 = vadd.f32 %v506, %v1035
    %v1041 = vrot.slane %v1031, 6
    %1042 = vrot.lane.b32.xlu0 %v1041, 64
    %v1043 = vpop.permute.xlu0 %1042
    %v1044 = vsel %vm625, %v1043, 0
    %1046 = vmatprep.subr.mxu0 %v590
    %1047 = vmatpush1.msra.mxu0 %v589
    %1048 = vmatprep.subr.mxu0 %v592
    %1049 = vmatpush1.msra.mxu0 %v591
    %1050 = vmatprep.subr.mxu0 %v594
    %1051 = vmatpush1.msra.mxu0 %v593
    %1052 = vmatprep.subr.mxu0 %v596
    %1053 = vmatpush1.msra.mxu0 %v595
    %1054 = vmatprep.subr.mxu0 %v598
    %1055 = vmatpush1.msra.mxu0 %v597
    %1056 = vmatprep.subr.mxu0 %v600
    %1057 = vmatpush1.msra.mxu0 %v599
    %1058 = vmatprep.subr.mxu0 %v602
    %1059 = vmatpush1.msra.mxu0 %v601
    %1060 = vmatprep.subr.mxu0 %v604
    %1061 = vmatpush1.msra.mxu0 %v603
    %1062 = vmatprep.subr.mxu0 0.0
    %1063 = vmatpush1.msra.mxu0 0.0
    %1064 = vmatprep.subr.mxu0 0.0
    %1065 = vmatpush1.msra.mxu0 0.0
    %1066 = vmatprep.subr.mxu0 0.0
    %1067 = vmatpush1.msra.mxu0 0.0
    %1068 = vmatprep.subr.mxu0 0.0
    %1069 = vmatpush1.msra.mxu0 0.0
    %1070 = vmatprep.subr.mxu0 0.0
    %1071 = vmatpush1.msra.mxu0 0.0
    %1072 = vmatprep.subr.mxu0 0.0
    %1073 = vmatpush1.msra.mxu0 0.0
    %1074 = vmatprep.subr.mxu0 0.0
    %1075 = vmatpush1.msra.mxu0 0.0
    %1076 = vmatprep.subr.mxu0 0.0
    %1077 = vmatpush1.msra.mxu0 0.0
    %1078 = vmatprep.subr.mxu0 0.0
    %1079 = vmatpush1.msra.mxu0 0.0
    %1080 = vmatprep.subr.mxu0 0.0
    %1081 = vmatpush1.msra.mxu0 0.0
    %1082 = vmatprep.subr.mxu0 0.0
    %1083 = vmatpush1.msra.mxu0 0.0
    %1084 = vmatprep.subr.mxu0 0.0
    %1085 = vmatpush1.msra.mxu0 0.0
    %1086 = vmatprep.subr.mxu0 0.0
    %1087 = vmatpush1.msra.mxu0 0.0
    %1088 = vmatprep.subr.mxu0 0.0
    %1089 = vmatpush1.msra.mxu0 0.0
    %1090 = vmatprep.subr.mxu0 0.0
    %1091 = vmatpush1.msra.mxu0 0.0
    %1092 = vmatprep.subr.mxu0 0.0
    %1093 = vmatpush1.msra.mxu0 0.0
    %1094 = vmatprep.subr.mxu0 0.0
    %1095 = vmatpush1.msra.mxu0 0.0
    %1096 = vmatprep.subr.mxu0 0.0
    %1097 = vmatpush1.msra.mxu0 0.0
    %1098 = vmatprep.subr.mxu0 0.0
    %1099 = vmatpush1.msra.mxu0 0.0
    %1100 = vmatprep.subr.mxu0 0.0
    %1101 = vmatpush1.msra.mxu0 0.0
    %1102 = vmatprep.subr.mxu0 0.0
    %1103 = vmatpush1.msra.mxu0 0.0
    %1104 = vmatprep.subr.mxu0 0.0
    %1105 = vmatpush1.msra.mxu0 0.0
    %1106 = vmatprep.subr.mxu0 0.0
    %1107 = vmatpush1.msra.mxu0 0.0
    %1108 = vmatprep.subr.mxu0 0.0
    %1109 = vmatpush1.msra.mxu0 0.0
    %1110 = vmatprep.mubr.f32.mxu0 0.0
    %1111 = vmatmul.mubr.f32.gmra.mrb[0].mxu0 %v1044
    %v1112 = vpop.f32.mrb[0].mxu0
    %v1113 = vadd.f32 %v610, %v1112
    %v1114 = vpop.f32.mrb[0].mxu0
    %v1115 = vadd.f32 %v614, %v1114
    %1116 = vdwg.mxu0
    %v1117 = vadd.f32 %v1038, %v1113
    %v1118 = vxor.u32 %v1117, 2147483648
    %v1119 = vmul.f32 %v1118, 1.442695
    %v1120 = vpow.pop %v1119
    %v1121 = vadd.f32 %v1120, 1.0
    %v1122 = vrcp.pop %v1121
    %v1123 = vmul.f32 1.0, %v1122
    %v1124 = vmul.f32 %v1123, %v1115
    %v1125 = vadd.f32 %v1039, %v1124
    %v1126 = vtanh.pop %v1125
    %v1127 = vsub.f32 1.0, %v1123
    %1129 = vrot.lane.b32.xlu0 %v1126, 64
    %v1130 = vpop.permute.xlu0 %1129
    %v1132 = vmul.f32 %v1127, %v1130
    %v1134 = vmul.f32 %v1123, %v1041
    %v1135 = vadd.f32 %v1132, %v1134
    %v1136 = vrot.slane %v579, 2
    %v1137 = vrot.slane %v581, 2
    %v1140 = vadd.f32 %v504, %v1136
    %v1141 = vadd.f32 %v506, %v1137
    %1143 = vrot.lane.b32.xlu0 %v1135, 64
    %v1144 = vpop.permute.xlu0 %1143
    %v1145 = vsel %vm625, %v1144, 0
    %1147 = vmatprep.subr.mxu0 %v590
    %1148 = vmatpush1.msra.mxu0 %v589
    %1149 = vmatprep.subr.mxu0 %v592
    %1150 = vmatpush1.msra.mxu0 %v591
    %1151 = vmatprep.subr.mxu0 %v594
    %1152 = vmatpush1.msra.mxu0 %v593
    %1153 = vmatprep.subr.mxu0 %v596
    %1154 = vmatpush1.msra.mxu0 %v595
    %1155 = vmatprep.subr.mxu0 %v598
    %1156 = vmatpush1.msra.mxu0 %v597
    %1157 = vmatprep.subr.mxu0 %v600
    %1158 = vmatpush1.msra.mxu0 %v599
    %1159 = vmatprep.subr.mxu0 %v602
    %1160 = vmatpush1.msra.mxu0 %v601
    %1161 = vmatprep.subr.mxu0 %v604
    %1162 = vmatpush1.msra.mxu0 %v603
    %1163 = vmatprep.subr.mxu0 0.0
    %1164 = vmatpush1.msra.mxu0 0.0
    %1165 = vmatprep.subr.mxu0 0.0
    %1166 = vmatpush1.msra.mxu0 0.0
    %1167 = vmatprep.subr.mxu0 0.0
    %1168 = vmatpush1.msra.mxu0 0.0
    %1169 = vmatprep.subr.mxu0 0.0
    %1170 = vmatpush1.msra.mxu0 0.0
    %1171 = vmatprep.subr.mxu0 0.0
    %1172 = vmatpush1.msra.mxu0 0.0
    %1173 = vmatprep.subr.mxu0 0.0
    %1174 = vmatpush1.msra.mxu0 0.0
    %1175 = vmatprep.subr.mxu0 0.0
    %1176 = vmatpush1.msra.mxu0 0.0
    %1177 = vmatprep.subr.mxu0 0.0
    %1178 = vmatpush1.msra.mxu0 0.0
    %1179 = vmatprep.subr.mxu0 0.0
    %1180 = vmatpush1.msra.mxu0 0.0
    %1181 = vmatprep.subr.mxu0 0.0
    %1182 = vmatpush1.msra.mxu0 0.0
    %1183 = vmatprep.subr.mxu0 0.0
    %1184 = vmatpush1.msra.mxu0 0.0
    %1185 = vmatprep.subr.mxu0 0.0
    %1186 = vmatpush1.msra.mxu0 0.0
    %1187 = vmatprep.subr.mxu0 0.0
    %1188 = vmatpush1.msra.mxu0 0.0
    %1189 = vmatprep.subr.mxu0 0.0
    %1190 = vmatpush1.msra.mxu0 0.0
    %1191 = vmatprep.subr.mxu0 0.0
    %1192 = vmatpush1.msra.mxu0 0.0
    %1193 = vmatprep.subr.mxu0 0.0
    %1194 = vmatpush1.msra.mxu0 0.0
    %1195 = vmatprep.subr.mxu0 0.0
    %1196 = vmatpush1.msra.mxu0 0.0
    %1197 = vmatprep.subr.mxu0 0.0
    %1198 = vmatpush1.msra.mxu0 0.0
    %1199 = vmatprep.subr.mxu0 0.0
    %1200 = vmatpush1.msra.mxu0 0.0
    %1201 = vmatprep.subr.mxu0 0.0
    %1202 = vmatpush1.msra.mxu0 0.0
    %1203 = vmatprep.subr.mxu0 0.0
    %1204 = vmatpush1.msra.mxu0 0.0
    %1205 = vmatprep.subr.mxu0 0.0
    %1206 = vmatpush1.msra.mxu0 0.0
    %1207 = vmatprep.subr.mxu0 0.0
    %1208 = vmatpush1.msra.mxu0 0.0
    %1209 = vmatprep.subr.mxu0 0.0
    %1210 = vmatpush1.msra.mxu0 0.0
    %1211 = vmatprep.mubr.f32.mxu0 0.0
    %1212 = vmatmul.mubr.f32.gmra.mrb[0].mxu0 %v1145
    %v1213 = vpop.f32.mrb[0].mxu0
    %v1214 = vadd.f32 %v610, %v1213
    %v1215 = vpop.f32.mrb[0].mxu0
    %v1216 = vadd.f32 %v614, %v1215
    %1217 = vdwg.mxu0
    %v1219 = vrot.slane %v1214, 6
    %v1221 = vadd.f32 %v1140, %v1219
    %v1222 = vxor.u32 %v1221, 2147483648
    %v1223 = vmul.f32 %v1222, 1.442695
    %v1224 = vpow.pop %v1223
    %v1225 = vadd.f32 %v1224, 1.0
    %v1226 = vrcp.pop %v1225
    %v1227 = vmul.f32 1.0, %v1226
    %v1229 = vrot.slane %v1216, 6
    %v1231 = vmul.f32 %v1227, %v1229
    %v1232 = vadd.f32 %v1141, %v1231
    %v1233 = vtanh.pop %v1232
    %v1234 = vsub.f32 1.0, %v1227
    %1236 = vrot.lane.b32.xlu0 %v1233, 64
    %v1237 = vpop.permute.xlu0 %1236
    %v1239 = vmul.f32 %v1234, %v1237
    %v1240 = vrot.slane %v1135, 6
    %v1242 = vmul.f32 %v1227, %v1240
    %v1243 = vadd.f32 %v1239, %v1242
    %v1245 = vrot.slane %v1243, 2
    %1246 = vrot.lane.b32.xlu0 %v1245, 64
    %v1247 = vpop.permute.xlu0 %1246
    %v1248 = vsel %vm625, %v1247, 0
    %1250 = vmatprep.subr.mxu0 %v590
    %1251 = vmatpush1.msra.mxu0 %v589
    %1252 = vmatprep.subr.mxu0 %v592
    %1253 = vmatpush1.msra.mxu0 %v591
    %1254 = vmatprep.subr.mxu0 %v594
    %1255 = vmatpush1.msra.mxu0 %v593
    %1256 = vmatprep.subr.mxu0 %v596
    %1257 = vmatpush1.msra.mxu0 %v595
    %1258 = vmatprep.subr.mxu0 %v598
    %1259 = vmatpush1.msra.mxu0 %v597
    %1260 = vmatprep.subr.mxu0 %v600
    %1261 = vmatpush1.msra.mxu0 %v599
    %1262 = vmatprep.subr.mxu0 %v602
    %1263 = vmatpush1.msra.mxu0 %v601
    %1264 = vmatprep.subr.mxu0 %v604
    %1265 = vmatpush1.msra.mxu0 %v603
    %1266 = vmatprep.subr.mxu0 0.0
    %1267 = vmatpush1.msra.mxu0 0.0
    %1268 = vmatprep.subr.mxu0 0.0
    %1269 = vmatpush1.msra.mxu0 0.0
    %1270 = vmatprep.subr.mxu0 0.0
    %1271 = vmatpush1.msra.mxu0 0.0
    %1272 = vmatprep.subr.mxu0 0.0
    %1273 = vmatpush1.msra.mxu0 0.0
    %1274 = vmatprep.subr.mxu0 0.0
    %1275 = vmatpush1.msra.mxu0 0.0
    %1276 = vmatprep.subr.mxu0 0.0
    %1277 = vmatpush1.msra.mxu0 0.0
    %1278 = vmatprep.subr.mxu0 0.0
    %1279 = vmatpush1.msra.mxu0 0.0
    %1280 = vmatprep.subr.mxu0 0.0
    %1281 = vmatpush1.msra.mxu0 0.0
    %1282 = vmatprep.subr.mxu0 0.0
    %1283 = vmatpush1.msra.mxu0 0.0
    %1284 = vmatprep.subr.mxu0 0.0
    %1285 = vmatpush1.msra.mxu0 0.0
    %1286 = vmatprep.subr.mxu0 0.0
    %1287 = vmatpush1.msra.mxu0 0.0
    %1288 = vmatprep.subr.mxu0 0.0
    %1289 = vmatpush1.msra.mxu0 0.0
    %1290 = vmatprep.subr.mxu0 0.0
    %1291 = vmatpush1.msra.mxu0 0.0
    %1292 = vmatprep.subr.mxu0 0.0
    %1293 = vmatpush1.msra.mxu0 0.0
    %1294 = vmatprep.subr.mxu0 0.0
    %1295 = vmatpush1.msra.mxu0 0.0
    %1296 = vmatprep.subr.mxu0 0.0
    %1297 = vmatpush1.msra.mxu0 0.0
    %1298 = vmatprep.subr.mxu0 0.0
    %1299 = vmatpush1.msra.mxu0 0.0
    %1300 = vmatprep.subr.mxu0 0.0
    %1301 = vmatpush1.msra.mxu0 0.0
    %1302 = vmatprep.subr.mxu0 0.0
    %1303 = vmatpush1.msra.mxu0 0.0
    %1304 = vmatprep.subr.mxu0 0.0
    %1305 = vmatpush1.msra.mxu0 0.0
    %1306 = vmatprep.subr.mxu0 0.0
    %1307 = vmatpush1.msra.mxu0 0.0
    %1308 = vmatprep.subr.mxu0 0.0
    %1309 = vmatpush1.msra.mxu0 0.0
    %1310 = vmatprep.subr.mxu0 0.0
    %1311 = vmatpush1.msra.mxu0 0.0
    %1312 = vmatprep.subr.mxu0 0.0
    %1313 = vmatpush1.msra.mxu0 0.0
    %1314 = vmatprep.mubr.f32.mxu0 0.0
    %1315 = vmatmul.mubr.f32.gmra.mrb[0].mxu0 %v1248
    %v1316 = vpop.f32.mrb[0].mxu0
    %v1317 = vadd.f32 %v610, %v1316
    %v1318 = vpop.f32.mrb[0].mxu0
    %v1319 = vadd.f32 %v614, %v1318
    %1320 = vdwg.mxu0
    %v1322 = vrot.slane %v1317, 4
    %v1324 = vadd.f32 %v1038, %v1322
    %v1325 = vxor.u32 %v1324, 2147483648
    %v1326 = vmul.f32 %v1325, 1.442695
    %v1327 = vpow.pop %v1326
    %v1328 = vadd.f32 %v1327, 1.0
    %v1329 = vrcp.pop %v1328
    %v1330 = vmul.f32 1.0, %v1329
    %v1332 = vrot.slane %v1319, 4
    %v1334 = vmul.f32 %v1330, %v1332
    %v1335 = vadd.f32 %v1039, %v1334
    %v1336 = vtanh.pop %v1335
    %v1337 = vsub.f32 1.0, %v1330
    %1339 = vrot.lane.b32.xlu0 %v1336, 64
    %v1340 = vpop.permute.xlu0 %1339
    %v1342 = vmul.f32 %v1337, %v1340
    %v1343 = vrot.slane %v1243, 6
    %v1345 = vmul.f32 %v1330, %v1343
    %v1346 = vadd.f32 %v1342, %v1345
    %v1348 = vrot.slane %v1346, 4
    %1349 = vrot.lane.b32.xlu0 %v1348, 64
    %v1350 = vpop.permute.xlu0 %1349
    %v1351 = vsel %vm625, %v1350, 0
    %1353 = vmatprep.subr.mxu0 %v590
    %1354 = vmatpush1.msra.mxu0 %v589
    %1355 = vmatprep.subr.mxu0 %v592
    %1356 = vmatpush1.msra.mxu0 %v591
    %1357 = vmatprep.subr.mxu0 %v594
    %1358 = vmatpush1.msra.mxu0 %v593
    %1359 = vmatprep.subr.mxu0 %v596
    %1360 = vmatpush1.msra.mxu0 %v595
    %1361 = vmatprep.subr.mxu0 %v598
    %1362 = vmatpush1.msra.mxu0 %v597
    %1363 = vmatprep.subr.mxu0 %v600
    %1364 = vmatpush1.msra.mxu0 %v599
    %1365 = vmatprep.subr.mxu0 %v602
    %1366 = vmatpush1.msra.mxu0 %v601
    %1367 = vmatprep.subr.mxu0 %v604
    %1368 = vmatpush1.msra.mxu0 %v603
    %1369 = vmatprep.subr.mxu0 0.0
    %1370 = vmatpush1.msra.mxu0 0.0
    %1371 = vmatprep.subr.mxu0 0.0
    %1372 = vmatpush1.msra.mxu0 0.0
    %1373 = vmatprep.subr.mxu0 0.0
    %1374 = vmatpush1.msra.mxu0 0.0
    %1375 = vmatprep.subr.mxu0 0.0
    %1376 = vmatpush1.msra.mxu0 0.0
    %1377 = vmatprep.subr.mxu0 0.0
    %1378 = vmatpush1.msra.mxu0 0.0
    %1379 = vmatprep.subr.mxu0 0.0
    %1380 = vmatpush1.msra.mxu0 0.0
    %1381 = vmatprep.subr.mxu0 0.0
    %1382 = vmatpush1.msra.mxu0 0.0
    %1383 = vmatprep.subr.mxu0 0.0
    %1384 = vmatpush1.msra.mxu0 0.0
    %1385 = vmatprep.subr.mxu0 0.0
    %1386 = vmatpush1.msra.mxu0 0.0
    %1387 = vmatprep.subr.mxu0 0.0
    %1388 = vmatpush1.msra.mxu0 0.0
    %1389 = vmatprep.subr.mxu0 0.0
    %1390 = vmatpush1.msra.mxu0 0.0
    %1391 = vmatprep.subr.mxu0 0.0
    %1392 = vmatpush1.msra.mxu0 0.0
    %1393 = vmatprep.subr.mxu0 0.0
    %1394 = vmatpush1.msra.mxu0 0.0
    %1395 = vmatprep.subr.mxu0 0.0
    %1396 = vmatpush1.msra.mxu0 0.0
    %1397 = vmatprep.subr.mxu0 0.0
    %1398 = vmatpush1.msra.mxu0 0.0
    %1399 = vmatprep.subr.mxu0 0.0
    %1400 = vmatpush1.msra.mxu0 0.0
    %1401 = vmatprep.subr.mxu0 0.0
    %1402 = vmatpush1.msra.mxu0 0.0
    %1403 = vmatprep.subr.mxu0 0.0
    %1404 = vmatpush1.msra.mxu0 0.0
    %1405 = vmatprep.subr.mxu0 0.0
    %1406 = vmatpush1.msra.mxu0 0.0
    %1407 = vmatprep.subr.mxu0 0.0
    %1408 = vmatpush1.msra.mxu0 0.0
    %1409 = vmatprep.subr.mxu0 0.0
    %1410 = vmatpush1.msra.mxu0 0.0
    %1411 = vmatprep.subr.mxu0 0.0
    %1412 = vmatpush1.msra.mxu0 0.0
    %1413 = vmatprep.subr.mxu0 0.0
    %1414 = vmatpush1.msra.mxu0 0.0
    %1415 = vmatprep.subr.mxu0 0.0
    %1416 = vmatpush1.msra.mxu0 0.0
    %1417 = vmatprep.mubr.f32.mxu0 0.0
    %1418 = vmatmul.mubr.f32.gmra.mrb[0].mxu0 %v1351
    %v1419 = vpop.f32.mrb[0].mxu0
    %v1420 = vadd.f32 %v610, %v1419
    %v1421 = vpop.f32.mrb[0].mxu0
    %v1422 = vadd.f32 %v614, %v1421
    %1423 = vdwg.mxu0
    %v1425 = vrot.slane %v1420, 2
    %v1427 = vadd.f32 %v1140, %v1425
    %v1428 = vxor.u32 %v1427, 2147483648
    %v1429 = vmul.f32 %v1428, 1.442695
    %v1430 = vpow.pop %v1429
    %v1431 = vadd.f32 %v1430, 1.0
    %v1432 = vrcp.pop %v1431
    %v1433 = vmul.f32 1.0, %v1432
    %v1435 = vrot.slane %v1422, 2
    %v1437 = vmul.f32 %v1433, %v1435
    %v1438 = vadd.f32 %v1141, %v1437
    %v1439 = vtanh.pop %v1438
    %v1440 = vsub.f32 1.0, %v1433
    %1442 = vrot.lane.b32.xlu0 %v1439, 64
    %v1443 = vpop.permute.xlu0 %1442
    %v1445 = vmul.f32 %v1440, %v1443
    %v1446 = vrot.slane %v1346, 6
    %v1448 = vmul.f32 %v1433, %v1446
    %v1449 = vadd.f32 %v1445, %v1448
    %v1450 = vsel %vm329, %v717, %v825
    %vm1451 = vcmask 1043456
    %v1452 = vsel %vm1451, %v1450, %v928
    %vm1453 = vcmask 1045504
    %v1454 = vsel %vm1453, %v1452, %v1031
    %v1455 = vsel %vm329, %v1135, %v1243
    %v1456 = vsel %vm1451, %v1455, %v1346
    %v1457 = vsel %vm1453, %v1456, %v1449
    %v1459 = vrot.slane %v1449, 6
    %v1461 = vrot.slane %v1346, 2
    %v1463 = vrot.slane %v1135, 2
    %v1465 = vrot.slane %v928, 2
    %v1467 = vrot.slane %v717, 2
    %v1469 = vsel %vm329, %v1459, %v1461
    %v1470 = vsel %vm1451, %v1469, %v1343
    %v1471 = vsel %vm1453, %v1470, %v1463
    %v1472 = vsel %vm329, %v1041, %v1465
    %v1473 = vsel %vm1451, %v1472, %v925
    %v1474 = vsel %vm1453, %v1473, %v1467
    %1477 = vrot.lane.b32.xlu0 %v1454, 64
    %v1478 = vpop.permute.xlu0 %1477
    %1479 = vrot.lane.b32.xlu0 %v1457, 64
    %v1480 = vpop.permute.xlu0 %1479
    %1485 = vrot.lane.b32.xlu0 %v1471, 64
    %v1486 = vpop.permute.xlu0 %1485
    %1487 = vrot.lane.b32.xlu0 %v1474, 64
    %v1488 = vpop.permute.xlu0 %1487
    %vm1491 = vcmask 261120
    %v1492 = vsel %vm1491, %v1478, %v1486
    %v1493 = vsel %vm1491, %v1480, %v1488
    %v1494 = vld [vmem:[%s15] sm:$0xff]
    %v1495 = vld [vmem:[%s15 + $0x8] sm:$0xff]
    %v1496 = vld [vmem:[%s15 + $0x10] sm:$0xff]
    %v1497 = vld [vmem:[%s15 + $0x18] sm:$0xff]
    %v1498 = vld [vmem:[%s15 + $0x20] sm:$0xff]
    %v1499 = vld [vmem:[%s15 + $0x28] sm:$0xff]
    %v1500 = vld [vmem:[%s15 + $0x30] sm:$0xff]
    %v1501 = vld [vmem:[%s15 + $0x38] sm:$0xff]
    %v1502 = vld [vmem:[%s15 + $0x40] sm:$0xff]
    %v1503 = vld [vmem:[%s15 + $0x48] sm:$0xff]
    %v1504 = vld [vmem:[%s15 + $0x50] sm:$0xff]
    %v1505 = vld [vmem:[%s15 + $0x58] sm:$0xff]
    %v1506 = vld [vmem:[%s15 + $0x60] sm:$0xff]
    %v1507 = vld [vmem:[%s15 + $0x68] sm:$0xff]
    %v1508 = vld [vmem:[%s15 + $0x70] sm:$0xff]
    %v1509 = vld [vmem:[%s15 + $0x78] sm:$0xff]
    %v1510 = vld [vmem:[%s19] sm:$0x3]
    %v1512 = vlaneseq
    %v1513 = vshrl.u32 %v1512, 7
    %v1514 = vsub.s32 0, %v1513
    %v1515 = vrot.slane %v1510, %v1514
    %v1516 = vlaneseq
    %v1517 = vshrl.u32 %v1516, 7
    %v1518 = vsub.s32 1, %v1517
    %v1519 = vrot.slane %v1510, %v1518
    %v1523 = vsel %vm625, %v1492, 0
    %v1526 = vsel %vm625, %v1493, 0
    %1528 = vmatprep.subr.mxu0 %v1495
    %1529 = vmatpush1.msra.mxu0 %v1494
    %1530 = vmatprep.subr.mxu0 %v1497
    %1531 = vmatpush1.msra.mxu0 %v1496
    %1532 = vmatprep.subr.mxu0 %v1499
    %1533 = vmatpush1.msra.mxu0 %v1498
    %1534 = vmatprep.subr.mxu0 %v1501
    %1535 = vmatpush1.msra.mxu0 %v1500
    %1536 = vmatprep.subr.mxu0 %v1503
    %1537 = vmatpush1.msra.mxu0 %v1502
    %1538 = vmatprep.subr.mxu0 %v1505
    %1539 = vmatpush1.msra.mxu0 %v1504
    %1540 = vmatprep.subr.mxu0 %v1507
    %1541 = vmatpush1.msra.mxu0 %v1506
    %1542 = vmatprep.subr.mxu0 %v1509
    %1543 = vmatpush1.msra.mxu0 %v1508
    %1544 = vmatprep.subr.mxu0 0.0
    %1545 = vmatpush1.msra.mxu0 0.0
    %1546 = vmatprep.subr.mxu0 0.0
    %1547 = vmatpush1.msra.mxu0 0.0
    %1548 = vmatprep.subr.mxu0 0.0
    %1549 = vmatpush1.msra.mxu0 0.0
    %1550 = vmatprep.subr.mxu0 0.0
    %1551 = vmatpush1.msra.mxu0 0.0
    %1552 = vmatprep.subr.mxu0 0.0
    %1553 = vmatpush1.msra.mxu0 0.0
    %1554 = vmatprep.subr.mxu0 0.0
    %1555 = vmatpush1.msra.mxu0 0.0
    %1556 = vmatprep.subr.mxu0 0.0
    %1557 = vmatpush1.msra.mxu0 0.0
    %1558 = vmatprep.subr.mxu0 0.0
    %1559 = vmatpush1.msra.mxu0 0.0
    %1560 = vmatprep.subr.mxu0 0.0
    %1561 = vmatpush1.msra.mxu0 0.0
    %1562 = vmatprep.subr.mxu0 0.0
    %1563 = vmatpush1.msra.mxu0 0.0
    %1564 = vmatprep.subr.mxu0 0.0
    %1565 = vmatpush1.msra.mxu0 0.0
    %1566 = vmatprep.subr.mxu0 0.0
    %1567 = vmatpush1.msra.mxu0 0.0
    %1568 = vmatprep.subr.mxu0 0.0
    %1569 = vmatpush1.msra.mxu0 0.0
    %1570 = vmatprep.subr.mxu0 0.0
    %1571 = vmatpush1.msra.mxu0 0.0
    %1572 = vmatprep.subr.mxu0 0.0
    %1573 = vmatpush1.msra.mxu0 0.0
    %1574 = vmatprep.subr.mxu0 0.0
    %1575 = vmatpush1.msra.mxu0 0.0
    %1576 = vmatprep.subr.mxu0 0.0
    %1577 = vmatpush1.msra.mxu0 0.0
    %1578 = vmatprep.subr.mxu0 0.0
    %1579 = vmatpush1.msra.mxu0 0.0
    %1580 = vmatprep.subr.mxu0 0.0
    %1581 = vmatpush1.msra.mxu0 0.0
    %1582 = vmatprep.subr.mxu0 0.0
    %1583 = vmatpush1.msra.mxu0 0.0
    %1584 = vmatprep.subr.mxu0 0.0
    %1585 = vmatpush1.msra.mxu0 0.0
    %1586 = vmatprep.subr.mxu0 0.0
    %1587 = vmatpush1.msra.mxu0 0.0
    %1588 = vmatprep.subr.mxu0 0.0
    %1589 = vmatpush1.msra.mxu0 0.0
    %1590 = vmatprep.subr.mxu0 0.0
    %1591 = vmatpush1.msra.mxu0 0.0
    %1592 = vmatprep.mubr.f32.mxu0 0.0
    %1593 = vmatmul.mubr.f32.gmra.mrb[0].mxu0 %v1523
    %v1594 = vpop.f32.mrb[0].mxu0
    %v1595 = vadd.f32 %v1515, %v1594
    %v1596 = vpop.f32.mrb[0].mxu0
    %v1597 = vadd.f32 %v1519, %v1596
    %1598 = vmatprep.mubr.f32.mxu0 0.0
    %1599 = vmatmul.mubr.f32.gmra.mrb[0].mxu0 %v1526
    %v1600 = vpop.f32.mrb[0].mxu0
    %v1601 = vadd.f32 %v1515, %v1600
    %v1602 = vpop.f32.mrb[0].mxu0
    %v1603 = vadd.f32 %v1519, %v1602
    %1604 = vdwg.mxu0
    %v1605 = vld [vmem:[%s17] sm:$0xff]
    %v1606 = vld [vmem:[%s17 + $0x8] sm:$0xff]
    %v1607 = vld [vmem:[%s17 + $0x10] sm:$0xff]
    %v1608 = vld [vmem:[%s17 + $0x18] sm:$0xff]
    %v1609 = vld [vmem:[%s17 + $0x20] sm:$0xff]
    %v1610 = vld [vmem:[%s17 + $0x28] sm:$0xff]
    %v1611 = vld [vmem:[%s17 + $0x30] sm:$0xff]
    %v1612 = vld [vmem:[%s17 + $0x38] sm:$0xff]
    %v1613 = vld [vmem:[%s17 + $0x40] sm:$0xff]
    %v1614 = vld [vmem:[%s17 + $0x48] sm:$0xff]
    %v1615 = vld [vmem:[%s17 + $0x50] sm:$0xff]
    %v1616 = vld [vmem:[%s17 + $0x58] sm:$0xff]
    %v1617 = vld [vmem:[%s17 + $0x60] sm:$0xff]
    %v1618 = vld [vmem:[%s17 + $0x68] sm:$0xff]
    %v1619 = vld [vmem:[%s17 + $0x70] sm:$0xff]
    %v1620 = vld [vmem:[%s17 + $0x78] sm:$0xff]
    %1621 = vmatprep.subr.mxu0 %v1606
    %1622 = vmatpush1.msra.mxu0 %v1605
    %1623 = vmatprep.subr.mxu0 %v1608
    %1624 = vmatpush1.msra.mxu0 %v1607
    %1625 = vmatprep.subr.mxu0 %v1610
    %1626 = vmatpush1.msra.mxu0 %v1609
    %1627 = vmatprep.subr.mxu0 %v1612
    %1628 = vmatpush1.msra.mxu0 %v1611
    %1629 = vmatprep.subr.mxu0 %v1614
    %1630 = vmatpush1.msra.mxu0 %v1613
    %1631 = vmatprep.subr.mxu0 %v1616
    %1632 = vmatpush1.msra.mxu0 %v1615
    %1633 = vmatprep.subr.mxu0 %v1618
    %1634 = vmatpush1.msra.mxu0 %v1617
    %1635 = vmatprep.subr.mxu0 %v1620
    %1636 = vmatpush1.msra.mxu0 %v1619
    %1637 = vmatprep.subr.mxu0 0.0
    %1638 = vmatpush1.msra.mxu0 0.0
    %1639 = vmatprep.subr.mxu0 0.0
    %1640 = vmatpush1.msra.mxu0 0.0
    %1641 = vmatprep.subr.mxu0 0.0
    %1642 = vmatpush1.msra.mxu0 0.0
    %1643 = vmatprep.subr.mxu0 0.0
    %1644 = vmatpush1.msra.mxu0 0.0
    %1645 = vmatprep.subr.mxu0 0.0
    %1646 = vmatpush1.msra.mxu0 0.0
    %1647 = vmatprep.subr.mxu0 0.0
    %1648 = vmatpush1.msra.mxu0 0.0
    %1649 = vmatprep.subr.mxu0 0.0
    %1650 = vmatpush1.msra.mxu0 0.0
    %1651 = vmatprep.subr.mxu0 0.0
    %1652 = vmatpush1.msra.mxu0 0.0
    %1653 = vmatprep.subr.mxu0 0.0
    %1654 = vmatpush1.msra.mxu0 0.0
    %1655 = vmatprep.subr.mxu0 0.0
    %1656 = vmatpush1.msra.mxu0 0.0
    %1657 = vmatprep.subr.mxu0 0.0
    %1658 = vmatpush1.msra.mxu0 0.0
    %1659 = vmatprep.subr.mxu0 0.0
    %1660 = vmatpush1.msra.mxu0 0.0
    %1661 = vmatprep.subr.mxu0 0.0
    %1662 = vmatpush1.msra.mxu0 0.0
    %1663 = vmatprep.subr.mxu0 0.0
    %1664 = vmatpush1.msra.mxu0 0.0
    %1665 = vmatprep.subr.mxu0 0.0
    %1666 = vmatpush1.msra.mxu0 0.0
    %1667 = vmatprep.subr.mxu0 0.0
    %1668 = vmatpush1.msra.mxu0 0.0
    %1669 = vmatprep.subr.mxu0 0.0
    %1670 = vmatpush1.msra.mxu0 0.0
    %1671 = vmatprep.subr.mxu0 0.0
    %1672 = vmatpush1.msra.mxu0 0.0
    %1673 = vmatprep.subr.mxu0 0.0
    %1674 = vmatpush1.msra.mxu0 0.0
    %1675 = vmatprep.subr.mxu0 0.0
    %1676 = vmatpush1.msra.mxu0 0.0
    %1677 = vmatprep.subr.mxu0 0.0
    %1678 = vmatpush1.msra.mxu0 0.0
    %1679 = vmatprep.subr.mxu0 0.0
    %1680 = vmatpush1.msra.mxu0 0.0
    %1681 = vmatprep.subr.mxu0 0.0
    %1682 = vmatpush1.msra.mxu0 0.0
    %1683 = vmatprep.subr.mxu0 0.0
    %1684 = vmatpush1.msra.mxu0 0.0
    %1685 = vmatprep.mubr.f32.mxu0 0.0
    %1686 = vmatmul.mubr.f32.gmra.mrb[0].mxu0 %v1523
    %v1687 = vpop.f32.mrb[0].mxu0
    %v1688 = vadd.f32 0.0, %v1687
    %v1689 = vpop.f32.mrb[0].mxu0
    %v1690 = vadd.f32 0.0, %v1689
    %1691 = vmatprep.mubr.f32.mxu0 0.0
    %1692 = vmatmul.mubr.f32.gmra.mrb[0].mxu0 %v1526
    %v1693 = vpop.f32.mrb[0].mxu0
    %v1694 = vadd.f32 0.0, %v1693
    %v1695 = vpop.f32.mrb[0].mxu0
    %v1696 = vadd.f32 0.0, %v1695
    %1697 = vdwg.mxu0
    %v1698 = vld [vmem:[%s21] sm:$0xff]
    %v1699 = vld [vmem:[%s21 + $0x8] sm:$0xff]
    %v1700 = vld [vmem:[%s21 + $0x10] sm:$0xff]
    %v1701 = vld [vmem:[%s21 + $0x18] sm:$0xff]
    %v1702 = vld [vmem:[%s21 + $0x20] sm:$0xff]
    %v1703 = vld [vmem:[%s21 + $0x28] sm:$0xff]
    %v1704 = vld [vmem:[%s21 + $0x30] sm:$0xff]
    %v1705 = vld [vmem:[%s21 + $0x38] sm:$0xff]
    %v1706 = vld [vmem:[%s21 + $0x40] sm:$0xff]
    %v1707 = vld [vmem:[%s21 + $0x48] sm:$0xff]
    %v1708 = vld [vmem:[%s21 + $0x50] sm:$0xff]
    %v1709 = vld [vmem:[%s21 + $0x58] sm:$0xff]
    %v1710 = vld [vmem:[%s21 + $0x60] sm:$0xff]
    %v1711 = vld [vmem:[%s21 + $0x68] sm:$0xff]
    %v1712 = vld [vmem:[%s21 + $0x70] sm:$0xff]
    %v1713 = vld [vmem:[%s21 + $0x78] sm:$0xff]
    %v1714 = vld [vmem:[%s23] sm:$0x3]
    %v1716 = vlaneseq
    %v1717 = vshrl.u32 %v1716, 7
    %v1718 = vsub.s32 0, %v1717
    %v1719 = vrot.slane %v1714, %v1718
    %v1720 = vlaneseq
    %v1721 = vshrl.u32 %v1720, 7
    %v1722 = vsub.s32 1, %v1721
    %v1723 = vrot.slane %v1714, %v1722
    %v1728 = vrot.slane %v1694, 6
    %v1729 = vrot.slane %v1696, 6
    %v1732 = vadd.f32 %v1595, %v1728
    %v1733 = vadd.f32 %v1597, %v1729
    %1734 = vmatprep.subr.mxu0 %v1699
    %1735 = vmatpush1.msra.mxu0 %v1698
    %1736 = vmatprep.subr.mxu0 %v1701
    %1737 = vmatpush1.msra.mxu0 %v1700
    %1738 = vmatprep.subr.mxu0 %v1703
    %1739 = vmatpush1.msra.mxu0 %v1702
    %1740 = vmatprep.subr.mxu0 %v1705
    %1741 = vmatpush1.msra.mxu0 %v1704
    %1742 = vmatprep.subr.mxu0 %v1707
    %1743 = vmatpush1.msra.mxu0 %v1706
    %1744 = vmatprep.subr.mxu0 %v1709
    %1745 = vmatpush1.msra.mxu0 %v1708
    %1746 = vmatprep.subr.mxu0 %v1711
    %1747 = vmatpush1.msra.mxu0 %v1710
    %1748 = vmatprep.subr.mxu0 %v1713
    %1749 = vmatpush1.msra.mxu0 %v1712
    %1750 = vmatprep.subr.mxu0 0.0
    %1751 = vmatpush1.msra.mxu0 0.0
    %1752 = vmatprep.subr.mxu0 0.0
    %1753 = vmatpush1.msra.mxu0 0.0
    %1754 = vmatprep.subr.mxu0 0.0
    %1755 = vmatpush1.msra.mxu0 0.0
    %1756 = vmatprep.subr.mxu0 0.0
    %1757 = vmatpush1.msra.mxu0 0.0
    %1758 = vmatprep.subr.mxu0 0.0
    %1759 = vmatpush1.msra.mxu0 0.0
    %1760 = vmatprep.subr.mxu0 0.0
    %1761 = vmatpush1.msra.mxu0 0.0
    %1762 = vmatprep.subr.mxu0 0.0
    %1763 = vmatpush1.msra.mxu0 0.0
    %1764 = vmatprep.subr.mxu0 0.0
    %1765 = vmatpush1.msra.mxu0 0.0
    %1766 = vmatprep.subr.mxu0 0.0
    %1767 = vmatpush1.msra.mxu0 0.0
    %1768 = vmatprep.subr.mxu0 0.0
    %1769 = vmatpush1.msra.mxu0 0.0
    %1770 = vmatprep.subr.mxu0 0.0
    %1771 = vmatpush1.msra.mxu0 0.0
    %1772 = vmatprep.subr.mxu0 0.0
    %1773 = vmatpush1.msra.mxu0 0.0
    %1774 = vmatprep.subr.mxu0 0.0
    %1775 = vmatpush1.msra.mxu0 0.0
    %1776 = vmatprep.subr.mxu0 0.0
    %1777 = vmatpush1.msra.mxu0 0.0
    %1778 = vmatprep.subr.mxu0 0.0
    %1779 = vmatpush1.msra.mxu0 0.0
    %1780 = vmatprep.subr.mxu0 0.0
    %1781 = vmatpush1.msra.mxu0 0.0
    %1782 = vmatprep.subr.mxu0 0.0
    %1783 = vmatpush1.msra.mxu0 0.0
    %1784 = vmatprep.subr.mxu0 0.0
    %1785 = vmatpush1.msra.mxu0 0.0
    %1786 = vmatprep.subr.mxu0 0.0
    %1787 = vmatpush1.msra.mxu0 0.0
    %1788 = vmatprep.subr.mxu0 0.0
    %1789 = vmatpush1.msra.mxu0 0.0
    %1790 = vmatprep.subr.mxu0 0.0
    %1791 = vmatpush1.msra.mxu0 0.0
    %1792 = vmatprep.subr.mxu0 0.0
    %1793 = vmatpush1.msra.mxu0 0.0
    %1794 = vmatprep.subr.mxu0 0.0
    %1795 = vmatpush1.msra.mxu0 0.0
    %1796 = vmatprep.subr.mxu0 0.0
    %1797 = vmatpush1.msra.mxu0 0.0
    %1798 = vmatprep.mubr.f32.mxu0 0.0
    %1799 = vmatmul.mubr.f32.gmra.mrb[0].mxu0 %v627
    %v1800 = vpop.f32.mrb[0].mxu0
    %v1801 = vadd.f32 %v1719, %v1800
    %v1802 = vpop.f32.mrb[0].mxu0
    %v1803 = vadd.f32 %v1723, %v1802
    %1804 = vdwg.mxu0
    %v1805 = vadd.f32 %v1732, %v1801
    %v1806 = vxor.u32 %v1805, 2147483648
    %v1807 = vmul.f32 %v1806, 1.442695
    %v1808 = vpow.pop %v1807
    %v1809 = vadd.f32 %v1808, 1.0
    %v1810 = vrcp.pop %v1809
    %v1811 = vmul.f32 1.0, %v1810
    %v1812 = vmul.f32 %v1811, %v1803
    %v1813 = vadd.f32 %v1733, %v1812
    %v1814 = vtanh.pop %v1813
    %v1815 = vsub.f32 1.0, %v1811
    %1817 = vrot.lane.b32.xlu0 %v1814, 64
    %v1818 = vpop.permute.xlu0 %1817
    %v1820 = vmul.f32 %v1815, %v1818
    %v1821 = vmul.f32 %v1811, 0.0
    %v1822 = vadd.f32 %v1820, %v1821
    %v1823 = vrot.slane %v1694, 2
    %v1824 = vrot.slane %v1696, 2
    %v1827 = vadd.f32 %v1595, %v1823
    %v1828 = vadd.f32 %v1597, %v1824
    %1830 = vrot.lane.b32.xlu0 %v1822, 64
    %v1831 = vpop.permute.xlu0 %1830
    %v1832 = vsel %vm625, %v1831, 0
    %1834 = vmatprep.subr.mxu0 %v1699
    %1835 = vmatpush1.msra.mxu0 %v1698
    %1836 = vmatprep.subr.mxu0 %v1701
    %1837 = vmatpush1.msra.mxu0 %v1700
    %1838 = vmatprep.subr.mxu0 %v1703
    %1839 = vmatpush1.msra.mxu0 %v1702
    %1840 = vmatprep.subr.mxu0 %v1705
    %1841 = vmatpush1.msra.mxu0 %v1704
    %1842 = vmatprep.subr.mxu0 %v1707
    %1843 = vmatpush1.msra.mxu0 %v1706
    %1844 = vmatprep.subr.mxu0 %v1709
    %1845 = vmatpush1.msra.mxu0 %v1708
    %1846 = vmatprep.subr.mxu0 %v1711
    %1847 = vmatpush1.msra.mxu0 %v1710
    %1848 = vmatprep.subr.mxu0 %v1713
    %1849 = vmatpush1.msra.mxu0 %v1712
    %1850 = vmatprep.subr.mxu0 0.0
    %1851 = vmatpush1.msra.mxu0 0.0
    %1852 = vmatprep.subr.mxu0 0.0
    %1853 = vmatpush1.msra.mxu0 0.0
    %1854 = vmatprep.subr.mxu0 0.0
    %1855 = vmatpush1.msra.mxu0 0.0
    %1856 = vmatprep.subr.mxu0 0.0
    %1857 = vmatpush1.msra.mxu0 0.0
    %1858 = vmatprep.subr.mxu0 0.0
    %1859 = vmatpush1.msra.mxu0 0.0
    %1860 = vmatprep.subr.mxu0 0.0
    %1861 = vmatpush1.msra.mxu0 0.0
    %1862 = vmatprep.subr.mxu0 0.0
    %1863 = vmatpush1.msra.mxu0 0.0
    %1864 = vmatprep.subr.mxu0 0.0
    %1865 = vmatpush1.msra.mxu0 0.0
    %1866 = vmatprep.subr.mxu0 0.0
    %1867 = vmatpush1.msra.mxu0 0.0
    %1868 = vmatprep.subr.mxu0 0.0
    %1869 = vmatpush1.msra.mxu0 0.0
    %1870 = vmatprep.subr.mxu0 0.0
    %1871 = vmatpush1.msra.mxu0 0.0
    %1872 = vmatprep.subr.mxu0 0.0
    %1873 = vmatpush1.msra.mxu0 0.0
    %1874 = vmatprep.subr.mxu0 0.0
    %1875 = vmatpush1.msra.mxu0 0.0
    %1876 = vmatprep.subr.mxu0 0.0
    %1877 = vmatpush1.msra.mxu0 0.0
    %1878 = vmatprep.subr.mxu0 0.0
    %1879 = vmatpush1.msra.mxu0 0.0
    %1880 = vmatprep.subr.mxu0 0.0
    %1881 = vmatpush1.msra.mxu0 0.0
    %1882 = vmatprep.subr.mxu0 0.0
    %1883 = vmatpush1.msra.mxu0 0.0
    %1884 = vmatprep.subr.mxu0 0.0
    %1885 = vmatpush1.msra.mxu0 0.0
    %1886 = vmatprep.subr.mxu0 0.0
    %1887 = vmatpush1.msra.mxu0 0.0
    %1888 = vmatprep.subr.mxu0 0.0
    %1889 = vmatpush1.msra.mxu0 0.0
    %1890 = vmatprep.subr.mxu0 0.0
    %1891 = vmatpush1.msra.mxu0 0.0
    %1892 = vmatprep.subr.mxu0 0.0
    %1893 = vmatpush1.msra.mxu0 0.0
    %1894 = vmatprep.subr.mxu0 0.0
    %1895 = vmatpush1.msra.mxu0 0.0
    %1896 = vmatprep.subr.mxu0 0.0
    %1897 = vmatpush1.msra.mxu0 0.0
    %1898 = vmatprep.mubr.f32.mxu0 0.0
    %1899 = vmatmul.mubr.f32.gmra.mrb[0].mxu0 %v1832
    %v1900 = vpop.f32.mrb[0].mxu0
    %v1901 = vadd.f32 %v1719, %v1900
    %v1902 = vpop.f32.mrb[0].mxu0
    %v1903 = vadd.f32 %v1723, %v1902
    %1904 = vdwg.mxu0
    %v1906 = vrot.slane %v1901, 6
    %v1908 = vadd.f32 %v1827, %v1906
    %v1909 = vxor.u32 %v1908, 2147483648
    %v1910 = vmul.f32 %v1909, 1.442695
    %v1911 = vpow.pop %v1910
    %v1912 = vadd.f32 %v1911, 1.0
    %v1913 = vrcp.pop %v1912
    %v1914 = vmul.f32 1.0, %v1913
    %v1916 = vrot.slane %v1903, 6
    %v1918 = vmul.f32 %v1914, %v1916
    %v1919 = vadd.f32 %v1828, %v1918
    %v1920 = vtanh.pop %v1919
    %v1921 = vsub.f32 1.0, %v1914
    %1923 = vrot.lane.b32.xlu0 %v1920, 64
    %v1924 = vpop.permute.xlu0 %1923
    %v1926 = vmul.f32 %v1921, %v1924
    %v1927 = vrot.slane %v1822, 6
    %v1929 = vmul.f32 %v1914, %v1927
    %v1930 = vadd.f32 %v1926, %v1929
    %v1932 = vrot.slane %v1930, 2
    %1933 = vrot.lane.b32.xlu0 %v1932, 64
    %v1934 = vpop.permute.xlu0 %1933
    %v1935 = vsel %vm625, %v1934, 0
    %1937 = vmatprep.subr.mxu0 %v1699
    %1938 = vmatpush1.msra.mxu0 %v1698
    %1939 = vmatprep.subr.mxu0 %v1701
    %1940 = vmatpush1.msra.mxu0 %v1700
    %1941 = vmatprep.subr.mxu0 %v1703
    %1942 = vmatpush1.msra.mxu0 %v1702
    %1943 = vmatprep.subr.mxu0 %v1705
    %1944 = vmatpush1.msra.mxu0 %v1704
    %1945 = vmatprep.subr.mxu0 %v1707
    %1946 = vmatpush1.msra.mxu0 %v1706
    %1947 = vmatprep.subr.mxu0 %v1709
    %1948 = vmatpush1.msra.mxu0 %v1708
    %1949 = vmatprep.subr.mxu0 %v1711
    %1950 = vmatpush1.msra.mxu0 %v1710
    %1951 = vmatprep.subr.mxu0 %v1713
    %1952 = vmatpush1.msra.mxu0 %v1712
    %1953 = vmatprep.subr.mxu0 0.0
    %1954 = vmatpush1.msra.mxu0 0.0
    %1955 = vmatprep.subr.mxu0 0.0
    %1956 = vmatpush1.msra.mxu0 0.0
    %1957 = vmatprep.subr.mxu0 0.0
    %1958 = vmatpush1.msra.mxu0 0.0
    %1959 = vmatprep.subr.mxu0 0.0
    %1960 = vmatpush1.msra.mxu0 0.0
    %1961 = vmatprep.subr.mxu0 0.0
    %1962 = vmatpush1.msra.mxu0 0.0
    %1963 = vmatprep.subr.mxu0 0.0
    %1964 = vmatpush1.msra.mxu0 0.0
    %1965 = vmatprep.subr.mxu0 0.0
    %1966 = vmatpush1.msra.mxu0 0.0
    %1967 = vmatprep.subr.mxu0 0.0
    %1968 = vmatpush1.msra.mxu0 0.0
    %1969 = vmatprep.subr.mxu0 0.0
    %1970 = vmatpush1.msra.mxu0 0.0
    %1971 = vmatprep.subr.mxu0 0.0
    %1972 = vmatpush1.msra.mxu0 0.0
    %1973 = vmatprep.subr.mxu0 0.0
    %1974 = vmatpush1.msra.mxu0 0.0
    %1975 = vmatprep.subr.mxu0 0.0
    %1976 = vmatpush1.msra.mxu0 0.0
    %1977 = vmatprep.subr.mxu0 0.0
    %1978 = vmatpush1.msra.mxu0 0.0
    %1979 = vmatprep.subr.mxu0 0.0
    %1980 = vmatpush1.msra.mxu0 0.0
    %1981 = vmatprep.subr.mxu0 0.0
    %1982 = vmatpush1.msra.mxu0 0.0
    %1983 = vmatprep.subr.mxu0 0.0
    %1984 = vmatpush1.msra.mxu0 0.0
    %1985 = vmatprep.subr.mxu0 0.0
    %1986 = vmatpush1.msra.mxu0 0.0
    %1987 = vmatprep.subr.mxu0 0.0
    %1988 = vmatpush1.msra.mxu0 0.0
    %1989 = vmatprep.subr.mxu0 0.0
    %1990 = vmatpush1.msra.mxu0 0.0
    %1991 = vmatprep.subr.mxu0 0.0
    %1992 = vmatpush1.msra.mxu0 0.0
    %1993 = vmatprep.subr.mxu0 0.0
    %1994 = vmatpush1.msra.mxu0 0.0
    %1995 = vmatprep.subr.mxu0 0.0
    %1996 = vmatpush1.msra.mxu0 0.0
    %1997 = vmatprep.subr.mxu0 0.0
    %1998 = vmatpush1.msra.mxu0 0.0
    %1999 = vmatprep.subr.mxu0 0.0
    %2000 = vmatpush1.msra.mxu0 0.0
    %2001 = vmatprep.mubr.f32.mxu0 0.0
    %2002 = vmatmul.mubr.f32.gmra.mrb[0].mxu0 %v1935
    %v2003 = vpop.f32.mrb[0].mxu0
    %v2004 = vadd.f32 %v1719, %v2003
    %v2005 = vpop.f32.mrb[0].mxu0
    %v2006 = vadd.f32 %v1723, %v2005
    %2007 = vdwg.mxu0
    %v2009 = vrot.slane %v2004, 4
    %v2011 = vadd.f32 %v1732, %v2009
    %v2012 = vxor.u32 %v2011, 2147483648
    %v2013 = vmul.f32 %v2012, 1.442695
    %v2014 = vpow.pop %v2013
    %v2015 = vadd.f32 %v2014, 1.0
    %v2016 = vrcp.pop %v2015
    %v2017 = vmul.f32 1.0, %v2016
    %v2019 = vrot.slane %v2006, 4
    %v2021 = vmul.f32 %v2017, %v2019
    %v2022 = vadd.f32 %v1733, %v2021
    %v2023 = vtanh.pop %v2022
    %v2024 = vsub.f32 1.0, %v2017
    %2026 = vrot.lane.b32.xlu0 %v2023, 64
    %v2027 = vpop.permute.xlu0 %2026
    %v2029 = vmul.f32 %v2024, %v2027
    %v2030 = vrot.slane %v1930, 6
    %v2032 = vmul.f32 %v2017, %v2030
    %v2033 = vadd.f32 %v2029, %v2032
    %v2035 = vrot.slane %v2033, 4
    %2036 = vrot.lane.b32.xlu0 %v2035, 64
    %v2037 = vpop.permute.xlu0 %2036
    %v2038 = vsel %vm625, %v2037, 0
    %2040 = vmatprep.subr.mxu0 %v1699
    %2041 = vmatpush1.msra.mxu0 %v1698
    %2042 = vmatprep.subr.mxu0 %v1701
    %2043 = vmatpush1.msra.mxu0 %v1700
    %2044 = vmatprep.subr.mxu0 %v1703
    %2045 = vmatpush1.msra.mxu0 %v1702
    %2046 = vmatprep.subr.mxu0 %v1705
    %2047 = vmatpush1.msra.mxu0 %v1704
    %2048 = vmatprep.subr.mxu0 %v1707
    %2049 = vmatpush1.msra.mxu0 %v1706
    %2050 = vmatprep.subr.mxu0 %v1709
    %2051 = vmatpush1.msra.mxu0 %v1708
    %2052 = vmatprep.subr.mxu0 %v1711
    %2053 = vmatpush1.msra.mxu0 %v1710
    %2054 = vmatprep.subr.mxu0 %v1713
    %2055 = vmatpush1.msra.mxu0 %v1712
    %2056 = vmatprep.subr.mxu0 0.0
    %2057 = vmatpush1.msra.mxu0 0.0
    %2058 = vmatprep.subr.mxu0 0.0
    %2059 = vmatpush1.msra.mxu0 0.0
    %2060 = vmatprep.subr.mxu0 0.0
    %2061 = vmatpush1.msra.mxu0 0.0
    %2062 = vmatprep.subr.mxu0 0.0
    %2063 = vmatpush1.msra.mxu0 0.0
    %2064 = vmatprep.subr.mxu0 0.0
    %2065 = vmatpush1.msra.mxu0 0.0
    %2066 = vmatprep.subr.mxu0 0.0
    %2067 = vmatpush1.msra.mxu0 0.0
    %2068 = vmatprep.subr.mxu0 0.0
    %2069 = vmatpush1.msra.mxu0 0.0
    %2070 = vmatprep.subr.mxu0 0.0
    %2071 = vmatpush1.msra.mxu0 0.0
    %2072 = vmatprep.subr.mxu0 0.0
    %2073 = vmatpush1.msra.mxu0 0.0
    %2074 = vmatprep.subr.mxu0 0.0
    %2075 = vmatpush1.msra.mxu0 0.0
    %2076 = vmatprep.subr.mxu0 0.0
    %2077 = vmatpush1.msra.mxu0 0.0
    %2078 = vmatprep.subr.mxu0 0.0
    %2079 = vmatpush1.msra.mxu0 0.0
    %2080 = vmatprep.subr.mxu0 0.0
    %2081 = vmatpush1.msra.mxu0 0.0
    %2082 = vmatprep.subr.mxu0 0.0
    %2083 = vmatpush1.msra.mxu0 0.0
    %2084 = vmatprep.subr.mxu0 0.0
    %2085 = vmatpush1.msra.mxu0 0.0
    %2086 = vmatprep.subr.mxu0 0.0
    %2087 = vmatpush1.msra.mxu0 0.0
    %2088 = vmatprep.subr.mxu0 0.0
    %2089 = vmatpush1.msra.mxu0 0.0
    %2090 = vmatprep.subr.mxu0 0.0
    %2091 = vmatpush1.msra.mxu0 0.0
    %2092 = vmatprep.subr.mxu0 0.0
    %2093 = vmatpush1.msra.mxu0 0.0
    %2094 = vmatprep.subr.mxu0 0.0
    %2095 = vmatpush1.msra.mxu0 0.0
    %2096 = vmatprep.subr.mxu0 0.0
    %2097 = vmatpush1.msra.mxu0 0.0
    %2098 = vmatprep.subr.mxu0 0.0
    %2099 = vmatpush1.msra.mxu0 0.0
    %2100 = vmatprep.subr.mxu0 0.0
    %2101 = vmatpush1.msra.mxu0 0.0
    %2102 = vmatprep.subr.mxu0 0.0
    %2103 = vmatpush1.msra.mxu0 0.0
    %2104 = vmatprep.mubr.f32.mxu0 0.0
    %2105 = vmatmul.mubr.f32.gmra.mrb[0].mxu0 %v2038
    %v2106 = vpop.f32.mrb[0].mxu0
    %v2107 = vadd.f32 %v1719, %v2106
    %v2108 = vpop.f32.mrb[0].mxu0
    %v2109 = vadd.f32 %v1723, %v2108
    %2110 = vdwg.mxu0
    %v2112 = vrot.slane %v2107, 2
    %v2114 = vadd.f32 %v1827, %v2112
    %v2115 = vxor.u32 %v2114, 2147483648
    %v2116 = vmul.f32 %v2115, 1.442695
    %v2117 = vpow.pop %v2116
    %v2118 = vadd.f32 %v2117, 1.0
    %v2119 = vrcp.pop %v2118
    %v2120 = vmul.f32 1.0, %v2119
    %v2122 = vrot.slane %v2109, 2
    %v2124 = vmul.f32 %v2120, %v2122
    %v2125 = vadd.f32 %v1828, %v2124
    %v2126 = vtanh.pop %v2125
    %v2127 = vsub.f32 1.0, %v2120
    %2129 = vrot.lane.b32.xlu0 %v2126, 64
    %v2130 = vpop.permute.xlu0 %2129
    %v2132 = vmul.f32 %v2127, %v2130
    %v2133 = vrot.slane %v2033, 6
    %v2135 = vmul.f32 %v2120, %v2133
    %v2136 = vadd.f32 %v2132, %v2135
    %v2139 = vrot.slane %v1688, 6
    %v2140 = vrot.slane %v1690, 6
    %v2143 = vadd.f32 %v1601, %v2139
    %v2144 = vadd.f32 %v1603, %v2140
    %v2146 = vrot.slane %v2136, 6
    %2147 = vrot.lane.b32.xlu0 %v2146, 64
    %v2148 = vpop.permute.xlu0 %2147
    %v2149 = vsel %vm625, %v2148, 0
    %2151 = vmatprep.subr.mxu0 %v1699
    %2152 = vmatpush1.msra.mxu0 %v1698
    %2153 = vmatprep.subr.mxu0 %v1701
    %2154 = vmatpush1.msra.mxu0 %v1700
    %2155 = vmatprep.subr.mxu0 %v1703
    %2156 = vmatpush1.msra.mxu0 %v1702
    %2157 = vmatprep.subr.mxu0 %v1705
    %2158 = vmatpush1.msra.mxu0 %v1704
    %2159 = vmatprep.subr.mxu0 %v1707
    %2160 = vmatpush1.msra.mxu0 %v1706
    %2161 = vmatprep.subr.mxu0 %v1709
    %2162 = vmatpush1.msra.mxu0 %v1708
    %2163 = vmatprep.subr.mxu0 %v1711
    %2164 = vmatpush1.msra.mxu0 %v1710
    %2165 = vmatprep.subr.mxu0 %v1713
    %2166 = vmatpush1.msra.mxu0 %v1712
    %2167 = vmatprep.subr.mxu0 0.0
    %2168 = vmatpush1.msra.mxu0 0.0
    %2169 = vmatprep.subr.mxu0 0.0
    %2170 = vmatpush1.msra.mxu0 0.0
    %2171 = vmatprep.subr.mxu0 0.0
    %2172 = vmatpush1.msra.mxu0 0.0
    %2173 = vmatprep.subr.mxu0 0.0
    %2174 = vmatpush1.msra.mxu0 0.0
    %2175 = vmatprep.subr.mxu0 0.0
    %2176 = vmatpush1.msra.mxu0 0.0
    %2177 = vmatprep.subr.mxu0 0.0
    %2178 = vmatpush1.msra.mxu0 0.0
    %2179 = vmatprep.subr.mxu0 0.0
    %2180 = vmatpush1.msra.mxu0 0.0
    %2181 = vmatprep.subr.mxu0 0.0
    %2182 = vmatpush1.msra.mxu0 0.0
    %2183 = vmatprep.subr.mxu0 0.0
    %2184 = vmatpush1.msra.mxu0 0.0
    %2185 = vmatprep.subr.mxu0 0.0
    %2186 = vmatpush1.msra.mxu0 0.0
    %2187 = vmatprep.subr.mxu0 0.0
    %2188 = vmatpush1.msra.mxu0 0.0
    %2189 = vmatprep.subr.mxu0 0.0
    %2190 = vmatpush1.msra.mxu0 0.0
    %2191 = vmatprep.subr.mxu0 0.0
    %2192 = vmatpush1.msra.mxu0 0.0
    %2193 = vmatprep.subr.mxu0 0.0
    %2194 = vmatpush1.msra.mxu0 0.0
    %2195 = vmatprep.subr.mxu0 0.0
    %2196 = vmatpush1.msra.mxu0 0.0
    %2197 = vmatprep.subr.mxu0 0.0
    %2198 = vmatpush1.msra.mxu0 0.0
    %2199 = vmatprep.subr.mxu0 0.0
    %2200 = vmatpush1.msra.mxu0 0.0
    %2201 = vmatprep.subr.mxu0 0.0
    %2202 = vmatpush1.msra.mxu0 0.0
    %2203 = vmatprep.subr.mxu0 0.0
    %2204 = vmatpush1.msra.mxu0 0.0
    %2205 = vmatprep.subr.mxu0 0.0
    %2206 = vmatpush1.msra.mxu0 0.0
    %2207 = vmatprep.subr.mxu0 0.0
    %2208 = vmatpush1.msra.mxu0 0.0
    %2209 = vmatprep.subr.mxu0 0.0
    %2210 = vmatpush1.msra.mxu0 0.0
    %2211 = vmatprep.subr.mxu0 0.0
    %2212 = vmatpush1.msra.mxu0 0.0
    %2213 = vmatprep.subr.mxu0 0.0
    %2214 = vmatpush1.msra.mxu0 0.0
    %2215 = vmatprep.mubr.f32.mxu0 0.0
    %2216 = vmatmul.mubr.f32.gmra.mrb[0].mxu0 %v2149
    %v2217 = vpop.f32.mrb[0].mxu0
    %v2218 = vadd.f32 %v1719, %v2217
    %v2219 = vpop.f32.mrb[0].mxu0
    %v2220 = vadd.f32 %v1723, %v2219
    %2221 = vdwg.mxu0
    %v2222 = vadd.f32 %v2143, %v2218
    %v2223 = vxor.u32 %v2222, 2147483648
    %v2224 = vmul.f32 %v2223, 1.442695
    %v2225 = vpow.pop %v2224
    %v2226 = vadd.f32 %v2225, 1.0
    %v2227 = vrcp.pop %v2226
    %v2228 = vmul.f32 1.0, %v2227
    %v2229 = vmul.f32 %v2228, %v2220
    %v2230 = vadd.f32 %v2144, %v2229
    %v2231 = vtanh.pop %v2230
    %v2232 = vsub.f32 1.0, %v2228
    %2234 = vrot.lane.b32.xlu0 %v2231, 64
    %v2235 = vpop.permute.xlu0 %2234
    %v2237 = vmul.f32 %v2232, %v2235
    %v2239 = vmul.f32 %v2228, %v2146
    %v2240 = vadd.f32 %v2237, %v2239
    %v2241 = vrot.slane %v1688, 2
    %v2242 = vrot.slane %v1690, 2
    %v2245 = vadd.f32 %v1601, %v2241
    %v2246 = vadd.f32 %v1603, %v2242
    %2248 = vrot.lane.b32.xlu0 %v2240, 64
    %v2249 = vpop.permute.xlu0 %2248
    %v2250 = vsel %vm625, %v2249, 0
    %2252 = vmatprep.subr.mxu0 %v1699
    %2253 = vmatpush1.msra.mxu0 %v1698
    %2254 = vmatprep.subr.mxu0 %v1701
    %2255 = vmatpush1.msra.mxu0 %v1700
    %2256 = vmatprep.subr.mxu0 %v1703
    %2257 = vmatpush1.msra.mxu0 %v1702
    %2258 = vmatprep.subr.mxu0 %v1705
    %2259 = vmatpush1.msra.mxu0 %v1704
    %2260 = vmatprep.subr.mxu0 %v1707
    %2261 = vmatpush1.msra.mxu0 %v1706
    %2262 = vmatprep.subr.mxu0 %v1709
    %2263 = vmatpush1.msra.mxu0 %v1708
    %2264 = vmatprep.subr.mxu0 %v1711
    %2265 = vmatpush1.msra.mxu0 %v1710
    %2266 = vmatprep.subr.mxu0 %v1713
    %2267 = vmatpush1.msra.mxu0 %v1712
    %2268 = vmatprep.subr.mxu0 0.0
    %2269 = vmatpush1.msra.mxu0 0.0
    %2270 = vmatprep.subr.mxu0 0.0
    %2271 = vmatpush1.msra.mxu0 0.0
    %2272 = vmatprep.subr.mxu0 0.0
    %2273 = vmatpush1.msra.mxu0 0.0
    %2274 = vmatprep.subr.mxu0 0.0
    %2275 = vmatpush1.msra.mxu0 0.0
    %2276 = vmatprep.subr.mxu0 0.0
    %2277 = vmatpush1.msra.mxu0 0.0
    %2278 = vmatprep.subr.mxu0 0.0
    %2279 = vmatpush1.msra.mxu0 0.0
    %2280 = vmatprep.subr.mxu0 0.0
    %2281 = vmatpush1.msra.mxu0 0.0
    %2282 = vmatprep.subr.mxu0 0.0
    %2283 = vmatpush1.msra.mxu0 0.0
    %2284 = vmatprep.subr.mxu0 0.0
    %2285 = vmatpush1.msra.mxu0 0.0
    %2286 = vmatprep.subr.mxu0 0.0
    %2287 = vmatpush1.msra.mxu0 0.0
    %2288 = vmatprep.subr.mxu0 0.0
    %2289 = vmatpush1.msra.mxu0 0.0
    %2290 = vmatprep.subr.mxu0 0.0
    %2291 = vmatpush1.msra.mxu0 0.0
    %2292 = vmatprep.subr.mxu0 0.0
    %2293 = vmatpush1.msra.mxu0 0.0
    %2294 = vmatprep.subr.mxu0 0.0
    %2295 = vmatpush1.msra.mxu0 0.0
    %2296 = vmatprep.subr.mxu0 0.0
    %2297 = vmatpush1.msra.mxu0 0.0
    %2298 = vmatprep.subr.mxu0 0.0
    %2299 = vmatpush1.msra.mxu0 0.0
    %2300 = vmatprep.subr.mxu0 0.0
    %2301 = vmatpush1.msra.mxu0 0.0
    %2302 = vmatprep.subr.mxu0 0.0
    %2303 = vmatpush1.msra.mxu0 0.0
    %2304 = vmatprep.subr.mxu0 0.0
    %2305 = vmatpush1.msra.mxu0 0.0
    %2306 = vmatprep.subr.mxu0 0.0
    %2307 = vmatpush1.msra.mxu0 0.0
    %2308 = vmatprep.subr.mxu0 0.0
    %2309 = vmatpush1.msra.mxu0 0.0
    %2310 = vmatprep.subr.mxu0 0.0
    %2311 = vmatpush1.msra.mxu0 0.0
    %2312 = vmatprep.subr.mxu0 0.0
    %2313 = vmatpush1.msra.mxu0 0.0
    %2314 = vmatprep.subr.mxu0 0.0
    %2315 = vmatpush1.msra.mxu0 0.0
    %2316 = vmatprep.mubr.f32.mxu0 0.0
    %2317 = vmatmul.mubr.f32.gmra.mrb[0].mxu0 %v2250
    %v2318 = vpop.f32.mrb[0].mxu0
    %v2319 = vadd.f32 %v1719, %v2318
    %v2320 = vpop.f32.mrb[0].mxu0
    %v2321 = vadd.f32 %v1723, %v2320
    %2322 = vdwg.mxu0
    %v2324 = vrot.slane %v2319, 6
    %v2326 = vadd.f32 %v2245, %v2324
    %v2327 = vxor.u32 %v2326, 2147483648
    %v2328 = vmul.f32 %v2327, 1.442695
    %v2329 = vpow.pop %v2328
    %v2330 = vadd.f32 %v2329, 1.0
    %v2331 = vrcp.pop %v2330
    %v2332 = vmul.f32 1.0, %v2331
    %v2334 = vrot.slane %v2321, 6
    %v2336 = vmul.f32 %v2332, %v2334
    %v2337 = vadd.f32 %v2246, %v2336
    %v2338 = vtanh.pop %v2337
    %v2339 = vsub.f32 1.0, %v2332
    %2341 = vrot.lane.b32.xlu0 %v2338, 64
    %v2342 = vpop.permute.xlu0 %2341
    %v2344 = vmul.f32 %v2339, %v2342
    %v2345 = vrot.slane %v2240, 6
    %v2347 = vmul.f32 %v2332, %v2345
    %v2348 = vadd.f32 %v2344, %v2347
    %v2350 = vrot.slane %v2348, 2
    %2351 = vrot.lane.b32.xlu0 %v2350, 64
    %v2352 = vpop.permute.xlu0 %2351
    %v2353 = vsel %vm625, %v2352, 0
    %2355 = vmatprep.subr.mxu0 %v1699
    %2356 = vmatpush1.msra.mxu0 %v1698
    %2357 = vmatprep.subr.mxu0 %v1701
    %2358 = vmatpush1.msra.mxu0 %v1700
    %2359 = vmatprep.subr.mxu0 %v1703
    %2360 = vmatpush1.msra.mxu0 %v1702
    %2361 = vmatprep.subr.mxu0 %v1705
    %2362 = vmatpush1.msra.mxu0 %v1704
    %2363 = vmatprep.subr.mxu0 %v1707
    %2364 = vmatpush1.msra.mxu0 %v1706
    %2365 = vmatprep.subr.mxu0 %v1709
    %2366 = vmatpush1.msra.mxu0 %v1708
    %2367 = vmatprep.subr.mxu0 %v1711
    %2368 = vmatpush1.msra.mxu0 %v1710
    %2369 = vmatprep.subr.mxu0 %v1713
    %2370 = vmatpush1.msra.mxu0 %v1712
    %2371 = vmatprep.subr.mxu0 0.0
    %2372 = vmatpush1.msra.mxu0 0.0
    %2373 = vmatprep.subr.mxu0 0.0
    %2374 = vmatpush1.msra.mxu0 0.0
    %2375 = vmatprep.subr.mxu0 0.0
    %2376 = vmatpush1.msra.mxu0 0.0
    %2377 = vmatprep.subr.mxu0 0.0
    %2378 = vmatpush1.msra.mxu0 0.0
    %2379 = vmatprep.subr.mxu0 0.0
    %2380 = vmatpush1.msra.mxu0 0.0
    %2381 = vmatprep.subr.mxu0 0.0
    %2382 = vmatpush1.msra.mxu0 0.0
    %2383 = vmatprep.subr.mxu0 0.0
    %2384 = vmatpush1.msra.mxu0 0.0
    %2385 = vmatprep.subr.mxu0 0.0
    %2386 = vmatpush1.msra.mxu0 0.0
    %2387 = vmatprep.subr.mxu0 0.0
    %2388 = vmatpush1.msra.mxu0 0.0
    %2389 = vmatprep.subr.mxu0 0.0
    %2390 = vmatpush1.msra.mxu0 0.0
    %2391 = vmatprep.subr.mxu0 0.0
    %2392 = vmatpush1.msra.mxu0 0.0
    %2393 = vmatprep.subr.mxu0 0.0
    %2394 = vmatpush1.msra.mxu0 0.0
    %2395 = vmatprep.subr.mxu0 0.0
    %2396 = vmatpush1.msra.mxu0 0.0
    %2397 = vmatprep.subr.mxu0 0.0
    %2398 = vmatpush1.msra.mxu0 0.0
    %2399 = vmatprep.subr.mxu0 0.0
    %2400 = vmatpush1.msra.mxu0 0.0
    %2401 = vmatprep.subr.mxu0 0.0
    %2402 = vmatpush1.msra.mxu0 0.0
    %2403 = vmatprep.subr.mxu0 0.0
    %2404 = vmatpush1.msra.mxu0 0.0
    %2405 = vmatprep.subr.mxu0 0.0
    %2406 = vmatpush1.msra.mxu0 0.0
    %2407 = vmatprep.subr.mxu0 0.0
    %2408 = vmatpush1.msra.mxu0 0.0
    %2409 = vmatprep.subr.mxu0 0.0
    %2410 = vmatpush1.msra.mxu0 0.0
    %2411 = vmatprep.subr.mxu0 0.0
    %2412 = vmatpush1.msra.mxu0 0.0
    %2413 = vmatprep.subr.mxu0 0.0
    %2414 = vmatpush1.msra.mxu0 0.0
    %2415 = vmatprep.subr.mxu0 0.0
    %2416 = vmatpush1.msra.mxu0 0.0
    %2417 = vmatprep.subr.mxu0 0.0
    %2418 = vmatpush1.msra.mxu0 0.0
    %2419 = vmatprep.mubr.f32.mxu0 0.0
    %2420 = vmatmul.mubr.f32.gmra.mrb[0].mxu0 %v2353
    %v2421 = vpop.f32.mrb[0].mxu0
    %v2422 = vadd.f32 %v1719, %v2421
    %v2423 = vpop.f32.mrb[0].mxu0
    %v2424 = vadd.f32 %v1723, %v2423
    %2425 = vdwg.mxu0
    %v2427 = vrot.slane %v2422, 4
    %v2429 = vadd.f32 %v2143, %v2427
    %v2430 = vxor.u32 %v2429, 2147483648
    %v2431 = vmul.f32 %v2430, 1.442695
    %v2432 = vpow.pop %v2431
    %v2433 = vadd.f32 %v2432, 1.0
    %v2434 = vrcp.pop %v2433
    %v2435 = vmul.f32 1.0, %v2434
    %v2437 = vrot.slane %v2424, 4
    %v2439 = vmul.f32 %v2435, %v2437
    %v2440 = vadd.f32 %v2144, %v2439
    %v2441 = vtanh.pop %v2440
    %v2442 = vsub.f32 1.0, %v2435
    %2444 = vrot.lane.b32.xlu0 %v2441, 64
    %v2445 = vpop.permute.xlu0 %2444
    %v2447 = vmul.f32 %v2442, %v2445
    %v2448 = vrot.slane %v2348, 6
    %v2450 = vmul.f32 %v2435, %v2448
    %v2451 = vadd.f32 %v2447, %v2450
    %v2453 = vrot.slane %v2451, 4
    %2454 = vrot.lane.b32.xlu0 %v2453, 64
    %v2455 = vpop.permute.xlu0 %2454
    %v2456 = vsel %vm625, %v2455, 0
    %2458 = vmatprep.subr.mxu0 %v1699
    %2459 = vmatpush1.msra.mxu0 %v1698
    %2460 = vmatprep.subr.mxu0 %v1701
    %2461 = vmatpush1.msra.mxu0 %v1700
    %2462 = vmatprep.subr.mxu0 %v1703
    %2463 = vmatpush1.msra.mxu0 %v1702
    %2464 = vmatprep.subr.mxu0 %v1705
    %2465 = vmatpush1.msra.mxu0 %v1704
    %2466 = vmatprep.subr.mxu0 %v1707
    %2467 = vmatpush1.msra.mxu0 %v1706
    %2468 = vmatprep.subr.mxu0 %v1709
    %2469 = vmatpush1.msra.mxu0 %v1708
    %2470 = vmatprep.subr.mxu0 %v1711
    %2471 = vmatpush1.msra.mxu0 %v1710
    %2472 = vmatprep.subr.mxu0 %v1713
    %2473 = vmatpush1.msra.mxu0 %v1712
    %2474 = vmatprep.subr.mxu0 0.0
    %2475 = vmatpush1.msra.mxu0 0.0
    %2476 = vmatprep.subr.mxu0 0.0
    %2477 = vmatpush1.msra.mxu0 0.0
    %2478 = vmatprep.subr.mxu0 0.0
    %2479 = vmatpush1.msra.mxu0 0.0
    %2480 = vmatprep.subr.mxu0 0.0
    %2481 = vmatpush1.msra.mxu0 0.0
    %2482 = vmatprep.subr.mxu0 0.0
    %2483 = vmatpush1.msra.mxu0 0.0
    %2484 = vmatprep.subr.mxu0 0.0
    %2485 = vmatpush1.msra.mxu0 0.0
    %2486 = vmatprep.subr.mxu0 0.0
    %2487 = vmatpush1.msra.mxu0 0.0
    %2488 = vmatprep.subr.mxu0 0.0
    %2489 = vmatpush1.msra.mxu0 0.0
    %2490 = vmatprep.subr.mxu0 0.0
    %2491 = vmatpush1.msra.mxu0 0.0
    %2492 = vmatprep.subr.mxu0 0.0
    %2493 = vmatpush1.msra.mxu0 0.0
    %2494 = vmatprep.subr.mxu0 0.0
    %2495 = vmatpush1.msra.mxu0 0.0
    %2496 = vmatprep.subr.mxu0 0.0
    %2497 = vmatpush1.msra.mxu0 0.0
    %2498 = vmatprep.subr.mxu0 0.0
    %2499 = vmatpush1.msra.mxu0 0.0
    %2500 = vmatprep.subr.mxu0 0.0
    %2501 = vmatpush1.msra.mxu0 0.0
    %2502 = vmatprep.subr.mxu0 0.0
    %2503 = vmatpush1.msra.mxu0 0.0
    %2504 = vmatprep.subr.mxu0 0.0
    %2505 = vmatpush1.msra.mxu0 0.0
    %2506 = vmatprep.subr.mxu0 0.0
    %2507 = vmatpush1.msra.mxu0 0.0
    %2508 = vmatprep.subr.mxu0 0.0
    %2509 = vmatpush1.msra.mxu0 0.0
    %2510 = vmatprep.subr.mxu0 0.0
    %2511 = vmatpush1.msra.mxu0 0.0
    %2512 = vmatprep.subr.mxu0 0.0
    %2513 = vmatpush1.msra.mxu0 0.0
    %2514 = vmatprep.subr.mxu0 0.0
    %2515 = vmatpush1.msra.mxu0 0.0
    %2516 = vmatprep.subr.mxu0 0.0
    %2517 = vmatpush1.msra.mxu0 0.0
    %2518 = vmatprep.subr.mxu0 0.0
    %2519 = vmatpush1.msra.mxu0 0.0
    %2520 = vmatprep.subr.mxu0 0.0
    %2521 = vmatpush1.msra.mxu0 0.0
    %2522 = vmatprep.mubr.f32.mxu0 0.0
    %2523 = vmatmul.mubr.f32.gmra.mrb[0].mxu0 %v2456
    %v2524 = vpop.f32.mrb[0].mxu0
    %v2525 = vadd.f32 %v1719, %v2524
    %v2526 = vpop.f32.mrb[0].mxu0
    %v2527 = vadd.f32 %v1723, %v2526
    %2528 = vdwg.mxu0
    %v2530 = vrot.slane %v2525, 2
    %v2532 = vadd.f32 %v2245, %v2530
    %v2533 = vxor.u32 %v2532, 2147483648
    %v2534 = vmul.f32 %v2533, 1.442695
    %v2535 = vpow.pop %v2534
    %v2536 = vadd.f32 %v2535, 1.0
    %v2537 = vrcp.pop %v2536
    %v2538 = vmul.f32 1.0, %v2537
    %v2540 = vrot.slane %v2527, 2
    %v2542 = vmul.f32 %v2538, %v2540
    %v2543 = vadd.f32 %v2246, %v2542
    %v2544 = vtanh.pop %v2543
    %v2545 = vsub.f32 1.0, %v2538
    %2547 = vrot.lane.b32.xlu0 %v2544, 64
    %v2548 = vpop.permute.xlu0 %2547
    %v2550 = vmul.f32 %v2545, %v2548
    %v2551 = vrot.slane %v2451, 6
    %v2553 = vmul.f32 %v2538, %v2551
    %v2554 = vadd.f32 %v2550, %v2553
    %2555 = vrot.lane.b32.xlu0 %v1449, 64
    %v2556 = vpop.permute.xlu0 %2555
    %v2558 = vsel %vm625, %v2556, %v2554
    %v2559 = vld [vmem:[%s25] sm:$0xff]
    %v2560 = vld [vmem:[%s25 + $0x8] sm:$0xff]
    %v2561 = vld [vmem:[%s25 + $0x10] sm:$0xff]
    %v2562 = vld [vmem:[%s25 + $0x18] sm:$0xff]
    %v2563 = vld [vmem:[%s25 + $0x20] sm:$0xff]
    %v2564 = vld [vmem:[%s25 + $0x28] sm:$0xff]
    %v2565 = vld [vmem:[%s25 + $0x30] sm:$0xff]
    %v2566 = vld [vmem:[%s25 + $0x38] sm:$0xff]
    %v2567 = vld [vmem:[%s25 + $0x40] sm:$0xff]
    %v2568 = vld [vmem:[%s25 + $0x48] sm:$0xff]
    %v2569 = vld [vmem:[%s25 + $0x50] sm:$0xff]
    %v2570 = vld [vmem:[%s25 + $0x58] sm:$0xff]
    %v2571 = vld [vmem:[%s25 + $0x60] sm:$0xff]
    %v2572 = vld [vmem:[%s25 + $0x68] sm:$0xff]
    %v2573 = vld [vmem:[%s25 + $0x70] sm:$0xff]
    %v2574 = vld [vmem:[%s25 + $0x78] sm:$0xff]
    %v2575 = vld [vmem:[%s25 + $0x80] sm:$0xff]
    %v2576 = vld [vmem:[%s25 + $0x88] sm:$0xff]
    %v2577 = vld [vmem:[%s25 + $0x90] sm:$0xff]
    %v2578 = vld [vmem:[%s25 + $0x98] sm:$0xff]
    %v2579 = vld [vmem:[%s25 + $0xa0] sm:$0xff]
    %v2580 = vld [vmem:[%s25 + $0xa8] sm:$0xff]
    %v2581 = vld [vmem:[%s25 + $0xb0] sm:$0xff]
    %v2582 = vld [vmem:[%s25 + $0xb8] sm:$0xff]
    %v2583 = vld [vmem:[%s25 + $0xc0] sm:$0xff]
    %v2584 = vld [vmem:[%s25 + $0xc8] sm:$0xff]
    %v2585 = vld [vmem:[%s25 + $0xd0] sm:$0xff]
    %v2586 = vld [vmem:[%s25 + $0xd8] sm:$0xff]
    %v2587 = vld [vmem:[%s25 + $0xe0] sm:$0xff]
    %v2588 = vld [vmem:[%s25 + $0xe8] sm:$0xff]
    %v2589 = vld [vmem:[%s25 + $0xf0] sm:$0xff]
    %v2590 = vld [vmem:[%s25 + $0xf8] sm:$0xff]
    %v2591 = vld [vmem:[%s27] sm:$0xff]
    %v2592 = vld [vmem:[%s27 + $0x8] sm:$0xff]
    %v2593 = vld [vmem:[%s27 + $0x10] sm:$0xff]
    %v2594 = vld [vmem:[%s27 + $0x18] sm:$0xff]
    %v2595 = vld [vmem:[%s27 + $0x20] sm:$0xff]
    %v2596 = vld [vmem:[%s27 + $0x28] sm:$0xff]
    %v2597 = vld [vmem:[%s27 + $0x30] sm:$0xff]
    %v2598 = vld [vmem:[%s27 + $0x38] sm:$0xff]
    %v2599 = vld [vmem:[%s27 + $0x40] sm:$0xff]
    %v2600 = vld [vmem:[%s27 + $0x48] sm:$0xff]
    %v2601 = vld [vmem:[%s27 + $0x50] sm:$0xff]
    %v2602 = vld [vmem:[%s27 + $0x58] sm:$0xff]
    %v2603 = vld [vmem:[%s27 + $0x60] sm:$0xff]
    %v2604 = vld [vmem:[%s27 + $0x68] sm:$0xff]
    %v2605 = vld [vmem:[%s27 + $0x70] sm:$0xff]
    %v2606 = vld [vmem:[%s27 + $0x78] sm:$0xff]
    %v2607 = vld [vmem:[%s27 + $0x80] sm:$0xff]
    %v2608 = vld [vmem:[%s27 + $0x88] sm:$0xff]
    %v2609 = vld [vmem:[%s27 + $0x90] sm:$0xff]
    %v2610 = vld [vmem:[%s27 + $0x98] sm:$0xff]
    %v2611 = vld [vmem:[%s27 + $0xa0] sm:$0xff]
    %v2612 = vld [vmem:[%s27 + $0xa8] sm:$0xff]
    %v2613 = vld [vmem:[%s27 + $0xb0] sm:$0xff]
    %v2614 = vld [vmem:[%s27 + $0xb8] sm:$0xff]
    %v2615 = vld [vmem:[%s27 + $0xc0] sm:$0xff]
    %v2616 = vld [vmem:[%s27 + $0xc8] sm:$0xff]
    %v2617 = vld [vmem:[%s27 + $0xd0] sm:$0xff]
    %v2618 = vld [vmem:[%s27 + $0xd8] sm:$0xff]
    %v2619 = vld [vmem:[%s27 + $0xe0] sm:$0xff]
    %v2620 = vld [vmem:[%s27 + $0xe8] sm:$0xff]
    %v2621 = vld [vmem:[%s27 + $0xf0] sm:$0xff]
    %v2622 = vld [vmem:[%s27 + $0xf8] sm:$0xff]
    %v2624 = vrot.slane %v2558, 6
    %2626 = vmatprep.subr.mxu0 %v2592
    %2627 = vmatpush1.msra.mxu0 %v2591
    %2628 = vmatprep.subr.mxu0 %v2594
    %2629 = vmatpush1.msra.mxu0 %v2593
    %2630 = vmatprep.subr.mxu0 %v2596
    %2631 = vmatpush1.msra.mxu0 %v2595
    %2632 = vmatprep.subr.mxu0 %v2598
    %2633 = vmatpush1.msra.mxu0 %v2597
    %2634 = vmatprep.subr.mxu0 %v2600
    %2635 = vmatpush1.msra.mxu0 %v2599
    %2636 = vmatprep.subr.mxu0 %v2602
    %2637 = vmatpush1.msra.mxu0 %v2601
    %2638 = vmatprep.subr.mxu0 %v2604
    %2639 = vmatpush1.msra.mxu0 %v2603
    %2640 = vmatprep.subr.mxu0 %v2606
    %2641 = vmatpush1.msra.mxu0 %v2605
    %2642 = vmatprep.subr.mxu0 %v2608
    %2643 = vmatpush1.msra.mxu0 %v2607
    %2644 = vmatprep.subr.mxu0 %v2610
    %2645 = vmatpush1.msra.mxu0 %v2609
    %2646 = vmatprep.subr.mxu0 %v2612
    %2647 = vmatpush1.msra.mxu0 %v2611
    %2648 = vmatprep.subr.mxu0 %v2614
    %2649 = vmatpush1.msra.mxu0 %v2613
    %2650 = vmatprep.subr.mxu0 %v2616
    %2651 = vmatpush1.msra.mxu0 %v2615
    %2652 = vmatprep.subr.mxu0 %v2618
    %2653 = vmatpush1.msra.mxu0 %v2617
    %2654 = vmatprep.subr.mxu0 %v2620
    %2655 = vmatpush1.msra.mxu0 %v2619
    %2656 = vmatprep.subr.mxu0 %v2622
    %2657 = vmatpush1.msra.mxu0 %v2621
    %2658 = vmatprep.subr.mxu0 0.0
    %2659 = vmatpush1.msra.mxu0 0.0
    %2660 = vmatprep.subr.mxu0 0.0
    %2661 = vmatpush1.msra.mxu0 0.0
    %2662 = vmatprep.subr.mxu0 0.0
    %2663 = vmatpush1.msra.mxu0 0.0
    %2664 = vmatprep.subr.mxu0 0.0
    %2665 = vmatpush1.msra.mxu0 0.0
    %2666 = vmatprep.subr.mxu0 0.0
    %2667 = vmatpush1.msra.mxu0 0.0
    %2668 = vmatprep.subr.mxu0 0.0
    %2669 = vmatpush1.msra.mxu0 0.0
    %2670 = vmatprep.subr.mxu0 0.0
    %2671 = vmatpush1.msra.mxu0 0.0
    %2672 = vmatprep.subr.mxu0 0.0
    %2673 = vmatpush1.msra.mxu0 0.0
    %2674 = vmatprep.subr.mxu0 0.0
    %2675 = vmatpush1.msra.mxu0 0.0
    %2676 = vmatprep.subr.mxu0 0.0
    %2677 = vmatpush1.msra.mxu0 0.0
    %2678 = vmatprep.subr.mxu0 0.0
    %2679 = vmatpush1.msra.mxu0 0.0
    %2680 = vmatprep.subr.mxu0 0.0
    %2681 = vmatpush1.msra.mxu0 0.0
    %2682 = vmatprep.subr.mxu0 0.0
    %2683 = vmatpush1.msra.mxu0 0.0
    %2684 = vmatprep.subr.mxu0 0.0
    %2685 = vmatpush1.msra.mxu0 0.0
    %2686 = vmatprep.subr.mxu0 0.0
    %2687 = vmatpush1.msra.mxu0 0.0
    %2688 = vmatprep.subr.mxu0 0.0
    %2689 = vmatpush1.msra.mxu0 0.0
    %2690 = vmatprep.mubr.f32.mxu0 0.0
    %2691 = vmatmul.mubr.f32.gmra.mrb[0].mxu0 %v2624
    %v2692 = vpop.f32.mrb[0].mxu0
    %v2693 = vadd.f32 0.0, %v2692
    %v2694 = vpop.f32.mrb[0].mxu0
    %v2695 = vadd.f32 0.0, %v2694
    %2696 = vdwg.mxu0
    %2697 = vmatprep.subr.mxu0 %v2560
    %2698 = vmatpush1.msra.mxu0 %v2559
    %2699 = vmatprep.subr.mxu0 %v2562
    %2700 = vmatpush1.msra.mxu0 %v2561
    %2701 = vmatprep.subr.mxu0 %v2564
    %2702 = vmatpush1.msra.mxu0 %v2563
    %2703 = vmatprep.subr.mxu0 %v2566
    %2704 = vmatpush1.msra.mxu0 %v2565
    %2705 = vmatprep.subr.mxu0 %v2568
    %2706 = vmatpush1.msra.mxu0 %v2567
    %2707 = vmatprep.subr.mxu0 %v2570
    %2708 = vmatpush1.msra.mxu0 %v2569
    %2709 = vmatprep.subr.mxu0 %v2572
    %2710 = vmatpush1.msra.mxu0 %v2571
    %2711 = vmatprep.subr.mxu0 %v2574
    %2712 = vmatpush1.msra.mxu0 %v2573
    %2713 = vmatprep.subr.mxu0 %v2576
    %2714 = vmatpush1.msra.mxu0 %v2575
    %2715 = vmatprep.subr.mxu0 %v2578
    %2716 = vmatpush1.msra.mxu0 %v2577
    %2717 = vmatprep.subr.mxu0 %v2580
    %2718 = vmatpush1.msra.mxu0 %v2579
    %2719 = vmatprep.subr.mxu0 %v2582
    %2720 = vmatpush1.msra.mxu0 %v2581
    %2721 = vmatprep.subr.mxu0 %v2584
    %2722 = vmatpush1.msra.mxu0 %v2583
    %2723 = vmatprep.subr.mxu0 %v2586
    %2724 = vmatpush1.msra.mxu0 %v2585
    %2725 = vmatprep.subr.mxu0 %v2588
    %2726 = vmatpush1.msra.mxu0 %v2587
    %2727 = vmatprep.subr.mxu0 %v2590
    %2728 = vmatpush1.msra.mxu0 %v2589
    %2729 = vmatprep.subr.mxu0 0.0
    %2730 = vmatpush1.msra.mxu0 0.0
    %2731 = vmatprep.subr.mxu0 0.0
    %2732 = vmatpush1.msra.mxu0 0.0
    %2733 = vmatprep.subr.mxu0 0.0
    %2734 = vmatpush1.msra.mxu0 0.0
    %2735 = vmatprep.subr.mxu0 0.0
    %2736 = vmatpush1.msra.mxu0 0.0
    %2737 = vmatprep.subr.mxu0 0.0
    %2738 = vmatpush1.msra.mxu0 0.0
    %2739 = vmatprep.subr.mxu0 0.0
    %2740 = vmatpush1.msra.mxu0 0.0
    %2741 = vmatprep.subr.mxu0 0.0
    %2742 = vmatpush1.msra.mxu0 0.0
    %2743 = vmatprep.subr.mxu0 0.0
    %2744 = vmatpush1.msra.mxu0 0.0
    %2745 = vmatprep.subr.mxu0 0.0
    %2746 = vmatpush1.msra.mxu0 0.0
    %2747 = vmatprep.subr.mxu0 0.0
    %2748 = vmatpush1.msra.mxu0 0.0
    %2749 = vmatprep.subr.mxu0 0.0
    %2750 = vmatpush1.msra.mxu0 0.0
    %2751 = vmatprep.subr.mxu0 0.0
    %2752 = vmatpush1.msra.mxu0 0.0
    %2753 = vmatprep.subr.mxu0 0.0
    %2754 = vmatpush1.msra.mxu0 0.0
    %2755 = vmatprep.subr.mxu0 0.0
    %2756 = vmatpush1.msra.mxu0 0.0
    %2757 = vmatprep.subr.mxu0 0.0
    %2758 = vmatpush1.msra.mxu0 0.0
    %2759 = vmatprep.subr.mxu0 0.0
    %2760 = vmatpush1.msra.mxu0 0.0
    %2761 = vmatprep.mubr.f32.mxu0 0.0
    %2762 = vmatmul.mubr.f32.gmra.mrb[0].mxu0 %v2624
    %v2763 = vpop.f32.mrb[0].mxu0
    %v2764 = vadd.f32 %v2693, %v2763
    %v2765 = vpop.f32.mrb[0].mxu0
    %v2766 = vadd.f32 %v2695, %v2765
    %2767 = vdwg.mxu0
    %v2768 = vld [vmem:[#allocation7] sm:$0x3]
    %v2770 = vlaneseq
    %v2771 = vshrl.u32 %v2770, 7
    %v2772 = vsub.s32 0, %v2771
    %v2773 = vrot.slane %v2768, %v2772
    %v2774 = vlaneseq
    %v2775 = vshrl.u32 %v2774, 7
    %v2776 = vsub.s32 1, %v2775
    %v2777 = vrot.slane %v2768, %v2776
    %v2780 = vadd.f32 %v2764, %v2773
    %v2781 = vadd.f32 %v2766, %v2777
    %v2782 = vld [vmem:[#allocation8] sm:$0xff]
    %v2783 = vld [vmem:[#allocation8 + $0x8] sm:$0xff]
    %v2784 = vld [vmem:[#allocation8 + $0x10] sm:$0xff]
    %v2785 = vld [vmem:[#allocation8 + $0x18] sm:$0xff]
    %v2786 = vld [vmem:[#allocation8 + $0x20] sm:$0xff]
    %v2787 = vld [vmem:[#allocation8 + $0x28] sm:$0xff]
    %v2788 = vld [vmem:[#allocation8 + $0x30] sm:$0xff]
    %v2789 = vld [vmem:[#allocation8 + $0x38] sm:$0xff]
    %v2790 = vld [vmem:[#allocation8 + $0x40] sm:$0xff]
    %v2791 = vld [vmem:[#allocation8 + $0x48] sm:$0xff]
    %v2792 = vld [vmem:[#allocation8 + $0x50] sm:$0xff]
    %v2793 = vld [vmem:[#allocation8 + $0x58] sm:$0xff]
    %v2794 = vld [vmem:[#allocation8 + $0x60] sm:$0xff]
    %v2795 = vld [vmem:[#allocation8 + $0x68] sm:$0xff]
    %v2796 = vld [vmem:[#allocation8 + $0x70] sm:$0xff]
    %v2797 = vld [vmem:[#allocation8 + $0x78] sm:$0xff]
    %v2798 = vld [vmem:[#allocation10] sm:$0x3]
    %v2800 = vlaneseq
    %v2801 = vshrl.u32 %v2800, 7
    %v2802 = vsub.s32 0, %v2801
    %v2803 = vrot.slane %v2798, %v2802
    %v2804 = vlaneseq
    %v2805 = vshrl.u32 %v2804, 7
    %v2806 = vsub.s32 1, %v2805
    %v2807 = vrot.slane %v2798, %v2806
    %2810 = vmatprep.subr.mxu0 %v2783
    %2811 = vmatpush1.msra.mxu0 %v2782
    %2812 = vmatprep.subr.mxu0 %v2785
    %2813 = vmatpush1.msra.mxu0 %v2784
    %2814 = vmatprep.subr.mxu0 %v2787
    %2815 = vmatpush1.msra.mxu0 %v2786
    %2816 = vmatprep.subr.mxu0 %v2789
    %2817 = vmatpush1.msra.mxu0 %v2788
    %2818 = vmatprep.subr.mxu0 %v2791
    %2819 = vmatpush1.msra.mxu0 %v2790
    %2820 = vmatprep.subr.mxu0 %v2793
    %2821 = vmatpush1.msra.mxu0 %v2792
    %2822 = vmatprep.subr.mxu0 %v2795
    %2823 = vmatpush1.msra.mxu0 %v2794
    %2824 = vmatprep.subr.mxu0 %v2797
    %2825 = vmatpush1.msra.mxu0 %v2796
    %2826 = vmatprep.subr.mxu0 0.0
    %2827 = vmatpush1.msra.mxu0 0.0
    %2828 = vmatprep.subr.mxu0 0.0
    %2829 = vmatpush1.msra.mxu0 0.0
    %2830 = vmatprep.subr.mxu0 0.0
    %2831 = vmatpush1.msra.mxu0 0.0
    %2832 = vmatprep.subr.mxu0 0.0
    %2833 = vmatpush1.msra.mxu0 0.0
    %2834 = vmatprep.subr.mxu0 0.0
    %2835 = vmatpush1.msra.mxu0 0.0
    %2836 = vmatprep.subr.mxu0 0.0
    %2837 = vmatpush1.msra.mxu0 0.0
    %2838 = vmatprep.subr.mxu0 0.0
    %2839 = vmatpush1.msra.mxu0 0.0
    %2840 = vmatprep.subr.mxu0 0.0
    %2841 = vmatpush1.msra.mxu0 0.0
    %2842 = vmatprep.subr.mxu0 0.0
    %2843 = vmatpush1.msra.mxu0 0.0
    %2844 = vmatprep.subr.mxu0 0.0
    %2845 = vmatpush1.msra.mxu0 0.0
    %2846 = vmatprep.subr.mxu0 0.0
    %2847 = vmatpush1.msra.mxu0 0.0
    %2848 = vmatprep.subr.mxu0 0.0
    %2849 = vmatpush1.msra.mxu0 0.0
    %2850 = vmatprep.subr.mxu0 0.0
    %2851 = vmatpush1.msra.mxu0 0.0
    %2852 = vmatprep.subr.mxu0 0.0
    %2853 = vmatpush1.msra.mxu0 0.0
    %2854 = vmatprep.subr.mxu0 0.0
    %2855 = vmatpush1.msra.mxu0 0.0
    %2856 = vmatprep.subr.mxu0 0.0
    %2857 = vmatpush1.msra.mxu0 0.0
    %2858 = vmatprep.subr.mxu0 0.0
    %2859 = vmatpush1.msra.mxu0 0.0
    %2860 = vmatprep.subr.mxu0 0.0
    %2861 = vmatpush1.msra.mxu0 0.0
    %2862 = vmatprep.subr.mxu0 0.0
    %2863 = vmatpush1.msra.mxu0 0.0
    %2864 = vmatprep.subr.mxu0 0.0
    %2865 = vmatpush1.msra.mxu0 0.0
    %2866 = vmatprep.subr.mxu0 0.0
    %2867 = vmatpush1.msra.mxu0 0.0
    %2868 = vmatprep.subr.mxu0 0.0
    %2869 = vmatpush1.msra.mxu0 0.0
    %2870 = vmatprep.subr.mxu0 0.0
    %2871 = vmatpush1.msra.mxu0 0.0
    %2872 = vmatprep.subr.mxu0 0.0
    %2873 = vmatpush1.msra.mxu0 0.0
    %2874 = vmatprep.mubr.f32.mxu0 0.0
    %2875 = vmatmul.mubr.f32.gmra.mrb[0].mxu0 %v627
    %v2876 = vpop.f32.mrb[0].mxu0
    %v2877 = vadd.f32 %v2803, %v2876
    %v2878 = vpop.f32.mrb[0].mxu0
    %v2879 = vadd.f32 %v2807, %v2878
    %2880 = vdwg.mxu0
    %v2881 = vadd.f32 %v2780, %v2877
    %v2882 = vxor.u32 %v2881, 2147483648
    %v2883 = vmul.f32 %v2882, 1.442695
    %v2884 = vpow.pop %v2883
    %v2885 = vadd.f32 %v2884, 1.0
    %v2886 = vrcp.pop %v2885
    %v2887 = vmul.f32 1.0, %v2886
    %v2888 = vmul.f32 %v2887, %v2879
    %v2889 = vadd.f32 %v2781, %v2888
    %v2890 = vtanh.pop %v2889
    %v2891 = vsub.f32 1.0, %v2887
    %2893 = vrot.lane.b32.xlu0 %v2890, 64
    %v2894 = vpop.permute.xlu0 %2893
    %v2896 = vmul.f32 %v2891, %v2894
    %v2897 = vmul.f32 %v2887, 0.0
    %v2898 = vadd.f32 %v2896, %v2897
    %2900 = vrot.lane.b32.xlu0 %v2898, 64
    %v2901 = vpop.permute.xlu0 %2900
    %v2902 = vsel %vm625, %v2901, 0
    %2904 = vmatprep.subr.mxu0 %v2783
    %2905 = vmatpush1.msra.mxu0 %v2782
    %2906 = vmatprep.subr.mxu0 %v2785
    %2907 = vmatpush1.msra.mxu0 %v2784
    %2908 = vmatprep.subr.mxu0 %v2787
    %2909 = vmatpush1.msra.mxu0 %v2786
    %2910 = vmatprep.subr.mxu0 %v2789
    %2911 = vmatpush1.msra.mxu0 %v2788
    %2912 = vmatprep.subr.mxu0 %v2791
    %2913 = vmatpush1.msra.mxu0 %v2790
    %2914 = vmatprep.subr.mxu0 %v2793
    %2915 = vmatpush1.msra.mxu0 %v2792
    %2916 = vmatprep.subr.mxu0 %v2795
    %2917 = vmatpush1.msra.mxu0 %v2794
    %2918 = vmatprep.subr.mxu0 %v2797
    %2919 = vmatpush1.msra.mxu0 %v2796
    %2920 = vmatprep.subr.mxu0 0.0
    %2921 = vmatpush1.msra.mxu0 0.0
    %2922 = vmatprep.subr.mxu0 0.0
    %2923 = vmatpush1.msra.mxu0 0.0
    %2924 = vmatprep.subr.mxu0 0.0
    %2925 = vmatpush1.msra.mxu0 0.0
    %2926 = vmatprep.subr.mxu0 0.0
    %2927 = vmatpush1.msra.mxu0 0.0
    %2928 = vmatprep.subr.mxu0 0.0
    %2929 = vmatpush1.msra.mxu0 0.0
    %2930 = vmatprep.subr.mxu0 0.0
    %2931 = vmatpush1.msra.mxu0 0.0
    %2932 = vmatprep.subr.mxu0 0.0
    %2933 = vmatpush1.msra.mxu0 0.0
    %2934 = vmatprep.subr.mxu0 0.0
    %2935 = vmatpush1.msra.mxu0 0.0
    %2936 = vmatprep.subr.mxu0 0.0
    %2937 = vmatpush1.msra.mxu0 0.0
    %2938 = vmatprep.subr.mxu0 0.0
    %2939 = vmatpush1.msra.mxu0 0.0
    %2940 = vmatprep.subr.mxu0 0.0
    %2941 = vmatpush1.msra.mxu0 0.0
    %2942 = vmatprep.subr.mxu0 0.0
    %2943 = vmatpush1.msra.mxu0 0.0
    %2944 = vmatprep.subr.mxu0 0.0
    %2945 = vmatpush1.msra.mxu0 0.0
    %2946 = vmatprep.subr.mxu0 0.0
    %2947 = vmatpush1.msra.mxu0 0.0
    %2948 = vmatprep.subr.mxu0 0.0
    %2949 = vmatpush1.msra.mxu0 0.0
    %2950 = vmatprep.subr.mxu0 0.0
    %2951 = vmatpush1.msra.mxu0 0.0
    %2952 = vmatprep.subr.mxu0 0.0
    %2953 = vmatpush1.msra.mxu0 0.0
    %2954 = vmatprep.subr.mxu0 0.0
    %2955 = vmatpush1.msra.mxu0 0.0
    %2956 = vmatprep.subr.mxu0 0.0
    %2957 = vmatpush1.msra.mxu0 0.0
    %2958 = vmatprep.subr.mxu0 0.0
    %2959 = vmatpush1.msra.mxu0 0.0
    %2960 = vmatprep.subr.mxu0 0.0
    %2961 = vmatpush1.msra.mxu0 0.0
    %2962 = vmatprep.subr.mxu0 0.0
    %2963 = vmatpush1.msra.mxu0 0.0
    %2964 = vmatprep.subr.mxu0 0.0
    %2965 = vmatpush1.msra.mxu0 0.0
    %2966 = vmatprep.subr.mxu0 0.0
    %2967 = vmatpush1.msra.mxu0 0.0
    %2968 = vmatprep.mubr.f32.mxu0 0.0
    %2969 = vmatmul.mubr.f32.gmra.mrb[0].mxu0 %v2902
    %v2970 = vpop.f32.mrb[0].mxu0
    %v2971 = vadd.f32 %v2803, %v2970
    %v2972 = vpop.f32.mrb[0].mxu0
    %v2973 = vadd.f32 %v2807, %v2972
    %2974 = vdwg.mxu0
    %v2975 = vadd.f32 %v2780, %v2971
    %v2976 = vxor.u32 %v2975, 2147483648
    %v2977 = vmul.f32 %v2976, 1.442695
    %v2978 = vpow.pop %v2977
    %v2979 = vadd.f32 %v2978, 1.0
    %v2980 = vrcp.pop %v2979
    %v2981 = vmul.f32 1.0, %v2980
    %v2982 = vmul.f32 %v2981, %v2973
    %v2983 = vadd.f32 %v2781, %v2982
    %v2984 = vtanh.pop %v2983
    %v2985 = vsub.f32 1.0, %v2981
    %2987 = vrot.lane.b32.xlu0 %v2984, 64
    %v2988 = vpop.permute.xlu0 %2987
    %v2990 = vmul.f32 %v2985, %v2988
    %v2991 = vmul.f32 %v2981, %v2898
    %v2992 = vadd.f32 %v2990, %v2991
    %2994 = vrot.lane.b32.xlu0 %v2992, 64
    %v2995 = vpop.permute.xlu0 %2994
    %v2996 = vsel %vm625, %v2995, 0
    %2998 = vmatprep.subr.mxu0 %v2783
    %2999 = vmatpush1.msra.mxu0 %v2782
    %3000 = vmatprep.subr.mxu0 %v2785
    %3001 = vmatpush1.msra.mxu0 %v2784
    %3002 = vmatprep.subr.mxu0 %v2787
    %3003 = vmatpush1.msra.mxu0 %v2786
    %3004 = vmatprep.subr.mxu0 %v2789
    %3005 = vmatpush1.msra.mxu0 %v2788
    %3006 = vmatprep.subr.mxu0 %v2791
    %3007 = vmatpush1.msra.mxu0 %v2790
    %3008 = vmatprep.subr.mxu0 %v2793
    %3009 = vmatpush1.msra.mxu0 %v2792
    %3010 = vmatprep.subr.mxu0 %v2795
    %3011 = vmatpush1.msra.mxu0 %v2794
    %3012 = vmatprep.subr.mxu0 %v2797
    %3013 = vmatpush1.msra.mxu0 %v2796
    %3014 = vmatprep.subr.mxu0 0.0
    %3015 = vmatpush1.msra.mxu0 0.0
    %3016 = vmatprep.subr.mxu0 0.0
    %3017 = vmatpush1.msra.mxu0 0.0
    %3018 = vmatprep.subr.mxu0 0.0
    %3019 = vmatpush1.msra.mxu0 0.0
    %3020 = vmatprep.subr.mxu0 0.0
    %3021 = vmatpush1.msra.mxu0 0.0
    %3022 = vmatprep.subr.mxu0 0.0
    %3023 = vmatpush1.msra.mxu0 0.0
    %3024 = vmatprep.subr.mxu0 0.0
    %3025 = vmatpush1.msra.mxu0 0.0
    %3026 = vmatprep.subr.mxu0 0.0
    %3027 = vmatpush1.msra.mxu0 0.0
    %3028 = vmatprep.subr.mxu0 0.0
    %3029 = vmatpush1.msra.mxu0 0.0
    %3030 = vmatprep.subr.mxu0 0.0
    %3031 = vmatpush1.msra.mxu0 0.0
    %3032 = vmatprep.subr.mxu0 0.0
    %3033 = vmatpush1.msra.mxu0 0.0
    %3034 = vmatprep.subr.mxu0 0.0
    %3035 = vmatpush1.msra.mxu0 0.0
    %3036 = vmatprep.subr.mxu0 0.0
    %3037 = vmatpush1.msra.mxu0 0.0
    %3038 = vmatprep.subr.mxu0 0.0
    %3039 = vmatpush1.msra.mxu0 0.0
    %3040 = vmatprep.subr.mxu0 0.0
    %3041 = vmatpush1.msra.mxu0 0.0
    %3042 = vmatprep.subr.mxu0 0.0
    %3043 = vmatpush1.msra.mxu0 0.0
    %3044 = vmatprep.subr.mxu0 0.0
    %3045 = vmatpush1.msra.mxu0 0.0
    %3046 = vmatprep.subr.mxu0 0.0
    %3047 = vmatpush1.msra.mxu0 0.0
    %3048 = vmatprep.subr.mxu0 0.0
    %3049 = vmatpush1.msra.mxu0 0.0
    %3050 = vmatprep.subr.mxu0 0.0
    %3051 = vmatpush1.msra.mxu0 0.0
    %3052 = vmatprep.subr.mxu0 0.0
    %3053 = vmatpush1.msra.mxu0 0.0
    %3054 = vmatprep.subr.mxu0 0.0
    %3055 = vmatpush1.msra.mxu0 0.0
    %3056 = vmatprep.subr.mxu0 0.0
    %3057 = vmatpush1.msra.mxu0 0.0
    %3058 = vmatprep.subr.mxu0 0.0
    %3059 = vmatpush1.msra.mxu0 0.0
    %3060 = vmatprep.subr.mxu0 0.0
    %3061 = vmatpush1.msra.mxu0 0.0
    %3062 = vmatprep.mubr.f32.mxu0 0.0
    %3063 = vmatmul.mubr.f32.gmra.mrb[0].mxu0 %v2996
    %v3064 = vpop.f32.mrb[0].mxu0
    %v3065 = vadd.f32 %v2803, %v3064
    %v3066 = vpop.f32.mrb[0].mxu0
    %v3067 = vadd.f32 %v2807, %v3066
    %3068 = vdwg.mxu0
    %v3069 = vadd.f32 %v2780, %v3065
    %v3070 = vxor.u32 %v3069, 2147483648
    %v3071 = vmul.f32 %v3070, 1.442695
    %v3072 = vpow.pop %v3071
    %v3073 = vadd.f32 %v3072, 1.0
    %v3074 = vrcp.pop %v3073
    %v3075 = vmul.f32 1.0, %v3074
    %v3076 = vmul.f32 %v3075, %v3067
    %v3077 = vadd.f32 %v2781, %v3076
    %v3078 = vtanh.pop %v3077
    %v3079 = vsub.f32 1.0, %v3075
    %3081 = vrot.lane.b32.xlu0 %v3078, 64
    %v3082 = vpop.permute.xlu0 %3081
    %v3084 = vmul.f32 %v3079, %v3082
    %v3085 = vmul.f32 %v3075, %v2992
    %v3086 = vadd.f32 %v3084, %v3085
    %3088 = vrot.lane.b32.xlu0 %v3086, 64
    %v3089 = vpop.permute.xlu0 %3088
    %v3090 = vsel %vm625, %v3089, 0
    %3092 = vmatprep.subr.mxu0 %v2783
    %3093 = vmatpush1.msra.mxu0 %v2782
    %3094 = vmatprep.subr.mxu0 %v2785
    %3095 = vmatpush1.msra.mxu0 %v2784
    %3096 = vmatprep.subr.mxu0 %v2787
    %3097 = vmatpush1.msra.mxu0 %v2786
    %3098 = vmatprep.subr.mxu0 %v2789
    %3099 = vmatpush1.msra.mxu0 %v2788
    %3100 = vmatprep.subr.mxu0 %v2791
    %3101 = vmatpush1.msra.mxu0 %v2790
    %3102 = vmatprep.subr.mxu0 %v2793
    %3103 = vmatpush1.msra.mxu0 %v2792
    %3104 = vmatprep.subr.mxu0 %v2795
    %3105 = vmatpush1.msra.mxu0 %v2794
    %3106 = vmatprep.subr.mxu0 %v2797
    %3107 = vmatpush1.msra.mxu0 %v2796
    %3108 = vmatprep.subr.mxu0 0.0
    %3109 = vmatpush1.msra.mxu0 0.0
    %3110 = vmatprep.subr.mxu0 0.0
    %3111 = vmatpush1.msra.mxu0 0.0
    %3112 = vmatprep.subr.mxu0 0.0
    %3113 = vmatpush1.msra.mxu0 0.0
    %3114 = vmatprep.subr.mxu0 0.0
    %3115 = vmatpush1.msra.mxu0 0.0
    %3116 = vmatprep.subr.mxu0 0.0
    %3117 = vmatpush1.msra.mxu0 0.0
    %3118 = vmatprep.subr.mxu0 0.0
    %3119 = vmatpush1.msra.mxu0 0.0
    %3120 = vmatprep.subr.mxu0 0.0
    %3121 = vmatpush1.msra.mxu0 0.0
    %3122 = vmatprep.subr.mxu0 0.0
    %3123 = vmatpush1.msra.mxu0 0.0
    %3124 = vmatprep.subr.mxu0 0.0
    %3125 = vmatpush1.msra.mxu0 0.0
    %3126 = vmatprep.subr.mxu0 0.0
    %3127 = vmatpush1.msra.mxu0 0.0
    %3128 = vmatprep.subr.mxu0 0.0
    %3129 = vmatpush1.msra.mxu0 0.0
    %3130 = vmatprep.subr.mxu0 0.0
    %3131 = vmatpush1.msra.mxu0 0.0
    %3132 = vmatprep.subr.mxu0 0.0
    %3133 = vmatpush1.msra.mxu0 0.0
    %3134 = vmatprep.subr.mxu0 0.0
    %3135 = vmatpush1.msra.mxu0 0.0
    %3136 = vmatprep.subr.mxu0 0.0
    %3137 = vmatpush1.msra.mxu0 0.0
    %3138 = vmatprep.subr.mxu0 0.0
    %3139 = vmatpush1.msra.mxu0 0.0
    %3140 = vmatprep.subr.mxu0 0.0
    %3141 = vmatpush1.msra.mxu0 0.0
    %3142 = vmatprep.subr.mxu0 0.0
    %3143 = vmatpush1.msra.mxu0 0.0
    %3144 = vmatprep.subr.mxu0 0.0
    %3145 = vmatpush1.msra.mxu0 0.0
    %3146 = vmatprep.subr.mxu0 0.0
    %3147 = vmatpush1.msra.mxu0 0.0
    %3148 = vmatprep.subr.mxu0 0.0
    %3149 = vmatpush1.msra.mxu0 0.0
    %3150 = vmatprep.subr.mxu0 0.0
    %3151 = vmatpush1.msra.mxu0 0.0
    %3152 = vmatprep.subr.mxu0 0.0
    %3153 = vmatpush1.msra.mxu0 0.0
    %3154 = vmatprep.subr.mxu0 0.0
    %3155 = vmatpush1.msra.mxu0 0.0
    %3156 = vmatprep.mubr.f32.mxu0 0.0
    %3157 = vmatmul.mubr.f32.gmra.mrb[0].mxu0 %v3090
    %v3158 = vpop.f32.mrb[0].mxu0
    %v3159 = vadd.f32 %v2803, %v3158
    %v3160 = vpop.f32.mrb[0].mxu0
    %v3161 = vadd.f32 %v2807, %v3160
    %3162 = vdwg.mxu0
    %v3163 = vadd.f32 %v2780, %v3159
    %v3164 = vxor.u32 %v3163, 2147483648
    %v3165 = vmul.f32 %v3164, 1.442695
    %v3166 = vpow.pop %v3165
    %v3167 = vadd.f32 %v3166, 1.0
    %v3168 = vrcp.pop %v3167
    %v3169 = vmul.f32 1.0, %v3168
    %v3170 = vmul.f32 %v3169, %v3161
    %v3171 = vadd.f32 %v2781, %v3170
    %v3172 = vtanh.pop %v3171
    %v3173 = vsub.f32 1.0, %v3169
    %3175 = vrot.lane.b32.xlu0 %v3172, 64
    %v3176 = vpop.permute.xlu0 %3175
    %v3178 = vmul.f32 %v3173, %v3176
    %v3179 = vmul.f32 %v3169, %v3086
    %v3180 = vadd.f32 %v3178, %v3179
    %3182 = vrot.lane.b32.xlu0 %v3180, 64
    %v3183 = vpop.permute.xlu0 %3182
    %v3184 = vsel %vm625, %v3183, 0
    %3186 = vmatprep.subr.mxu0 %v2783
    %3187 = vmatpush1.msra.mxu0 %v2782
    %3188 = vmatprep.subr.mxu0 %v2785
    %3189 = vmatpush1.msra.mxu0 %v2784
    %3190 = vmatprep.subr.mxu0 %v2787
    %3191 = vmatpush1.msra.mxu0 %v2786
    %3192 = vmatprep.subr.mxu0 %v2789
    %3193 = vmatpush1.msra.mxu0 %v2788
    %3194 = vmatprep.subr.mxu0 %v2791
    %3195 = vmatpush1.msra.mxu0 %v2790
    %3196 = vmatprep.subr.mxu0 %v2793
    %3197 = vmatpush1.msra.mxu0 %v2792
    %3198 = vmatprep.subr.mxu0 %v2795
    %3199 = vmatpush1.msra.mxu0 %v2794
    %3200 = vmatprep.subr.mxu0 %v2797
    %3201 = vmatpush1.msra.mxu0 %v2796
    %3202 = vmatprep.subr.mxu0 0.0
    %3203 = vmatpush1.msra.mxu0 0.0
    %3204 = vmatprep.subr.mxu0 0.0
    %3205 = vmatpush1.msra.mxu0 0.0
    %3206 = vmatprep.subr.mxu0 0.0
    %3207 = vmatpush1.msra.mxu0 0.0
    %3208 = vmatprep.subr.mxu0 0.0
    %3209 = vmatpush1.msra.mxu0 0.0
    %3210 = vmatprep.subr.mxu0 0.0
    %3211 = vmatpush1.msra.mxu0 0.0
    %3212 = vmatprep.subr.mxu0 0.0
    %3213 = vmatpush1.msra.mxu0 0.0
    %3214 = vmatprep.subr.mxu0 0.0
    %3215 = vmatpush1.msra.mxu0 0.0
    %3216 = vmatprep.subr.mxu0 0.0
    %3217 = vmatpush1.msra.mxu0 0.0
    %3218 = vmatprep.subr.mxu0 0.0
    %3219 = vmatpush1.msra.mxu0 0.0
    %3220 = vmatprep.subr.mxu0 0.0
    %3221 = vmatpush1.msra.mxu0 0.0
    %3222 = vmatprep.subr.mxu0 0.0
    %3223 = vmatpush1.msra.mxu0 0.0
    %3224 = vmatprep.subr.mxu0 0.0
    %3225 = vmatpush1.msra.mxu0 0.0
    %3226 = vmatprep.subr.mxu0 0.0
    %3227 = vmatpush1.msra.mxu0 0.0
    %3228 = vmatprep.subr.mxu0 0.0
    %3229 = vmatpush1.msra.mxu0 0.0
    %3230 = vmatprep.subr.mxu0 0.0
    %3231 = vmatpush1.msra.mxu0 0.0
    %3232 = vmatprep.subr.mxu0 0.0
    %3233 = vmatpush1.msra.mxu0 0.0
    %3234 = vmatprep.subr.mxu0 0.0
    %3235 = vmatpush1.msra.mxu0 0.0
    %3236 = vmatprep.subr.mxu0 0.0
    %3237 = vmatpush1.msra.mxu0 0.0
    %3238 = vmatprep.subr.mxu0 0.0
    %3239 = vmatpush1.msra.mxu0 0.0
    %3240 = vmatprep.subr.mxu0 0.0
    %3241 = vmatpush1.msra.mxu0 0.0
    %3242 = vmatprep.subr.mxu0 0.0
    %3243 = vmatpush1.msra.mxu0 0.0
    %3244 = vmatprep.subr.mxu0 0.0
    %3245 = vmatpush1.msra.mxu0 0.0
    %3246 = vmatprep.subr.mxu0 0.0
    %3247 = vmatpush1.msra.mxu0 0.0
    %3248 = vmatprep.subr.mxu0 0.0
    %3249 = vmatpush1.msra.mxu0 0.0
    %3250 = vmatprep.mubr.f32.mxu0 0.0
    %3251 = vmatmul.mubr.f32.gmra.mrb[0].mxu0 %v3184
    %v3252 = vpop.f32.mrb[0].mxu0
    %v3253 = vadd.f32 %v2803, %v3252
    %v3254 = vpop.f32.mrb[0].mxu0
    %v3255 = vadd.f32 %v2807, %v3254
    %3256 = vdwg.mxu0
    %v3257 = vadd.f32 %v2780, %v3253
    %v3258 = vxor.u32 %v3257, 2147483648
    %v3259 = vmul.f32 %v3258, 1.442695
    %v3260 = vpow.pop %v3259
    %v3261 = vadd.f32 %v3260, 1.0
    %v3262 = vrcp.pop %v3261
    %v3263 = vmul.f32 1.0, %v3262
    %v3264 = vmul.f32 %v3263, %v3255
    %v3265 = vadd.f32 %v2781, %v3264
    %v3266 = vtanh.pop %v3265
    %v3267 = vsub.f32 1.0, %v3263
    %3269 = vrot.lane.b32.xlu0 %v3266, 64
    %v3270 = vpop.permute.xlu0 %3269
    %v3272 = vmul.f32 %v3267, %v3270
    %v3273 = vmul.f32 %v3263, %v3180
    %v3274 = vadd.f32 %v3272, %v3273
    %3276 = vrot.lane.b32.xlu0 %v3274, 64
    %v3277 = vpop.permute.xlu0 %3276
    %v3278 = vsel %vm625, %v3277, 0
    %3280 = vmatprep.subr.mxu0 %v2783
    %3281 = vmatpush1.msra.mxu0 %v2782
    %3282 = vmatprep.subr.mxu0 %v2785
    %3283 = vmatpush1.msra.mxu0 %v2784
    %3284 = vmatprep.subr.mxu0 %v2787
    %3285 = vmatpush1.msra.mxu0 %v2786
    %3286 = vmatprep.subr.mxu0 %v2789
    %3287 = vmatpush1.msra.mxu0 %v2788
    %3288 = vmatprep.subr.mxu0 %v2791
    %3289 = vmatpush1.msra.mxu0 %v2790
    %3290 = vmatprep.subr.mxu0 %v2793
    %3291 = vmatpush1.msra.mxu0 %v2792
    %3292 = vmatprep.subr.mxu0 %v2795
    %3293 = vmatpush1.msra.mxu0 %v2794
    %3294 = vmatprep.subr.mxu0 %v2797
    %3295 = vmatpush1.msra.mxu0 %v2796
    %3296 = vmatprep.subr.mxu0 0.0
    %3297 = vmatpush1.msra.mxu0 0.0
    %3298 = vmatprep.subr.mxu0 0.0
    %3299 = vmatpush1.msra.mxu0 0.0
    %3300 = vmatprep.subr.mxu0 0.0
    %3301 = vmatpush1.msra.mxu0 0.0
    %3302 = vmatprep.subr.mxu0 0.0
    %3303 = vmatpush1.msra.mxu0 0.0
    %3304 = vmatprep.subr.mxu0 0.0
    %3305 = vmatpush1.msra.mxu0 0.0
    %3306 = vmatprep.subr.mxu0 0.0
    %3307 = vmatpush1.msra.mxu0 0.0
    %3308 = vmatprep.subr.mxu0 0.0
    %3309 = vmatpush1.msra.mxu0 0.0
    %3310 = vmatprep.subr.mxu0 0.0
    %3311 = vmatpush1.msra.mxu0 0.0
    %3312 = vmatprep.subr.mxu0 0.0
    %3313 = vmatpush1.msra.mxu0 0.0
    %3314 = vmatprep.subr.mxu0 0.0
    %3315 = vmatpush1.msra.mxu0 0.0
    %3316 = vmatprep.subr.mxu0 0.0
    %3317 = vmatpush1.msra.mxu0 0.0
    %3318 = vmatprep.subr.mxu0 0.0
    %3319 = vmatpush1.msra.mxu0 0.0
    %3320 = vmatprep.subr.mxu0 0.0
    %3321 = vmatpush1.msra.mxu0 0.0
    %3322 = vmatprep.subr.mxu0 0.0
    %3323 = vmatpush1.msra.mxu0 0.0
    %3324 = vmatprep.subr.mxu0 0.0
    %3325 = vmatpush1.msra.mxu0 0.0
    %3326 = vmatprep.subr.mxu0 0.0
    %3327 = vmatpush1.msra.mxu0 0.0
    %3328 = vmatprep.subr.mxu0 0.0
    %3329 = vmatpush1.msra.mxu0 0.0
    %3330 = vmatprep.subr.mxu0 0.0
    %3331 = vmatpush1.msra.mxu0 0.0
    %3332 = vmatprep.subr.mxu0 0.0
    %3333 = vmatpush1.msra.mxu0 0.0
    %3334 = vmatprep.subr.mxu0 0.0
    %3335 = vmatpush1.msra.mxu0 0.0
    %3336 = vmatprep.subr.mxu0 0.0
    %3337 = vmatpush1.msra.mxu0 0.0
    %3338 = vmatprep.subr.mxu0 0.0
    %3339 = vmatpush1.msra.mxu0 0.0
    %3340 = vmatprep.subr.mxu0 0.0
    %3341 = vmatpush1.msra.mxu0 0.0
    %3342 = vmatprep.subr.mxu0 0.0
    %3343 = vmatpush1.msra.mxu0 0.0
    %3344 = vmatprep.mubr.f32.mxu0 0.0
    %3345 = vmatmul.mubr.f32.gmra.mrb[0].mxu0 %v3278
    %v3346 = vpop.f32.mrb[0].mxu0
    %v3347 = vadd.f32 %v2803, %v3346
    %v3348 = vpop.f32.mrb[0].mxu0
    %v3349 = vadd.f32 %v2807, %v3348
    %3350 = vdwg.mxu0
    %v3351 = vadd.f32 %v2780, %v3347
    %v3352 = vxor.u32 %v3351, 2147483648
    %v3353 = vmul.f32 %v3352, 1.442695
    %v3354 = vpow.pop %v3353
    %v3355 = vadd.f32 %v3354, 1.0
    %v3356 = vrcp.pop %v3355
    %v3357 = vmul.f32 1.0, %v3356
    %v3358 = vmul.f32 %v3357, %v3349
    %v3359 = vadd.f32 %v2781, %v3358
    %v3360 = vtanh.pop %v3359
    %v3361 = vsub.f32 1.0, %v3357
    %3363 = vrot.lane.b32.xlu0 %v3360, 64
    %v3364 = vpop.permute.xlu0 %3363
    %v3366 = vmul.f32 %v3361, %v3364
    %v3367 = vmul.f32 %v3357, %v3274
    %v3368 = vadd.f32 %v3366, %v3367
    %3370 = vrot.lane.b32.xlu0 %v3368, 64
    %v3371 = vpop.permute.xlu0 %3370
    %v3372 = vsel %vm625, %v3371, 0
    %3374 = vmatprep.subr.mxu0 %v2783
    %3375 = vmatpush1.msra.mxu0 %v2782
    %3376 = vmatprep.subr.mxu0 %v2785
    %3377 = vmatpush1.msra.mxu0 %v2784
    %3378 = vmatprep.subr.mxu0 %v2787
    %3379 = vmatpush1.msra.mxu0 %v2786
    %3380 = vmatprep.subr.mxu0 %v2789
    %3381 = vmatpush1.msra.mxu0 %v2788
    %3382 = vmatprep.subr.mxu0 %v2791
    %3383 = vmatpush1.msra.mxu0 %v2790
    %3384 = vmatprep.subr.mxu0 %v2793
    %3385 = vmatpush1.msra.mxu0 %v2792
    %3386 = vmatprep.subr.mxu0 %v2795
    %3387 = vmatpush1.msra.mxu0 %v2794
    %3388 = vmatprep.subr.mxu0 %v2797
    %3389 = vmatpush1.msra.mxu0 %v2796
    %3390 = vmatprep.subr.mxu0 0.0
    %3391 = vmatpush1.msra.mxu0 0.0
    %3392 = vmatprep.subr.mxu0 0.0
    %3393 = vmatpush1.msra.mxu0 0.0
    %3394 = vmatprep.subr.mxu0 0.0
    %3395 = vmatpush1.msra.mxu0 0.0
    %3396 = vmatprep.subr.mxu0 0.0
    %3397 = vmatpush1.msra.mxu0 0.0
    %3398 = vmatprep.subr.mxu0 0.0
    %3399 = vmatpush1.msra.mxu0 0.0
    %3400 = vmatprep.subr.mxu0 0.0
    %3401 = vmatpush1.msra.mxu0 0.0
    %3402 = vmatprep.subr.mxu0 0.0
    %3403 = vmatpush1.msra.mxu0 0.0
    %3404 = vmatprep.subr.mxu0 0.0
    %3405 = vmatpush1.msra.mxu0 0.0
    %3406 = vmatprep.subr.mxu0 0.0
    %3407 = vmatpush1.msra.mxu0 0.0
    %3408 = vmatprep.subr.mxu0 0.0
    %3409 = vmatpush1.msra.mxu0 0.0
    %3410 = vmatprep.subr.mxu0 0.0
    %3411 = vmatpush1.msra.mxu0 0.0
    %3412 = vmatprep.subr.mxu0 0.0
    %3413 = vmatpush1.msra.mxu0 0.0
    %3414 = vmatprep.subr.mxu0 0.0
    %3415 = vmatpush1.msra.mxu0 0.0
    %3416 = vmatprep.subr.mxu0 0.0
    %3417 = vmatpush1.msra.mxu0 0.0
    %3418 = vmatprep.subr.mxu0 0.0
    %3419 = vmatpush1.msra.mxu0 0.0
    %3420 = vmatprep.subr.mxu0 0.0
    %3421 = vmatpush1.msra.mxu0 0.0
    %3422 = vmatprep.subr.mxu0 0.0
    %3423 = vmatpush1.msra.mxu0 0.0
    %3424 = vmatprep.subr.mxu0 0.0
    %3425 = vmatpush1.msra.mxu0 0.0
    %3426 = vmatprep.subr.mxu0 0.0
    %3427 = vmatpush1.msra.mxu0 0.0
    %3428 = vmatprep.subr.mxu0 0.0
    %3429 = vmatpush1.msra.mxu0 0.0
    %3430 = vmatprep.subr.mxu0 0.0
    %3431 = vmatpush1.msra.mxu0 0.0
    %3432 = vmatprep.subr.mxu0 0.0
    %3433 = vmatpush1.msra.mxu0 0.0
    %3434 = vmatprep.subr.mxu0 0.0
    %3435 = vmatpush1.msra.mxu0 0.0
    %3436 = vmatprep.subr.mxu0 0.0
    %3437 = vmatpush1.msra.mxu0 0.0
    %3438 = vmatprep.mubr.f32.mxu0 0.0
    %3439 = vmatmul.mubr.f32.gmra.mrb[0].mxu0 %v3372
    %v3440 = vpop.f32.mrb[0].mxu0
    %v3441 = vadd.f32 %v2803, %v3440
    %v3442 = vpop.f32.mrb[0].mxu0
    %v3443 = vadd.f32 %v2807, %v3442
    %3444 = vdwg.mxu0
    %v3445 = vadd.f32 %v2780, %v3441
    %v3446 = vxor.u32 %v3445, 2147483648
    %v3447 = vmul.f32 %v3446, 1.442695
    %v3448 = vpow.pop %v3447
    %v3449 = vadd.f32 %v3448, 1.0
    %v3450 = vrcp.pop %v3449
    %v3451 = vmul.f32 1.0, %v3450
    %v3452 = vmul.f32 %v3451, %v3443
    %v3453 = vadd.f32 %v2781, %v3452
    %v3454 = vtanh.pop %v3453
    %v3455 = vsub.f32 1.0, %v3451
    %3457 = vrot.lane.b32.xlu0 %v3454, 64
    %v3458 = vpop.permute.xlu0 %3457
    %v3460 = vmul.f32 %v3455, %v3458
    %v3461 = vmul.f32 %v3451, %v3368
    %v3462 = vadd.f32 %v3460, %v3461
    %3464 = vrot.lane.b32.xlu0 %v3462, 64
    %v3465 = vpop.permute.xlu0 %3464
    %v3466 = vsel %vm625, %v3465, 0
    %3468 = vmatprep.subr.mxu0 %v2783
    %3469 = vmatpush1.msra.mxu0 %v2782
    %3470 = vmatprep.subr.mxu0 %v2785
    %3471 = vmatpush1.msra.mxu0 %v2784
    %3472 = vmatprep.subr.mxu0 %v2787
    %3473 = vmatpush1.msra.mxu0 %v2786
    %3474 = vmatprep.subr.mxu0 %v2789
    %3475 = vmatpush1.msra.mxu0 %v2788
    %3476 = vmatprep.subr.mxu0 %v2791
    %3477 = vmatpush1.msra.mxu0 %v2790
    %3478 = vmatprep.subr.mxu0 %v2793
    %3479 = vmatpush1.msra.mxu0 %v2792
    %3480 = vmatprep.subr.mxu0 %v2795
    %3481 = vmatpush1.msra.mxu0 %v2794
    %3482 = vmatprep.subr.mxu0 %v2797
    %3483 = vmatpush1.msra.mxu0 %v2796
    %3484 = vmatprep.subr.mxu0 0.0
    %3485 = vmatpush1.msra.mxu0 0.0
    %3486 = vmatprep.subr.mxu0 0.0
    %3487 = vmatpush1.msra.mxu0 0.0
    %3488 = vmatprep.subr.mxu0 0.0
    %3489 = vmatpush1.msra.mxu0 0.0
    %3490 = vmatprep.subr.mxu0 0.0
    %3491 = vmatpush1.msra.mxu0 0.0
    %3492 = vmatprep.subr.mxu0 0.0
    %3493 = vmatpush1.msra.mxu0 0.0
    %3494 = vmatprep.subr.mxu0 0.0
    %3495 = vmatpush1.msra.mxu0 0.0
    %3496 = vmatprep.subr.mxu0 0.0
    %3497 = vmatpush1.msra.mxu0 0.0
    %3498 = vmatprep.subr.mxu0 0.0
    %3499 = vmatpush1.msra.mxu0 0.0
    %3500 = vmatprep.subr.mxu0 0.0
    %3501 = vmatpush1.msra.mxu0 0.0
    %3502 = vmatprep.subr.mxu0 0.0
    %3503 = vmatpush1.msra.mxu0 0.0
    %3504 = vmatprep.subr.mxu0 0.0
    %3505 = vmatpush1.msra.mxu0 0.0
    %3506 = vmatprep.subr.mxu0 0.0
    %3507 = vmatpush1.msra.mxu0 0.0
    %3508 = vmatprep.subr.mxu0 0.0
    %3509 = vmatpush1.msra.mxu0 0.0
    %3510 = vmatprep.subr.mxu0 0.0
    %3511 = vmatpush1.msra.mxu0 0.0
    %3512 = vmatprep.subr.mxu0 0.0
    %3513 = vmatpush1.msra.mxu0 0.0
    %3514 = vmatprep.subr.mxu0 0.0
    %3515 = vmatpush1.msra.mxu0 0.0
    %3516 = vmatprep.subr.mxu0 0.0
    %3517 = vmatpush1.msra.mxu0 0.0
    %3518 = vmatprep.subr.mxu0 0.0
    %3519 = vmatpush1.msra.mxu0 0.0
    %3520 = vmatprep.subr.mxu0 0.0
    %3521 = vmatpush1.msra.mxu0 0.0
    %3522 = vmatprep.subr.mxu0 0.0
    %3523 = vmatpush1.msra.mxu0 0.0
    %3524 = vmatprep.subr.mxu0 0.0
    %3525 = vmatpush1.msra.mxu0 0.0
    %3526 = vmatprep.subr.mxu0 0.0
    %3527 = vmatpush1.msra.mxu0 0.0
    %3528 = vmatprep.subr.mxu0 0.0
    %3529 = vmatpush1.msra.mxu0 0.0
    %3530 = vmatprep.subr.mxu0 0.0
    %3531 = vmatpush1.msra.mxu0 0.0
    %3532 = vmatprep.mubr.f32.mxu0 0.0
    %3533 = vmatmul.mubr.f32.gmra.mrb[0].mxu0 %v3466
    %v3534 = vpop.f32.mrb[0].mxu0
    %v3535 = vadd.f32 %v2803, %v3534
    %v3536 = vpop.f32.mrb[0].mxu0
    %v3537 = vadd.f32 %v2807, %v3536
    %3538 = vdwg.mxu0
    %v3539 = vadd.f32 %v2780, %v3535
    %v3540 = vxor.u32 %v3539, 2147483648
    %v3541 = vmul.f32 %v3540, 1.442695
    %v3542 = vpow.pop %v3541
    %v3543 = vadd.f32 %v3542, 1.0
    %v3544 = vrcp.pop %v3543
    %v3545 = vmul.f32 1.0, %v3544
    %v3546 = vmul.f32 %v3545, %v3537
    %v3547 = vadd.f32 %v2781, %v3546
    %v3548 = vtanh.pop %v3547
    %v3549 = vsub.f32 1.0, %v3545
    %3551 = vrot.lane.b32.xlu0 %v3548, 64
    %v3552 = vpop.permute.xlu0 %3551
    %v3554 = vmul.f32 %v3549, %v3552
    %v3555 = vmul.f32 %v3545, %v3462
    %v3556 = vadd.f32 %v3554, %v3555
    %v3557 = vrot.slane %v2992, 6
    %v3559 = vrot.slane %v3086, 4
    %v3561 = vrot.slane %v3180, 2
    %v3563 = vrot.slane %v3368, 6
    %v3565 = vrot.slane %v3462, 4
    %v3568 = vrot.slane %v3556, 2
    %v3570 = vsel %vm329, %v2898, %v3557
    %v3571 = vsel %vm1451, %v3570, %v3559
    %v3572 = vsel %vm1453, %v3571, %v3561
    %v3573 = vsel %vm329, %v3274, %v3563
    %v3574 = vsel %vm1451, %v3573, %v3565
    %v3575 = vsel %vm1453, %v3574, %v3568
    %v3576 = vrot.slane %v3462, 6
    %v3578 = vrot.slane %v3368, 4
    %v3580 = vrot.slane %v3274, 2
    %v3582 = vrot.slane %v3086, 6
    %v3584 = vrot.slane %v2992, 4
    %v3586 = vrot.slane %v2898, 2
    %v3588 = vsel %vm329, %v3556, %v3576
    %v3589 = vsel %vm1451, %v3588, %v3578
    %v3590 = vsel %vm1453, %v3589, %v3580
    %v3591 = vsel %vm329, %v3180, %v3582
    %v3592 = vsel %vm1451, %v3591, %v3584
    %v3593 = vsel %vm1453, %v3592, %v3586
    %3596 = vrot.lane.b32.xlu0 %v3572, 64
    %v3597 = vpop.permute.xlu0 %3596
    %3598 = vrot.lane.b32.xlu0 %v3575, 64
    %v3599 = vpop.permute.xlu0 %3598
    %3604 = vrot.lane.b32.xlu0 %v3590, 64
    %v3605 = vpop.permute.xlu0 %3604
    %3606 = vrot.lane.b32.xlu0 %v3593, 64
    %v3607 = vpop.permute.xlu0 %3606
    %v3610 = vsel %vm1491, %v3597, %v3605
    %v3611 = vsel %vm1491, %v3599, %v3607
    %v3612 = vld [vmem:[#allocation11] sm:$0xff]
    %v3613 = vld [vmem:[#allocation11 + $0x8] sm:$0xff]
    %v3614 = vld [vmem:[#allocation11 + $0x10] sm:$0xff]
    %v3615 = vld [vmem:[#allocation11 + $0x18] sm:$0xff]
    %v3616 = vld [vmem:[#allocation11 + $0x20] sm:$0xff]
    %v3617 = vld [vmem:[#allocation11 + $0x28] sm:$0xff]
    %v3618 = vld [vmem:[#allocation11 + $0x30] sm:$0xff]
    %v3619 = vld [vmem:[#allocation11 + $0x38] sm:$0xff]
    %v3620 = vld [vmem:[#allocation11 + $0x40] sm:$0xff]
    %v3621 = vld [vmem:[#allocation11 + $0x48] sm:$0xff]
    %v3622 = vld [vmem:[#allocation11 + $0x50] sm:$0xff]
    %v3623 = vld [vmem:[#allocation11 + $0x58] sm:$0xff]
    %v3624 = vld [vmem:[#allocation11 + $0x60] sm:$0xff]
    %v3625 = vld [vmem:[#allocation11 + $0x68] sm:$0xff]
    %v3626 = vld [vmem:[#allocation11 + $0x70] sm:$0xff]
    %v3627 = vld [vmem:[#allocation11 + $0x78] sm:$0xff]
    %v3628 = vld [vmem:[#allocation14] sm:$0x3]
    %v3630 = vlaneseq
    %v3631 = vshrl.u32 %v3630, 7
    %v3632 = vsub.s32 0, %v3631
    %v3633 = vrot.slane %v3628, %v3632
    %v3634 = vlaneseq
    %v3635 = vshrl.u32 %v3634, 7
    %v3636 = vsub.s32 1, %v3635
    %v3637 = vrot.slane %v3628, %v3636
    %v3641 = vsel %vm625, %v3610, 0
    %v3644 = vsel %vm625, %v3611, 0
    %3646 = vmatprep.subr.mxu0 %v3613
    %3647 = vmatpush1.msra.mxu0 %v3612
    %3648 = vmatprep.subr.mxu0 %v3615
    %3649 = vmatpush1.msra.mxu0 %v3614
    %3650 = vmatprep.subr.mxu0 %v3617
    %3651 = vmatpush1.msra.mxu0 %v3616
    %3652 = vmatprep.subr.mxu0 %v3619
    %3653 = vmatpush1.msra.mxu0 %v3618
    %3654 = vmatprep.subr.mxu0 %v3621
    %3655 = vmatpush1.msra.mxu0 %v3620
    %3656 = vmatprep.subr.mxu0 %v3623
    %3657 = vmatpush1.msra.mxu0 %v3622
    %3658 = vmatprep.subr.mxu0 %v3625
    %3659 = vmatpush1.msra.mxu0 %v3624
    %3660 = vmatprep.subr.mxu0 %v3627
    %3661 = vmatpush1.msra.mxu0 %v3626
    %3662 = vmatprep.subr.mxu0 0.0
    %3663 = vmatpush1.msra.mxu0 0.0
    %3664 = vmatprep.subr.mxu0 0.0
    %3665 = vmatpush1.msra.mxu0 0.0
    %3666 = vmatprep.subr.mxu0 0.0
    %3667 = vmatpush1.msra.mxu0 0.0
    %3668 = vmatprep.subr.mxu0 0.0
    %3669 = vmatpush1.msra.mxu0 0.0
    %3670 = vmatprep.subr.mxu0 0.0
    %3671 = vmatpush1.msra.mxu0 0.0
    %3672 = vmatprep.subr.mxu0 0.0
    %3673 = vmatpush1.msra.mxu0 0.0
    %3674 = vmatprep.subr.mxu0 0.0
    %3675 = vmatpush1.msra.mxu0 0.0
    %3676 = vmatprep.subr.mxu0 0.0
    %3677 = vmatpush1.msra.mxu0 0.0
    %3678 = vmatprep.subr.mxu0 0.0
    %3679 = vmatpush1.msra.mxu0 0.0
    %3680 = vmatprep.subr.mxu0 0.0
    %3681 = vmatpush1.msra.mxu0 0.0
    %3682 = vmatprep.subr.mxu0 0.0
    %3683 = vmatpush1.msra.mxu0 0.0
    %3684 = vmatprep.subr.mxu0 0.0
    %3685 = vmatpush1.msra.mxu0 0.0
    %3686 = vmatprep.subr.mxu0 0.0
    %3687 = vmatpush1.msra.mxu0 0.0
    %3688 = vmatprep.subr.mxu0 0.0
    %3689 = vmatpush1.msra.mxu0 0.0
    %3690 = vmatprep.subr.mxu0 0.0
    %3691 = vmatpush1.msra.mxu0 0.0
    %3692 = vmatprep.subr.mxu0 0.0
    %3693 = vmatpush1.msra.mxu0 0.0
    %3694 = vmatprep.subr.mxu0 0.0
    %3695 = vmatpush1.msra.mxu0 0.0
    %3696 = vmatprep.subr.mxu0 0.0
    %3697 = vmatpush1.msra.mxu0 0.0
    %3698 = vmatprep.subr.mxu0 0.0
    %3699 = vmatpush1.msra.mxu0 0.0
    %3700 = vmatprep.subr.mxu0 0.0
    %3701 = vmatpush1.msra.mxu0 0.0
    %3702 = vmatprep.subr.mxu0 0.0
    %3703 = vmatpush1.msra.mxu0 0.0
    %3704 = vmatprep.subr.mxu0 0.0
    %3705 = vmatpush1.msra.mxu0 0.0
    %3706 = vmatprep.subr.mxu0 0.0
    %3707 = vmatpush1.msra.mxu0 0.0
    %3708 = vmatprep.subr.mxu0 0.0
    %3709 = vmatpush1.msra.mxu0 0.0
    %3710 = vmatprep.mubr.f32.mxu0 0.0
    %3711 = vmatmul.mubr.f32.gmra.mrb[0].mxu0 %v3641
    %v3712 = vpop.f32.mrb[0].mxu0
    %v3713 = vadd.f32 %v3633, %v3712
    %v3714 = vpop.f32.mrb[0].mxu0
    %v3715 = vadd.f32 %v3637, %v3714
    %3716 = vmatprep.mubr.f32.mxu0 0.0
    %3717 = vmatmul.mubr.f32.gmra.mrb[0].mxu0 %v3644
    %v3718 = vpop.f32.mrb[0].mxu0
    %v3719 = vadd.f32 %v3633, %v3718
    %v3720 = vpop.f32.mrb[0].mxu0
    %v3721 = vadd.f32 %v3637, %v3720
    %3722 = vdwg.mxu0
    %v3723 = vld [vmem:[#allocation13] sm:$0xff]
    %v3724 = vld [vmem:[#allocation13 + $0x8] sm:$0xff]
    %v3725 = vld [vmem:[#allocation13 + $0x10] sm:$0xff]
    %v3726 = vld [vmem:[#allocation13 + $0x18] sm:$0xff]
    %v3727 = vld [vmem:[#allocation13 + $0x20] sm:$0xff]
    %v3728 = vld [vmem:[#allocation13 + $0x28] sm:$0xff]
    %v3729 = vld [vmem:[#allocation13 + $0x30] sm:$0xff]
    %v3730 = vld [vmem:[#allocation13 + $0x38] sm:$0xff]
    %v3731 = vld [vmem:[#allocation13 + $0x40] sm:$0xff]
    %v3732 = vld [vmem:[#allocation13 + $0x48] sm:$0xff]
    %v3733 = vld [vmem:[#allocation13 + $0x50] sm:$0xff]
    %v3734 = vld [vmem:[#allocation13 + $0x58] sm:$0xff]
    %v3735 = vld [vmem:[#allocation13 + $0x60] sm:$0xff]
    %v3736 = vld [vmem:[#allocation13 + $0x68] sm:$0xff]
    %v3737 = vld [vmem:[#allocation13 + $0x70] sm:$0xff]
    %v3738 = vld [vmem:[#allocation13 + $0x78] sm:$0xff]
    %3739 = vmatprep.subr.mxu0 %v3724
    %3740 = vmatpush1.msra.mxu0 %v3723
    %3741 = vmatprep.subr.mxu0 %v3726
    %3742 = vmatpush1.msra.mxu0 %v3725
    %3743 = vmatprep.subr.mxu0 %v3728
    %3744 = vmatpush1.msra.mxu0 %v3727
    %3745 = vmatprep.subr.mxu0 %v3730
    %3746 = vmatpush1.msra.mxu0 %v3729
    %3747 = vmatprep.subr.mxu0 %v3732
    %3748 = vmatpush1.msra.mxu0 %v3731
    %3749 = vmatprep.subr.mxu0 %v3734
    %3750 = vmatpush1.msra.mxu0 %v3733
    %3751 = vmatprep.subr.mxu0 %v3736
    %3752 = vmatpush1.msra.mxu0 %v3735
    %3753 = vmatprep.subr.mxu0 %v3738
    %3754 = vmatpush1.msra.mxu0 %v3737
    %3755 = vmatprep.subr.mxu0 0.0
    %3756 = vmatpush1.msra.mxu0 0.0
    %3757 = vmatprep.subr.mxu0 0.0
    %3758 = vmatpush1.msra.mxu0 0.0
    %3759 = vmatprep.subr.mxu0 0.0
    %3760 = vmatpush1.msra.mxu0 0.0
    %3761 = vmatprep.subr.mxu0 0.0
    %3762 = vmatpush1.msra.mxu0 0.0
    %3763 = vmatprep.subr.mxu0 0.0
    %3764 = vmatpush1.msra.mxu0 0.0
    %3765 = vmatprep.subr.mxu0 0.0
    %3766 = vmatpush1.msra.mxu0 0.0
    %3767 = vmatprep.subr.mxu0 0.0
    %3768 = vmatpush1.msra.mxu0 0.0
    %3769 = vmatprep.subr.mxu0 0.0
    %3770 = vmatpush1.msra.mxu0 0.0
    %3771 = vmatprep.subr.mxu0 0.0
    %3772 = vmatpush1.msra.mxu0 0.0
    %3773 = vmatprep.subr.mxu0 0.0
    %3774 = vmatpush1.msra.mxu0 0.0
    %3775 = vmatprep.subr.mxu0 0.0
    %3776 = vmatpush1.msra.mxu0 0.0
    %3777 = vmatprep.subr.mxu0 0.0
    %3778 = vmatpush1.msra.mxu0 0.0
    %3779 = vmatprep.subr.mxu0 0.0
    %3780 = vmatpush1.msra.mxu0 0.0
    %3781 = vmatprep.subr.mxu0 0.0
    %3782 = vmatpush1.msra.mxu0 0.0
    %3783 = vmatprep.subr.mxu0 0.0
    %3784 = vmatpush1.msra.mxu0 0.0
    %3785 = vmatprep.subr.mxu0 0.0
    %3786 = vmatpush1.msra.mxu0 0.0
    %3787 = vmatprep.subr.mxu0 0.0
    %3788 = vmatpush1.msra.mxu0 0.0
    %3789 = vmatprep.subr.mxu0 0.0
    %3790 = vmatpush1.msra.mxu0 0.0
    %3791 = vmatprep.subr.mxu0 0.0
    %3792 = vmatpush1.msra.mxu0 0.0
    %3793 = vmatprep.subr.mxu0 0.0
    %3794 = vmatpush1.msra.mxu0 0.0
    %3795 = vmatprep.subr.mxu0 0.0
    %3796 = vmatpush1.msra.mxu0 0.0
    %3797 = vmatprep.subr.mxu0 0.0
    %3798 = vmatpush1.msra.mxu0 0.0
    %3799 = vmatprep.subr.mxu0 0.0
    %3800 = vmatpush1.msra.mxu0 0.0
    %3801 = vmatprep.subr.mxu0 0.0
    %3802 = vmatpush1.msra.mxu0 0.0
    %3803 = vmatprep.mubr.f32.mxu0 0.0
    %3804 = vmatmul.mubr.f32.gmra.mrb[0].mxu0 %v3641
    %v3805 = vpop.f32.mrb[0].mxu0
    %v3806 = vadd.f32 0.0, %v3805
    %v3807 = vpop.f32.mrb[0].mxu0
    %v3808 = vadd.f32 0.0, %v3807
    %3809 = vmatprep.mubr.f32.mxu0 0.0
    %3810 = vmatmul.mubr.f32.gmra.mrb[0].mxu0 %v3644
    %v3811 = vpop.f32.mrb[0].mxu0
    %v3812 = vadd.f32 0.0, %v3811
    %v3813 = vpop.f32.mrb[0].mxu0
    %v3814 = vadd.f32 0.0, %v3813
    %3815 = vdwg.mxu0
    %v3816 = vld [vmem:[#allocation16] sm:$0xff]
    %v3817 = vld [vmem:[#allocation16 + $0x8] sm:$0xff]
    %v3818 = vld [vmem:[#allocation16 + $0x10] sm:$0xff]
    %v3819 = vld [vmem:[#allocation16 + $0x18] sm:$0xff]
    %v3820 = vld [vmem:[#allocation16 + $0x20] sm:$0xff]
    %v3821 = vld [vmem:[#allocation16 + $0x28] sm:$0xff]
    %v3822 = vld [vmem:[#allocation16 + $0x30] sm:$0xff]
    %v3823 = vld [vmem:[#allocation16 + $0x38] sm:$0xff]
    %v3824 = vld [vmem:[#allocation16 + $0x40] sm:$0xff]
    %v3825 = vld [vmem:[#allocation16 + $0x48] sm:$0xff]
    %v3826 = vld [vmem:[#allocation16 + $0x50] sm:$0xff]
    %v3827 = vld [vmem:[#allocation16 + $0x58] sm:$0xff]
    %v3828 = vld [vmem:[#allocation16 + $0x60] sm:$0xff]
    %v3829 = vld [vmem:[#allocation16 + $0x68] sm:$0xff]
    %v3830 = vld [vmem:[#allocation16 + $0x70] sm:$0xff]
    %v3831 = vld [vmem:[#allocation16 + $0x78] sm:$0xff]
    %v3832 = vld [vmem:[#allocation17] sm:$0x3]
    %v3834 = vlaneseq
    %v3835 = vshrl.u32 %v3834, 7
    %v3836 = vsub.s32 0, %v3835
    %v3837 = vrot.slane %v3832, %v3836
    %v3838 = vlaneseq
    %v3839 = vshrl.u32 %v3838, 7
    %v3840 = vsub.s32 1, %v3839
    %v3841 = vrot.slane %v3832, %v3840
    %v3846 = vrot.slane %v3812, 6
    %v3847 = vrot.slane %v3814, 6
    %v3850 = vadd.f32 %v3713, %v3846
    %v3851 = vadd.f32 %v3715, %v3847
    %3852 = vmatprep.subr.mxu0 %v3817
    %3853 = vmatpush1.msra.mxu0 %v3816
    %3854 = vmatprep.subr.mxu0 %v3819
    %3855 = vmatpush1.msra.mxu0 %v3818
    %3856 = vmatprep.subr.mxu0 %v3821
    %3857 = vmatpush1.msra.mxu0 %v3820
    %3858 = vmatprep.subr.mxu0 %v3823
    %3859 = vmatpush1.msra.mxu0 %v3822
    %3860 = vmatprep.subr.mxu0 %v3825
    %3861 = vmatpush1.msra.mxu0 %v3824
    %3862 = vmatprep.subr.mxu0 %v3827
    %3863 = vmatpush1.msra.mxu0 %v3826
    %3864 = vmatprep.subr.mxu0 %v3829
    %3865 = vmatpush1.msra.mxu0 %v3828
    %3866 = vmatprep.subr.mxu0 %v3831
    %3867 = vmatpush1.msra.mxu0 %v3830
    %3868 = vmatprep.subr.mxu0 0.0
    %3869 = vmatpush1.msra.mxu0 0.0
    %3870 = vmatprep.subr.mxu0 0.0
    %3871 = vmatpush1.msra.mxu0 0.0
    %3872 = vmatprep.subr.mxu0 0.0
    %3873 = vmatpush1.msra.mxu0 0.0
    %3874 = vmatprep.subr.mxu0 0.0
    %3875 = vmatpush1.msra.mxu0 0.0
    %3876 = vmatprep.subr.mxu0 0.0
    %3877 = vmatpush1.msra.mxu0 0.0
    %3878 = vmatprep.subr.mxu0 0.0
    %3879 = vmatpush1.msra.mxu0 0.0
    %3880 = vmatprep.subr.mxu0 0.0
    %3881 = vmatpush1.msra.mxu0 0.0
    %3882 = vmatprep.subr.mxu0 0.0
    %3883 = vmatpush1.msra.mxu0 0.0
    %3884 = vmatprep.subr.mxu0 0.0
    %3885 = vmatpush1.msra.mxu0 0.0
    %3886 = vmatprep.subr.mxu0 0.0
    %3887 = vmatpush1.msra.mxu0 0.0
    %3888 = vmatprep.subr.mxu0 0.0
    %3889 = vmatpush1.msra.mxu0 0.0
    %3890 = vmatprep.subr.mxu0 0.0
    %3891 = vmatpush1.msra.mxu0 0.0
    %3892 = vmatprep.subr.mxu0 0.0
    %3893 = vmatpush1.msra.mxu0 0.0
    %3894 = vmatprep.subr.mxu0 0.0
    %3895 = vmatpush1.msra.mxu0 0.0
    %3896 = vmatprep.subr.mxu0 0.0
    %3897 = vmatpush1.msra.mxu0 0.0
    %3898 = vmatprep.subr.mxu0 0.0
    %3899 = vmatpush1.msra.mxu0 0.0
    %3900 = vmatprep.subr.mxu0 0.0
    %3901 = vmatpush1.msra.mxu0 0.0
    %3902 = vmatprep.subr.mxu0 0.0
    %3903 = vmatpush1.msra.mxu0 0.0
    %3904 = vmatprep.subr.mxu0 0.0
    %3905 = vmatpush1.msra.mxu0 0.0
    %3906 = vmatprep.subr.mxu0 0.0
    %3907 = vmatpush1.msra.mxu0 0.0
    %3908 = vmatprep.subr.mxu0 0.0
    %3909 = vmatpush1.msra.mxu0 0.0
    %3910 = vmatprep.subr.mxu0 0.0
    %3911 = vmatpush1.msra.mxu0 0.0
    %3912 = vmatprep.subr.mxu0 0.0
    %3913 = vmatpush1.msra.mxu0 0.0
    %3914 = vmatprep.subr.mxu0 0.0
    %3915 = vmatpush1.msra.mxu0 0.0
    %3916 = vmatprep.mubr.f32.mxu0 0.0
    %3917 = vmatmul.mubr.f32.gmra.mrb[0].mxu0 %v627
    %v3918 = vpop.f32.mrb[0].mxu0
    %v3919 = vadd.f32 %v3837, %v3918
    %v3920 = vpop.f32.mrb[0].mxu0
    %v3921 = vadd.f32 %v3841, %v3920
    %3922 = vdwg.mxu0
    %v3923 = vadd.f32 %v3850, %v3919
    %v3924 = vxor.u32 %v3923, 2147483648
    %v3925 = vmul.f32 %v3924, 1.442695
    %v3926 = vpow.pop %v3925
    %v3927 = vadd.f32 %v3926, 1.0
    %v3928 = vrcp.pop %v3927
    %v3929 = vmul.f32 1.0, %v3928
    %v3930 = vmul.f32 %v3929, %v3921
    %v3931 = vadd.f32 %v3851, %v3930
    %v3932 = vtanh.pop %v3931
    %v3933 = vsub.f32 1.0, %v3929
    %3935 = vrot.lane.b32.xlu0 %v3932, 64
    %v3936 = vpop.permute.xlu0 %3935
    %v3938 = vmul.f32 %v3933, %v3936
    %v3939 = vmul.f32 %v3929, 0.0
    %v3940 = vadd.f32 %v3938, %v3939
    %v3941 = vrot.slane %v3812, 2
    %v3942 = vrot.slane %v3814, 2
    %v3945 = vadd.f32 %v3713, %v3941
    %v3946 = vadd.f32 %v3715, %v3942
    %3948 = vrot.lane.b32.xlu0 %v3940, 64
    %v3949 = vpop.permute.xlu0 %3948
    %v3950 = vsel %vm625, %v3949, 0
    %3952 = vmatprep.subr.mxu0 %v3817
    %3953 = vmatpush1.msra.mxu0 %v3816
    %3954 = vmatprep.subr.mxu0 %v3819
    %3955 = vmatpush1.msra.mxu0 %v3818
    %3956 = vmatprep.subr.mxu0 %v3821
    %3957 = vmatpush1.msra.mxu0 %v3820
    %3958 = vmatprep.subr.mxu0 %v3823
    %3959 = vmatpush1.msra.mxu0 %v3822
    %3960 = vmatprep.subr.mxu0 %v3825
    %3961 = vmatpush1.msra.mxu0 %v3824
    %3962 = vmatprep.subr.mxu0 %v3827
    %3963 = vmatpush1.msra.mxu0 %v3826
    %3964 = vmatprep.subr.mxu0 %v3829
    %3965 = vmatpush1.msra.mxu0 %v3828
    %3966 = vmatprep.subr.mxu0 %v3831
    %3967 = vmatpush1.msra.mxu0 %v3830
    %3968 = vmatprep.subr.mxu0 0.0
    %3969 = vmatpush1.msra.mxu0 0.0
    %3970 = vmatprep.subr.mxu0 0.0
    %3971 = vmatpush1.msra.mxu0 0.0
    %3972 = vmatprep.subr.mxu0 0.0
    %3973 = vmatpush1.msra.mxu0 0.0
    %3974 = vmatprep.subr.mxu0 0.0
    %3975 = vmatpush1.msra.mxu0 0.0
    %3976 = vmatprep.subr.mxu0 0.0
    %3977 = vmatpush1.msra.mxu0 0.0
    %3978 = vmatprep.subr.mxu0 0.0
    %3979 = vmatpush1.msra.mxu0 0.0
    %3980 = vmatprep.subr.mxu0 0.0
    %3981 = vmatpush1.msra.mxu0 0.0
    %3982 = vmatprep.subr.mxu0 0.0
    %3983 = vmatpush1.msra.mxu0 0.0
    %3984 = vmatprep.subr.mxu0 0.0
    %3985 = vmatpush1.msra.mxu0 0.0
    %3986 = vmatprep.subr.mxu0 0.0
    %3987 = vmatpush1.msra.mxu0 0.0
    %3988 = vmatprep.subr.mxu0 0.0
    %3989 = vmatpush1.msra.mxu0 0.0
    %3990 = vmatprep.subr.mxu0 0.0
    %3991 = vmatpush1.msra.mxu0 0.0
    %3992 = vmatprep.subr.mxu0 0.0
    %3993 = vmatpush1.msra.mxu0 0.0
    %3994 = vmatprep.subr.mxu0 0.0
    %3995 = vmatpush1.msra.mxu0 0.0
    %3996 = vmatprep.subr.mxu0 0.0
    %3997 = vmatpush1.msra.mxu0 0.0
    %3998 = vmatprep.subr.mxu0 0.0
    %3999 = vmatpush1.msra.mxu0 0.0
    %4000 = vmatprep.subr.mxu0 0.0
    %4001 = vmatpush1.msra.mxu0 0.0
    %4002 = vmatprep.subr.mxu0 0.0
    %4003 = vmatpush1.msra.mxu0 0.0
    %4004 = vmatprep.subr.mxu0 0.0
    %4005 = vmatpush1.msra.mxu0 0.0
    %4006 = vmatprep.subr.mxu0 0.0
    %4007 = vmatpush1.msra.mxu0 0.0
    %4008 = vmatprep.subr.mxu0 0.0
    %4009 = vmatpush1.msra.mxu0 0.0
    %4010 = vmatprep.subr.mxu0 0.0
    %4011 = vmatpush1.msra.mxu0 0.0
    %4012 = vmatprep.subr.mxu0 0.0
    %4013 = vmatpush1.msra.mxu0 0.0
    %4014 = vmatprep.subr.mxu0 0.0
    %4015 = vmatpush1.msra.mxu0 0.0
    %4016 = vmatprep.mubr.f32.mxu0 0.0
    %4017 = vmatmul.mubr.f32.gmra.mrb[0].mxu0 %v3950
    %v4018 = vpop.f32.mrb[0].mxu0
    %v4019 = vadd.f32 %v3837, %v4018
    %v4020 = vpop.f32.mrb[0].mxu0
    %v4021 = vadd.f32 %v3841, %v4020
    %4022 = vdwg.mxu0
    %v4024 = vrot.slane %v4019, 6
    %v4026 = vadd.f32 %v3945, %v4024
    %v4027 = vxor.u32 %v4026, 2147483648
    %v4028 = vmul.f32 %v4027, 1.442695
    %v4029 = vpow.pop %v4028
    %v4030 = vadd.f32 %v4029, 1.0
    %v4031 = vrcp.pop %v4030
    %v4032 = vmul.f32 1.0, %v4031
    %v4034 = vrot.slane %v4021, 6
    %v4036 = vmul.f32 %v4032, %v4034
    %v4037 = vadd.f32 %v3946, %v4036
    %v4038 = vtanh.pop %v4037
    %v4039 = vsub.f32 1.0, %v4032
    %4041 = vrot.lane.b32.xlu0 %v4038, 64
    %v4042 = vpop.permute.xlu0 %4041
    %v4044 = vmul.f32 %v4039, %v4042
    %v4045 = vrot.slane %v3940, 6
    %v4047 = vmul.f32 %v4032, %v4045
    %v4048 = vadd.f32 %v4044, %v4047
    %v4050 = vrot.slane %v4048, 2
    %4051 = vrot.lane.b32.xlu0 %v4050, 64
    %v4052 = vpop.permute.xlu0 %4051
    %v4053 = vsel %vm625, %v4052, 0
    %4055 = vmatprep.subr.mxu0 %v3817
    %4056 = vmatpush1.msra.mxu0 %v3816
    %4057 = vmatprep.subr.mxu0 %v3819
    %4058 = vmatpush1.msra.mxu0 %v3818
    %4059 = vmatprep.subr.mxu0 %v3821
    %4060 = vmatpush1.msra.mxu0 %v3820
    %4061 = vmatprep.subr.mxu0 %v3823
    %4062 = vmatpush1.msra.mxu0 %v3822
    %4063 = vmatprep.subr.mxu0 %v3825
    %4064 = vmatpush1.msra.mxu0 %v3824
    %4065 = vmatprep.subr.mxu0 %v3827
    %4066 = vmatpush1.msra.mxu0 %v3826
    %4067 = vmatprep.subr.mxu0 %v3829
    %4068 = vmatpush1.msra.mxu0 %v3828
    %4069 = vmatprep.subr.mxu0 %v3831
    %4070 = vmatpush1.msra.mxu0 %v3830
    %4071 = vmatprep.subr.mxu0 0.0
    %4072 = vmatpush1.msra.mxu0 0.0
    %4073 = vmatprep.subr.mxu0 0.0
    %4074 = vmatpush1.msra.mxu0 0.0
    %4075 = vmatprep.subr.mxu0 0.0
    %4076 = vmatpush1.msra.mxu0 0.0
    %4077 = vmatprep.subr.mxu0 0.0
    %4078 = vmatpush1.msra.mxu0 0.0
    %4079 = vmatprep.subr.mxu0 0.0
    %4080 = vmatpush1.msra.mxu0 0.0
    %4081 = vmatprep.subr.mxu0 0.0
    %4082 = vmatpush1.msra.mxu0 0.0
    %4083 = vmatprep.subr.mxu0 0.0
    %4084 = vmatpush1.msra.mxu0 0.0
    %4085 = vmatprep.subr.mxu0 0.0
    %4086 = vmatpush1.msra.mxu0 0.0
    %4087 = vmatprep.subr.mxu0 0.0
    %4088 = vmatpush1.msra.mxu0 0.0
    %4089 = vmatprep.subr.mxu0 0.0
    %4090 = vmatpush1.msra.mxu0 0.0
    %4091 = vmatprep.subr.mxu0 0.0
    %4092 = vmatpush1.msra.mxu0 0.0
    %4093 = vmatprep.subr.mxu0 0.0
    %4094 = vmatpush1.msra.mxu0 0.0
    %4095 = vmatprep.subr.mxu0 0.0
    %4096 = vmatpush1.msra.mxu0 0.0
    %4097 = vmatprep.subr.mxu0 0.0
    %4098 = vmatpush1.msra.mxu0 0.0
    %4099 = vmatprep.subr.mxu0 0.0
    %4100 = vmatpush1.msra.mxu0 0.0
    %4101 = vmatprep.subr.mxu0 0.0
    %4102 = vmatpush1.msra.mxu0 0.0
    %4103 = vmatprep.subr.mxu0 0.0
    %4104 = vmatpush1.msra.mxu0 0.0
    %4105 = vmatprep.subr.mxu0 0.0
    %4106 = vmatpush1.msra.mxu0 0.0
    %4107 = vmatprep.subr.mxu0 0.0
    %4108 = vmatpush1.msra.mxu0 0.0
    %4109 = vmatprep.subr.mxu0 0.0
    %4110 = vmatpush1.msra.mxu0 0.0
    %4111 = vmatprep.subr.mxu0 0.0
    %4112 = vmatpush1.msra.mxu0 0.0
    %4113 = vmatprep.subr.mxu0 0.0
    %4114 = vmatpush1.msra.mxu0 0.0
    %4115 = vmatprep.subr.mxu0 0.0
    %4116 = vmatpush1.msra.mxu0 0.0
    %4117 = vmatprep.subr.mxu0 0.0
    %4118 = vmatpush1.msra.mxu0 0.0
    %4119 = vmatprep.mubr.f32.mxu0 0.0
    %4120 = vmatmul.mubr.f32.gmra.mrb[0].mxu0 %v4053
    %v4121 = vpop.f32.mrb[0].mxu0
    %v4122 = vadd.f32 %v3837, %v4121
    %v4123 = vpop.f32.mrb[0].mxu0
    %v4124 = vadd.f32 %v3841, %v4123
    %4125 = vdwg.mxu0
    %v4127 = vrot.slane %v4122, 4
    %v4129 = vadd.f32 %v3850, %v4127
    %v4130 = vxor.u32 %v4129, 2147483648
    %v4131 = vmul.f32 %v4130, 1.442695
    %v4132 = vpow.pop %v4131
    %v4133 = vadd.f32 %v4132, 1.0
    %v4134 = vrcp.pop %v4133
    %v4135 = vmul.f32 1.0, %v4134
    %v4137 = vrot.slane %v4124, 4
    %v4139 = vmul.f32 %v4135, %v4137
    %v4140 = vadd.f32 %v3851, %v4139
    %v4141 = vtanh.pop %v4140
    %v4142 = vsub.f32 1.0, %v4135
    %4144 = vrot.lane.b32.xlu0 %v4141, 64
    %v4145 = vpop.permute.xlu0 %4144
    %v4147 = vmul.f32 %v4142, %v4145
    %v4148 = vrot.slane %v4048, 6
    %v4150 = vmul.f32 %v4135, %v4148
    %v4151 = vadd.f32 %v4147, %v4150
    %v4153 = vrot.slane %v4151, 4
    %4154 = vrot.lane.b32.xlu0 %v4153, 64
    %v4155 = vpop.permute.xlu0 %4154
    %v4156 = vsel %vm625, %v4155, 0
    %4158 = vmatprep.subr.mxu0 %v3817
    %4159 = vmatpush1.msra.mxu0 %v3816
    %4160 = vmatprep.subr.mxu0 %v3819
    %4161 = vmatpush1.msra.mxu0 %v3818
    %4162 = vmatprep.subr.mxu0 %v3821
    %4163 = vmatpush1.msra.mxu0 %v3820
    %4164 = vmatprep.subr.mxu0 %v3823
    %4165 = vmatpush1.msra.mxu0 %v3822
    %4166 = vmatprep.subr.mxu0 %v3825
    %4167 = vmatpush1.msra.mxu0 %v3824
    %4168 = vmatprep.subr.mxu0 %v3827
    %4169 = vmatpush1.msra.mxu0 %v3826
    %4170 = vmatprep.subr.mxu0 %v3829
    %4171 = vmatpush1.msra.mxu0 %v3828
    %4172 = vmatprep.subr.mxu0 %v3831
    %4173 = vmatpush1.msra.mxu0 %v3830
    %4174 = vmatprep.subr.mxu0 0.0
    %4175 = vmatpush1.msra.mxu0 0.0
    %4176 = vmatprep.subr.mxu0 0.0
    %4177 = vmatpush1.msra.mxu0 0.0
    %4178 = vmatprep.subr.mxu0 0.0
    %4179 = vmatpush1.msra.mxu0 0.0
    %4180 = vmatprep.subr.mxu0 0.0
    %4181 = vmatpush1.msra.mxu0 0.0
    %4182 = vmatprep.subr.mxu0 0.0
    %4183 = vmatpush1.msra.mxu0 0.0
    %4184 = vmatprep.subr.mxu0 0.0
    %4185 = vmatpush1.msra.mxu0 0.0
    %4186 = vmatprep.subr.mxu0 0.0
    %4187 = vmatpush1.msra.mxu0 0.0
    %4188 = vmatprep.subr.mxu0 0.0
    %4189 = vmatpush1.msra.mxu0 0.0
    %4190 = vmatprep.subr.mxu0 0.0
    %4191 = vmatpush1.msra.mxu0 0.0
    %4192 = vmatprep.subr.mxu0 0.0
    %4193 = vmatpush1.msra.mxu0 0.0
    %4194 = vmatprep.subr.mxu0 0.0
    %4195 = vmatpush1.msra.mxu0 0.0
    %4196 = vmatprep.subr.mxu0 0.0
    %4197 = vmatpush1.msra.mxu0 0.0
    %4198 = vmatprep.subr.mxu0 0.0
    %4199 = vmatpush1.msra.mxu0 0.0
    %4200 = vmatprep.subr.mxu0 0.0
    %4201 = vmatpush1.msra.mxu0 0.0
    %4202 = vmatprep.subr.mxu0 0.0
    %4203 = vmatpush1.msra.mxu0 0.0
    %4204 = vmatprep.subr.mxu0 0.0
    %4205 = vmatpush1.msra.mxu0 0.0
    %4206 = vmatprep.subr.mxu0 0.0
    %4207 = vmatpush1.msra.mxu0 0.0
    %4208 = vmatprep.subr.mxu0 0.0
    %4209 = vmatpush1.msra.mxu0 0.0
    %4210 = vmatprep.subr.mxu0 0.0
    %4211 = vmatpush1.msra.mxu0 0.0
    %4212 = vmatprep.subr.mxu0 0.0
    %4213 = vmatpush1.msra.mxu0 0.0
    %4214 = vmatprep.subr.mxu0 0.0
    %4215 = vmatpush1.msra.mxu0 0.0
    %4216 = vmatprep.subr.mxu0 0.0
    %4217 = vmatpush1.msra.mxu0 0.0
    %4218 = vmatprep.subr.mxu0 0.0
    %4219 = vmatpush1.msra.mxu0 0.0
    %4220 = vmatprep.subr.mxu0 0.0
    %4221 = vmatpush1.msra.mxu0 0.0
    %4222 = vmatprep.mubr.f32.mxu0 0.0
    %4223 = vmatmul.mubr.f32.gmra.mrb[0].mxu0 %v4156
    %v4224 = vpop.f32.mrb[0].mxu0
    %v4225 = vadd.f32 %v3837, %v4224
    %v4226 = vpop.f32.mrb[0].mxu0
    %v4227 = vadd.f32 %v3841, %v4226
    %4228 = vdwg.mxu0
    %v4230 = vrot.slane %v4225, 2
    %v4232 = vadd.f32 %v3945, %v4230
    %v4233 = vxor.u32 %v4232, 2147483648
    %v4234 = vmul.f32 %v4233, 1.442695
    %v4235 = vpow.pop %v4234
    %v4236 = vadd.f32 %v4235, 1.0
    %v4237 = vrcp.pop %v4236
    %v4238 = vmul.f32 1.0, %v4237
    %v4240 = vrot.slane %v4227, 2
    %v4242 = vmul.f32 %v4238, %v4240
    %v4243 = vadd.f32 %v3946, %v4242
    %v4244 = vtanh.pop %v4243
    %v4245 = vsub.f32 1.0, %v4238
    %4247 = vrot.lane.b32.xlu0 %v4244, 64
    %v4248 = vpop.permute.xlu0 %4247
    %v4250 = vmul.f32 %v4245, %v4248
    %v4251 = vrot.slane %v4151, 6
    %v4253 = vmul.f32 %v4238, %v4251
    %v4254 = vadd.f32 %v4250, %v4253
    %v4257 = vrot.slane %v3806, 6
    %v4258 = vrot.slane %v3808, 6
    %v4261 = vadd.f32 %v3719, %v4257
    %v4262 = vadd.f32 %v3721, %v4258
    %v4264 = vrot.slane %v4254, 6
    %4265 = vrot.lane.b32.xlu0 %v4264, 64
    %v4266 = vpop.permute.xlu0 %4265
    %v4267 = vsel %vm625, %v4266, 0
    %4269 = vmatprep.subr.mxu0 %v3817
    %4270 = vmatpush1.msra.mxu0 %v3816
    %4271 = vmatprep.subr.mxu0 %v3819
    %4272 = vmatpush1.msra.mxu0 %v3818
    %4273 = vmatprep.subr.mxu0 %v3821
    %4274 = vmatpush1.msra.mxu0 %v3820
    %4275 = vmatprep.subr.mxu0 %v3823
    %4276 = vmatpush1.msra.mxu0 %v3822
    %4277 = vmatprep.subr.mxu0 %v3825
    %4278 = vmatpush1.msra.mxu0 %v3824
    %4279 = vmatprep.subr.mxu0 %v3827
    %4280 = vmatpush1.msra.mxu0 %v3826
    %4281 = vmatprep.subr.mxu0 %v3829
    %4282 = vmatpush1.msra.mxu0 %v3828
    %4283 = vmatprep.subr.mxu0 %v3831
    %4284 = vmatpush1.msra.mxu0 %v3830
    %4285 = vmatprep.subr.mxu0 0.0
    %4286 = vmatpush1.msra.mxu0 0.0
    %4287 = vmatprep.subr.mxu0 0.0
    %4288 = vmatpush1.msra.mxu0 0.0
    %4289 = vmatprep.subr.mxu0 0.0
    %4290 = vmatpush1.msra.mxu0 0.0
    %4291 = vmatprep.subr.mxu0 0.0
    %4292 = vmatpush1.msra.mxu0 0.0
    %4293 = vmatprep.subr.mxu0 0.0
    %4294 = vmatpush1.msra.mxu0 0.0
    %4295 = vmatprep.subr.mxu0 0.0
    %4296 = vmatpush1.msra.mxu0 0.0
    %4297 = vmatprep.subr.mxu0 0.0
    %4298 = vmatpush1.msra.mxu0 0.0
    %4299 = vmatprep.subr.mxu0 0.0
    %4300 = vmatpush1.msra.mxu0 0.0
    %4301 = vmatprep.subr.mxu0 0.0
    %4302 = vmatpush1.msra.mxu0 0.0
    %4303 = vmatprep.subr.mxu0 0.0
    %4304 = vmatpush1.msra.mxu0 0.0
    %4305 = vmatprep.subr.mxu0 0.0
    %4306 = vmatpush1.msra.mxu0 0.0
    %4307 = vmatprep.subr.mxu0 0.0
    %4308 = vmatpush1.msra.mxu0 0.0
    %4309 = vmatprep.subr.mxu0 0.0
    %4310 = vmatpush1.msra.mxu0 0.0
    %4311 = vmatprep.subr.mxu0 0.0
    %4312 = vmatpush1.msra.mxu0 0.0
    %4313 = vmatprep.subr.mxu0 0.0
    %4314 = vmatpush1.msra.mxu0 0.0
    %4315 = vmatprep.subr.mxu0 0.0
    %4316 = vmatpush1.msra.mxu0 0.0
    %4317 = vmatprep.subr.mxu0 0.0
    %4318 = vmatpush1.msra.mxu0 0.0
    %4319 = vmatprep.subr.mxu0 0.0
    %4320 = vmatpush1.msra.mxu0 0.0
    %4321 = vmatprep.subr.mxu0 0.0
    %4322 = vmatpush1.msra.mxu0 0.0
    %4323 = vmatprep.subr.mxu0 0.0
    %4324 = vmatpush1.msra.mxu0 0.0
    %4325 = vmatprep.subr.mxu0 0.0
    %4326 = vmatpush1.msra.mxu0 0.0
    %4327 = vmatprep.subr.mxu0 0.0
    %4328 = vmatpush1.msra.mxu0 0.0
    %4329 = vmatprep.subr.mxu0 0.0
    %4330 = vmatpush1.msra.mxu0 0.0
    %4331 = vmatprep.subr.mxu0 0.0
    %4332 = vmatpush1.msra.mxu0 0.0
    %4333 = vmatprep.mubr.f32.mxu0 0.0
    %4334 = vmatmul.mubr.f32.gmra.mrb[0].mxu0 %v4267
    %v4335 = vpop.f32.mrb[0].mxu0
    %v4336 = vadd.f32 %v3837, %v4335
    %v4337 = vpop.f32.mrb[0].mxu0
    %v4338 = vadd.f32 %v3841, %v4337
    %4339 = vdwg.mxu0
    %v4340 = vadd.f32 %v4261, %v4336
    %v4341 = vxor.u32 %v4340, 2147483648
    %v4342 = vmul.f32 %v4341, 1.442695
    %v4343 = vpow.pop %v4342
    %v4344 = vadd.f32 %v4343, 1.0
    %v4345 = vrcp.pop %v4344
    %v4346 = vmul.f32 1.0, %v4345
    %v4347 = vmul.f32 %v4346, %v4338
    %v4348 = vadd.f32 %v4262, %v4347
    %v4349 = vtanh.pop %v4348
    %v4350 = vsub.f32 1.0, %v4346
    %4352 = vrot.lane.b32.xlu0 %v4349, 64
    %v4353 = vpop.permute.xlu0 %4352
    %v4355 = vmul.f32 %v4350, %v4353
    %v4357 = vmul.f32 %v4346, %v4264
    %v4358 = vadd.f32 %v4355, %v4357
    %v4359 = vrot.slane %v3806, 2
    %v4360 = vrot.slane %v3808, 2
    %v4363 = vadd.f32 %v3719, %v4359
    %v4364 = vadd.f32 %v3721, %v4360
    %4366 = vrot.lane.b32.xlu0 %v4358, 64
    %v4367 = vpop.permute.xlu0 %4366
    %v4368 = vsel %vm625, %v4367, 0
    %4370 = vmatprep.subr.mxu0 %v3817
    %4371 = vmatpush1.msra.mxu0 %v3816
    %4372 = vmatprep.subr.mxu0 %v3819
    %4373 = vmatpush1.msra.mxu0 %v3818
    %4374 = vmatprep.subr.mxu0 %v3821
    %4375 = vmatpush1.msra.mxu0 %v3820
    %4376 = vmatprep.subr.mxu0 %v3823
    %4377 = vmatpush1.msra.mxu0 %v3822
    %4378 = vmatprep.subr.mxu0 %v3825
    %4379 = vmatpush1.msra.mxu0 %v3824
    %4380 = vmatprep.subr.mxu0 %v3827
    %4381 = vmatpush1.msra.mxu0 %v3826
    %4382 = vmatprep.subr.mxu0 %v3829
    %4383 = vmatpush1.msra.mxu0 %v3828
    %4384 = vmatprep.subr.mxu0 %v3831
    %4385 = vmatpush1.msra.mxu0 %v3830
    %4386 = vmatprep.subr.mxu0 0.0
    %4387 = vmatpush1.msra.mxu0 0.0
    %4388 = vmatprep.subr.mxu0 0.0
    %4389 = vmatpush1.msra.mxu0 0.0
    %4390 = vmatprep.subr.mxu0 0.0
    %4391 = vmatpush1.msra.mxu0 0.0
    %4392 = vmatprep.subr.mxu0 0.0
    %4393 = vmatpush1.msra.mxu0 0.0
    %4394 = vmatprep.subr.mxu0 0.0
    %4395 = vmatpush1.msra.mxu0 0.0
    %4396 = vmatprep.subr.mxu0 0.0
    %4397 = vmatpush1.msra.mxu0 0.0
    %4398 = vmatprep.subr.mxu0 0.0
    %4399 = vmatpush1.msra.mxu0 0.0
    %4400 = vmatprep.subr.mxu0 0.0
    %4401 = vmatpush1.msra.mxu0 0.0
    %4402 = vmatprep.subr.mxu0 0.0
    %4403 = vmatpush1.msra.mxu0 0.0
    %4404 = vmatprep.subr.mxu0 0.0
    %4405 = vmatpush1.msra.mxu0 0.0
    %4406 = vmatprep.subr.mxu0 0.0
    %4407 = vmatpush1.msra.mxu0 0.0
    %4408 = vmatprep.subr.mxu0 0.0
    %4409 = vmatpush1.msra.mxu0 0.0
    %4410 = vmatprep.subr.mxu0 0.0
    %4411 = vmatpush1.msra.mxu0 0.0
    %4412 = vmatprep.subr.mxu0 0.0
    %4413 = vmatpush1.msra.mxu0 0.0
    %4414 = vmatprep.subr.mxu0 0.0
    %4415 = vmatpush1.msra.mxu0 0.0
    %4416 = vmatprep.subr.mxu0 0.0
    %4417 = vmatpush1.msra.mxu0 0.0
    %4418 = vmatprep.subr.mxu0 0.0
    %4419 = vmatpush1.msra.mxu0 0.0
    %4420 = vmatprep.subr.mxu0 0.0
    %4421 = vmatpush1.msra.mxu0 0.0
    %4422 = vmatprep.subr.mxu0 0.0
    %4423 = vmatpush1.msra.mxu0 0.0
    %4424 = vmatprep.subr.mxu0 0.0
    %4425 = vmatpush1.msra.mxu0 0.0
    %4426 = vmatprep.subr.mxu0 0.0
    %4427 = vmatpush1.msra.mxu0 0.0
    %4428 = vmatprep.subr.mxu0 0.0
    %4429 = vmatpush1.msra.mxu0 0.0
    %4430 = vmatprep.subr.mxu0 0.0
    %4431 = vmatpush1.msra.mxu0 0.0
    %4432 = vmatprep.subr.mxu0 0.0
    %4433 = vmatpush1.msra.mxu0 0.0
    %4434 = vmatprep.mubr.f32.mxu0 0.0
    %4435 = vmatmul.mubr.f32.gmra.mrb[0].mxu0 %v4368
    %v4436 = vpop.f32.mrb[0].mxu0
    %v4437 = vadd.f32 %v3837, %v4436
    %v4438 = vpop.f32.mrb[0].mxu0
    %v4439 = vadd.f32 %v3841, %v4438
    %4440 = vdwg.mxu0
    %v4442 = vrot.slane %v4437, 6
    %v4444 = vadd.f32 %v4363, %v4442
    %v4445 = vxor.u32 %v4444, 2147483648
    %v4446 = vmul.f32 %v4445, 1.442695
    %v4447 = vpow.pop %v4446
    %v4448 = vadd.f32 %v4447, 1.0
    %v4449 = vrcp.pop %v4448
    %v4450 = vmul.f32 1.0, %v4449
    %v4452 = vrot.slane %v4439, 6
    %v4454 = vmul.f32 %v4450, %v4452
    %v4455 = vadd.f32 %v4364, %v4454
    %v4456 = vtanh.pop %v4455
    %v4457 = vsub.f32 1.0, %v4450
    %4459 = vrot.lane.b32.xlu0 %v4456, 64
    %v4460 = vpop.permute.xlu0 %4459
    %v4462 = vmul.f32 %v4457, %v4460
    %v4463 = vrot.slane %v4358, 6
    %v4465 = vmul.f32 %v4450, %v4463
    %v4466 = vadd.f32 %v4462, %v4465
    %v4468 = vrot.slane %v4466, 2
    %4469 = vrot.lane.b32.xlu0 %v4468, 64
    %v4470 = vpop.permute.xlu0 %4469
    %v4471 = vsel %vm625, %v4470, 0
    %4473 = vmatprep.subr.mxu0 %v3817
    %4474 = vmatpush1.msra.mxu0 %v3816
    %4475 = vmatprep.subr.mxu0 %v3819
    %4476 = vmatpush1.msra.mxu0 %v3818
    %4477 = vmatprep.subr.mxu0 %v3821
    %4478 = vmatpush1.msra.mxu0 %v3820
    %4479 = vmatprep.subr.mxu0 %v3823
    %4480 = vmatpush1.msra.mxu0 %v3822
    %4481 = vmatprep.subr.mxu0 %v3825
    %4482 = vmatpush1.msra.mxu0 %v3824
    %4483 = vmatprep.subr.mxu0 %v3827
    %4484 = vmatpush1.msra.mxu0 %v3826
    %4485 = vmatprep.subr.mxu0 %v3829
    %4486 = vmatpush1.msra.mxu0 %v3828
    %4487 = vmatprep.subr.mxu0 %v3831
    %4488 = vmatpush1.msra.mxu0 %v3830
    %4489 = vmatprep.subr.mxu0 0.0
    %4490 = vmatpush1.msra.mxu0 0.0
    %4491 = vmatprep.subr.mxu0 0.0
    %4492 = vmatpush1.msra.mxu0 0.0
    %4493 = vmatprep.subr.mxu0 0.0
    %4494 = vmatpush1.msra.mxu0 0.0
    %4495 = vmatprep.subr.mxu0 0.0
    %4496 = vmatpush1.msra.mxu0 0.0
    %4497 = vmatprep.subr.mxu0 0.0
    %4498 = vmatpush1.msra.mxu0 0.0
    %4499 = vmatprep.subr.mxu0 0.0
    %4500 = vmatpush1.msra.mxu0 0.0
    %4501 = vmatprep.subr.mxu0 0.0
    %4502 = vmatpush1.msra.mxu0 0.0
    %4503 = vmatprep.subr.mxu0 0.0
    %4504 = vmatpush1.msra.mxu0 0.0
    %4505 = vmatprep.subr.mxu0 0.0
    %4506 = vmatpush1.msra.mxu0 0.0
    %4507 = vmatprep.subr.mxu0 0.0
    %4508 = vmatpush1.msra.mxu0 0.0
    %4509 = vmatprep.subr.mxu0 0.0
    %4510 = vmatpush1.msra.mxu0 0.0
    %4511 = vmatprep.subr.mxu0 0.0
    %4512 = vmatpush1.msra.mxu0 0.0
    %4513 = vmatprep.subr.mxu0 0.0
    %4514 = vmatpush1.msra.mxu0 0.0
    %4515 = vmatprep.subr.mxu0 0.0
    %4516 = vmatpush1.msra.mxu0 0.0
    %4517 = vmatprep.subr.mxu0 0.0
    %4518 = vmatpush1.msra.mxu0 0.0
    %4519 = vmatprep.subr.mxu0 0.0
    %4520 = vmatpush1.msra.mxu0 0.0
    %4521 = vmatprep.subr.mxu0 0.0
    %4522 = vmatpush1.msra.mxu0 0.0
    %4523 = vmatprep.subr.mxu0 0.0
    %4524 = vmatpush1.msra.mxu0 0.0
    %4525 = vmatprep.subr.mxu0 0.0
    %4526 = vmatpush1.msra.mxu0 0.0
    %4527 = vmatprep.subr.mxu0 0.0
    %4528 = vmatpush1.msra.mxu0 0.0
    %4529 = vmatprep.subr.mxu0 0.0
    %4530 = vmatpush1.msra.mxu0 0.0
    %4531 = vmatprep.subr.mxu0 0.0
    %4532 = vmatpush1.msra.mxu0 0.0
    %4533 = vmatprep.subr.mxu0 0.0
    %4534 = vmatpush1.msra.mxu0 0.0
    %4535 = vmatprep.subr.mxu0 0.0
    %4536 = vmatpush1.msra.mxu0 0.0
    %4537 = vmatprep.mubr.f32.mxu0 0.0
    %4538 = vmatmul.mubr.f32.gmra.mrb[0].mxu0 %v4471
    %v4539 = vpop.f32.mrb[0].mxu0
    %v4540 = vadd.f32 %v3837, %v4539
    %v4541 = vpop.f32.mrb[0].mxu0
    %v4542 = vadd.f32 %v3841, %v4541
    %4543 = vdwg.mxu0
    %v4545 = vrot.slane %v4540, 4
    %v4547 = vadd.f32 %v4261, %v4545
    %v4548 = vxor.u32 %v4547, 2147483648
    %v4549 = vmul.f32 %v4548, 1.442695
    %v4550 = vpow.pop %v4549
    %v4551 = vadd.f32 %v4550, 1.0
    %v4552 = vrcp.pop %v4551
    %v4553 = vmul.f32 1.0, %v4552
    %v4555 = vrot.slane %v4542, 4
    %v4557 = vmul.f32 %v4553, %v4555
    %v4558 = vadd.f32 %v4262, %v4557
    %v4559 = vtanh.pop %v4558
    %v4560 = vsub.f32 1.0, %v4553
    %4562 = vrot.lane.b32.xlu0 %v4559, 64
    %v4563 = vpop.permute.xlu0 %4562
    %v4565 = vmul.f32 %v4560, %v4563
    %v4566 = vrot.slane %v4466, 6
    %v4568 = vmul.f32 %v4553, %v4566
    %v4569 = vadd.f32 %v4565, %v4568
    %v4571 = vrot.slane %v4569, 4
    %4572 = vrot.lane.b32.xlu0 %v4571, 64
    %v4573 = vpop.permute.xlu0 %4572
    %v4574 = vsel %vm625, %v4573, 0
    %4576 = vmatprep.subr.mxu0 %v3817
    %4577 = vmatpush1.msra.mxu0 %v3816
    %4578 = vmatprep.subr.mxu0 %v3819
    %4579 = vmatpush1.msra.mxu0 %v3818
    %4580 = vmatprep.subr.mxu0 %v3821
    %4581 = vmatpush1.msra.mxu0 %v3820
    %4582 = vmatprep.subr.mxu0 %v3823
    %4583 = vmatpush1.msra.mxu0 %v3822
    %4584 = vmatprep.subr.mxu0 %v3825
    %4585 = vmatpush1.msra.mxu0 %v3824
    %4586 = vmatprep.subr.mxu0 %v3827
    %4587 = vmatpush1.msra.mxu0 %v3826
    %4588 = vmatprep.subr.mxu0 %v3829
    %4589 = vmatpush1.msra.mxu0 %v3828
    %4590 = vmatprep.subr.mxu0 %v3831
    %4591 = vmatpush1.msra.mxu0 %v3830
    %4592 = vmatprep.subr.mxu0 0.0
    %4593 = vmatpush1.msra.mxu0 0.0
    %4594 = vmatprep.subr.mxu0 0.0
    %4595 = vmatpush1.msra.mxu0 0.0
    %4596 = vmatprep.subr.mxu0 0.0
    %4597 = vmatpush1.msra.mxu0 0.0
    %4598 = vmatprep.subr.mxu0 0.0
    %4599 = vmatpush1.msra.mxu0 0.0
    %4600 = vmatprep.subr.mxu0 0.0
    %4601 = vmatpush1.msra.mxu0 0.0
    %4602 = vmatprep.subr.mxu0 0.0
    %4603 = vmatpush1.msra.mxu0 0.0
    %4604 = vmatprep.subr.mxu0 0.0
    %4605 = vmatpush1.msra.mxu0 0.0
    %4606 = vmatprep.subr.mxu0 0.0
    %4607 = vmatpush1.msra.mxu0 0.0
    %4608 = vmatprep.subr.mxu0 0.0
    %4609 = vmatpush1.msra.mxu0 0.0
    %4610 = vmatprep.subr.mxu0 0.0
    %4611 = vmatpush1.msra.mxu0 0.0
    %4612 = vmatprep.subr.mxu0 0.0
    %4613 = vmatpush1.msra.mxu0 0.0
    %4614 = vmatprep.subr.mxu0 0.0
    %4615 = vmatpush1.msra.mxu0 0.0
    %4616 = vmatprep.subr.mxu0 0.0
    %4617 = vmatpush1.msra.mxu0 0.0
    %4618 = vmatprep.subr.mxu0 0.0
    %4619 = vmatpush1.msra.mxu0 0.0
    %4620 = vmatprep.subr.mxu0 0.0
    %4621 = vmatpush1.msra.mxu0 0.0
    %4622 = vmatprep.subr.mxu0 0.0
    %4623 = vmatpush1.msra.mxu0 0.0
    %4624 = vmatprep.subr.mxu0 0.0
    %4625 = vmatpush1.msra.mxu0 0.0
    %4626 = vmatprep.subr.mxu0 0.0
    %4627 = vmatpush1.msra.mxu0 0.0
    %4628 = vmatprep.subr.mxu0 0.0
    %4629 = vmatpush1.msra.mxu0 0.0
    %4630 = vmatprep.subr.mxu0 0.0
    %4631 = vmatpush1.msra.mxu0 0.0
    %4632 = vmatprep.subr.mxu0 0.0
    %4633 = vmatpush1.msra.mxu0 0.0
    %4634 = vmatprep.subr.mxu0 0.0
    %4635 = vmatpush1.msra.mxu0 0.0
    %4636 = vmatprep.subr.mxu0 0.0
    %4637 = vmatpush1.msra.mxu0 0.0
    %4638 = vmatprep.subr.mxu0 0.0
    %4639 = vmatpush1.msra.mxu0 0.0
    %4640 = vmatprep.mubr.f32.mxu0 0.0
    %4641 = vmatmul.mubr.f32.gmra.mrb[0].mxu0 %v4574
    %v4642 = vpop.f32.mrb[0].mxu0
    %v4643 = vadd.f32 %v3837, %v4642
    %v4644 = vpop.f32.mrb[0].mxu0
    %v4645 = vadd.f32 %v3841, %v4644
    %4646 = vdwg.mxu0
    %v4648 = vrot.slane %v4643, 2
    %v4650 = vadd.f32 %v4363, %v4648
    %v4651 = vxor.u32 %v4650, 2147483648
    %v4652 = vmul.f32 %v4651, 1.442695
    %v4653 = vpow.pop %v4652
    %v4654 = vadd.f32 %v4653, 1.0
    %v4655 = vrcp.pop %v4654
    %v4656 = vmul.f32 1.0, %v4655
    %v4658 = vrot.slane %v4645, 2
    %v4660 = vmul.f32 %v4656, %v4658
    %v4661 = vadd.f32 %v4364, %v4660
    %v4662 = vtanh.pop %v4661
    %v4663 = vsub.f32 1.0, %v4656
    %4665 = vrot.lane.b32.xlu0 %v4662, 64
    %v4666 = vpop.permute.xlu0 %4665
    %v4668 = vmul.f32 %v4663, %v4666
    %v4669 = vrot.slane %v4569, 6
    %v4671 = vmul.f32 %v4656, %v4669
    %v4672 = vadd.f32 %v4668, %v4671
    %4673 = vrot.lane.b32.xlu0 %v3556, 64
    %v4674 = vpop.permute.xlu0 %4673
    %v4677 = vrot.slane %v4672, 6
    %v4679 = vsel %vm625, %v4674, %v4677
    %v4680 = vld [vmem:[#allocation19] sm:$0xff]
    %v4681 = vld [vmem:[#allocation19 + $0x8] sm:$0xff]
    %v4682 = vld [vmem:[#allocation19 + $0x10] sm:$0xff]
    %v4683 = vld [vmem:[#allocation19 + $0x18] sm:$0xff]
    %v4684 = vld [vmem:[#allocation19 + $0x20] sm:$0xff]
    %v4685 = vld [vmem:[#allocation19 + $0x28] sm:$0xff]
    %v4686 = vld [vmem:[#allocation19 + $0x30] sm:$0xff]
    %v4687 = vld [vmem:[#allocation19 + $0x38] sm:$0xff]
    %v4688 = vld [vmem:[#allocation19 + $0x40] sm:$0xff]
    %v4689 = vld [vmem:[#allocation19 + $0x48] sm:$0xff]
    %v4690 = vld [vmem:[#allocation19 + $0x50] sm:$0xff]
    %v4691 = vld [vmem:[#allocation19 + $0x58] sm:$0xff]
    %v4692 = vld [vmem:[#allocation19 + $0x60] sm:$0xff]
    %v4693 = vld [vmem:[#allocation19 + $0x68] sm:$0xff]
    %v4694 = vld [vmem:[#allocation19 + $0x70] sm:$0xff]
    %v4695 = vld [vmem:[#allocation19 + $0x78] sm:$0xff]
    %v4696 = vld [vmem:[%s47] sm:$0x1]
    %v4698 = vlaneseq
    %v4699 = vshrl.u32 %v4698, 7
    %v4700 = vsub.s32 0, %v4699
    %v4701 = vrot.slane %v4696, %v4700
    %4703 = vmatprep.subr.mxu0 0.0
    %4704 = vmatpush1.msra.mxu0 %v4680
    %4705 = vmatprep.subr.mxu0 0.0
    %4706 = vmatpush1.msra.mxu0 %v4681
    %4707 = vmatprep.subr.mxu0 0.0
    %4708 = vmatpush1.msra.mxu0 %v4682
    %4709 = vmatprep.subr.mxu0 0.0
    %4710 = vmatpush1.msra.mxu0 %v4683
    %4711 = vmatprep.subr.mxu0 0.0
    %4712 = vmatpush1.msra.mxu0 %v4684
    %4713 = vmatprep.subr.mxu0 0.0
    %4714 = vmatpush1.msra.mxu0 %v4685
    %4715 = vmatprep.subr.mxu0 0.0
    %4716 = vmatpush1.msra.mxu0 %v4686
    %4717 = vmatprep.subr.mxu0 0.0
    %4718 = vmatpush1.msra.mxu0 %v4687
    %4719 = vmatprep.subr.mxu0 0.0
    %4720 = vmatpush1.msra.mxu0 %v4688
    %4721 = vmatprep.subr.mxu0 0.0
    %4722 = vmatpush1.msra.mxu0 %v4689
    %4723 = vmatprep.subr.mxu0 0.0
    %4724 = vmatpush1.msra.mxu0 %v4690
    %4725 = vmatprep.subr.mxu0 0.0
    %4726 = vmatpush1.msra.mxu0 %v4691
    %4727 = vmatprep.subr.mxu0 0.0
    %4728 = vmatpush1.msra.mxu0 %v4692
    %4729 = vmatprep.subr.mxu0 0.0
    %4730 = vmatpush1.msra.mxu0 %v4693
    %4731 = vmatprep.subr.mxu0 0.0
    %4732 = vmatpush1.msra.mxu0 %v4694
    %4733 = vmatprep.subr.mxu0 0.0
    %4734 = vmatpush1.msra.mxu0 %v4695
    %4735 = vmatprep.subr.mxu0 0.0
    %4736 = vmatpush1.msra.mxu0 0.0
    %4737 = vmatprep.subr.mxu0 0.0
    %4738 = vmatpush1.msra.mxu0 0.0
    %4739 = vmatprep.subr.mxu0 0.0
    %4740 = vmatpush1.msra.mxu0 0.0
    %4741 = vmatprep.subr.mxu0 0.0
    %4742 = vmatpush1.msra.mxu0 0.0
    %4743 = vmatprep.subr.mxu0 0.0
    %4744 = vmatpush1.msra.mxu0 0.0
    %4745 = vmatprep.subr.mxu0 0.0
    %4746 = vmatpush1.msra.mxu0 0.0
    %4747 = vmatprep.subr.mxu0 0.0
    %4748 = vmatpush1.msra.mxu0 0.0
    %4749 = vmatprep.subr.mxu0 0.0
    %4750 = vmatpush1.msra.mxu0 0.0
    %4751 = vmatprep.subr.mxu0 0.0
    %4752 = vmatpush1.msra.mxu0 0.0
    %4753 = vmatprep.subr.mxu0 0.0
    %4754 = vmatpush1.msra.mxu0 0.0
    %4755 = vmatprep.subr.mxu0 0.0
    %4756 = vmatpush1.msra.mxu0 0.0
    %4757 = vmatprep.subr.mxu0 0.0
    %4758 = vmatpush1.msra.mxu0 0.0
    %4759 = vmatprep.subr.mxu0 0.0
    %4760 = vmatpush1.msra.mxu0 0.0
    %4761 = vmatprep.subr.mxu0 0.0
    %4762 = vmatpush1.msra.mxu0 0.0
    %4763 = vmatprep.subr.mxu0 0.0
    %4764 = vmatpush1.msra.mxu0 0.0
    %4765 = vmatprep.subr.mxu0 0.0
    %4766 = vmatpush1.msra.mxu0 0.0
    %4767 = vmatprep.mubr.f32.mxu0 0.0
    %4768 = vmatmul.mubr.f32.gmra.mrb[0].mxu0 %v2624
    %v4769 = vpop.f32.mrb[0].mxu0
    %v4770 = vadd.f32 %v4701, %v4769
    %v4771 = vpop.f32.mrb[0].mxu0
    %4772 = vdwg.mxu0
    %4773 = vst [vmem:[#allocation23] sm:$0x3] %v4770
    %v4775 = vrot.slane %v4679, 2
    %v4777 = vmul.f32 %v2558, %v4775
    %v4778 = vsub.f32 %v2558, %v4775
    %v4779 = vand.u32 2147483647, %v4778
    %v4780 = vld [vmem:[#allocation20] sm:$0xff]
    %v4781 = vld [vmem:[#allocation20 + $0x8] sm:$0xff]
    %v4782 = vld [vmem:[#allocation20 + $0x10] sm:$0xff]
    %v4783 = vld [vmem:[#allocation20 + $0x18] sm:$0xff]
    %v4784 = vld [vmem:[#allocation20 + $0x20] sm:$0xff]
    %v4785 = vld [vmem:[#allocation20 + $0x28] sm:$0xff]
    %v4786 = vld [vmem:[#allocation20 + $0x30] sm:$0xff]
    %v4787 = vld [vmem:[#allocation20 + $0x38] sm:$0xff]
    %v4788 = vld [vmem:[#allocation20 + $0x40] sm:$0xff]
    %v4789 = vld [vmem:[#allocation20 + $0x48] sm:$0xff]
    %v4790 = vld [vmem:[#allocation20 + $0x50] sm:$0xff]
    %v4791 = vld [vmem:[#allocation20 + $0x58] sm:$0xff]
    %v4792 = vld [vmem:[#allocation20 + $0x60] sm:$0xff]
    %v4793 = vld [vmem:[#allocation20 + $0x68] sm:$0xff]
    %v4794 = vld [vmem:[#allocation20 + $0x70] sm:$0xff]
    %v4795 = vld [vmem:[#allocation20 + $0x78] sm:$0xff]
    %v4796 = vld [vmem:[#allocation20 + $0x80] sm:$0xff]
    %v4797 = vld [vmem:[#allocation20 + $0x88] sm:$0xff]
    %v4798 = vld [vmem:[#allocation20 + $0x90] sm:$0xff]
    %v4799 = vld [vmem:[#allocation20 + $0x98] sm:$0xff]
    %v4800 = vld [vmem:[#allocation20 + $0xa0] sm:$0xff]
    %v4801 = vld [vmem:[#allocation20 + $0xa8] sm:$0xff]
    %v4802 = vld [vmem:[#allocation20 + $0xb0] sm:$0xff]
    %v4803 = vld [vmem:[#allocation20 + $0xb8] sm:$0xff]
    %v4804 = vld [vmem:[#allocation20 + $0xc0] sm:$0xff]
    %v4805 = vld [vmem:[#allocation20 + $0xc8] sm:$0xff]
    %v4806 = vld [vmem:[#allocation20 + $0xd0] sm:$0xff]
    %v4807 = vld [vmem:[#allocation20 + $0xd8] sm:$0xff]
    %v4808 = vld [vmem:[#allocation20 + $0xe0] sm:$0xff]
    %v4809 = vld [vmem:[#allocation20 + $0xe8] sm:$0xff]
    %v4810 = vld [vmem:[#allocation20 + $0xf0] sm:$0xff]
    %v4811 = vld [vmem:[#allocation20 + $0xf8] sm:$0xff]
    %v4812 = vld [vmem:[#allocation20 + $0x100] sm:$0xff]
    %v4813 = vld [vmem:[#allocation20 + $0x108] sm:$0xff]
    %v4814 = vld [vmem:[#allocation20 + $0x110] sm:$0xff]
    %v4815 = vld [vmem:[#allocation20 + $0x118] sm:$0xff]
    %v4816 = vld [vmem:[#allocation20 + $0x120] sm:$0xff]
    %v4817 = vld [vmem:[#allocation20 + $0x128] sm:$0xff]
    %v4818 = vld [vmem:[#allocation20 + $0x130] sm:$0xff]
    %v4819 = vld [vmem:[#allocation20 + $0x138] sm:$0xff]
    %v4820 = vld [vmem:[#allocation20 + $0x140] sm:$0xff]
    %v4821 = vld [vmem:[#allocation20 + $0x148] sm:$0xff]
    %v4822 = vld [vmem:[#allocation20 + $0x150] sm:$0xff]
    %v4823 = vld [vmem:[#allocation20 + $0x158] sm:$0xff]
    %v4824 = vld [vmem:[#allocation20 + $0x160] sm:$0xff]
    %v4825 = vld [vmem:[#allocation20 + $0x168] sm:$0xff]
    %v4826 = vld [vmem:[#allocation20 + $0x170] sm:$0xff]
    %v4827 = vld [vmem:[#allocation20 + $0x178] sm:$0xff]
    %v4828 = vld [vmem:[#allocation20 + $0x180] sm:$0xff]
    %v4829 = vld [vmem:[#allocation20 + $0x188] sm:$0xff]
    %v4830 = vld [vmem:[#allocation20 + $0x190] sm:$0xff]
    %v4831 = vld [vmem:[#allocation20 + $0x198] sm:$0xff]
    %v4832 = vld [vmem:[#allocation20 + $0x1a0] sm:$0xff]
    %v4833 = vld [vmem:[#allocation20 + $0x1a8] sm:$0xff]
    %v4834 = vld [vmem:[#allocation20 + $0x1b0] sm:$0xff]
    %v4835 = vld [vmem:[#allocation20 + $0x1b8] sm:$0xff]
    %v4836 = vld [vmem:[#allocation20 + $0x1c0] sm:$0xff]
    %v4837 = vld [vmem:[#allocation20 + $0x1c8] sm:$0xff]
    %v4838 = vld [vmem:[#allocation20 + $0x1d0] sm:$0xff]
    %v4839 = vld [vmem:[#allocation20 + $0x1d8] sm:$0xff]
    %v4840 = vld [vmem:[#allocation20 + $0x1e0] sm:$0xff]
    %v4841 = vld [vmem:[#allocation20 + $0x1e8] sm:$0xff]
    %v4842 = vld [vmem:[#allocation20 + $0x1f0] sm:$0xff]
    %v4843 = vld [vmem:[#allocation20 + $0x1f8] sm:$0xff]
    %v4844 = vld [vmem:[#allocation20 + $0x200] sm:$0xff]
    %v4845 = vld [vmem:[#allocation20 + $0x208] sm:$0xff]
    %v4846 = vld [vmem:[#allocation20 + $0x210] sm:$0xff]
    %v4847 = vld [vmem:[#allocation20 + $0x218] sm:$0xff]
    %v4848 = vld [vmem:[#allocation20 + $0x220] sm:$0xff]
    %v4849 = vld [vmem:[#allocation20 + $0x228] sm:$0xff]
    %v4850 = vld [vmem:[#allocation20 + $0x230] sm:$0xff]
    %v4851 = vld [vmem:[#allocation20 + $0x238] sm:$0xff]
    %v4852 = vld [vmem:[#allocation20 + $0x240] sm:$0xff]
    %v4853 = vld [vmem:[#allocation20 + $0x248] sm:$0xff]
    %v4854 = vld [vmem:[#allocation20 + $0x250] sm:$0xff]
    %v4855 = vld [vmem:[#allocation20 + $0x258] sm:$0xff]
    %v4856 = vld [vmem:[#allocation20 + $0x260] sm:$0xff]
    %v4857 = vld [vmem:[#allocation20 + $0x268] sm:$0xff]
    %v4858 = vld [vmem:[#allocation20 + $0x270] sm:$0xff]
    %v4859 = vld [vmem:[#allocation20 + $0x278] sm:$0xff]
    %v4860 = vld [vmem:[#allocation20 + $0x280] sm:$0xff]
    %v4861 = vld [vmem:[#allocation20 + $0x288] sm:$0xff]
    %v4862 = vld [vmem:[#allocation20 + $0x290] sm:$0xff]
    %v4863 = vld [vmem:[#allocation20 + $0x298] sm:$0xff]
    %v4864 = vld [vmem:[#allocation20 + $0x2a0] sm:$0xff]
    %v4865 = vld [vmem:[#allocation20 + $0x2a8] sm:$0xff]
    %v4866 = vld [vmem:[#allocation20 + $0x2b0] sm:$0xff]
    %v4867 = vld [vmem:[#allocation20 + $0x2b8] sm:$0xff]
    %v4868 = vld [vmem:[#allocation20 + $0x2c0] sm:$0xff]
    %v4869 = vld [vmem:[#allocation20 + $0x2c8] sm:$0xff]
    %v4870 = vld [vmem:[#allocation20 + $0x2d0] sm:$0xff]
    %v4871 = vld [vmem:[#allocation20 + $0x2d8] sm:$0xff]
    %v4872 = vld [vmem:[#allocation20 + $0x2e0] sm:$0xff]
    %v4873 = vld [vmem:[#allocation20 + $0x2e8] sm:$0xff]
    %v4874 = vld [vmem:[#allocation20 + $0x2f0] sm:$0xff]
    %v4875 = vld [vmem:[#allocation20 + $0x2f8] sm:$0xff]
    %v4876 = vld [vmem:[#allocation20 + $0x300] sm:$0xff]
    %v4877 = vld [vmem:[#allocation20 + $0x308] sm:$0xff]
    %v4878 = vld [vmem:[#allocation20 + $0x310] sm:$0xff]
    %v4879 = vld [vmem:[#allocation20 + $0x318] sm:$0xff]
    %v4880 = vld [vmem:[#allocation20 + $0x320] sm:$0xff]
    %v4881 = vld [vmem:[#allocation20 + $0x328] sm:$0xff]
    %v4882 = vld [vmem:[#allocation20 + $0x330] sm:$0xff]
    %v4883 = vld [vmem:[#allocation20 + $0x338] sm:$0xff]
    %v4884 = vld [vmem:[#allocation20 + $0x340] sm:$0xff]
    %v4885 = vld [vmem:[#allocation20 + $0x348] sm:$0xff]
    %v4886 = vld [vmem:[#allocation20 + $0x350] sm:$0xff]
    %v4887 = vld [vmem:[#allocation20 + $0x358] sm:$0xff]
    %v4888 = vld [vmem:[#allocation20 + $0x360] sm:$0xff]
    %v4889 = vld [vmem:[#allocation20 + $0x368] sm:$0xff]
    %v4890 = vld [vmem:[#allocation20 + $0x370] sm:$0xff]
    %v4891 = vld [vmem:[#allocation20 + $0x378] sm:$0xff]
    %v4892 = vld [vmem:[#allocation20 + $0x380] sm:$0xff]
    %v4893 = vld [vmem:[#allocation20 + $0x388] sm:$0xff]
    %v4894 = vld [vmem:[#allocation20 + $0x390] sm:$0xff]
    %v4895 = vld [vmem:[#allocation20 + $0x398] sm:$0xff]
    %v4896 = vld [vmem:[#allocation20 + $0x3a0] sm:$0xff]
    %v4897 = vld [vmem:[#allocation20 + $0x3a8] sm:$0xff]
    %v4898 = vld [vmem:[#allocation20 + $0x3b0] sm:$0xff]
    %v4899 = vld [vmem:[#allocation20 + $0x3b8] sm:$0xff]
    %v4900 = vld [vmem:[#allocation20 + $0x3c0] sm:$0xff]
    %v4901 = vld [vmem:[#allocation20 + $0x3c8] sm:$0xff]
    %v4902 = vld [vmem:[#allocation20 + $0x3d0] sm:$0xff]
    %v4903 = vld [vmem:[#allocation20 + $0x3d8] sm:$0xff]
    %v4904 = vld [vmem:[#allocation20 + $0x3e0] sm:$0xff]
    %v4905 = vld [vmem:[#allocation20 + $0x3e8] sm:$0xff]
    %v4906 = vld [vmem:[#allocation20 + $0x3f0] sm:$0xff]
    %v4907 = vld [vmem:[#allocation20 + $0x3f8] sm:$0xff]
    %v4908 = vld [vmem:[#allocation20 + $0x400] sm:$0xff]
    %v4909 = vld [vmem:[#allocation20 + $0x408] sm:$0xff]
    %v4910 = vld [vmem:[#allocation20 + $0x410] sm:$0xff]
    %v4911 = vld [vmem:[#allocation20 + $0x418] sm:$0xff]
    %v4912 = vld [vmem:[#allocation20 + $0x420] sm:$0xff]
    %v4913 = vld [vmem:[#allocation20 + $0x428] sm:$0xff]
    %v4914 = vld [vmem:[#allocation20 + $0x430] sm:$0xff]
    %v4915 = vld [vmem:[#allocation20 + $0x438] sm:$0xff]
    %v4916 = vld [vmem:[#allocation20 + $0x440] sm:$0xff]
    %v4917 = vld [vmem:[#allocation20 + $0x448] sm:$0xff]
    %v4918 = vld [vmem:[#allocation20 + $0x450] sm:$0xff]
    %v4919 = vld [vmem:[#allocation20 + $0x458] sm:$0xff]
    %v4920 = vld [vmem:[#allocation20 + $0x460] sm:$0xff]
    %v4921 = vld [vmem:[#allocation20 + $0x468] sm:$0xff]
    %v4922 = vld [vmem:[#allocation20 + $0x470] sm:$0xff]
    %v4923 = vld [vmem:[#allocation20 + $0x478] sm:$0xff]
    %v4924 = vld [vmem:[#allocation20 + $0x480] sm:$0xff]
    %v4925 = vld [vmem:[#allocation20 + $0x488] sm:$0xff]
    %v4926 = vld [vmem:[#allocation20 + $0x490] sm:$0xff]
    %v4927 = vld [vmem:[#allocation20 + $0x498] sm:$0xff]
    %v4928 = vld [vmem:[#allocation20 + $0x4a0] sm:$0xff]
    %v4929 = vld [vmem:[#allocation20 + $0x4a8] sm:$0xff]
    %v4930 = vld [vmem:[#allocation20 + $0x4b0] sm:$0xff]
    %v4931 = vld [vmem:[#allocation20 + $0x4b8] sm:$0xff]
    %v4932 = vld [vmem:[#allocation20 + $0x4c0] sm:$0xff]
    %v4933 = vld [vmem:[#allocation20 + $0x4c8] sm:$0xff]
    %v4934 = vld [vmem:[#allocation20 + $0x4d0] sm:$0xff]
    %v4935 = vld [vmem:[#allocation20 + $0x4d8] sm:$0xff]
    %v4936 = vld [vmem:[#allocation20 + $0x4e0] sm:$0xff]
    %v4937 = vld [vmem:[#allocation20 + $0x4e8] sm:$0xff]
    %v4938 = vld [vmem:[#allocation20 + $0x4f0] sm:$0xff]
    %v4939 = vld [vmem:[#allocation20 + $0x4f8] sm:$0xff]
    %v4940 = vld [vmem:[#allocation20 + $0x500] sm:$0xff]
    %v4941 = vld [vmem:[#allocation20 + $0x508] sm:$0xff]
    %v4942 = vld [vmem:[#allocation20 + $0x510] sm:$0xff]
    %v4943 = vld [vmem:[#allocation20 + $0x518] sm:$0xff]
    %v4944 = vld [vmem:[#allocation20 + $0x520] sm:$0xff]
    %v4945 = vld [vmem:[#allocation20 + $0x528] sm:$0xff]
    %v4946 = vld [vmem:[#allocation20 + $0x530] sm:$0xff]
    %v4947 = vld [vmem:[#allocation20 + $0x538] sm:$0xff]
    %v4948 = vld [vmem:[#allocation20 + $0x540] sm:$0xff]
    %v4949 = vld [vmem:[#allocation20 + $0x548] sm:$0xff]
    %v4950 = vld [vmem:[#allocation20 + $0x550] sm:$0xff]
    %v4951 = vld [vmem:[#allocation20 + $0x558] sm:$0xff]
    %v4952 = vld [vmem:[#allocation20 + $0x560] sm:$0xff]
    %v4953 = vld [vmem:[#allocation20 + $0x568] sm:$0xff]
    %v4954 = vld [vmem:[#allocation20 + $0x570] sm:$0xff]
    %v4955 = vld [vmem:[#allocation20 + $0x578] sm:$0xff]
    %v4956 = vld [vmem:[#allocation20 + $0x580] sm:$0xff]
    %v4957 = vld [vmem:[#allocation20 + $0x588] sm:$0xff]
    %v4958 = vld [vmem:[#allocation20 + $0x590] sm:$0xff]
    %v4959 = vld [vmem:[#allocation20 + $0x598] sm:$0xff]
    %v4960 = vld [vmem:[#allocation20 + $0x5a0] sm:$0xff]
    %v4961 = vld [vmem:[#allocation20 + $0x5a8] sm:$0xff]
    %v4962 = vld [vmem:[#allocation20 + $0x5b0] sm:$0xff]
    %v4963 = vld [vmem:[#allocation20 + $0x5b8] sm:$0xff]
    %v4964 = vld [vmem:[#allocation20 + $0x5c0] sm:$0xff]
    %v4965 = vld [vmem:[#allocation20 + $0x5c8] sm:$0xff]
    %v4966 = vld [vmem:[#allocation20 + $0x5d0] sm:$0xff]
    %v4967 = vld [vmem:[#allocation20 + $0x5d8] sm:$0xff]
    %v4968 = vld [vmem:[#allocation20 + $0x5e0] sm:$0xff]
    %v4969 = vld [vmem:[#allocation20 + $0x5e8] sm:$0xff]
    %v4970 = vld [vmem:[#allocation20 + $0x5f0] sm:$0xff]
    %v4971 = vld [vmem:[#allocation20 + $0x5f8] sm:$0xff]
    %v4972 = vld [vmem:[#allocation20 + $0x600] sm:$0xff]
    %v4973 = vld [vmem:[#allocation20 + $0x608] sm:$0xff]
    %v4974 = vld [vmem:[#allocation20 + $0x610] sm:$0xff]
    %v4975 = vld [vmem:[#allocation20 + $0x618] sm:$0xff]
    %v4976 = vld [vmem:[#allocation20 + $0x620] sm:$0xff]
    %v4977 = vld [vmem:[#allocation20 + $0x628] sm:$0xff]
    %v4978 = vld [vmem:[#allocation20 + $0x630] sm:$0xff]
    %v4979 = vld [vmem:[#allocation20 + $0x638] sm:$0xff]
    %v4980 = vld [vmem:[#allocation20 + $0x640] sm:$0xff]
    %v4981 = vld [vmem:[#allocation20 + $0x648] sm:$0xff]
    %v4982 = vld [vmem:[#allocation20 + $0x650] sm:$0xff]
    %v4983 = vld [vmem:[#allocation20 + $0x658] sm:$0xff]
    %v4984 = vld [vmem:[#allocation20 + $0x660] sm:$0xff]
    %v4985 = vld [vmem:[#allocation20 + $0x668] sm:$0xff]
    %v4986 = vld [vmem:[#allocation20 + $0x670] sm:$0xff]
    %v4987 = vld [vmem:[#allocation20 + $0x678] sm:$0xff]
    %v4988 = vld [vmem:[#allocation20 + $0x680] sm:$0xff]
    %v4989 = vld [vmem:[#allocation20 + $0x688] sm:$0xff]
    %v4990 = vld [vmem:[#allocation20 + $0x690] sm:$0xff]
    %v4991 = vld [vmem:[#allocation20 + $0x698] sm:$0xff]
    %v4992 = vld [vmem:[#allocation20 + $0x6a0] sm:$0xff]
    %v4993 = vld [vmem:[#allocation20 + $0x6a8] sm:$0xff]
    %v4994 = vld [vmem:[#allocation20 + $0x6b0] sm:$0xff]
    %v4995 = vld [vmem:[#allocation20 + $0x6b8] sm:$0xff]
    %v4996 = vld [vmem:[#allocation20 + $0x6c0] sm:$0xff]
    %v4997 = vld [vmem:[#allocation20 + $0x6c8] sm:$0xff]
    %v4998 = vld [vmem:[#allocation20 + $0x6d0] sm:$0xff]
    %v4999 = vld [vmem:[#allocation20 + $0x6d8] sm:$0xff]
    %v5000 = vld [vmem:[#allocation20 + $0x6e0] sm:$0xff]
    %v5001 = vld [vmem:[#allocation20 + $0x6e8] sm:$0xff]
    %v5002 = vld [vmem:[#allocation20 + $0x6f0] sm:$0xff]
    %v5003 = vld [vmem:[#allocation20 + $0x6f8] sm:$0xff]
    %v5004 = vld [vmem:[#allocation20 + $0x700] sm:$0xff]
    %v5005 = vld [vmem:[#allocation20 + $0x708] sm:$0xff]
    %v5006 = vld [vmem:[#allocation20 + $0x710] sm:$0xff]
    %v5007 = vld [vmem:[#allocation20 + $0x718] sm:$0xff]
    %v5008 = vld [vmem:[#allocation20 + $0x720] sm:$0xff]
    %v5009 = vld [vmem:[#allocation20 + $0x728] sm:$0xff]
    %v5010 = vld [vmem:[#allocation20 + $0x730] sm:$0xff]
    %v5011 = vld [vmem:[#allocation20 + $0x738] sm:$0xff]
    %v5012 = vld [vmem:[#allocation20 + $0x740] sm:$0xff]
    %v5013 = vld [vmem:[#allocation20 + $0x748] sm:$0xff]
    %v5014 = vld [vmem:[#allocation20 + $0x750] sm:$0xff]
    %v5015 = vld [vmem:[#allocation20 + $0x758] sm:$0xff]
    %v5016 = vld [vmem:[#allocation20 + $0x760] sm:$0xff]
    %v5017 = vld [vmem:[#allocation20 + $0x768] sm:$0xff]
    %v5018 = vld [vmem:[#allocation20 + $0x770] sm:$0xff]
    %v5019 = vld [vmem:[#allocation20 + $0x778] sm:$0xff]
    %v5020 = vld [vmem:[#allocation20 + $0x780] sm:$0xff]
    %v5021 = vld [vmem:[#allocation20 + $0x788] sm:$0xff]
    %v5022 = vld [vmem:[#allocation20 + $0x790] sm:$0xff]
    %v5023 = vld [vmem:[#allocation20 + $0x798] sm:$0xff]
    %v5024 = vld [vmem:[#allocation20 + $0x7a0] sm:$0xff]
    %v5025 = vld [vmem:[#allocation20 + $0x7a8] sm:$0xff]
    %v5026 = vld [vmem:[#allocation20 + $0x7b0] sm:$0xff]
    %v5027 = vld [vmem:[#allocation20 + $0x7b8] sm:$0xff]
    %v5028 = vld [vmem:[#allocation20 + $0x7c0] sm:$0xff]
    %v5029 = vld [vmem:[#allocation20 + $0x7c8] sm:$0xff]
    %v5030 = vld [vmem:[#allocation20 + $0x7d0] sm:$0xff]
    %v5031 = vld [vmem:[#allocation20 + $0x7d8] sm:$0xff]
    %v5032 = vld [vmem:[#allocation20 + $0x7e0] sm:$0xff]
    %v5033 = vld [vmem:[#allocation20 + $0x7e8] sm:$0xff]
    %v5034 = vld [vmem:[#allocation20 + $0x7f0] sm:$0xff]
    %v5035 = vld [vmem:[#allocation20 + $0x7f8] sm:$0xff]
    %v5036 = vld [vmem:[%s51] sm:$0xf]
    %v5038 = vlaneseq
    %v5039 = vshrl.u32 %v5038, 7
    %v5040 = vsub.s32 0, %v5039
    %v5041 = vrot.slane %v5036, %v5040
    %v5042 = vlaneseq
    %v5043 = vshrl.u32 %v5042, 7
    %v5044 = vsub.s32 1, %v5043
    %v5045 = vrot.slane %v5036, %v5044
    %v5046 = vlaneseq
    %v5047 = vshrl.u32 %v5046, 7
    %v5048 = vsub.s32 2, %v5047
    %v5049 = vrot.slane %v5036, %v5048
    %v5050 = vlaneseq
    %v5051 = vshrl.u32 %v5050, 7
    %v5052 = vsub.s32 3, %v5051
    %v5053 = vrot.slane %v5036, %v5052
    %v5060 = vrot.slane %v4775, 6
    %v5061 = vrot.slane %v4777, 6
    %v5062 = vrot.slane %v4779, 6
    %5066 = vmatprep.subr.mxu0 %v4781
    %5067 = vmatpush1.msra.mxu0 %v4780
    %5068 = vmatprep.subr.mxu0 %v4785
    %5069 = vmatpush1.msra.mxu0 %v4784
    %5070 = vmatprep.subr.mxu0 %v4789
    %5071 = vmatpush1.msra.mxu0 %v4788
    %5072 = vmatprep.subr.mxu0 %v4793
    %5073 = vmatpush1.msra.mxu0 %v4792
    %5074 = vmatprep.subr.mxu0 %v4797
    %5075 = vmatpush1.msra.mxu0 %v4796
    %5076 = vmatprep.subr.mxu0 %v4801
    %5077 = vmatpush1.msra.mxu0 %v4800
    %5078 = vmatprep.subr.mxu0 %v4805
    %5079 = vmatpush1.msra.mxu0 %v4804
    %5080 = vmatprep.subr.mxu0 %v4809
    %5081 = vmatpush1.msra.mxu0 %v4808
    %5082 = vmatprep.subr.mxu0 %v4813
    %5083 = vmatpush1.msra.mxu0 %v4812
    %5084 = vmatprep.subr.mxu0 %v4817
    %5085 = vmatpush1.msra.mxu0 %v4816
    %5086 = vmatprep.subr.mxu0 %v4821
    %5087 = vmatpush1.msra.mxu0 %v4820
    %5088 = vmatprep.subr.mxu0 %v4825
    %5089 = vmatpush1.msra.mxu0 %v4824
    %5090 = vmatprep.subr.mxu0 %v4829
    %5091 = vmatpush1.msra.mxu0 %v4828
    %5092 = vmatprep.subr.mxu0 %v4833
    %5093 = vmatpush1.msra.mxu0 %v4832
    %5094 = vmatprep.subr.mxu0 %v4837
    %5095 = vmatpush1.msra.mxu0 %v4836
    %5096 = vmatprep.subr.mxu0 %v4841
    %5097 = vmatpush1.msra.mxu0 %v4840
    %5098 = vmatprep.subr.mxu0 %v4845
    %5099 = vmatpush1.msra.mxu0 %v4844
    %5100 = vmatprep.subr.mxu0 %v4849
    %5101 = vmatpush1.msra.mxu0 %v4848
    %5102 = vmatprep.subr.mxu0 %v4853
    %5103 = vmatpush1.msra.mxu0 %v4852
    %5104 = vmatprep.subr.mxu0 %v4857
    %5105 = vmatpush1.msra.mxu0 %v4856
    %5106 = vmatprep.subr.mxu0 %v4861
    %5107 = vmatpush1.msra.mxu0 %v4860
    %5108 = vmatprep.subr.mxu0 %v4865
    %5109 = vmatpush1.msra.mxu0 %v4864
    %5110 = vmatprep.subr.mxu0 %v4869
    %5111 = vmatpush1.msra.mxu0 %v4868
    %5112 = vmatprep.subr.mxu0 %v4873
    %5113 = vmatpush1.msra.mxu0 %v4872
    %5114 = vmatprep.subr.mxu0 %v4877
    %5115 = vmatpush1.msra.mxu0 %v4876
    %5116 = vmatprep.subr.mxu0 %v4881
    %5117 = vmatpush1.msra.mxu0 %v4880
    %5118 = vmatprep.subr.mxu0 %v4885
    %5119 = vmatpush1.msra.mxu0 %v4884
    %5120 = vmatprep.subr.mxu0 %v4889
    %5121 = vmatpush1.msra.mxu0 %v4888
    %5122 = vmatprep.subr.mxu0 %v4893
    %5123 = vmatpush1.msra.mxu0 %v4892
    %5124 = vmatprep.subr.mxu0 %v4897
    %5125 = vmatpush1.msra.mxu0 %v4896
    %5126 = vmatprep.subr.mxu0 %v4901
    %5127 = vmatpush1.msra.mxu0 %v4900
    %5128 = vmatprep.subr.mxu0 %v4905
    %5129 = vmatpush1.msra.mxu0 %v4904
    %5130 = vmatprep.mubr.f32.mxu0 %v5060
    %5131 = vmatmul.mubr.f32.gmra.mrb[0].mxu0 %v2624
    %v5132 = vpop.f32.mrb[0].mxu0
    %v5133 = vadd.f32 %v5041, %v5132
    %v5134 = vpop.f32.mrb[0].mxu0
    %v5135 = vadd.f32 %v5045, %v5134
    %5136 = vdwg.mxu0
    %5137 = vmatprep.subr.mxu0 %v4909
    %5138 = vmatpush1.msra.mxu0 %v4908
    %5139 = vmatprep.subr.mxu0 %v4913
    %5140 = vmatpush1.msra.mxu0 %v4912
    %5141 = vmatprep.subr.mxu0 %v4917
    %5142 = vmatpush1.msra.mxu0 %v4916
    %5143 = vmatprep.subr.mxu0 %v4921
    %5144 = vmatpush1.msra.mxu0 %v4920
    %5145 = vmatprep.subr.mxu0 %v4925
    %5146 = vmatpush1.msra.mxu0 %v4924
    %5147 = vmatprep.subr.mxu0 %v4929
    %5148 = vmatpush1.msra.mxu0 %v4928
    %5149 = vmatprep.subr.mxu0 %v4933
    %5150 = vmatpush1.msra.mxu0 %v4932
    %5151 = vmatprep.subr.mxu0 %v4937
    %5152 = vmatpush1.msra.mxu0 %v4936
    %5153 = vmatprep.subr.mxu0 %v4941
    %5154 = vmatpush1.msra.mxu0 %v4940
    %5155 = vmatprep.subr.mxu0 %v4945
    %5156 = vmatpush1.msra.mxu0 %v4944
    %5157 = vmatprep.subr.mxu0 %v4949
    %5158 = vmatpush1.msra.mxu0 %v4948
    %5159 = vmatprep.subr.mxu0 %v4953
    %5160 = vmatpush1.msra.mxu0 %v4952
    %5161 = vmatprep.subr.mxu0 %v4957
    %5162 = vmatpush1.msra.mxu0 %v4956
    %5163 = vmatprep.subr.mxu0 %v4961
    %5164 = vmatpush1.msra.mxu0 %v4960
    %5165 = vmatprep.subr.mxu0 %v4965
    %5166 = vmatpush1.msra.mxu0 %v4964
    %5167 = vmatprep.subr.mxu0 %v4969
    %5168 = vmatpush1.msra.mxu0 %v4968
    %5169 = vmatprep.subr.mxu0 %v4973
    %5170 = vmatpush1.msra.mxu0 %v4972
    %5171 = vmatprep.subr.mxu0 %v4977
    %5172 = vmatpush1.msra.mxu0 %v4976
    %5173 = vmatprep.subr.mxu0 %v4981
    %5174 = vmatpush1.msra.mxu0 %v4980
    %5175 = vmatprep.subr.mxu0 %v4985
    %5176 = vmatpush1.msra.mxu0 %v4984
    %5177 = vmatprep.subr.mxu0 %v4989
    %5178 = vmatpush1.msra.mxu0 %v4988
    %5179 = vmatprep.subr.mxu0 %v4993
    %5180 = vmatpush1.msra.mxu0 %v4992
    %5181 = vmatprep.subr.mxu0 %v4997
    %5182 = vmatpush1.msra.mxu0 %v4996
    %5183 = vmatprep.subr.mxu0 %v5001
    %5184 = vmatpush1.msra.mxu0 %v5000
    %5185 = vmatprep.subr.mxu0 %v5005
    %5186 = vmatpush1.msra.mxu0 %v5004
    %5187 = vmatprep.subr.mxu0 %v5009
    %5188 = vmatpush1.msra.mxu0 %v5008
    %5189 = vmatprep.subr.mxu0 %v5013
    %5190 = vmatpush1.msra.mxu0 %v5012
    %5191 = vmatprep.subr.mxu0 %v5017
    %5192 = vmatpush1.msra.mxu0 %v5016
    %5193 = vmatprep.subr.mxu0 %v5021
    %5194 = vmatpush1.msra.mxu0 %v5020
    %5195 = vmatprep.subr.mxu0 %v5025
    %5196 = vmatpush1.msra.mxu0 %v5024
    %5197 = vmatprep.subr.mxu0 %v5029
    %5198 = vmatpush1.msra.mxu0 %v5028
    %5199 = vmatprep.subr.mxu0 %v5033
    %5200 = vmatpush1.msra.mxu0 %v5032
    %5201 = vmatprep.mubr.f32.mxu0 %v5062
    %5202 = vmatmul.mubr.f32.gmra.mrb[0].mxu0 %v5061
    %v5203 = vpop.f32.mrb[0].mxu0
    %v5204 = vadd.f32 %v5133, %v5203
    %v5205 = vpop.f32.mrb[0].mxu0
    %v5206 = vadd.f32 %v5135, %v5205
    %5207 = vdwg.mxu0
    %5208 = vmatprep.subr.mxu0 %v4783
    %5209 = vmatpush1.msra.mxu0 %v4782
    %5210 = vmatprep.subr.mxu0 %v4787
    %5211 = vmatpush1.msra.mxu0 %v4786
    %5212 = vmatprep.subr.mxu0 %v4791
    %5213 = vmatpush1.msra.mxu0 %v4790
    %5214 = vmatprep.subr.mxu0 %v4795
    %5215 = vmatpush1.msra.mxu0 %v4794
    %5216 = vmatprep.subr.mxu0 %v4799
    %5217 = vmatpush1.msra.mxu0 %v4798
    %5218 = vmatprep.subr.mxu0 %v4803
    %5219 = vmatpush1.msra.mxu0 %v4802
    %5220 = vmatprep.subr.mxu0 %v4807
    %5221 = vmatpush1.msra.mxu0 %v4806
    %5222 = vmatprep.subr.mxu0 %v4811
    %5223 = vmatpush1.msra.mxu0 %v4810
    %5224 = vmatprep.subr.mxu0 %v4815
    %5225 = vmatpush1.msra.mxu0 %v4814
    %5226 = vmatprep.subr.mxu0 %v4819
    %5227 = vmatpush1.msra.mxu0 %v4818
    %5228 = vmatprep.subr.mxu0 %v4823
    %5229 = vmatpush1.msra.mxu0 %v4822
    %5230 = vmatprep.subr.mxu0 %v4827
    %5231 = vmatpush1.msra.mxu0 %v4826
    %5232 = vmatprep.subr.mxu0 %v4831
    %5233 = vmatpush1.msra.mxu0 %v4830
    %5234 = vmatprep.subr.mxu0 %v4835
    %5235 = vmatpush1.msra.mxu0 %v4834
    %5236 = vmatprep.subr.mxu0 %v4839
    %5237 = vmatpush1.msra.mxu0 %v4838
    %5238 = vmatprep.subr.mxu0 %v4843
    %5239 = vmatpush1.msra.mxu0 %v4842
    %5240 = vmatprep.subr.mxu0 %v4847
    %5241 = vmatpush1.msra.mxu0 %v4846
    %5242 = vmatprep.subr.mxu0 %v4851
    %5243 = vmatpush1.msra.mxu0 %v4850
    %5244 = vmatprep.subr.mxu0 %v4855
    %5245 = vmatpush1.msra.mxu0 %v4854
    %5246 = vmatprep.subr.mxu0 %v4859
    %5247 = vmatpush1.msra.mxu0 %v4858
    %5248 = vmatprep.subr.mxu0 %v4863
    %5249 = vmatpush1.msra.mxu0 %v4862
    %5250 = vmatprep.subr.mxu0 %v4867
    %5251 = vmatpush1.msra.mxu0 %v4866
    %5252 = vmatprep.subr.mxu0 %v4871
    %5253 = vmatpush1.msra.mxu0 %v4870
    %5254 = vmatprep.subr.mxu0 %v4875
    %5255 = vmatpush1.msra.mxu0 %v4874
    %5256 = vmatprep.subr.mxu0 %v4879
    %5257 = vmatpush1.msra.mxu0 %v4878
    %5258 = vmatprep.subr.mxu0 %v4883
    %5259 = vmatpush1.msra.mxu0 %v4882
    %5260 = vmatprep.subr.mxu0 %v4887
    %5261 = vmatpush1.msra.mxu0 %v4886
    %5262 = vmatprep.subr.mxu0 %v4891
    %5263 = vmatpush1.msra.mxu0 %v4890
    %5264 = vmatprep.subr.mxu0 %v4895
    %5265 = vmatpush1.msra.mxu0 %v4894
    %5266 = vmatprep.subr.mxu0 %v4899
    %5267 = vmatpush1.msra.mxu0 %v4898
    %5268 = vmatprep.subr.mxu0 %v4903
    %5269 = vmatpush1.msra.mxu0 %v4902
    %5270 = vmatprep.subr.mxu0 %v4907
    %5271 = vmatpush1.msra.mxu0 %v4906
    %5272 = vmatprep.mubr.f32.mxu0 %v5060
    %5273 = vmatmul.mubr.f32.gmra.mrb[0].mxu0 %v2624
    %v5274 = vpop.f32.mrb[0].mxu0
    %v5275 = vadd.f32 %v5049, %v5274
    %v5276 = vpop.f32.mrb[0].mxu0
    %v5277 = vadd.f32 %v5053, %v5276
    %5278 = vdwg.mxu0
    %5279 = vmatprep.subr.mxu0 %v4911
    %5280 = vmatpush1.msra.mxu0 %v4910
    %5281 = vmatprep.subr.mxu0 %v4915
    %5282 = vmatpush1.msra.mxu0 %v4914
    %5283 = vmatprep.subr.mxu0 %v4919
    %5284 = vmatpush1.msra.mxu0 %v4918
    %5285 = vmatprep.subr.mxu0 %v4923
    %5286 = vmatpush1.msra.mxu0 %v4922
    %5287 = vmatprep.subr.mxu0 %v4927
    %5288 = vmatpush1.msra.mxu0 %v4926
    %5289 = vmatprep.subr.mxu0 %v4931
    %5290 = vmatpush1.msra.mxu0 %v4930
    %5291 = vmatprep.subr.mxu0 %v4935
    %5292 = vmatpush1.msra.mxu0 %v4934
    %5293 = vmatprep.subr.mxu0 %v4939
    %5294 = vmatpush1.msra.mxu0 %v4938
    %5295 = vmatprep.subr.mxu0 %v4943
    %5296 = vmatpush1.msra.mxu0 %v4942
    %5297 = vmatprep.subr.mxu0 %v4947
    %5298 = vmatpush1.msra.mxu0 %v4946
    %5299 = vmatprep.subr.mxu0 %v4951
    %5300 = vmatpush1.msra.mxu0 %v4950
    %5301 = vmatprep.subr.mxu0 %v4955
    %5302 = vmatpush1.msra.mxu0 %v4954
    %5303 = vmatprep.subr.mxu0 %v4959
    %5304 = vmatpush1.msra.mxu0 %v4958
    %5305 = vmatprep.subr.mxu0 %v4963
    %5306 = vmatpush1.msra.mxu0 %v4962
    %5307 = vmatprep.subr.mxu0 %v4967
    %5308 = vmatpush1.msra.mxu0 %v4966
    %5309 = vmatprep.subr.mxu0 %v4971
    %5310 = vmatpush1.msra.mxu0 %v4970
    %5311 = vmatprep.subr.mxu0 %v4975
    %5312 = vmatpush1.msra.mxu0 %v4974
    %5313 = vmatprep.subr.mxu0 %v4979
    %5314 = vmatpush1.msra.mxu0 %v4978
    %5315 = vmatprep.subr.mxu0 %v4983
    %5316 = vmatpush1.msra.mxu0 %v4982
    %5317 = vmatprep.subr.mxu0 %v4987
    %5318 = vmatpush1.msra.mxu0 %v4986
    %5319 = vmatprep.subr.mxu0 %v4991
    %5320 = vmatpush1.msra.mxu0 %v4990
    %5321 = vmatprep.subr.mxu0 %v4995
    %5322 = vmatpush1.msra.mxu0 %v4994
    %5323 = vmatprep.subr.mxu0 %v4999
    %5324 = vmatpush1.msra.mxu0 %v4998
    %5325 = vmatprep.subr.mxu0 %v5003
    %5326 = vmatpush1.msra.mxu0 %v5002
    %5327 = vmatprep.subr.mxu0 %v5007
    %5328 = vmatpush1.msra.mxu0 %v5006
    %5329 = vmatprep.subr.mxu0 %v5011
    %5330 = vmatpush1.msra.mxu0 %v5010
    %5331 = vmatprep.subr.mxu0 %v5015
    %5332 = vmatpush1.msra.mxu0 %v5014
    %5333 = vmatprep.subr.mxu0 %v5019
    %5334 = vmatpush1.msra.mxu0 %v5018
    %5335 = vmatprep.subr.mxu0 %v5023
    %5336 = vmatpush1.msra.mxu0 %v5022
    %5337 = vmatprep.subr.mxu0 %v5027
    %5338 = vmatpush1.msra.mxu0 %v5026
    %5339 = vmatprep.subr.mxu0 %v5031
    %5340 = vmatpush1.msra.mxu0 %v5030
    %5341 = vmatprep.subr.mxu0 %v5035
    %5342 = vmatpush1.msra.mxu0 %v5034
    %5343 = vmatprep.mubr.f32.mxu0 %v5062
    %5344 = vmatmul.mubr.f32.gmra.mrb[0].mxu0 %v5061
    %v5345 = vpop.f32.mrb[0].mxu0
    %v5346 = vadd.f32 %v5275, %v5345
    %v5347 = vpop.f32.mrb[0].mxu0
    %v5348 = vadd.f32 %v5277, %v5347
    %5349 = vdwg.mxu0
    %v5350 = vmax.f32 %v5204, 0.0
    %v5351 = vmax.f32 %v5206, 0.0
    %v5352 = vmax.f32 %v5346, 0.0
    %v5353 = vmax.f32 %v5348, 0.0
    %v5354 = vld [vmem:[#allocation22] sm:$0xff]
    %v5355 = vld [vmem:[#allocation22 + $0x8] sm:$0xff]
    %v5356 = vld [vmem:[#allocation22 + $0x10] sm:$0xff]
    %v5357 = vld [vmem:[#allocation22 + $0x18] sm:$0xff]
    %v5358 = vld [vmem:[#allocation22 + $0x20] sm:$0xff]
    %v5359 = vld [vmem:[#allocation22 + $0x28] sm:$0xff]
    %v5360 = vld [vmem:[#allocation22 + $0x30] sm:$0xff]
    %v5361 = vld [vmem:[#allocation22 + $0x38] sm:$0xff]
    %v5362 = vld [vmem:[#allocation22 + $0x40] sm:$0xff]
    %v5363 = vld [vmem:[#allocation22 + $0x48] sm:$0xff]
    %v5364 = vld [vmem:[#allocation22 + $0x50] sm:$0xff]
    %v5365 = vld [vmem:[#allocation22 + $0x58] sm:$0xff]
    %v5366 = vld [vmem:[#allocation22 + $0x60] sm:$0xff]
    %v5367 = vld [vmem:[#allocation22 + $0x68] sm:$0xff]
    %v5368 = vld [vmem:[#allocation22 + $0x70] sm:$0xff]
    %v5369 = vld [vmem:[#allocation22 + $0x78] sm:$0xff]
    %v5370 = vld [vmem:[#allocation22 + $0x80] sm:$0xff]
    %v5371 = vld [vmem:[#allocation22 + $0x88] sm:$0xff]
    %v5372 = vld [vmem:[#allocation22 + $0x90] sm:$0xff]
    %v5373 = vld [vmem:[#allocation22 + $0x98] sm:$0xff]
    %v5374 = vld [vmem:[#allocation22 + $0xa0] sm:$0xff]
    %v5375 = vld [vmem:[#allocation22 + $0xa8] sm:$0xff]
    %v5376 = vld [vmem:[#allocation22 + $0xb0] sm:$0xff]
    %v5377 = vld [vmem:[#allocation22 + $0xb8] sm:$0xff]
    %v5378 = vld [vmem:[#allocation22 + $0xc0] sm:$0xff]
    %v5379 = vld [vmem:[#allocation22 + $0xc8] sm:$0xff]
    %v5380 = vld [vmem:[#allocation22 + $0xd0] sm:$0xff]
    %v5381 = vld [vmem:[#allocation22 + $0xd8] sm:$0xff]
    %v5382 = vld [vmem:[#allocation22 + $0xe0] sm:$0xff]
    %v5383 = vld [vmem:[#allocation22 + $0xe8] sm:$0xff]
    %v5384 = vld [vmem:[#allocation22 + $0xf0] sm:$0xff]
    %v5385 = vld [vmem:[#allocation22 + $0xf8] sm:$0xff]
    %v5386 = vld [vmem:[#allocation22 + $0x100] sm:$0xff]
    %v5387 = vld [vmem:[#allocation22 + $0x108] sm:$0xff]
    %v5388 = vld [vmem:[#allocation22 + $0x110] sm:$0xff]
    %v5389 = vld [vmem:[#allocation22 + $0x118] sm:$0xff]
    %v5390 = vld [vmem:[#allocation22 + $0x120] sm:$0xff]
    %v5391 = vld [vmem:[#allocation22 + $0x128] sm:$0xff]
    %v5392 = vld [vmem:[#allocation22 + $0x130] sm:$0xff]
    %v5393 = vld [vmem:[#allocation22 + $0x138] sm:$0xff]
    %v5394 = vld [vmem:[#allocation22 + $0x140] sm:$0xff]
    %v5395 = vld [vmem:[#allocation22 + $0x148] sm:$0xff]
    %v5396 = vld [vmem:[#allocation22 + $0x150] sm:$0xff]
    %v5397 = vld [vmem:[#allocation22 + $0x158] sm:$0xff]
    %v5398 = vld [vmem:[#allocation22 + $0x160] sm:$0xff]
    %v5399 = vld [vmem:[#allocation22 + $0x168] sm:$0xff]
    %v5400 = vld [vmem:[#allocation22 + $0x170] sm:$0xff]
    %v5401 = vld [vmem:[#allocation22 + $0x178] sm:$0xff]
    %v5402 = vld [vmem:[#allocation22 + $0x180] sm:$0xff]
    %v5403 = vld [vmem:[#allocation22 + $0x188] sm:$0xff]
    %v5404 = vld [vmem:[#allocation22 + $0x190] sm:$0xff]
    %v5405 = vld [vmem:[#allocation22 + $0x198] sm:$0xff]
    %v5406 = vld [vmem:[#allocation22 + $0x1a0] sm:$0xff]
    %v5407 = vld [vmem:[#allocation22 + $0x1a8] sm:$0xff]
    %v5408 = vld [vmem:[#allocation22 + $0x1b0] sm:$0xff]
    %v5409 = vld [vmem:[#allocation22 + $0x1b8] sm:$0xff]
    %v5410 = vld [vmem:[#allocation22 + $0x1c0] sm:$0xff]
    %v5411 = vld [vmem:[#allocation22 + $0x1c8] sm:$0xff]
    %v5412 = vld [vmem:[#allocation22 + $0x1d0] sm:$0xff]
    %v5413 = vld [vmem:[#allocation22 + $0x1d8] sm:$0xff]
    %v5414 = vld [vmem:[#allocation22 + $0x1e0] sm:$0xff]
    %v5415 = vld [vmem:[#allocation22 + $0x1e8] sm:$0xff]
    %v5416 = vld [vmem:[#allocation22 + $0x1f0] sm:$0xff]
    %v5417 = vld [vmem:[#allocation22 + $0x1f8] sm:$0xff]
    %v5418 = vld [vmem:[#allocation22 + $0x200] sm:$0xff]
    %v5419 = vld [vmem:[#allocation22 + $0x208] sm:$0xff]
    %v5420 = vld [vmem:[#allocation22 + $0x210] sm:$0xff]
    %v5421 = vld [vmem:[#allocation22 + $0x218] sm:$0xff]
    %v5422 = vld [vmem:[#allocation22 + $0x220] sm:$0xff]
    %v5423 = vld [vmem:[#allocation22 + $0x228] sm:$0xff]
    %v5424 = vld [vmem:[#allocation22 + $0x230] sm:$0xff]
    %v5425 = vld [vmem:[#allocation22 + $0x238] sm:$0xff]
    %v5426 = vld [vmem:[#allocation22 + $0x240] sm:$0xff]
    %v5427 = vld [vmem:[#allocation22 + $0x248] sm:$0xff]
    %v5428 = vld [vmem:[#allocation22 + $0x250] sm:$0xff]
    %v5429 = vld [vmem:[#allocation22 + $0x258] sm:$0xff]
    %v5430 = vld [vmem:[#allocation22 + $0x260] sm:$0xff]
    %v5431 = vld [vmem:[#allocation22 + $0x268] sm:$0xff]
    %v5432 = vld [vmem:[#allocation22 + $0x270] sm:$0xff]
    %v5433 = vld [vmem:[#allocation22 + $0x278] sm:$0xff]
    %v5434 = vld [vmem:[#allocation22 + $0x280] sm:$0xff]
    %v5435 = vld [vmem:[#allocation22 + $0x288] sm:$0xff]
    %v5436 = vld [vmem:[#allocation22 + $0x290] sm:$0xff]
    %v5437 = vld [vmem:[#allocation22 + $0x298] sm:$0xff]
    %v5438 = vld [vmem:[#allocation22 + $0x2a0] sm:$0xff]
    %v5439 = vld [vmem:[#allocation22 + $0x2a8] sm:$0xff]
    %v5440 = vld [vmem:[#allocation22 + $0x2b0] sm:$0xff]
    %v5441 = vld [vmem:[#allocation22 + $0x2b8] sm:$0xff]
    %v5442 = vld [vmem:[#allocation22 + $0x2c0] sm:$0xff]
    %v5443 = vld [vmem:[#allocation22 + $0x2c8] sm:$0xff]
    %v5444 = vld [vmem:[#allocation22 + $0x2d0] sm:$0xff]
    %v5445 = vld [vmem:[#allocation22 + $0x2d8] sm:$0xff]
    %v5446 = vld [vmem:[#allocation22 + $0x2e0] sm:$0xff]
    %v5447 = vld [vmem:[#allocation22 + $0x2e8] sm:$0xff]
    %v5448 = vld [vmem:[#allocation22 + $0x2f0] sm:$0xff]
    %v5449 = vld [vmem:[#allocation22 + $0x2f8] sm:$0xff]
    %v5450 = vld [vmem:[#allocation22 + $0x300] sm:$0xff]
    %v5451 = vld [vmem:[#allocation22 + $0x308] sm:$0xff]
    %v5452 = vld [vmem:[#allocation22 + $0x310] sm:$0xff]
    %v5453 = vld [vmem:[#allocation22 + $0x318] sm:$0xff]
    %v5454 = vld [vmem:[#allocation22 + $0x320] sm:$0xff]
    %v5455 = vld [vmem:[#allocation22 + $0x328] sm:$0xff]
    %v5456 = vld [vmem:[#allocation22 + $0x330] sm:$0xff]
    %v5457 = vld [vmem:[#allocation22 + $0x338] sm:$0xff]
    %v5458 = vld [vmem:[#allocation22 + $0x340] sm:$0xff]
    %v5459 = vld [vmem:[#allocation22 + $0x348] sm:$0xff]
    %v5460 = vld [vmem:[#allocation22 + $0x350] sm:$0xff]
    %v5461 = vld [vmem:[#allocation22 + $0x358] sm:$0xff]
    %v5462 = vld [vmem:[#allocation22 + $0x360] sm:$0xff]
    %v5463 = vld [vmem:[#allocation22 + $0x368] sm:$0xff]
    %v5464 = vld [vmem:[#allocation22 + $0x370] sm:$0xff]
    %v5465 = vld [vmem:[#allocation22 + $0x378] sm:$0xff]
    %v5466 = vld [vmem:[#allocation22 + $0x380] sm:$0xff]
    %v5467 = vld [vmem:[#allocation22 + $0x388] sm:$0xff]
    %v5468 = vld [vmem:[#allocation22 + $0x390] sm:$0xff]
    %v5469 = vld [vmem:[#allocation22 + $0x398] sm:$0xff]
    %v5470 = vld [vmem:[#allocation22 + $0x3a0] sm:$0xff]
    %v5471 = vld [vmem:[#allocation22 + $0x3a8] sm:$0xff]
    %v5472 = vld [vmem:[#allocation22 + $0x3b0] sm:$0xff]
    %v5473 = vld [vmem:[#allocation22 + $0x3b8] sm:$0xff]
    %v5474 = vld [vmem:[#allocation22 + $0x3c0] sm:$0xff]
    %v5475 = vld [vmem:[#allocation22 + $0x3c8] sm:$0xff]
    %v5476 = vld [vmem:[#allocation22 + $0x3d0] sm:$0xff]
    %v5477 = vld [vmem:[#allocation22 + $0x3d8] sm:$0xff]
    %v5478 = vld [vmem:[#allocation22 + $0x3e0] sm:$0xff]
    %v5479 = vld [vmem:[#allocation22 + $0x3e8] sm:$0xff]
    %v5480 = vld [vmem:[#allocation22 + $0x3f0] sm:$0xff]
    %v5481 = vld [vmem:[#allocation22 + $0x3f8] sm:$0xff]
    %v5482 = vld [vmem:[#allocation22 + $0x400] sm:$0xff]
    %v5483 = vld [vmem:[#allocation22 + $0x408] sm:$0xff]
    %v5484 = vld [vmem:[#allocation22 + $0x410] sm:$0xff]
    %v5485 = vld [vmem:[#allocation22 + $0x418] sm:$0xff]
    %v5486 = vld [vmem:[#allocation22 + $0x420] sm:$0xff]
    %v5487 = vld [vmem:[#allocation22 + $0x428] sm:$0xff]
    %v5488 = vld [vmem:[#allocation22 + $0x430] sm:$0xff]
    %v5489 = vld [vmem:[#allocation22 + $0x438] sm:$0xff]
    %v5490 = vld [vmem:[#allocation22 + $0x440] sm:$0xff]
    %v5491 = vld [vmem:[#allocation22 + $0x448] sm:$0xff]
    %v5492 = vld [vmem:[#allocation22 + $0x450] sm:$0xff]
    %v5493 = vld [vmem:[#allocation22 + $0x458] sm:$0xff]
    %v5494 = vld [vmem:[#allocation22 + $0x460] sm:$0xff]
    %v5495 = vld [vmem:[#allocation22 + $0x468] sm:$0xff]
    %v5496 = vld [vmem:[#allocation22 + $0x470] sm:$0xff]
    %v5497 = vld [vmem:[#allocation22 + $0x478] sm:$0xff]
    %v5498 = vld [vmem:[#allocation22 + $0x480] sm:$0xff]
    %v5499 = vld [vmem:[#allocation22 + $0x488] sm:$0xff]
    %v5500 = vld [vmem:[#allocation22 + $0x490] sm:$0xff]
    %v5501 = vld [vmem:[#allocation22 + $0x498] sm:$0xff]
    %v5502 = vld [vmem:[#allocation22 + $0x4a0] sm:$0xff]
    %v5503 = vld [vmem:[#allocation22 + $0x4a8] sm:$0xff]
    %v5504 = vld [vmem:[#allocation22 + $0x4b0] sm:$0xff]
    %v5505 = vld [vmem:[#allocation22 + $0x4b8] sm:$0xff]
    %v5506 = vld [vmem:[#allocation22 + $0x4c0] sm:$0xff]
    %v5507 = vld [vmem:[#allocation22 + $0x4c8] sm:$0xff]
    %v5508 = vld [vmem:[#allocation22 + $0x4d0] sm:$0xff]
    %v5509 = vld [vmem:[#allocation22 + $0x4d8] sm:$0xff]
    %v5510 = vld [vmem:[#allocation22 + $0x4e0] sm:$0xff]
    %v5511 = vld [vmem:[#allocation22 + $0x4e8] sm:$0xff]
    %v5512 = vld [vmem:[#allocation22 + $0x4f0] sm:$0xff]
    %v5513 = vld [vmem:[#allocation22 + $0x4f8] sm:$0xff]
    %v5514 = vld [vmem:[#allocation22 + $0x500] sm:$0xff]
    %v5515 = vld [vmem:[#allocation22 + $0x508] sm:$0xff]
    %v5516 = vld [vmem:[#allocation22 + $0x510] sm:$0xff]
    %v5517 = vld [vmem:[#allocation22 + $0x518] sm:$0xff]
    %v5518 = vld [vmem:[#allocation22 + $0x520] sm:$0xff]
    %v5519 = vld [vmem:[#allocation22 + $0x528] sm:$0xff]
    %v5520 = vld [vmem:[#allocation22 + $0x530] sm:$0xff]
    %v5521 = vld [vmem:[#allocation22 + $0x538] sm:$0xff]
    %v5522 = vld [vmem:[#allocation22 + $0x540] sm:$0xff]
    %v5523 = vld [vmem:[#allocation22 + $0x548] sm:$0xff]
    %v5524 = vld [vmem:[#allocation22 + $0x550] sm:$0xff]
    %v5525 = vld [vmem:[#allocation22 + $0x558] sm:$0xff]
    %v5526 = vld [vmem:[#allocation22 + $0x560] sm:$0xff]
    %v5527 = vld [vmem:[#allocation22 + $0x568] sm:$0xff]
    %v5528 = vld [vmem:[#allocation22 + $0x570] sm:$0xff]
    %v5529 = vld [vmem:[#allocation22 + $0x578] sm:$0xff]
    %v5530 = vld [vmem:[#allocation22 + $0x580] sm:$0xff]
    %v5531 = vld [vmem:[#allocation22 + $0x588] sm:$0xff]
    %v5532 = vld [vmem:[#allocation22 + $0x590] sm:$0xff]
    %v5533 = vld [vmem:[#allocation22 + $0x598] sm:$0xff]
    %v5534 = vld [vmem:[#allocation22 + $0x5a0] sm:$0xff]
    %v5535 = vld [vmem:[#allocation22 + $0x5a8] sm:$0xff]
    %v5536 = vld [vmem:[#allocation22 + $0x5b0] sm:$0xff]
    %v5537 = vld [vmem:[#allocation22 + $0x5b8] sm:$0xff]
    %v5538 = vld [vmem:[#allocation22 + $0x5c0] sm:$0xff]
    %v5539 = vld [vmem:[#allocation22 + $0x5c8] sm:$0xff]
    %v5540 = vld [vmem:[#allocation22 + $0x5d0] sm:$0xff]
    %v5541 = vld [vmem:[#allocation22 + $0x5d8] sm:$0xff]
    %v5542 = vld [vmem:[#allocation22 + $0x5e0] sm:$0xff]
    %v5543 = vld [vmem:[#allocation22 + $0x5e8] sm:$0xff]
    %v5544 = vld [vmem:[#allocation22 + $0x5f0] sm:$0xff]
    %v5545 = vld [vmem:[#allocation22 + $0x5f8] sm:$0xff]
    %v5546 = vld [vmem:[#allocation22 + $0x600] sm:$0xff]
    %v5547 = vld [vmem:[#allocation22 + $0x608] sm:$0xff]
    %v5548 = vld [vmem:[#allocation22 + $0x610] sm:$0xff]
    %v5549 = vld [vmem:[#allocation22 + $0x618] sm:$0xff]
    %v5550 = vld [vmem:[#allocation22 + $0x620] sm:$0xff]
    %v5551 = vld [vmem:[#allocation22 + $0x628] sm:$0xff]
    %v5552 = vld [vmem:[#allocation22 + $0x630] sm:$0xff]
    %v5553 = vld [vmem:[#allocation22 + $0x638] sm:$0xff]
    %v5554 = vld [vmem:[#allocation22 + $0x640] sm:$0xff]
    %v5555 = vld [vmem:[#allocation22 + $0x648] sm:$0xff]
    %v5556 = vld [vmem:[#allocation22 + $0x650] sm:$0xff]
    %v5557 = vld [vmem:[#allocation22 + $0x658] sm:$0xff]
    %v5558 = vld [vmem:[#allocation22 + $0x660] sm:$0xff]
    %v5559 = vld [vmem:[#allocation22 + $0x668] sm:$0xff]
    %v5560 = vld [vmem:[#allocation22 + $0x670] sm:$0xff]
    %v5561 = vld [vmem:[#allocation22 + $0x678] sm:$0xff]
    %v5562 = vld [vmem:[#allocation22 + $0x680] sm:$0xff]
    %v5563 = vld [vmem:[#allocation22 + $0x688] sm:$0xff]
    %v5564 = vld [vmem:[#allocation22 + $0x690] sm:$0xff]
    %v5565 = vld [vmem:[#allocation22 + $0x698] sm:$0xff]
    %v5566 = vld [vmem:[#allocation22 + $0x6a0] sm:$0xff]
    %v5567 = vld [vmem:[#allocation22 + $0x6a8] sm:$0xff]
    %v5568 = vld [vmem:[#allocation22 + $0x6b0] sm:$0xff]
    %v5569 = vld [vmem:[#allocation22 + $0x6b8] sm:$0xff]
    %v5570 = vld [vmem:[#allocation22 + $0x6c0] sm:$0xff]
    %v5571 = vld [vmem:[#allocation22 + $0x6c8] sm:$0xff]
    %v5572 = vld [vmem:[#allocation22 + $0x6d0] sm:$0xff]
    %v5573 = vld [vmem:[#allocation22 + $0x6d8] sm:$0xff]
    %v5574 = vld [vmem:[#allocation22 + $0x6e0] sm:$0xff]
    %v5575 = vld [vmem:[#allocation22 + $0x6e8] sm:$0xff]
    %v5576 = vld [vmem:[#allocation22 + $0x6f0] sm:$0xff]
    %v5577 = vld [vmem:[#allocation22 + $0x6f8] sm:$0xff]
    %v5578 = vld [vmem:[#allocation22 + $0x700] sm:$0xff]
    %v5579 = vld [vmem:[#allocation22 + $0x708] sm:$0xff]
    %v5580 = vld [vmem:[#allocation22 + $0x710] sm:$0xff]
    %v5581 = vld [vmem:[#allocation22 + $0x718] sm:$0xff]
    %v5582 = vld [vmem:[#allocation22 + $0x720] sm:$0xff]
    %v5583 = vld [vmem:[#allocation22 + $0x728] sm:$0xff]
    %v5584 = vld [vmem:[#allocation22 + $0x730] sm:$0xff]
    %v5585 = vld [vmem:[#allocation22 + $0x738] sm:$0xff]
    %v5586 = vld [vmem:[#allocation22 + $0x740] sm:$0xff]
    %v5587 = vld [vmem:[#allocation22 + $0x748] sm:$0xff]
    %v5588 = vld [vmem:[#allocation22 + $0x750] sm:$0xff]
    %v5589 = vld [vmem:[#allocation22 + $0x758] sm:$0xff]
    %v5590 = vld [vmem:[#allocation22 + $0x760] sm:$0xff]
    %v5591 = vld [vmem:[#allocation22 + $0x768] sm:$0xff]
    %v5592 = vld [vmem:[#allocation22 + $0x770] sm:$0xff]
    %v5593 = vld [vmem:[#allocation22 + $0x778] sm:$0xff]
    %v5594 = vld [vmem:[#allocation22 + $0x780] sm:$0xff]
    %v5595 = vld [vmem:[#allocation22 + $0x788] sm:$0xff]
    %v5596 = vld [vmem:[#allocation22 + $0x790] sm:$0xff]
    %v5597 = vld [vmem:[#allocation22 + $0x798] sm:$0xff]
    %v5598 = vld [vmem:[#allocation22 + $0x7a0] sm:$0xff]
    %v5599 = vld [vmem:[#allocation22 + $0x7a8] sm:$0xff]
    %v5600 = vld [vmem:[#allocation22 + $0x7b0] sm:$0xff]
    %v5601 = vld [vmem:[#allocation22 + $0x7b8] sm:$0xff]
    %v5602 = vld [vmem:[#allocation22 + $0x7c0] sm:$0xff]
    %v5603 = vld [vmem:[#allocation22 + $0x7c8] sm:$0xff]
    %v5604 = vld [vmem:[#allocation22 + $0x7d0] sm:$0xff]
    %v5605 = vld [vmem:[#allocation22 + $0x7d8] sm:$0xff]
    %v5606 = vld [vmem:[#allocation22 + $0x7e0] sm:$0xff]
    %v5607 = vld [vmem:[#allocation22 + $0x7e8] sm:$0xff]
    %v5608 = vld [vmem:[#allocation22 + $0x7f0] sm:$0xff]
    %v5609 = vld [vmem:[#allocation22 + $0x7f8] sm:$0xff]
    %v5610 = vld [vmem:[%s55] sm:$0xf]
    %v5612 = vlaneseq
    %v5613 = vshrl.u32 %v5612, 7
    %v5614 = vsub.s32 0, %v5613
    %v5615 = vrot.slane %v5610, %v5614
    %v5616 = vlaneseq
    %v5617 = vshrl.u32 %v5616, 7
    %v5618 = vsub.s32 1, %v5617
    %v5619 = vrot.slane %v5610, %v5618
    %v5620 = vlaneseq
    %v5621 = vshrl.u32 %v5620, 7
    %v5622 = vsub.s32 2, %v5621
    %v5623 = vrot.slane %v5610, %v5622
    %v5624 = vlaneseq
    %v5625 = vshrl.u32 %v5624, 7
    %v5626 = vsub.s32 3, %v5625
    %v5627 = vrot.slane %v5610, %v5626
    %5632 = vmatprep.subr.mxu0 %v5355
    %5633 = vmatpush1.msra.mxu0 %v5354
    %5634 = vmatprep.subr.mxu0 %v5359
    %5635 = vmatpush1.msra.mxu0 %v5358
    %5636 = vmatprep.subr.mxu0 %v5363
    %5637 = vmatpush1.msra.mxu0 %v5362
    %5638 = vmatprep.subr.mxu0 %v5367
    %5639 = vmatpush1.msra.mxu0 %v5366
    %5640 = vmatprep.subr.mxu0 %v5371
    %5641 = vmatpush1.msra.mxu0 %v5370
    %5642 = vmatprep.subr.mxu0 %v5375
    %5643 = vmatpush1.msra.mxu0 %v5374
    %5644 = vmatprep.subr.mxu0 %v5379
    %5645 = vmatpush1.msra.mxu0 %v5378
    %5646 = vmatprep.subr.mxu0 %v5383
    %5647 = vmatpush1.msra.mxu0 %v5382
    %5648 = vmatprep.subr.mxu0 %v5387
    %5649 = vmatpush1.msra.mxu0 %v5386
    %5650 = vmatprep.subr.mxu0 %v5391
    %5651 = vmatpush1.msra.mxu0 %v5390
    %5652 = vmatprep.subr.mxu0 %v5395
    %5653 = vmatpush1.msra.mxu0 %v5394
    %5654 = vmatprep.subr.mxu0 %v5399
    %5655 = vmatpush1.msra.mxu0 %v5398
    %5656 = vmatprep.subr.mxu0 %v5403
    %5657 = vmatpush1.msra.mxu0 %v5402
    %5658 = vmatprep.subr.mxu0 %v5407
    %5659 = vmatpush1.msra.mxu0 %v5406
    %5660 = vmatprep.subr.mxu0 %v5411
    %5661 = vmatpush1.msra.mxu0 %v5410
    %5662 = vmatprep.subr.mxu0 %v5415
    %5663 = vmatpush1.msra.mxu0 %v5414
    %5664 = vmatprep.subr.mxu0 %v5419
    %5665 = vmatpush1.msra.mxu0 %v5418
    %5666 = vmatprep.subr.mxu0 %v5423
    %5667 = vmatpush1.msra.mxu0 %v5422
    %5668 = vmatprep.subr.mxu0 %v5427
    %5669 = vmatpush1.msra.mxu0 %v5426
    %5670 = vmatprep.subr.mxu0 %v5431
    %5671 = vmatpush1.msra.mxu0 %v5430
    %5672 = vmatprep.subr.mxu0 %v5435
    %5673 = vmatpush1.msra.mxu0 %v5434
    %5674 = vmatprep.subr.mxu0 %v5439
    %5675 = vmatpush1.msra.mxu0 %v5438
    %5676 = vmatprep.subr.mxu0 %v5443
    %5677 = vmatpush1.msra.mxu0 %v5442
    %5678 = vmatprep.subr.mxu0 %v5447
    %5679 = vmatpush1.msra.mxu0 %v5446
    %5680 = vmatprep.subr.mxu0 %v5451
    %5681 = vmatpush1.msra.mxu0 %v5450
    %5682 = vmatprep.subr.mxu0 %v5455
    %5683 = vmatpush1.msra.mxu0 %v5454
    %5684 = vmatprep.subr.mxu0 %v5459
    %5685 = vmatpush1.msra.mxu0 %v5458
    %5686 = vmatprep.subr.mxu0 %v5463
    %5687 = vmatpush1.msra.mxu0 %v5462
    %5688 = vmatprep.subr.mxu0 %v5467
    %5689 = vmatpush1.msra.mxu0 %v5466
    %5690 = vmatprep.subr.mxu0 %v5471
    %5691 = vmatpush1.msra.mxu0 %v5470
    %5692 = vmatprep.subr.mxu0 %v5475
    %5693 = vmatpush1.msra.mxu0 %v5474
    %5694 = vmatprep.subr.mxu0 %v5479
    %5695 = vmatpush1.msra.mxu0 %v5478
    %5696 = vmatprep.mubr.f32.mxu0 %v5351
    %5697 = vmatmul.mubr.f32.gmra.mrb[0].mxu0 %v5350
    %v5698 = vpop.f32.mrb[0].mxu0
    %v5699 = vadd.f32 %v5615, %v5698
    %v5700 = vpop.f32.mrb[0].mxu0
    %v5701 = vadd.f32 %v5619, %v5700
    %5702 = vdwg.mxu0
    %5703 = vmatprep.subr.mxu0 %v5483
    %5704 = vmatpush1.msra.mxu0 %v5482
    %5705 = vmatprep.subr.mxu0 %v5487
    %5706 = vmatpush1.msra.mxu0 %v5486
    %5707 = vmatprep.subr.mxu0 %v5491
    %5708 = vmatpush1.msra.mxu0 %v5490
    %5709 = vmatprep.subr.mxu0 %v5495
    %5710 = vmatpush1.msra.mxu0 %v5494
    %5711 = vmatprep.subr.mxu0 %v5499
    %5712 = vmatpush1.msra.mxu0 %v5498
    %5713 = vmatprep.subr.mxu0 %v5503
    %5714 = vmatpush1.msra.mxu0 %v5502
    %5715 = vmatprep.subr.mxu0 %v5507
    %5716 = vmatpush1.msra.mxu0 %v5506
    %5717 = vmatprep.subr.mxu0 %v5511
    %5718 = vmatpush1.msra.mxu0 %v5510
    %5719 = vmatprep.subr.mxu0 %v5515
    %5720 = vmatpush1.msra.mxu0 %v5514
    %5721 = vmatprep.subr.mxu0 %v5519
    %5722 = vmatpush1.msra.mxu0 %v5518
    %5723 = vmatprep.subr.mxu0 %v5523
    %5724 = vmatpush1.msra.mxu0 %v5522
    %5725 = vmatprep.subr.mxu0 %v5527
    %5726 = vmatpush1.msra.mxu0 %v5526
    %5727 = vmatprep.subr.mxu0 %v5531
    %5728 = vmatpush1.msra.mxu0 %v5530
    %5729 = vmatprep.subr.mxu0 %v5535
    %5730 = vmatpush1.msra.mxu0 %v5534
    %5731 = vmatprep.subr.mxu0 %v5539
    %5732 = vmatpush1.msra.mxu0 %v5538
    %5733 = vmatprep.subr.mxu0 %v5543
    %5734 = vmatpush1.msra.mxu0 %v5542
    %5735 = vmatprep.subr.mxu0 %v5547
    %5736 = vmatpush1.msra.mxu0 %v5546
    %5737 = vmatprep.subr.mxu0 %v5551
    %5738 = vmatpush1.msra.mxu0 %v5550
    %5739 = vmatprep.subr.mxu0 %v5555
    %5740 = vmatpush1.msra.mxu0 %v5554
    %5741 = vmatprep.subr.mxu0 %v5559
    %5742 = vmatpush1.msra.mxu0 %v5558
    %5743 = vmatprep.subr.mxu0 %v5563
    %5744 = vmatpush1.msra.mxu0 %v5562
    %5745 = vmatprep.subr.mxu0 %v5567
    %5746 = vmatpush1.msra.mxu0 %v5566
    %5747 = vmatprep.subr.mxu0 %v5571
    %5748 = vmatpush1.msra.mxu0 %v5570
    %5749 = vmatprep.subr.mxu0 %v5575
    %5750 = vmatpush1.msra.mxu0 %v5574
    %5751 = vmatprep.subr.mxu0 %v5579
    %5752 = vmatpush1.msra.mxu0 %v5578
    %5753 = vmatprep.subr.mxu0 %v5583
    %5754 = vmatpush1.msra.mxu0 %v5582
    %5755 = vmatprep.subr.mxu0 %v5587
    %5756 = vmatpush1.msra.mxu0 %v5586
    %5757 = vmatprep.subr.mxu0 %v5591
    %5758 = vmatpush1.msra.mxu0 %v5590
    %5759 = vmatprep.subr.mxu0 %v5595
    %5760 = vmatpush1.msra.mxu0 %v5594
    %5761 = vmatprep.subr.mxu0 %v5599
    %5762 = vmatpush1.msra.mxu0 %v5598
    %5763 = vmatprep.subr.mxu0 %v5603
    %5764 = vmatpush1.msra.mxu0 %v5602
    %5765 = vmatprep.subr.mxu0 %v5607
    %5766 = vmatpush1.msra.mxu0 %v5606
    %5767 = vmatprep.mubr.f32.mxu0 %v5353
    %5768 = vmatmul.mubr.f32.gmra.mrb[0].mxu0 %v5352
    %v5769 = vpop.f32.mrb[0].mxu0
    %v5770 = vadd.f32 %v5699, %v5769
    %v5771 = vpop.f32.mrb[0].mxu0
    %v5772 = vadd.f32 %v5701, %v5771
    %5773 = vdwg.mxu0
    %5774 = vmatprep.subr.mxu0 %v5357
    %5775 = vmatpush1.msra.mxu0 %v5356
    %5776 = vmatprep.subr.mxu0 %v5361
    %5777 = vmatpush1.msra.mxu0 %v5360
    %5778 = vmatprep.subr.mxu0 %v5365
    %5779 = vmatpush1.msra.mxu0 %v5364
    %5780 = vmatprep.subr.mxu0 %v5369
    %5781 = vmatpush1.msra.mxu0 %v5368
    %5782 = vmatprep.subr.mxu0 %v5373
    %5783 = vmatpush1.msra.mxu0 %v5372
    %5784 = vmatprep.subr.mxu0 %v5377
    %5785 = vmatpush1.msra.mxu0 %v5376
    %5786 = vmatprep.subr.mxu0 %v5381
    %5787 = vmatpush1.msra.mxu0 %v5380
    %5788 = vmatprep.subr.mxu0 %v5385
    %5789 = vmatpush1.msra.mxu0 %v5384
    %5790 = vmatprep.subr.mxu0 %v5389
    %5791 = vmatpush1.msra.mxu0 %v5388
    %5792 = vmatprep.subr.mxu0 %v5393
    %5793 = vmatpush1.msra.mxu0 %v5392
    %5794 = vmatprep.subr.mxu0 %v5397
    %5795 = vmatpush1.msra.mxu0 %v5396
    %5796 = vmatprep.subr.mxu0 %v5401
    %5797 = vmatpush1.msra.mxu0 %v5400
    %5798 = vmatprep.subr.mxu0 %v5405
    %5799 = vmatpush1.msra.mxu0 %v5404
    %5800 = vmatprep.subr.mxu0 %v5409
    %5801 = vmatpush1.msra.mxu0 %v5408
    %5802 = vmatprep.subr.mxu0 %v5413
    %5803 = vmatpush1.msra.mxu0 %v5412
    %5804 = vmatprep.subr.mxu0 %v5417
    %5805 = vmatpush1.msra.mxu0 %v5416
    %5806 = vmatprep.subr.mxu0 %v5421
    %5807 = vmatpush1.msra.mxu0 %v5420
    %5808 = vmatprep.subr.mxu0 %v5425
    %5809 = vmatpush1.msra.mxu0 %v5424
    %5810 = vmatprep.subr.mxu0 %v5429
    %5811 = vmatpush1.msra.mxu0 %v5428
    %5812 = vmatprep.subr.mxu0 %v5433
    %5813 = vmatpush1.msra.mxu0 %v5432
    %5814 = vmatprep.subr.mxu0 %v5437
    %5815 = vmatpush1.msra.mxu0 %v5436
    %5816 = vmatprep.subr.mxu0 %v5441
    %5817 = vmatpush1.msra.mxu0 %v5440
    %5818 = vmatprep.subr.mxu0 %v5445
    %5819 = vmatpush1.msra.mxu0 %v5444
    %5820 = vmatprep.subr.mxu0 %v5449
    %5821 = vmatpush1.msra.mxu0 %v5448
    %5822 = vmatprep.subr.mxu0 %v5453
    %5823 = vmatpush1.msra.mxu0 %v5452
    %5824 = vmatprep.subr.mxu0 %v5457
    %5825 = vmatpush1.msra.mxu0 %v5456
    %5826 = vmatprep.subr.mxu0 %v5461
    %5827 = vmatpush1.msra.mxu0 %v5460
    %5828 = vmatprep.subr.mxu0 %v5465
    %5829 = vmatpush1.msra.mxu0 %v5464
    %5830 = vmatprep.subr.mxu0 %v5469
    %5831 = vmatpush1.msra.mxu0 %v5468
    %5832 = vmatprep.subr.mxu0 %v5473
    %5833 = vmatpush1.msra.mxu0 %v5472
    %5834 = vmatprep.subr.mxu0 %v5477
    %5835 = vmatpush1.msra.mxu0 %v5476
    %5836 = vmatprep.subr.mxu0 %v5481
    %5837 = vmatpush1.msra.mxu0 %v5480
    %5838 = vmatprep.mubr.f32.mxu0 %v5351
    %5839 = vmatmul.mubr.f32.gmra.mrb[0].mxu0 %v5350
    %v5840 = vpop.f32.mrb[0].mxu0
    %v5841 = vadd.f32 %v5623, %v5840
    %v5842 = vpop.f32.mrb[0].mxu0
    %v5843 = vadd.f32 %v5627, %v5842
    %5844 = vdwg.mxu0
    %5845 = vmatprep.subr.mxu0 %v5485
    %5846 = vmatpush1.msra.mxu0 %v5484
    %5847 = vmatprep.subr.mxu0 %v5489
    %5848 = vmatpush1.msra.mxu0 %v5488
    %5849 = vmatprep.subr.mxu0 %v5493
    %5850 = vmatpush1.msra.mxu0 %v5492
    %5851 = vmatprep.subr.mxu0 %v5497
    %5852 = vmatpush1.msra.mxu0 %v5496
    %5853 = vmatprep.subr.mxu0 %v5501
    %5854 = vmatpush1.msra.mxu0 %v5500
    %5855 = vmatprep.subr.mxu0 %v5505
    %5856 = vmatpush1.msra.mxu0 %v5504
    %5857 = vmatprep.subr.mxu0 %v5509
    %5858 = vmatpush1.msra.mxu0 %v5508
    %5859 = vmatprep.subr.mxu0 %v5513
    %5860 = vmatpush1.msra.mxu0 %v5512
    %5861 = vmatprep.subr.mxu0 %v5517
    %5862 = vmatpush1.msra.mxu0 %v5516
    %5863 = vmatprep.subr.mxu0 %v5521
    %5864 = vmatpush1.msra.mxu0 %v5520
    %5865 = vmatprep.subr.mxu0 %v5525
    %5866 = vmatpush1.msra.mxu0 %v5524
    %5867 = vmatprep.subr.mxu0 %v5529
    %5868 = vmatpush1.msra.mxu0 %v5528
    %5869 = vmatprep.subr.mxu0 %v5533
    %5870 = vmatpush1.msra.mxu0 %v5532
    %5871 = vmatprep.subr.mxu0 %v5537
    %5872 = vmatpush1.msra.mxu0 %v5536
    %5873 = vmatprep.subr.mxu0 %v5541
    %5874 = vmatpush1.msra.mxu0 %v5540
    %5875 = vmatprep.subr.mxu0 %v5545
    %5876 = vmatpush1.msra.mxu0 %v5544
    %5877 = vmatprep.subr.mxu0 %v5549
    %5878 = vmatpush1.msra.mxu0 %v5548
    %5879 = vmatprep.subr.mxu0 %v5553
    %5880 = vmatpush1.msra.mxu0 %v5552
    %5881 = vmatprep.subr.mxu0 %v5557
    %5882 = vmatpush1.msra.mxu0 %v5556
    %5883 = vmatprep.subr.mxu0 %v5561
    %5884 = vmatpush1.msra.mxu0 %v5560
    %5885 = vmatprep.subr.mxu0 %v5565
    %5886 = vmatpush1.msra.mxu0 %v5564
    %5887 = vmatprep.subr.mxu0 %v5569
    %5888 = vmatpush1.msra.mxu0 %v5568
    %5889 = vmatprep.subr.mxu0 %v5573
    %5890 = vmatpush1.msra.mxu0 %v5572
    %5891 = vmatprep.subr.mxu0 %v5577
    %5892 = vmatpush1.msra.mxu0 %v5576
    %5893 = vmatprep.subr.mxu0 %v5581
    %5894 = vmatpush1.msra.mxu0 %v5580
    %5895 = vmatprep.subr.mxu0 %v5585
    %5896 = vmatpush1.msra.mxu0 %v5584
    %5897 = vmatprep.subr.mxu0 %v5589
    %5898 = vmatpush1.msra.mxu0 %v5588
    %5899 = vmatprep.subr.mxu0 %v5593
    %5900 = vmatpush1.msra.mxu0 %v5592
    %5901 = vmatprep.subr.mxu0 %v5597
    %5902 = vmatpush1.msra.mxu0 %v5596
    %5903 = vmatprep.subr.mxu0 %v5601
    %5904 = vmatpush1.msra.mxu0 %v5600
    %5905 = vmatprep.subr.mxu0 %v5605
    %5906 = vmatpush1.msra.mxu0 %v5604
    %5907 = vmatprep.subr.mxu0 %v5609
    %5908 = vmatpush1.msra.mxu0 %v5608
    %5909 = vmatprep.mubr.f32.mxu0 %v5353
    %5910 = vmatmul.mubr.f32.gmra.mrb[0].mxu0 %v5352
    %v5911 = vpop.f32.mrb[0].mxu0
    %v5912 = vadd.f32 %v5841, %v5911
    %v5913 = vpop.f32.mrb[0].mxu0
    %v5914 = vadd.f32 %v5843, %v5913
    %5915 = vdwg.mxu0
    %v5916 = vmax.f32 %v5770, 0.0
    %v5917 = vmax.f32 %v5772, 0.0
    %v5918 = vmax.f32 %v5912, 0.0
    %v5919 = vmax.f32 %v5914, 0.0
    %v5920 = vld [vmem:[%s57] sm:$0xff]
    %v5921 = vld [vmem:[%s57 + $0x8] sm:$0xff]
    %v5922 = vld [vmem:[%s57 + $0x10] sm:$0xff]
    %v5923 = vld [vmem:[%s57 + $0x18] sm:$0xff]
    %v5924 = vld [vmem:[%s57 + $0x20] sm:$0xff]
    %v5925 = vld [vmem:[%s57 + $0x28] sm:$0xff]
    %v5926 = vld [vmem:[%s57 + $0x30] sm:$0xff]
    %v5927 = vld [vmem:[%s57 + $0x38] sm:$0xff]
    %v5928 = vld [vmem:[%s57 + $0x40] sm:$0xff]
    %v5929 = vld [vmem:[%s57 + $0x48] sm:$0xff]
    %v5930 = vld [vmem:[%s57 + $0x50] sm:$0xff]
    %v5931 = vld [vmem:[%s57 + $0x58] sm:$0xff]
    %v5932 = vld [vmem:[%s57 + $0x60] sm:$0xff]
    %v5933 = vld [vmem:[%s57 + $0x68] sm:$0xff]
    %v5934 = vld [vmem:[%s57 + $0x70] sm:$0xff]
    %v5935 = vld [vmem:[%s57 + $0x78] sm:$0xff]
    %v5936 = vld [vmem:[%s57 + $0x80] sm:$0xff]
    %v5937 = vld [vmem:[%s57 + $0x88] sm:$0xff]
    %v5938 = vld [vmem:[%s57 + $0x90] sm:$0xff]
    %v5939 = vld [vmem:[%s57 + $0x98] sm:$0xff]
    %v5940 = vld [vmem:[%s57 + $0xa0] sm:$0xff]
    %v5941 = vld [vmem:[%s57 + $0xa8] sm:$0xff]
    %v5942 = vld [vmem:[%s57 + $0xb0] sm:$0xff]
    %v5943 = vld [vmem:[%s57 + $0xb8] sm:$0xff]
    %v5944 = vld [vmem:[%s57 + $0xc0] sm:$0xff]
    %v5945 = vld [vmem:[%s57 + $0xc8] sm:$0xff]
    %v5946 = vld [vmem:[%s57 + $0xd0] sm:$0xff]
    %v5947 = vld [vmem:[%s57 + $0xd8] sm:$0xff]
    %v5948 = vld [vmem:[%s57 + $0xe0] sm:$0xff]
    %v5949 = vld [vmem:[%s57 + $0xe8] sm:$0xff]
    %v5950 = vld [vmem:[%s57 + $0xf0] sm:$0xff]
    %v5951 = vld [vmem:[%s57 + $0xf8] sm:$0xff]
    %v5952 = vld [vmem:[%s57 + $0x100] sm:$0xff]
    %v5953 = vld [vmem:[%s57 + $0x108] sm:$0xff]
    %v5954 = vld [vmem:[%s57 + $0x110] sm:$0xff]
    %v5955 = vld [vmem:[%s57 + $0x118] sm:$0xff]
    %v5956 = vld [vmem:[%s57 + $0x120] sm:$0xff]
    %v5957 = vld [vmem:[%s57 + $0x128] sm:$0xff]
    %v5958 = vld [vmem:[%s57 + $0x130] sm:$0xff]
    %v5959 = vld [vmem:[%s57 + $0x138] sm:$0xff]
    %v5960 = vld [vmem:[%s57 + $0x140] sm:$0xff]
    %v5961 = vld [vmem:[%s57 + $0x148] sm:$0xff]
    %v5962 = vld [vmem:[%s57 + $0x150] sm:$0xff]
    %v5963 = vld [vmem:[%s57 + $0x158] sm:$0xff]
    %v5964 = vld [vmem:[%s57 + $0x160] sm:$0xff]
    %v5965 = vld [vmem:[%s57 + $0x168] sm:$0xff]
    %v5966 = vld [vmem:[%s57 + $0x170] sm:$0xff]
    %v5967 = vld [vmem:[%s57 + $0x178] sm:$0xff]
    %v5968 = vld [vmem:[%s57 + $0x180] sm:$0xff]
    %v5969 = vld [vmem:[%s57 + $0x188] sm:$0xff]
    %v5970 = vld [vmem:[%s57 + $0x190] sm:$0xff]
    %v5971 = vld [vmem:[%s57 + $0x198] sm:$0xff]
    %v5972 = vld [vmem:[%s57 + $0x1a0] sm:$0xff]
    %v5973 = vld [vmem:[%s57 + $0x1a8] sm:$0xff]
    %v5974 = vld [vmem:[%s57 + $0x1b0] sm:$0xff]
    %v5975 = vld [vmem:[%s57 + $0x1b8] sm:$0xff]
    %v5976 = vld [vmem:[%s57 + $0x1c0] sm:$0xff]
    %v5977 = vld [vmem:[%s57 + $0x1c8] sm:$0xff]
    %v5978 = vld [vmem:[%s57 + $0x1d0] sm:$0xff]
    %v5979 = vld [vmem:[%s57 + $0x1d8] sm:$0xff]
    %v5980 = vld [vmem:[%s57 + $0x1e0] sm:$0xff]
    %v5981 = vld [vmem:[%s57 + $0x1e8] sm:$0xff]
    %v5982 = vld [vmem:[%s57 + $0x1f0] sm:$0xff]
    %v5983 = vld [vmem:[%s57 + $0x1f8] sm:$0xff]
    %v5984 = vld [vmem:[%s59] sm:$0x1]
    %v5986 = vlaneseq
    %v5987 = vshrl.u32 %v5986, 7
    %v5988 = vsub.s32 0, %v5987
    %v5989 = vrot.slane %v5984, %v5988
    %5991 = vmatprep.subr.mxu0 0.0
    %5992 = vmatpush1.msra.mxu0 %v5920
    %5993 = vmatprep.subr.mxu0 0.0
    %5994 = vmatpush1.msra.mxu0 %v5921
    %5995 = vmatprep.subr.mxu0 0.0
    %5996 = vmatpush1.msra.mxu0 %v5922
    %5997 = vmatprep.subr.mxu0 0.0
    %5998 = vmatpush1.msra.mxu0 %v5923
    %5999 = vmatprep.subr.mxu0 0.0
    %6000 = vmatpush1.msra.mxu0 %v5924
    %6001 = vmatprep.subr.mxu0 0.0
    %6002 = vmatpush1.msra.mxu0 %v5925
    %6003 = vmatprep.subr.mxu0 0.0
    %6004 = vmatpush1.msra.mxu0 %v5926
    %6005 = vmatprep.subr.mxu0 0.0
    %6006 = vmatpush1.msra.mxu0 %v5927
    %6007 = vmatprep.subr.mxu0 0.0
    %6008 = vmatpush1.msra.mxu0 %v5928
    %6009 = vmatprep.subr.mxu0 0.0
    %6010 = vmatpush1.msra.mxu0 %v5929
    %6011 = vmatprep.subr.mxu0 0.0
    %6012 = vmatpush1.msra.mxu0 %v5930
    %6013 = vmatprep.subr.mxu0 0.0
    %6014 = vmatpush1.msra.mxu0 %v5931
    %6015 = vmatprep.subr.mxu0 0.0
    %6016 = vmatpush1.msra.mxu0 %v5932
    %6017 = vmatprep.subr.mxu0 0.0
    %6018 = vmatpush1.msra.mxu0 %v5933
    %6019 = vmatprep.subr.mxu0 0.0
    %6020 = vmatpush1.msra.mxu0 %v5934
    %6021 = vmatprep.subr.mxu0 0.0
    %6022 = vmatpush1.msra.mxu0 %v5935
    %6023 = vmatprep.subr.mxu0 0.0
    %6024 = vmatpush1.msra.mxu0 %v5936
    %6025 = vmatprep.subr.mxu0 0.0
    %6026 = vmatpush1.msra.mxu0 %v5937
    %6027 = vmatprep.subr.mxu0 0.0
    %6028 = vmatpush1.msra.mxu0 %v5938
    %6029 = vmatprep.subr.mxu0 0.0
    %6030 = vmatpush1.msra.mxu0 %v5939
    %6031 = vmatprep.subr.mxu0 0.0
    %6032 = vmatpush1.msra.mxu0 %v5940
    %6033 = vmatprep.subr.mxu0 0.0
    %6034 = vmatpush1.msra.mxu0 %v5941
    %6035 = vmatprep.subr.mxu0 0.0
    %6036 = vmatpush1.msra.mxu0 %v5942
    %6037 = vmatprep.subr.mxu0 0.0
    %6038 = vmatpush1.msra.mxu0 %v5943
    %6039 = vmatprep.subr.mxu0 0.0
    %6040 = vmatpush1.msra.mxu0 %v5944
    %6041 = vmatprep.subr.mxu0 0.0
    %6042 = vmatpush1.msra.mxu0 %v5945
    %6043 = vmatprep.subr.mxu0 0.0
    %6044 = vmatpush1.msra.mxu0 %v5946
    %6045 = vmatprep.subr.mxu0 0.0
    %6046 = vmatpush1.msra.mxu0 %v5947
    %6047 = vmatprep.subr.mxu0 0.0
    %6048 = vmatpush1.msra.mxu0 %v5948
    %6049 = vmatprep.subr.mxu0 0.0
    %6050 = vmatpush1.msra.mxu0 %v5949
    %6051 = vmatprep.subr.mxu0 0.0
    %6052 = vmatpush1.msra.mxu0 %v5950
    %6053 = vmatprep.subr.mxu0 0.0
    %6054 = vmatpush1.msra.mxu0 %v5951
    %6055 = vmatprep.mubr.f32.mxu0 %v5917
    %6056 = vmatmul.mubr.f32.gmra.mrb[0].mxu0 %v5916
    %v6057 = vpop.f32.mrb[0].mxu0
    %v6058 = vadd.f32 %v5989, %v6057
    %v6059 = vpop.f32.mrb[0].mxu0
    %6060 = vdwg.mxu0
    %6061 = vmatprep.subr.mxu0 0.0
    %6062 = vmatpush1.msra.mxu0 %v5952
    %6063 = vmatprep.subr.mxu0 0.0
    %6064 = vmatpush1.msra.mxu0 %v5953
    %6065 = vmatprep.subr.mxu0 0.0
    %6066 = vmatpush1.msra.mxu0 %v5954
    %6067 = vmatprep.subr.mxu0 0.0
    %6068 = vmatpush1.msra.mxu0 %v5955
    %6069 = vmatprep.subr.mxu0 0.0
    %6070 = vmatpush1.msra.mxu0 %v5956
    %6071 = vmatprep.subr.mxu0 0.0
    %6072 = vmatpush1.msra.mxu0 %v5957
    %6073 = vmatprep.subr.mxu0 0.0
    %6074 = vmatpush1.msra.mxu0 %v5958
    %6075 = vmatprep.subr.mxu0 0.0
    %6076 = vmatpush1.msra.mxu0 %v5959
    %6077 = vmatprep.subr.mxu0 0.0
    %6078 = vmatpush1.msra.mxu0 %v5960
    %6079 = vmatprep.subr.mxu0 0.0
    %6080 = vmatpush1.msra.mxu0 %v5961
    %6081 = vmatprep.subr.mxu0 0.0
    %6082 = vmatpush1.msra.mxu0 %v5962
    %6083 = vmatprep.subr.mxu0 0.0
    %6084 = vmatpush1.msra.mxu0 %v5963
    %6085 = vmatprep.subr.mxu0 0.0
    %6086 = vmatpush1.msra.mxu0 %v5964
    %6087 = vmatprep.subr.mxu0 0.0
    %6088 = vmatpush1.msra.mxu0 %v5965
    %6089 = vmatprep.subr.mxu0 0.0
    %6090 = vmatpush1.msra.mxu0 %v5966
    %6091 = vmatprep.subr.mxu0 0.0
    %6092 = vmatpush1.msra.mxu0 %v5967
    %6093 = vmatprep.subr.mxu0 0.0
    %6094 = vmatpush1.msra.mxu0 %v5968
    %6095 = vmatprep.subr.mxu0 0.0
    %6096 = vmatpush1.msra.mxu0 %v5969
    %6097 = vmatprep.subr.mxu0 0.0
    %6098 = vmatpush1.msra.mxu0 %v5970
    %6099 = vmatprep.subr.mxu0 0.0
    %6100 = vmatpush1.msra.mxu0 %v5971
    %6101 = vmatprep.subr.mxu0 0.0
    %6102 = vmatpush1.msra.mxu0 %v5972
    %6103 = vmatprep.subr.mxu0 0.0
    %6104 = vmatpush1.msra.mxu0 %v5973
    %6105 = vmatprep.subr.mxu0 0.0
    %6106 = vmatpush1.msra.mxu0 %v5974
    %6107 = vmatprep.subr.mxu0 0.0
    %6108 = vmatpush1.msra.mxu0 %v5975
    %6109 = vmatprep.subr.mxu0 0.0
    %6110 = vmatpush1.msra.mxu0 %v5976
    %6111 = vmatprep.subr.mxu0 0.0
    %6112 = vmatpush1.msra.mxu0 %v5977
    %6113 = vmatprep.subr.mxu0 0.0
    %6114 = vmatpush1.msra.mxu0 %v5978
    %6115 = vmatprep.subr.mxu0 0.0
    %6116 = vmatpush1.msra.mxu0 %v5979
    %6117 = vmatprep.subr.mxu0 0.0
    %6118 = vmatpush1.msra.mxu0 %v5980
    %6119 = vmatprep.subr.mxu0 0.0
    %6120 = vmatpush1.msra.mxu0 %v5981
    %6121 = vmatprep.subr.mxu0 0.0
    %6122 = vmatpush1.msra.mxu0 %v5982
    %6123 = vmatprep.subr.mxu0 0.0
    %6124 = vmatpush1.msra.mxu0 %v5983
    %6125 = vmatprep.mubr.f32.mxu0 %v5919
    %6126 = vmatmul.mubr.f32.gmra.mrb[0].mxu0 %v5918
    %v6127 = vpop.f32.mrb[0].mxu0
    %v6128 = vadd.f32 %v6058, %v6127
    %v6129 = vpop.f32.mrb[0].mxu0
    %6130 = vdwg.mxu0
    %6131 = vst [vmem:[#allocation24] sm:$0x3] %v6128
    // Predicated region
    $region174: #{fsnet_forward.1} parent=1 // pred_check
      _
    $region175: #{fsnet_forward.1} parent=1 // pred_check_branch
      %6133 = sbr.rel (0) target = $region177
    $region176: #{fsnet_forward.1} parent=1 // pred_region
      %s6135 = ssub.s32 32, 32
      %6136 = vsyncadd [#allocation4], %s6135
      %s6138 = sshll.u32 [#allocation23], 4
      %s6139 = int_to_ptr.vmem [resolvable:$true] %s6138
      %6141 = dma.vmem_to_hbm [thread:$0]  %s6139, 32, %s61, [#allocation4]
    $region177: #{fsnet_forward.1} parent=1 // pred_fallthru
      _
    // Predicated region
    $region178: #{fsnet_forward.1} parent=1 // pred_check
      _
    $region179: #{fsnet_forward.1} parent=1 // pred_check_branch
      %6143 = sbr.rel (0) target = $region181
    $region180: #{fsnet_forward.1} parent=1 // pred_region
      %s6145 = ssub.s32 32, 32
      %6146 = vsyncadd [#allocation25], %s6145
      %s6148 = sshll.u32 [#allocation24], 4
      %s6149 = int_to_ptr.vmem [resolvable:$true] %s6148
      %6151 = dma.vmem_to_hbm [thread:$0]  %s6149, 32, %s63, [#allocation25]
    $region181: #{fsnet_forward.1} parent=1 // pred_fallthru
      _
    // Predicated region
    $region182: #{fsnet_forward.1} parent=1 // pred_check
      _
    $region183: #{fsnet_forward.1} parent=1 // pred_check_branch
      %6153 = sbr.rel (0) target = $region185
    $region184: #{fsnet_forward.1} parent=1 // pred_region
      %6154 = dma.done [#allocation4], 32
    $region185: #{fsnet_forward.1} parent=1 // pred_fallthru
      _
    // Predicated region
    $region186: #{fsnet_forward.1} parent=1 // pred_check
      _
    $region187: #{fsnet_forward.1} parent=1 // pred_check_branch
      %6156 = sbr.rel (0) target = $region189
    $region188: #{fsnet_forward.1} parent=1 // pred_region
      %6157 = dma.done [#allocation25], 32
    $region189: #{fsnet_forward.1} parent=1 // pred_fallthru
      _
    %6158 = vsyncpa [#allocation3], 1
    %6159 = vsyncpa [#allocation6], 1
    %6160 = vsyncpa [#allocation9], 1
    %6161 = vsyncpa [#allocation12], 1
    %6162 = vsyncpa [#allocation15], 1
    %6163 = vsyncpa [#allocation18], 1
    %6164 = vsyncpa [#allocation21], 1
    %6165 = vsyncpa [#allocation4], 1
    %6166 = vsyncpa [#allocation25], 1

</llo_original>
